<compile_context>
chip_gen: v7x
topology: tpu7x:2x2x1
jax: 0.10.0
libtpu: 0.0.40
codegen_flags: <defaults>
</compile_context>

<pallas_src>
import math

import jax
import jax.numpy as jnp
import numpy as np
from jax import lax
from jax.experimental import pallas as pl
from jax.experimental.pallas import tpu as pltpu

NUM_CLASSES = 32      # nn.Linear(216, 32); 216 = 6*6*6 implies a 28x28 input.
BATCH_BLOCK = 128     # images per grid step == lane width of every slab


# --------------------------------------------------------------------------- #
# Kernel: whole LeNet forward for a block of B images (batch on the lane axis)
# --------------------------------------------------------------------------- #
def _lenet_kernel(xp_ref, w1_ref, b1_ref, w2_ref, b2_ref, w3_ref, b3_ref,
                  out_ref):
    # xp_ref : [4, 28, 7, B]  column phase k -> x[:, 4j+k, b]
    # out_ref: [32, B]

    # ---- phase slabs at row offsets 0 / 1 (direct ref loads) -----------------
    # X[k][ro] = x[rows ro..ro+25, cols 4j+k]  -> [26, 7, B]
    X = [[xp_ref[k, ro:ro + 26, :, :] for ro in range(2)] for k in range(4)]
    # phase-0 shifted one phase-column right (x cols 4(j+1)), used by phase-3 taps
    X0s = [xp_ref[0, ro:ro + 26, 1:7, :] for ro in range(2)]        # [26, 6, B]

    def row_pool(cm, n_out):
        # stride-2 max along the leading (outer) axis: [2n, c, B] -> [n, c, B]
        return jnp.stack(
            [jnp.maximum(cm[2 * i], cm[2 * i + 1]) for i in range(n_out)],
            axis=0)

    # ---- stage 1: conv1 (1->3, 2x2, VALID) + 2x2/2 max-pool + relu -----------
    # y_k[r, j] = conv1 output at row r, column 4j+k  (column phase mod 4).
    # pooled even columns use phases {0,1}, pooled odd columns use phases {2,3},
    # so no sublane-strided access is ever needed.
    h1e, h1o = [], []                       # per channel: [13, 7, B] / [13, 6, B]
    for c in range(3):
        w = [w1_ref[c, t] for t in range(4)]            # (0,0),(0,1),(1,0),(1,1)
        y0 = w[0] * X[0][0] + w[1] * X[1][0] + w[2] * X[0][1] + w[3] * X[1][1]
        y1 = w[0] * X[1][0] + w[1] * X[2][0] + w[2] * X[1][1] + w[3] * X[2][1]
        y2 = (w[0] * X[2][0][:, 0:6] + w[1] * X[3][0][:, 0:6]
              + w[2] * X[2][1][:, 0:6] + w[3] * X[3][1][:, 0:6])
        y3 = (w[0] * X[3][0][:, 0:6] + w[1] * X0s[0]
              + w[2] * X[3][1][:, 0:6] + w[3] * X0s[1])
        cm_e = jnp.maximum(y0, y1)                       # [26, 7, B]
        cm_o = jnp.maximum(y2, y3)                       # [26, 6, B]
        b = b1_ref[c]
        h1e.append(jnp.maximum(row_pool(cm_e, 13) + b, 0.0))   # [13, 7, B]
        h1o.append(jnp.maximum(row_pool(cm_o, 13) + b, 0.0))   # [13, 6, B]

    # ---- stage 2: conv2 (3->6, 2x2, VALID) + 2x2/2 max-pool + relu -----------
    # pre-slice the h1 slabs once; reused across all 6 output channels
    he00 = [h1e[ci][0:12, 0:6, :] for ci in range(3)]    # rows r,   cols 2j
    he10 = [h1e[ci][1:13, 0:6, :] for ci in range(3)]    # rows r+1, cols 2j
    he01 = [h1e[ci][0:12, 1:7, :] for ci in range(3)]    # rows r,   cols 2j+2
    he11 = [h1e[ci][1:13, 1:7, :] for ci in range(3)]    # rows r+1, cols 2j+2
    ho0 = [h1o[ci][0:12, :, :] for ci in range(3)]       # rows r,   cols 2j+1
    ho1 = [h1o[ci][1:13, :, :] for ci in range(3)]       # rows r+1, cols 2j+1

    rows = []                                            # 36 x [6, B], torch .view order
    for co in range(6):
        ze = None                                        # conv2 output, even cols
        zo = None                                        # conv2 output, odd cols
        for ci in range(3):
            w00 = w2_ref[co, ci * 4 + 0]
            w01 = w2_ref[co, ci * 4 + 1]
            w10 = w2_ref[co, ci * 4 + 2]
            w11 = w2_ref[co, ci * 4 + 3]
            te = w00 * he00[ci] + w01 * ho0[ci] + w10 * he10[ci] + w11 * ho1[ci]
            to = w00 * ho0[ci] + w01 * he01[ci] + w10 * ho1[ci] + w11 * he11[ci]
            ze = te if ze is None else ze + te
            zo = to if zo is None else zo + to
        cm2 = jnp.maximum(ze, zo)                                   # [12, 6, B]
        p2 = jnp.maximum(row_pool(cm2, 6) + b2_ref[co], 0.0)        # [6, 6, B]
        for r in range(6):
            rows.append(p2[r])                                      # [6, B]

    # ---- flatten (sublane concat of full-lane rows) + fc3 (MXU) + tanh -------
    flat = jnp.concatenate(rows, axis=0)                            # [216, B]
    logits = jnp.dot(w3_ref[...], flat.astype(jnp.bfloat16),
                     preferred_element_type=jnp.float32)            # [32, B]
    out_ref[...] = jnp.tanh(logits + b3_ref[...])


# --------------------------------------------------------------------------- #
# Host wrapper
# --------------------------------------------------------------------------- #
def _round_up(n, m):
    return ((n + m - 1) // m) * m


@jax.jit
def lenet_forward(x, w1, b1, w2, b2, w3, b3):
    """x: [N, 1, 28, 28] (NCHW, f32). Weights in PyTorch layout. Returns [N, 32]."""
    N = x.shape[0]
    B = BATCH_BLOCK
    Np = max(B, _round_up(N, B))

    # batch -> lane axis; zero-pad batch to a multiple of the lane block
    xt = jnp.transpose(x[:, 0, :, :].astype(jnp.float32), (1, 2, 0))   # [28, 28, N]
    xt = jnp.pad(xt, ((0, 0), (0, 0), (0, Np - N)))
    # mod-4 column polyphase split (wrapper-side layout plumbing) so both
    # pooling stages only need unit-offset slices inside the kernel
    xp = jnp.stack([xt[:, k::4, :] for k in range(4)], axis=0)         # [4, 28, 7, Np]

    w1s = w1.reshape(3, 4).astype(jnp.float32)          # [c, di*2+dj]
    w2s = w2.reshape(6, 12).astype(jnp.float32)         # [co, ci*4+di*2+dj]
    w3b = w3.astype(jnp.bfloat16)                        # [32, 216] MXU operand
    b3v = b3.reshape(NUM_CLASSES, 1).astype(jnp.float32)

    smem = lambda: pl.BlockSpec(memory_space=pltpu.MemorySpace.SMEM)

    out = pl.pallas_call(
        _lenet_kernel,
        out_shape=jax.ShapeDtypeStruct((NUM_CLASSES, Np), jnp.float32),
        grid=(Np // B,),
        in_specs=[
            pl.BlockSpec((4, 28, 7, B), lambda n: (0, 0, 0, n)),   # phased input
            smem(),                                                 # conv1 w [3,4]
            smem(),                                                 # conv1 b [3]
            smem(),                                                 # conv2 w [6,12]
            smem(),                                                 # conv2 b [6]
            pl.BlockSpec((NUM_CLASSES, 216), lambda n: (0, 0)),     # fc3 w (bf16)
            pl.BlockSpec((NUM_CLASSES, 1), lambda n: (0, 0)),       # fc3 b
        ],
        out_specs=pl.BlockSpec((NUM_CLASSES, B), lambda n: (0, n)),
        compiler_params=pltpu.CompilerParams(
            dimension_semantics=("parallel",)),   # v7x: 2 TCs split the batch blocks
    )(xp, w1s, b1.astype(jnp.float32), w2s, b2.astype(jnp.float32), w3b, b3v)

    return jnp.transpose(out[:, :N], (1, 0))


# --------------------------------------------------------------------------- #
# Pure-JAX reference (mirrors the PyTorch forward exactly)
# --------------------------------------------------------------------------- #
def reference_forward(x, w1, b1, w2, b2, w3, b3):
    dn = ("NCHW", "OIHW", "NCHW")
    y = lax.conv_general_dilated(x, w1, (1, 1), "VALID", dimension_numbers=dn)
    y = y + b1[None, :, None, None]
    y = lax.reduce_window(y, -jnp.inf, lax.max, (1, 1, 2, 2), (1, 1, 2, 2), "VALID")
    y = jnp.maximum(y, 0.0)
    y = lax.conv_general_dilated(y, w2, (1, 1), "VALID", dimension_numbers=dn)
    y = y + b2[None, :, None, None]
    y = lax.reduce_window(y, -jnp.inf, lax.max, (1, 1, 2, 2), (1, 1, 2, 2), "VALID")
    y = jnp.maximum(y, 0.0)
    y = y.reshape(y.shape[0], -1)                        # [N, 216]
    return jnp.tanh(y @ w3.T + b3)


if __name__ == "__main__":
    key = jax.random.PRNGKey(0)
    kx, k1, k2, k3, k4, k5, k6 = jax.random.split(key, 7)

    N = 8
    x = jax.random.normal(kx, (N, 1, 28, 28), jnp.float32)

    def uni(k, shape, fan_in):
        bound = 1.0 / math.sqrt(fan_in)
        return jax.random.uniform(k, shape, jnp.float32, -bound, bound)

    # PyTorch default Conv/Linear init: U(-1/sqrt(fan_in), 1/sqrt(fan_in))
    w1 = uni(k1, (3, 1, 2, 2), 4)
    b1 = uni(k2, (3,), 4)
    w2 = uni(k3, (6, 3, 2, 2), 12)
    b2 = uni(k4, (6,), 12)
    w3 = uni(k5, (NUM_CLASSES, 216), 216)
    b3 = uni(k6, (NUM_CLASSES,), 216)

    out = lenet_forward(x, w1, b1, w2, b2, w3, b3)
    jax.block_until_ready(out)
    assert out.shape == (N, NUM_CLASSES)

    ref = reference_forward(x, w1, b1, w2, b2, w3, b3)
    np.testing.assert_allclose(np.asarray(out), np.asarray(ref),
                               rtol=2e-2, atol=2e-2)

    print("KERNEL_OK")
</pallas_src>

<mosaic_0001>
module attributes {stable_mosaic.version = 11 : i64} {
  func.func @_lenet_kernel(%arg0: i32, %arg1: memref<4x28x7x128xf32, #tpu.memory_space<vmem>>, %arg2: memref<3x4xf32, #tpu.memory_space<smem>>, %arg3: memref<3xf32, #tpu.memory_space<smem>>, %arg4: memref<6x12xf32, #tpu.memory_space<smem>>, %arg5: memref<6xf32, #tpu.memory_space<smem>>, %arg6: memref<32x216xbf16, #tpu.memory_space<vmem>>, %arg7: memref<32x1xf32, #tpu.memory_space<vmem>>, %arg8: memref<32x128xf32, #tpu.memory_space<vmem>>) attributes {dimension_semantics = [#tpu.dimension_semantics<parallel>], iteration_bounds = array<i64: 1>, scalar_prefetch = 0 : i64, scratch_operands = 0 : i64, tpu.core_type = #tpu.core_type<tc>, window_params = [{transform_indices = @transform_0, window_bounds = array<i64: 4, 28, 7, 128>}, {transform_indices = @transform_1, window_bounds = array<i64: 3, 4>}, {transform_indices = @transform_2, window_bounds = array<i64: 3>}, {transform_indices = @transform_3, window_bounds = array<i64: 6, 12>}, {transform_indices = @transform_4, window_bounds = array<i64: 6>}, {pipeline_mode = #tpu.pipeline_mode<synchronous>, transform_indices = @transform_5, window_bounds = array<i64: 32, 216>}, {pipeline_mode = #tpu.pipeline_mode<synchronous>, transform_indices = @transform_6, window_bounds = array<i64: 32, 1>}, {transform_indices = @transform_7, window_bounds = array<i64: 32, 128>}]} {
    %c0 = arith.constant 0 : index
    %c0_0 = arith.constant 0 : index
    %c0_1 = arith.constant 0 : index
    %c0_2 = arith.constant 0 : index
    %0 = vector.load %arg1[%c0, %c0_0, %c0_1, %c0_2] : memref<4x28x7x128xf32, #tpu.memory_space<vmem>>, vector<1x26x7x128xf32>
    %1 = vector.shape_cast %0 : vector<1x26x7x128xf32> to vector<26x7x128xf32>
    %c0_3 = arith.constant 0 : index
    %c1 = arith.constant 1 : index
    %c0_4 = arith.constant 0 : index
    %c0_5 = arith.constant 0 : index
    %2 = vector.load %arg1[%c0_3, %c1, %c0_4, %c0_5] : memref<4x28x7x128xf32, #tpu.memory_space<vmem>>, vector<1x26x7x128xf32>
    %3 = vector.shape_cast %2 : vector<1x26x7x128xf32> to vector<26x7x128xf32>
    %c1_6 = arith.constant 1 : index
    %c0_7 = arith.constant 0 : index
    %c0_8 = arith.constant 0 : index
    %c0_9 = arith.constant 0 : index
    %4 = vector.load %arg1[%c1_6, %c0_7, %c0_8, %c0_9] : memref<4x28x7x128xf32, #tpu.memory_space<vmem>>, vector<1x26x7x128xf32>
    %5 = vector.shape_cast %4 : vector<1x26x7x128xf32> to vector<26x7x128xf32>
    %c1_10 = arith.constant 1 : index
    %c1_11 = arith.constant 1 : index
    %c0_12 = arith.constant 0 : index
    %c0_13 = arith.constant 0 : index
    %6 = vector.load %arg1[%c1_10, %c1_11, %c0_12, %c0_13] : memref<4x28x7x128xf32, #tpu.memory_space<vmem>>, vector<1x26x7x128xf32>
    %7 = vector.shape_cast %6 : vector<1x26x7x128xf32> to vector<26x7x128xf32>
    %c2 = arith.constant 2 : index
    %c0_14 = arith.constant 0 : index
    %c0_15 = arith.constant 0 : index
    %c0_16 = arith.constant 0 : index
    %8 = vector.load %arg1[%c2, %c0_14, %c0_15, %c0_16] : memref<4x28x7x128xf32, #tpu.memory_space<vmem>>, vector<1x26x7x128xf32>
    %9 = vector.shape_cast %8 : vector<1x26x7x128xf32> to vector<26x7x128xf32>
    %c2_17 = arith.constant 2 : index
    %c1_18 = arith.constant 1 : index
    %c0_19 = arith.constant 0 : index
    %c0_20 = arith.constant 0 : index
    %10 = vector.load %arg1[%c2_17, %c1_18, %c0_19, %c0_20] : memref<4x28x7x128xf32, #tpu.memory_space<vmem>>, vector<1x26x7x128xf32>
    %11 = vector.shape_cast %10 : vector<1x26x7x128xf32> to vector<26x7x128xf32>
    %c3 = arith.constant 3 : index
    %c0_21 = arith.constant 0 : index
    %c0_22 = arith.constant 0 : index
    %c0_23 = arith.constant 0 : index
    %12 = vector.load %arg1[%c3, %c0_21, %c0_22, %c0_23] : memref<4x28x7x128xf32, #tpu.memory_space<vmem>>, vector<1x26x7x128xf32>
    %13 = vector.shape_cast %12 : vector<1x26x7x128xf32> to vector<26x7x128xf32>
    %c3_24 = arith.constant 3 : index
    %c1_25 = arith.constant 1 : index
    %c0_26 = arith.constant 0 : index
    %c0_27 = arith.constant 0 : index
    %14 = vector.load %arg1[%c3_24, %c1_25, %c0_26, %c0_27] : memref<4x28x7x128xf32, #tpu.memory_space<vmem>>, vector<1x26x7x128xf32>
    %15 = vector.shape_cast %14 : vector<1x26x7x128xf32> to vector<26x7x128xf32>
    %c0_28 = arith.constant 0 : index
    %c0_29 = arith.constant 0 : index
    %c1_30 = arith.constant 1 : index
    %c0_31 = arith.constant 0 : index
    %16 = vector.load %arg1[%c0_28, %c0_29, %c1_30, %c0_31] : memref<4x28x7x128xf32, #tpu.memory_space<vmem>>, vector<1x26x6x128xf32>
    %17 = vector.shape_cast %16 : vector<1x26x6x128xf32> to vector<26x6x128xf32>
    %c0_32 = arith.constant 0 : index
    %c1_33 = arith.constant 1 : index
    %c1_34 = arith.constant 1 : index
    %c0_35 = arith.constant 0 : index
    %18 = vector.load %arg1[%c0_32, %c1_33, %c1_34, %c0_35] : memref<4x28x7x128xf32, #tpu.memory_space<vmem>>, vector<1x26x6x128xf32>
    %19 = vector.shape_cast %18 : vector<1x26x6x128xf32> to vector<26x6x128xf32>
    %c0_36 = arith.constant 0 : index
    %c0_37 = arith.constant 0 : index
    %20 = memref.load %arg2[%c0_36, %c0_37] : memref<3x4xf32, #tpu.memory_space<smem>>
    %c0_38 = arith.constant 0 : index
    %c1_39 = arith.constant 1 : index
    %21 = memref.load %arg2[%c0_38, %c1_39] : memref<3x4xf32, #tpu.memory_space<smem>>
    %c0_40 = arith.constant 0 : index
    %c2_41 = arith.constant 2 : index
    %22 = memref.load %arg2[%c0_40, %c2_41] : memref<3x4xf32, #tpu.memory_space<smem>>
    %c0_42 = arith.constant 0 : index
    %c3_43 = arith.constant 3 : index
    %23 = memref.load %arg2[%c0_42, %c3_43] : memref<3x4xf32, #tpu.memory_space<smem>>
    %24 = vector.broadcast %20 : f32 to vector<26x7x128xf32>
    %25 = arith.mulf %24, %1 : vector<26x7x128xf32>
    %26 = vector.broadcast %21 : f32 to vector<26x7x128xf32>
    %27 = arith.mulf %26, %5 : vector<26x7x128xf32>
    %28 = arith.addf %25, %27 : vector<26x7x128xf32>
    %29 = vector.broadcast %22 : f32 to vector<26x7x128xf32>
    %30 = arith.mulf %29, %3 : vector<26x7x128xf32>
    %31 = arith.addf %28, %30 : vector<26x7x128xf32>
    %32 = vector.broadcast %23 : f32 to vector<26x7x128xf32>
    %33 = arith.mulf %32, %7 : vector<26x7x128xf32>
    %34 = arith.addf %31, %33 : vector<26x7x128xf32>
    %35 = vector.broadcast %20 : f32 to vector<26x7x128xf32>
    %36 = arith.mulf %35, %5 : vector<26x7x128xf32>
    %37 = vector.broadcast %21 : f32 to vector<26x7x128xf32>
    %38 = arith.mulf %37, %9 : vector<26x7x128xf32>
    %39 = arith.addf %36, %38 : vector<26x7x128xf32>
    %40 = vector.broadcast %22 : f32 to vector<26x7x128xf32>
    %41 = arith.mulf %40, %7 : vector<26x7x128xf32>
    %42 = arith.addf %39, %41 : vector<26x7x128xf32>
    %43 = vector.broadcast %23 : f32 to vector<26x7x128xf32>
    %44 = arith.mulf %43, %11 : vector<26x7x128xf32>
    %45 = arith.addf %42, %44 : vector<26x7x128xf32>
    %46 = vector.extract_strided_slice %9 {offsets = [0, 0, 0], sizes = [26, 6, 128], strides = [1, 1, 1]} : vector<26x7x128xf32> to vector<26x6x128xf32>
    %47 = vector.broadcast %20 : f32 to vector<26x6x128xf32>
    %48 = arith.mulf %47, %46 : vector<26x6x128xf32>
    %49 = vector.extract_strided_slice %13 {offsets = [0, 0, 0], sizes = [26, 6, 128], strides = [1, 1, 1]} : vector<26x7x128xf32> to vector<26x6x128xf32>
    %50 = vector.broadcast %21 : f32 to vector<26x6x128xf32>
    %51 = arith.mulf %50, %49 : vector<26x6x128xf32>
    %52 = arith.addf %48, %51 : vector<26x6x128xf32>
    %53 = vector.extract_strided_slice %11 {offsets = [0, 0, 0], sizes = [26, 6, 128], strides = [1, 1, 1]} : vector<26x7x128xf32> to vector<26x6x128xf32>
    %54 = vector.broadcast %22 : f32 to vector<26x6x128xf32>
    %55 = arith.mulf %54, %53 : vector<26x6x128xf32>
    %56 = arith.addf %52, %55 : vector<26x6x128xf32>
    %57 = vector.extract_strided_slice %15 {offsets = [0, 0, 0], sizes = [26, 6, 128], strides = [1, 1, 1]} : vector<26x7x128xf32> to vector<26x6x128xf32>
    %58 = vector.broadcast %23 : f32 to vector<26x6x128xf32>
    %59 = arith.mulf %58, %57 : vector<26x6x128xf32>
    %60 = arith.addf %56, %59 : vector<26x6x128xf32>
    %61 = vector.extract_strided_slice %13 {offsets = [0, 0, 0], sizes = [26, 6, 128], strides = [1, 1, 1]} : vector<26x7x128xf32> to vector<26x6x128xf32>
    %62 = vector.broadcast %20 : f32 to vector<26x6x128xf32>
    %63 = arith.mulf %62, %61 : vector<26x6x128xf32>
    %64 = vector.broadcast %21 : f32 to vector<26x6x128xf32>
    %65 = arith.mulf %64, %17 : vector<26x6x128xf32>
    %66 = arith.addf %63, %65 : vector<26x6x128xf32>
    %67 = vector.extract_strided_slice %15 {offsets = [0, 0, 0], sizes = [26, 6, 128], strides = [1, 1, 1]} : vector<26x7x128xf32> to vector<26x6x128xf32>
    %68 = vector.broadcast %22 : f32 to vector<26x6x128xf32>
    %69 = arith.mulf %68, %67 : vector<26x6x128xf32>
    %70 = arith.addf %66, %69 : vector<26x6x128xf32>
    %71 = vector.broadcast %23 : f32 to vector<26x6x128xf32>
    %72 = arith.mulf %71, %19 : vector<26x6x128xf32>
    %73 = arith.addf %70, %72 : vector<26x6x128xf32>
    %74 = arith.maximumf %34, %45 : vector<26x7x128xf32>
    %75 = arith.maximumf %60, %73 : vector<26x6x128xf32>
    %c0_44 = arith.constant 0 : index
    %76 = memref.load %arg3[%c0_44] : memref<3xf32, #tpu.memory_space<smem>>
    %77 = vector.extract_strided_slice %74 {offsets = [0, 0, 0], sizes = [1, 7, 128], strides = [1, 1, 1]} : vector<26x7x128xf32> to vector<1x7x128xf32>
    %78 = vector.shape_cast %77 : vector<1x7x128xf32> to vector<7x128xf32>
    %79 = vector.extract_strided_slice %74 {offsets = [1, 0, 0], sizes = [1, 7, 128], strides = [1, 1, 1]} : vector<26x7x128xf32> to vector<1x7x128xf32>
    %80 = vector.shape_cast %79 : vector<1x7x128xf32> to vector<7x128xf32>
    %81 = arith.maximumf %78, %80 : vector<7x128xf32>
    %82 = vector.extract_strided_slice %74 {offsets = [2, 0, 0], sizes = [1, 7, 128], strides = [1, 1, 1]} : vector<26x7x128xf32> to vector<1x7x128xf32>
    %83 = vector.shape_cast %82 : vector<1x7x128xf32> to vector<7x128xf32>
    %84 = vector.extract_strided_slice %74 {offsets = [3, 0, 0], sizes = [1, 7, 128], strides = [1, 1, 1]} : vector<26x7x128xf32> to vector<1x7x128xf32>
    %85 = vector.shape_cast %84 : vector<1x7x128xf32> to vector<7x128xf32>
    %86 = arith.maximumf %83, %85 : vector<7x128xf32>
    %87 = vector.extract_strided_slice %74 {offsets = [4, 0, 0], sizes = [1, 7, 128], strides = [1, 1, 1]} : vector<26x7x128xf32> to vector<1x7x128xf32>
    %88 = vector.shape_cast %87 : vector<1x7x128xf32> to vector<7x128xf32>
    %89 = vector.extract_strided_slice %74 {offsets = [5, 0, 0], sizes = [1, 7, 128], strides = [1, 1, 1]} : vector<26x7x128xf32> to vector<1x7x128xf32>
    %90 = vector.shape_cast %89 : vector<1x7x128xf32> to vector<7x128xf32>
    %91 = arith.maximumf %88, %90 : vector<7x128xf32>
    %92 = vector.extract_strided_slice %74 {offsets = [6, 0, 0], sizes = [1, 7, 128], strides = [1, 1, 1]} : vector<26x7x128xf32> to vector<1x7x128xf32>
    %93 = vector.shape_cast %92 : vector<1x7x128xf32> to vector<7x128xf32>
    %94 = vector.extract_strided_slice %74 {offsets = [7, 0, 0], sizes = [1, 7, 128], strides = [1, 1, 1]} : vector<26x7x128xf32> to vector<1x7x128xf32>
    %95 = vector.shape_cast %94 : vector<1x7x128xf32> to vector<7x128xf32>
    %96 = arith.maximumf %93, %95 : vector<7x128xf32>
    %97 = vector.extract_strided_slice %74 {offsets = [8, 0, 0], sizes = [1, 7, 128], strides = [1, 1, 1]} : vector<26x7x128xf32> to vector<1x7x128xf32>
    %98 = vector.shape_cast %97 : vector<1x7x128xf32> to vector<7x128xf32>
    %99 = vector.extract_strided_slice %74 {offsets = [9, 0, 0], sizes = [1, 7, 128], strides = [1, 1, 1]} : vector<26x7x128xf32> to vector<1x7x128xf32>
    %100 = vector.shape_cast %99 : vector<1x7x128xf32> to vector<7x128xf32>
    %101 = arith.maximumf %98, %100 : vector<7x128xf32>
    %102 = vector.extract_strided_slice %74 {offsets = [10, 0, 0], sizes = [1, 7, 128], strides = [1, 1, 1]} : vector<26x7x128xf32> to vector<1x7x128xf32>
    %103 = vector.shape_cast %102 : vector<1x7x128xf32> to vector<7x128xf32>
    %104 = vector.extract_strided_slice %74 {offsets = [11, 0, 0], sizes = [1, 7, 128], strides = [1, 1, 1]} : vector<26x7x128xf32> to vector<1x7x128xf32>
    %105 = vector.shape_cast %104 : vector<1x7x128xf32> to vector<7x128xf32>
    %106 = arith.maximumf %103, %105 : vector<7x128xf32>
    %107 = vector.extract_strided_slice %74 {offsets = [12, 0, 0], sizes = [1, 7, 128], strides = [1, 1, 1]} : vector<26x7x128xf32> to vector<1x7x128xf32>
    %108 = vector.shape_cast %107 : vector<1x7x128xf32> to vector<7x128xf32>
    %109 = vector.extract_strided_slice %74 {offsets = [13, 0, 0], sizes = [1, 7, 128], strides = [1, 1, 1]} : vector<26x7x128xf32> to vector<1x7x128xf32>
    %110 = vector.shape_cast %109 : vector<1x7x128xf32> to vector<7x128xf32>
    %111 = arith.maximumf %108, %110 : vector<7x128xf32>
    %112 = vector.extract_strided_slice %74 {offsets = [14, 0, 0], sizes = [1, 7, 128], strides = [1, 1, 1]} : vector<26x7x128xf32> to vector<1x7x128xf32>
    %113 = vector.shape_cast %112 : vector<1x7x128xf32> to vector<7x128xf32>
    %114 = vector.extract_strided_slice %74 {offsets = [15, 0, 0], sizes = [1, 7, 128], strides = [1, 1, 1]} : vector<26x7x128xf32> to vector<1x7x128xf32>
    %115 = vector.shape_cast %114 : vector<1x7x128xf32> to vector<7x128xf32>
    %116 = arith.maximumf %113, %115 : vector<7x128xf32>
    %117 = vector.extract_strided_slice %74 {offsets = [16, 0, 0], sizes = [1, 7, 128], strides = [1, 1, 1]} : vector<26x7x128xf32> to vector<1x7x128xf32>
    %118 = vector.shape_cast %117 : vector<1x7x128xf32> to vector<7x128xf32>
    %119 = vector.extract_strided_slice %74 {offsets = [17, 0, 0], sizes = [1, 7, 128], strides = [1, 1, 1]} : vector<26x7x128xf32> to vector<1x7x128xf32>
    %120 = vector.shape_cast %119 : vector<1x7x128xf32> to vector<7x128xf32>
    %121 = arith.maximumf %118, %120 : vector<7x128xf32>
    %122 = vector.extract_strided_slice %74 {offsets = [18, 0, 0], sizes = [1, 7, 128], strides = [1, 1, 1]} : vector<26x7x128xf32> to vector<1x7x128xf32>
    %123 = vector.shape_cast %122 : vector<1x7x128xf32> to vector<7x128xf32>
    %124 = vector.extract_strided_slice %74 {offsets = [19, 0, 0], sizes = [1, 7, 128], strides = [1, 1, 1]} : vector<26x7x128xf32> to vector<1x7x128xf32>
    %125 = vector.shape_cast %124 : vector<1x7x128xf32> to vector<7x128xf32>
    %126 = arith.maximumf %123, %125 : vector<7x128xf32>
    %127 = vector.extract_strided_slice %74 {offsets = [20, 0, 0], sizes = [1, 7, 128], strides = [1, 1, 1]} : vector<26x7x128xf32> to vector<1x7x128xf32>
    %128 = vector.shape_cast %127 : vector<1x7x128xf32> to vector<7x128xf32>
    %129 = vector.extract_strided_slice %74 {offsets = [21, 0, 0], sizes = [1, 7, 128], strides = [1, 1, 1]} : vector<26x7x128xf32> to vector<1x7x128xf32>
    %130 = vector.shape_cast %129 : vector<1x7x128xf32> to vector<7x128xf32>
    %131 = arith.maximumf %128, %130 : vector<7x128xf32>
    %132 = vector.extract_strided_slice %74 {offsets = [22, 0, 0], sizes = [1, 7, 128], strides = [1, 1, 1]} : vector<26x7x128xf32> to vector<1x7x128xf32>
    %133 = vector.shape_cast %132 : vector<1x7x128xf32> to vector<7x128xf32>
    %134 = vector.extract_strided_slice %74 {offsets = [23, 0, 0], sizes = [1, 7, 128], strides = [1, 1, 1]} : vector<26x7x128xf32> to vector<1x7x128xf32>
    %135 = vector.shape_cast %134 : vector<1x7x128xf32> to vector<7x128xf32>
    %136 = arith.maximumf %133, %135 : vector<7x128xf32>
    %137 = vector.extract_strided_slice %74 {offsets = [24, 0, 0], sizes = [1, 7, 128], strides = [1, 1, 1]} : vector<26x7x128xf32> to vector<1x7x128xf32>
    %138 = vector.shape_cast %137 : vector<1x7x128xf32> to vector<7x128xf32>
    %139 = vector.extract_strided_slice %74 {offsets = [25, 0, 0], sizes = [1, 7, 128], strides = [1, 1, 1]} : vector<26x7x128xf32> to vector<1x7x128xf32>
    %140 = vector.shape_cast %139 : vector<1x7x128xf32> to vector<7x128xf32>
    %141 = arith.maximumf %138, %140 : vector<7x128xf32>
    %142 = vector.shape_cast %81 : vector<7x128xf32> to vector<1x7x128xf32>
    %143 = vector.shape_cast %86 : vector<7x128xf32> to vector<1x7x128xf32>
    %144 = vector.shape_cast %91 : vector<7x128xf32> to vector<1x7x128xf32>
    %145 = vector.shape_cast %96 : vector<7x128xf32> to vector<1x7x128xf32>
    %146 = vector.shape_cast %101 : vector<7x128xf32> to vector<1x7x128xf32>
    %147 = vector.shape_cast %106 : vector<7x128xf32> to vector<1x7x128xf32>
    %148 = vector.shape_cast %111 : vector<7x128xf32> to vector<1x7x128xf32>
    %149 = vector.shape_cast %116 : vector<7x128xf32> to vector<1x7x128xf32>
    %150 = vector.shape_cast %121 : vector<7x128xf32> to vector<1x7x128xf32>
    %151 = vector.shape_cast %126 : vector<7x128xf32> to vector<1x7x128xf32>
    %152 = vector.shape_cast %131 : vector<7x128xf32> to vector<1x7x128xf32>
    %153 = vector.shape_cast %136 : vector<7x128xf32> to vector<1x7x128xf32>
    %154 = vector.shape_cast %141 : vector<7x128xf32> to vector<1x7x128xf32>
    %155 = tpu.concatenate %142, %143, %144, %145, %146, %147, %148, %149, %150, %151, %152, %153, %154 in 0 : vector<1x7x128xf32>, vector<1x7x128xf32>, vector<1x7x128xf32>, vector<1x7x128xf32>, vector<1x7x128xf32>, vector<1x7x128xf32>, vector<1x7x128xf32>, vector<1x7x128xf32>, vector<1x7x128xf32>, vector<1x7x128xf32>, vector<1x7x128xf32>, vector<1x7x128xf32>, vector<1x7x128xf32> -> vector<13x7x128xf32>
    %156 = vector.broadcast %76 : f32 to vector<13x7x128xf32>
    %157 = arith.addf %155, %156 : vector<13x7x128xf32>
    %cst = arith.constant 0.000000e+00 : f32
    %158 = vector.broadcast %cst : f32 to vector<13x7x128xf32>
    %159 = arith.maximumf %157, %158 : vector<13x7x128xf32>
    %160 = vector.extract_strided_slice %75 {offsets = [0, 0, 0], sizes = [1, 6, 128], strides = [1, 1, 1]} : vector<26x6x128xf32> to vector<1x6x128xf32>
    %161 = vector.shape_cast %160 : vector<1x6x128xf32> to vector<6x128xf32>
    %162 = vector.extract_strided_slice %75 {offsets = [1, 0, 0], sizes = [1, 6, 128], strides = [1, 1, 1]} : vector<26x6x128xf32> to vector<1x6x128xf32>
    %163 = vector.shape_cast %162 : vector<1x6x128xf32> to vector<6x128xf32>
    %164 = arith.maximumf %161, %163 : vector<6x128xf32>
    %165 = vector.extract_strided_slice %75 {offsets = [2, 0, 0], sizes = [1, 6, 128], strides = [1, 1, 1]} : vector<26x6x128xf32> to vector<1x6x128xf32>
    %166 = vector.shape_cast %165 : vector<1x6x128xf32> to vector<6x128xf32>
    %167 = vector.extract_strided_slice %75 {offsets = [3, 0, 0], sizes = [1, 6, 128], strides = [1, 1, 1]} : vector<26x6x128xf32> to vector<1x6x128xf32>
    %168 = vector.shape_cast %167 : vector<1x6x128xf32> to vector<6x128xf32>
    %169 = arith.maximumf %166, %168 : vector<6x128xf32>
    %170 = vector.extract_strided_slice %75 {offsets = [4, 0, 0], sizes = [1, 6, 128], strides = [1, 1, 1]} : vector<26x6x128xf32> to vector<1x6x128xf32>
    %171 = vector.shape_cast %170 : vector<1x6x128xf32> to vector<6x128xf32>
    %172 = vector.extract_strided_slice %75 {offsets = [5, 0, 0], sizes = [1, 6, 128], strides = [1, 1, 1]} : vector<26x6x128xf32> to vector<1x6x128xf32>
    %173 = vector.shape_cast %172 : vector<1x6x128xf32> to vector<6x128xf32>
    %174 = arith.maximumf %171, %173 : vector<6x128xf32>
    %175 = vector.extract_strided_slice %75 {offsets = [6, 0, 0], sizes = [1, 6, 128], strides = [1, 1, 1]} : vector<26x6x128xf32> to vector<1x6x128xf32>
    %176 = vector.shape_cast %175 : vector<1x6x128xf32> to vector<6x128xf32>
    %177 = vector.extract_strided_slice %75 {offsets = [7, 0, 0], sizes = [1, 6, 128], strides = [1, 1, 1]} : vector<26x6x128xf32> to vector<1x6x128xf32>
    %178 = vector.shape_cast %177 : vector<1x6x128xf32> to vector<6x128xf32>
    %179 = arith.maximumf %176, %178 : vector<6x128xf32>
    %180 = vector.extract_strided_slice %75 {offsets = [8, 0, 0], sizes = [1, 6, 128], strides = [1, 1, 1]} : vector<26x6x128xf32> to vector<1x6x128xf32>
    %181 = vector.shape_cast %180 : vector<1x6x128xf32> to vector<6x128xf32>
    %182 = vector.extract_strided_slice %75 {offsets = [9, 0, 0], sizes = [1, 6, 128], strides = [1, 1, 1]} : vector<26x6x128xf32> to vector<1x6x128xf32>
    %183 = vector.shape_cast %182 : vector<1x6x128xf32> to vector<6x128xf32>
    %184 = arith.maximumf %181, %183 : vector<6x128xf32>
    %185 = vector.extract_strided_slice %75 {offsets = [10, 0, 0], sizes = [1, 6, 128], strides = [1, 1, 1]} : vector<26x6x128xf32> to vector<1x6x128xf32>
    %186 = vector.shape_cast %185 : vector<1x6x128xf32> to vector<6x128xf32>
    %187 = vector.extract_strided_slice %75 {offsets = [11, 0, 0], sizes = [1, 6, 128], strides = [1, 1, 1]} : vector<26x6x128xf32> to vector<1x6x128xf32>
    %188 = vector.shape_cast %187 : vector<1x6x128xf32> to vector<6x128xf32>
    %189 = arith.maximumf %186, %188 : vector<6x128xf32>
    %190 = vector.extract_strided_slice %75 {offsets = [12, 0, 0], sizes = [1, 6, 128], strides = [1, 1, 1]} : vector<26x6x128xf32> to vector<1x6x128xf32>
    %191 = vector.shape_cast %190 : vector<1x6x128xf32> to vector<6x128xf32>
    %192 = vector.extract_strided_slice %75 {offsets = [13, 0, 0], sizes = [1, 6, 128], strides = [1, 1, 1]} : vector<26x6x128xf32> to vector<1x6x128xf32>
    %193 = vector.shape_cast %192 : vector<1x6x128xf32> to vector<6x128xf32>
    %194 = arith.maximumf %191, %193 : vector<6x128xf32>
    %195 = vector.extract_strided_slice %75 {offsets = [14, 0, 0], sizes = [1, 6, 128], strides = [1, 1, 1]} : vector<26x6x128xf32> to vector<1x6x128xf32>
    %196 = vector.shape_cast %195 : vector<1x6x128xf32> to vector<6x128xf32>
    %197 = vector.extract_strided_slice %75 {offsets = [15, 0, 0], sizes = [1, 6, 128], strides = [1, 1, 1]} : vector<26x6x128xf32> to vector<1x6x128xf32>
    %198 = vector.shape_cast %197 : vector<1x6x128xf32> to vector<6x128xf32>
    %199 = arith.maximumf %196, %198 : vector<6x128xf32>
    %200 = vector.extract_strided_slice %75 {offsets = [16, 0, 0], sizes = [1, 6, 128], strides = [1, 1, 1]} : vector<26x6x128xf32> to vector<1x6x128xf32>
    %201 = vector.shape_cast %200 : vector<1x6x128xf32> to vector<6x128xf32>
    %202 = vector.extract_strided_slice %75 {offsets = [17, 0, 0], sizes = [1, 6, 128], strides = [1, 1, 1]} : vector<26x6x128xf32> to vector<1x6x128xf32>
    %203 = vector.shape_cast %202 : vector<1x6x128xf32> to vector<6x128xf32>
    %204 = arith.maximumf %201, %203 : vector<6x128xf32>
    %205 = vector.extract_strided_slice %75 {offsets = [18, 0, 0], sizes = [1, 6, 128], strides = [1, 1, 1]} : vector<26x6x128xf32> to vector<1x6x128xf32>
    %206 = vector.shape_cast %205 : vector<1x6x128xf32> to vector<6x128xf32>
    %207 = vector.extract_strided_slice %75 {offsets = [19, 0, 0], sizes = [1, 6, 128], strides = [1, 1, 1]} : vector<26x6x128xf32> to vector<1x6x128xf32>
    %208 = vector.shape_cast %207 : vector<1x6x128xf32> to vector<6x128xf32>
    %209 = arith.maximumf %206, %208 : vector<6x128xf32>
    %210 = vector.extract_strided_slice %75 {offsets = [20, 0, 0], sizes = [1, 6, 128], strides = [1, 1, 1]} : vector<26x6x128xf32> to vector<1x6x128xf32>
    %211 = vector.shape_cast %210 : vector<1x6x128xf32> to vector<6x128xf32>
    %212 = vector.extract_strided_slice %75 {offsets = [21, 0, 0], sizes = [1, 6, 128], strides = [1, 1, 1]} : vector<26x6x128xf32> to vector<1x6x128xf32>
    %213 = vector.shape_cast %212 : vector<1x6x128xf32> to vector<6x128xf32>
    %214 = arith.maximumf %211, %213 : vector<6x128xf32>
    %215 = vector.extract_strided_slice %75 {offsets = [22, 0, 0], sizes = [1, 6, 128], strides = [1, 1, 1]} : vector<26x6x128xf32> to vector<1x6x128xf32>
    %216 = vector.shape_cast %215 : vector<1x6x128xf32> to vector<6x128xf32>
    %217 = vector.extract_strided_slice %75 {offsets = [23, 0, 0], sizes = [1, 6, 128], strides = [1, 1, 1]} : vector<26x6x128xf32> to vector<1x6x128xf32>
    %218 = vector.shape_cast %217 : vector<1x6x128xf32> to vector<6x128xf32>
    %219 = arith.maximumf %216, %218 : vector<6x128xf32>
    %220 = vector.extract_strided_slice %75 {offsets = [24, 0, 0], sizes = [1, 6, 128], strides = [1, 1, 1]} : vector<26x6x128xf32> to vector<1x6x128xf32>
    %221 = vector.shape_cast %220 : vector<1x6x128xf32> to vector<6x128xf32>
    %222 = vector.extract_strided_slice %75 {offsets = [25, 0, 0], sizes = [1, 6, 128], strides = [1, 1, 1]} : vector<26x6x128xf32> to vector<1x6x128xf32>
    %223 = vector.shape_cast %222 : vector<1x6x128xf32> to vector<6x128xf32>
    %224 = arith.maximumf %221, %223 : vector<6x128xf32>
    %225 = vector.shape_cast %164 : vector<6x128xf32> to vector<1x6x128xf32>
    %226 = vector.shape_cast %169 : vector<6x128xf32> to vector<1x6x128xf32>
    %227 = vector.shape_cast %174 : vector<6x128xf32> to vector<1x6x128xf32>
    %228 = vector.shape_cast %179 : vector<6x128xf32> to vector<1x6x128xf32>
    %229 = vector.shape_cast %184 : vector<6x128xf32> to vector<1x6x128xf32>
    %230 = vector.shape_cast %189 : vector<6x128xf32> to vector<1x6x128xf32>
    %231 = vector.shape_cast %194 : vector<6x128xf32> to vector<1x6x128xf32>
    %232 = vector.shape_cast %199 : vector<6x128xf32> to vector<1x6x128xf32>
    %233 = vector.shape_cast %204 : vector<6x128xf32> to vector<1x6x128xf32>
    %234 = vector.shape_cast %209 : vector<6x128xf32> to vector<1x6x128xf32>
    %235 = vector.shape_cast %214 : vector<6x128xf32> to vector<1x6x128xf32>
    %236 = vector.shape_cast %219 : vector<6x128xf32> to vector<1x6x128xf32>
    %237 = vector.shape_cast %224 : vector<6x128xf32> to vector<1x6x128xf32>
    %238 = tpu.concatenate %225, %226, %227, %228, %229, %230, %231, %232, %233, %234, %235, %236, %237 in 0 : vector<1x6x128xf32>, vector<1x6x128xf32>, vector<1x6x128xf32>, vector<1x6x128xf32>, vector<1x6x128xf32>, vector<1x6x128xf32>, vector<1x6x128xf32>, vector<1x6x128xf32>, vector<1x6x128xf32>, vector<1x6x128xf32>, vector<1x6x128xf32>, vector<1x6x128xf32>, vector<1x6x128xf32> -> vector<13x6x128xf32>
    %239 = vector.broadcast %76 : f32 to vector<13x6x128xf32>
    %240 = arith.addf %238, %239 : vector<13x6x128xf32>
    %cst_45 = arith.constant 0.000000e+00 : f32
    %241 = vector.broadcast %cst_45 : f32 to vector<13x6x128xf32>
    %242 = arith.maximumf %240, %241 : vector<13x6x128xf32>
    %c1_46 = arith.constant 1 : index
    %c0_47 = arith.constant 0 : index
    %243 = memref.load %arg2[%c1_46, %c0_47] : memref<3x4xf32, #tpu.memory_space<smem>>
    %c1_48 = arith.constant 1 : index
    %c1_49 = arith.constant 1 : index
    %244 = memref.load %arg2[%c1_48, %c1_49] : memref<3x4xf32, #tpu.memory_space<smem>>
    %c1_50 = arith.constant 1 : index
    %c2_51 = arith.constant 2 : index
    %245 = memref.load %arg2[%c1_50, %c2_51] : memref<3x4xf32, #tpu.memory_space<smem>>
    %c1_52 = arith.constant 1 : index
    %c3_53 = arith.constant 3 : index
    %246 = memref.load %arg2[%c1_52, %c3_53] : memref<3x4xf32, #tpu.memory_space<smem>>
    %247 = vector.broadcast %243 : f32 to vector<26x7x128xf32>
    %248 = arith.mulf %247, %1 : vector<26x7x128xf32>
    %249 = vector.broadcast %244 : f32 to vector<26x7x128xf32>
    %250 = arith.mulf %249, %5 : vector<26x7x128xf32>
    %251 = arith.addf %248, %250 : vector<26x7x128xf32>
    %252 = vector.broadcast %245 : f32 to vector<26x7x128xf32>
    %253 = arith.mulf %252, %3 : vector<26x7x128xf32>
    %254 = arith.addf %251, %253 : vector<26x7x128xf32>
    %255 = vector.broadcast %246 : f32 to vector<26x7x128xf32>
    %256 = arith.mulf %255, %7 : vector<26x7x128xf32>
    %257 = arith.addf %254, %256 : vector<26x7x128xf32>
    %258 = vector.broadcast %243 : f32 to vector<26x7x128xf32>
    %259 = arith.mulf %258, %5 : vector<26x7x128xf32>
    %260 = vector.broadcast %244 : f32 to vector<26x7x128xf32>
    %261 = arith.mulf %260, %9 : vector<26x7x128xf32>
    %262 = arith.addf %259, %261 : vector<26x7x128xf32>
    %263 = vector.broadcast %245 : f32 to vector<26x7x128xf32>
    %264 = arith.mulf %263, %7 : vector<26x7x128xf32>
    %265 = arith.addf %262, %264 : vector<26x7x128xf32>
    %266 = vector.broadcast %246 : f32 to vector<26x7x128xf32>
    %267 = arith.mulf %266, %11 : vector<26x7x128xf32>
    %268 = arith.addf %265, %267 : vector<26x7x128xf32>
    %269 = vector.extract_strided_slice %9 {offsets = [0, 0, 0], sizes = [26, 6, 128], strides = [1, 1, 1]} : vector<26x7x128xf32> to vector<26x6x128xf32>
    %270 = vector.broadcast %243 : f32 to vector<26x6x128xf32>
    %271 = arith.mulf %270, %269 : vector<26x6x128xf32>
    %272 = vector.extract_strided_slice %13 {offsets = [0, 0, 0], sizes = [26, 6, 128], strides = [1, 1, 1]} : vector<26x7x128xf32> to vector<26x6x128xf32>
    %273 = vector.broadcast %244 : f32 to vector<26x6x128xf32>
    %274 = arith.mulf %273, %272 : vector<26x6x128xf32>
    %275 = arith.addf %271, %274 : vector<26x6x128xf32>
    %276 = vector.extract_strided_slice %11 {offsets = [0, 0, 0], sizes = [26, 6, 128], strides = [1, 1, 1]} : vector<26x7x128xf32> to vector<26x6x128xf32>
    %277 = vector.broadcast %245 : f32 to vector<26x6x128xf32>
    %278 = arith.mulf %277, %276 : vector<26x6x128xf32>
    %279 = arith.addf %275, %278 : vector<26x6x128xf32>
    %280 = vector.extract_strided_slice %15 {offsets = [0, 0, 0], sizes = [26, 6, 128], strides = [1, 1, 1]} : vector<26x7x128xf32> to vector<26x6x128xf32>
    %281 = vector.broadcast %246 : f32 to vector<26x6x128xf32>
    %282 = arith.mulf %281, %280 : vector<26x6x128xf32>
    %283 = arith.addf %279, %282 : vector<26x6x128xf32>
    %284 = vector.extract_strided_slice %13 {offsets = [0, 0, 0], sizes = [26, 6, 128], strides = [1, 1, 1]} : vector<26x7x128xf32> to vector<26x6x128xf32>
    %285 = vector.broadcast %243 : f32 to vector<26x6x128xf32>
    %286 = arith.mulf %285, %284 : vector<26x6x128xf32>
    %287 = vector.broadcast %244 : f32 to vector<26x6x128xf32>
    %288 = arith.mulf %287, %17 : vector<26x6x128xf32>
    %289 = arith.addf %286, %288 : vector<26x6x128xf32>
    %290 = vector.extract_strided_slice %15 {offsets = [0, 0, 0], sizes = [26, 6, 128], strides = [1, 1, 1]} : vector<26x7x128xf32> to vector<26x6x128xf32>
    %291 = vector.broadcast %245 : f32 to vector<26x6x128xf32>
    %292 = arith.mulf %291, %290 : vector<26x6x128xf32>
    %293 = arith.addf %289, %292 : vector<26x6x128xf32>
    %294 = vector.broadcast %246 : f32 to vector<26x6x128xf32>
    %295 = arith.mulf %294, %19 : vector<26x6x128xf32>
    %296 = arith.addf %293, %295 : vector<26x6x128xf32>
    %297 = arith.maximumf %257, %268 : vector<26x7x128xf32>
    %298 = arith.maximumf %283, %296 : vector<26x6x128xf32>
    %c1_54 = arith.constant 1 : index
    %299 = memref.load %arg3[%c1_54] : memref<3xf32, #tpu.memory_space<smem>>
    %300 = vector.extract_strided_slice %297 {offsets = [0, 0, 0], sizes = [1, 7, 128], strides = [1, 1, 1]} : vector<26x7x128xf32> to vector<1x7x128xf32>
    %301 = vector.shape_cast %300 : vector<1x7x128xf32> to vector<7x128xf32>
    %302 = vector.extract_strided_slice %297 {offsets = [1, 0, 0], sizes = [1, 7, 128], strides = [1, 1, 1]} : vector<26x7x128xf32> to vector<1x7x128xf32>
    %303 = vector.shape_cast %302 : vector<1x7x128xf32> to vector<7x128xf32>
    %304 = arith.maximumf %301, %303 : vector<7x128xf32>
    %305 = vector.extract_strided_slice %297 {offsets = [2, 0, 0], sizes = [1, 7, 128], strides = [1, 1, 1]} : vector<26x7x128xf32> to vector<1x7x128xf32>
    %306 = vector.shape_cast %305 : vector<1x7x128xf32> to vector<7x128xf32>
    %307 = vector.extract_strided_slice %297 {offsets = [3, 0, 0], sizes = [1, 7, 128], strides = [1, 1, 1]} : vector<26x7x128xf32> to vector<1x7x128xf32>
    %308 = vector.shape_cast %307 : vector<1x7x128xf32> to vector<7x128xf32>
    %309 = arith.maximumf %306, %308 : vector<7x128xf32>
    %310 = vector.extract_strided_slice %297 {offsets = [4, 0, 0], sizes = [1, 7, 128], strides = [1, 1, 1]} : vector<26x7x128xf32> to vector<1x7x128xf32>
    %311 = vector.shape_cast %310 : vector<1x7x128xf32> to vector<7x128xf32>
    %312 = vector.extract_strided_slice %297 {offsets = [5, 0, 0], sizes = [1, 7, 128], strides = [1, 1, 1]} : vector<26x7x128xf32> to vector<1x7x128xf32>
    %313 = vector.shape_cast %312 : vector<1x7x128xf32> to vector<7x128xf32>
    %314 = arith.maximumf %311, %313 : vector<7x128xf32>
    %315 = vector.extract_strided_slice %297 {offsets = [6, 0, 0], sizes = [1, 7, 128], strides = [1, 1, 1]} : vector<26x7x128xf32> to vector<1x7x128xf32>
    %316 = vector.shape_cast %315 : vector<1x7x128xf32> to vector<7x128xf32>
    %317 = vector.extract_strided_slice %297 {offsets = [7, 0, 0], sizes = [1, 7, 128], strides = [1, 1, 1]} : vector<26x7x128xf32> to vector<1x7x128xf32>
    %318 = vector.shape_cast %317 : vector<1x7x128xf32> to vector<7x128xf32>
    %319 = arith.maximumf %316, %318 : vector<7x128xf32>
    %320 = vector.extract_strided_slice %297 {offsets = [8, 0, 0], sizes = [1, 7, 128], strides = [1, 1, 1]} : vector<26x7x128xf32> to vector<1x7x128xf32>
    %321 = vector.shape_cast %320 : vector<1x7x128xf32> to vector<7x128xf32>
    %322 = vector.extract_strided_slice %297 {offsets = [9, 0, 0], sizes = [1, 7, 128], strides = [1, 1, 1]} : vector<26x7x128xf32> to vector<1x7x128xf32>
    %323 = vector.shape_cast %322 : vector<1x7x128xf32> to vector<7x128xf32>
    %324 = arith.maximumf %321, %323 : vector<7x128xf32>
    %325 = vector.extract_strided_slice %297 {offsets = [10, 0, 0], sizes = [1, 7, 128], strides = [1, 1, 1]} : vector<26x7x128xf32> to vector<1x7x128xf32>
    %326 = vector.shape_cast %325 : vector<1x7x128xf32> to vector<7x128xf32>
    %327 = vector.extract_strided_slice %297 {offsets = [11, 0, 0], sizes = [1, 7, 128], strides = [1, 1, 1]} : vector<26x7x128xf32> to vector<1x7x128xf32>
    %328 = vector.shape_cast %327 : vector<1x7x128xf32> to vector<7x128xf32>
    %329 = arith.maximumf %326, %328 : vector<7x128xf32>
    %330 = vector.extract_strided_slice %297 {offsets = [12, 0, 0], sizes = [1, 7, 128], strides = [1, 1, 1]} : vector<26x7x128xf32> to vector<1x7x128xf32>
    %331 = vector.shape_cast %330 : vector<1x7x128xf32> to vector<7x128xf32>
    %332 = vector.extract_strided_slice %297 {offsets = [13, 0, 0], sizes = [1, 7, 128], strides = [1, 1, 1]} : vector<26x7x128xf32> to vector<1x7x128xf32>
    %333 = vector.shape_cast %332 : vector<1x7x128xf32> to vector<7x128xf32>
    %334 = arith.maximumf %331, %333 : vector<7x128xf32>
    %335 = vector.extract_strided_slice %297 {offsets = [14, 0, 0], sizes = [1, 7, 128], strides = [1, 1, 1]} : vector<26x7x128xf32> to vector<1x7x128xf32>
    %336 = vector.shape_cast %335 : vector<1x7x128xf32> to vector<7x128xf32>
    %337 = vector.extract_strided_slice %297 {offsets = [15, 0, 0], sizes = [1, 7, 128], strides = [1, 1, 1]} : vector<26x7x128xf32> to vector<1x7x128xf32>
    %338 = vector.shape_cast %337 : vector<1x7x128xf32> to vector<7x128xf32>
    %339 = arith.maximumf %336, %338 : vector<7x128xf32>
    %340 = vector.extract_strided_slice %297 {offsets = [16, 0, 0], sizes = [1, 7, 128], strides = [1, 1, 1]} : vector<26x7x128xf32> to vector<1x7x128xf32>
    %341 = vector.shape_cast %340 : vector<1x7x128xf32> to vector<7x128xf32>
    %342 = vector.extract_strided_slice %297 {offsets = [17, 0, 0], sizes = [1, 7, 128], strides = [1, 1, 1]} : vector<26x7x128xf32> to vector<1x7x128xf32>
    %343 = vector.shape_cast %342 : vector<1x7x128xf32> to vector<7x128xf32>
    %344 = arith.maximumf %341, %343 : vector<7x128xf32>
    %345 = vector.extract_strided_slice %297 {offsets = [18, 0, 0], sizes = [1, 7, 128], strides = [1, 1, 1]} : vector<26x7x128xf32> to vector<1x7x128xf32>
    %346 = vector.shape_cast %345 : vector<1x7x128xf32> to vector<7x128xf32>
    %347 = vector.extract_strided_slice %297 {offsets = [19, 0, 0], sizes = [1, 7, 128], strides = [1, 1, 1]} : vector<26x7x128xf32> to vector<1x7x128xf32>
    %348 = vector.shape_cast %347 : vector<1x7x128xf32> to vector<7x128xf32>
    %349 = arith.maximumf %346, %348 : vector<7x128xf32>
    %350 = vector.extract_strided_slice %297 {offsets = [20, 0, 0], sizes = [1, 7, 128], strides = [1, 1, 1]} : vector<26x7x128xf32> to vector<1x7x128xf32>
    %351 = vector.shape_cast %350 : vector<1x7x128xf32> to vector<7x128xf32>
    %352 = vector.extract_strided_slice %297 {offsets = [21, 0, 0], sizes = [1, 7, 128], strides = [1, 1, 1]} : vector<26x7x128xf32> to vector<1x7x128xf32>
    %353 = vector.shape_cast %352 : vector<1x7x128xf32> to vector<7x128xf32>
    %354 = arith.maximumf %351, %353 : vector<7x128xf32>
    %355 = vector.extract_strided_slice %297 {offsets = [22, 0, 0], sizes = [1, 7, 128], strides = [1, 1, 1]} : vector<26x7x128xf32> to vector<1x7x128xf32>
    %356 = vector.shape_cast %355 : vector<1x7x128xf32> to vector<7x128xf32>
    %357 = vector.extract_strided_slice %297 {offsets = [23, 0, 0], sizes = [1, 7, 128], strides = [1, 1, 1]} : vector<26x7x128xf32> to vector<1x7x128xf32>
    %358 = vector.shape_cast %357 : vector<1x7x128xf32> to vector<7x128xf32>
    %359 = arith.maximumf %356, %358 : vector<7x128xf32>
    %360 = vector.extract_strided_slice %297 {offsets = [24, 0, 0], sizes = [1, 7, 128], strides = [1, 1, 1]} : vector<26x7x128xf32> to vector<1x7x128xf32>
    %361 = vector.shape_cast %360 : vector<1x7x128xf32> to vector<7x128xf32>
    %362 = vector.extract_strided_slice %297 {offsets = [25, 0, 0], sizes = [1, 7, 128], strides = [1, 1, 1]} : vector<26x7x128xf32> to vector<1x7x128xf32>
    %363 = vector.shape_cast %362 : vector<1x7x128xf32> to vector<7x128xf32>
    %364 = arith.maximumf %361, %363 : vector<7x128xf32>
    %365 = vector.shape_cast %304 : vector<7x128xf32> to vector<1x7x128xf32>
    %366 = vector.shape_cast %309 : vector<7x128xf32> to vector<1x7x128xf32>
    %367 = vector.shape_cast %314 : vector<7x128xf32> to vector<1x7x128xf32>
    %368 = vector.shape_cast %319 : vector<7x128xf32> to vector<1x7x128xf32>
    %369 = vector.shape_cast %324 : vector<7x128xf32> to vector<1x7x128xf32>
    %370 = vector.shape_cast %329 : vector<7x128xf32> to vector<1x7x128xf32>
    %371 = vector.shape_cast %334 : vector<7x128xf32> to vector<1x7x128xf32>
    %372 = vector.shape_cast %339 : vector<7x128xf32> to vector<1x7x128xf32>
    %373 = vector.shape_cast %344 : vector<7x128xf32> to vector<1x7x128xf32>
    %374 = vector.shape_cast %349 : vector<7x128xf32> to vector<1x7x128xf32>
    %375 = vector.shape_cast %354 : vector<7x128xf32> to vector<1x7x128xf32>
    %376 = vector.shape_cast %359 : vector<7x128xf32> to vector<1x7x128xf32>
    %377 = vector.shape_cast %364 : vector<7x128xf32> to vector<1x7x128xf32>
    %378 = tpu.concatenate %365, %366, %367, %368, %369, %370, %371, %372, %373, %374, %375, %376, %377 in 0 : vector<1x7x128xf32>, vector<1x7x128xf32>, vector<1x7x128xf32>, vector<1x7x128xf32>, vector<1x7x128xf32>, vector<1x7x128xf32>, vector<1x7x128xf32>, vector<1x7x128xf32>, vector<1x7x128xf32>, vector<1x7x128xf32>, vector<1x7x128xf32>, vector<1x7x128xf32>, vector<1x7x128xf32> -> vector<13x7x128xf32>
    %379 = vector.broadcast %299 : f32 to vector<13x7x128xf32>
    %380 = arith.addf %378, %379 : vector<13x7x128xf32>
    %cst_55 = arith.constant 0.000000e+00 : f32
    %381 = vector.broadcast %cst_55 : f32 to vector<13x7x128xf32>
    %382 = arith.maximumf %380, %381 : vector<13x7x128xf32>
    %383 = vector.extract_strided_slice %298 {offsets = [0, 0, 0], sizes = [1, 6, 128], strides = [1, 1, 1]} : vector<26x6x128xf32> to vector<1x6x128xf32>
    %384 = vector.shape_cast %383 : vector<1x6x128xf32> to vector<6x128xf32>
    %385 = vector.extract_strided_slice %298 {offsets = [1, 0, 0], sizes = [1, 6, 128], strides = [1, 1, 1]} : vector<26x6x128xf32> to vector<1x6x128xf32>
    %386 = vector.shape_cast %385 : vector<1x6x128xf32> to vector<6x128xf32>
    %387 = arith.maximumf %384, %386 : vector<6x128xf32>
    %388 = vector.extract_strided_slice %298 {offsets = [2, 0, 0], sizes = [1, 6, 128], strides = [1, 1, 1]} : vector<26x6x128xf32> to vector<1x6x128xf32>
    %389 = vector.shape_cast %388 : vector<1x6x128xf32> to vector<6x128xf32>
    %390 = vector.extract_strided_slice %298 {offsets = [3, 0, 0], sizes = [1, 6, 128], strides = [1, 1, 1]} : vector<26x6x128xf32> to vector<1x6x128xf32>
    %391 = vector.shape_cast %390 : vector<1x6x128xf32> to vector<6x128xf32>
    %392 = arith.maximumf %389, %391 : vector<6x128xf32>
    %393 = vector.extract_strided_slice %298 {offsets = [4, 0, 0], sizes = [1, 6, 128], strides = [1, 1, 1]} : vector<26x6x128xf32> to vector<1x6x128xf32>
    %394 = vector.shape_cast %393 : vector<1x6x128xf32> to vector<6x128xf32>
    %395 = vector.extract_strided_slice %298 {offsets = [5, 0, 0], sizes = [1, 6, 128], strides = [1, 1, 1]} : vector<26x6x128xf32> to vector<1x6x128xf32>
    %396 = vector.shape_cast %395 : vector<1x6x128xf32> to vector<6x128xf32>
    %397 = arith.maximumf %394, %396 : vector<6x128xf32>
    %398 = vector.extract_strided_slice %298 {offsets = [6, 0, 0], sizes = [1, 6, 128], strides = [1, 1, 1]} : vector<26x6x128xf32> to vector<1x6x128xf32>
    %399 = vector.shape_cast %398 : vector<1x6x128xf32> to vector<6x128xf32>
    %400 = vector.extract_strided_slice %298 {offsets = [7, 0, 0], sizes = [1, 6, 128], strides = [1, 1, 1]} : vector<26x6x128xf32> to vector<1x6x128xf32>
    %401 = vector.shape_cast %400 : vector<1x6x128xf32> to vector<6x128xf32>
    %402 = arith.maximumf %399, %401 : vector<6x128xf32>
    %403 = vector.extract_strided_slice %298 {offsets = [8, 0, 0], sizes = [1, 6, 128], strides = [1, 1, 1]} : vector<26x6x128xf32> to vector<1x6x128xf32>
    %404 = vector.shape_cast %403 : vector<1x6x128xf32> to vector<6x128xf32>
    %405 = vector.extract_strided_slice %298 {offsets = [9, 0, 0], sizes = [1, 6, 128], strides = [1, 1, 1]} : vector<26x6x128xf32> to vector<1x6x128xf32>
    %406 = vector.shape_cast %405 : vector<1x6x128xf32> to vector<6x128xf32>
    %407 = arith.maximumf %404, %406 : vector<6x128xf32>
    %408 = vector.extract_strided_slice %298 {offsets = [10, 0, 0], sizes = [1, 6, 128], strides = [1, 1, 1]} : vector<26x6x128xf32> to vector<1x6x128xf32>
    %409 = vector.shape_cast %408 : vector<1x6x128xf32> to vector<6x128xf32>
    %410 = vector.extract_strided_slice %298 {offsets = [11, 0, 0], sizes = [1, 6, 128], strides = [1, 1, 1]} : vector<26x6x128xf32> to vector<1x6x128xf32>
    %411 = vector.shape_cast %410 : vector<1x6x128xf32> to vector<6x128xf32>
    %412 = arith.maximumf %409, %411 : vector<6x128xf32>
    %413 = vector.extract_strided_slice %298 {offsets = [12, 0, 0], sizes = [1, 6, 128], strides = [1, 1, 1]} : vector<26x6x128xf32> to vector<1x6x128xf32>
    %414 = vector.shape_cast %413 : vector<1x6x128xf32> to vector<6x128xf32>
    %415 = vector.extract_strided_slice %298 {offsets = [13, 0, 0], sizes = [1, 6, 128], strides = [1, 1, 1]} : vector<26x6x128xf32> to vector<1x6x128xf32>
    %416 = vector.shape_cast %415 : vector<1x6x128xf32> to vector<6x128xf32>
    %417 = arith.maximumf %414, %416 : vector<6x128xf32>
    %418 = vector.extract_strided_slice %298 {offsets = [14, 0, 0], sizes = [1, 6, 128], strides = [1, 1, 1]} : vector<26x6x128xf32> to vector<1x6x128xf32>
    %419 = vector.shape_cast %418 : vector<1x6x128xf32> to vector<6x128xf32>
    %420 = vector.extract_strided_slice %298 {offsets = [15, 0, 0], sizes = [1, 6, 128], strides = [1, 1, 1]} : vector<26x6x128xf32> to vector<1x6x128xf32>
    %421 = vector.shape_cast %420 : vector<1x6x128xf32> to vector<6x128xf32>
    %422 = arith.maximumf %419, %421 : vector<6x128xf32>
    %423 = vector.extract_strided_slice %298 {offsets = [16, 0, 0], sizes = [1, 6, 128], strides = [1, 1, 1]} : vector<26x6x128xf32> to vector<1x6x128xf32>
    %424 = vector.shape_cast %423 : vector<1x6x128xf32> to vector<6x128xf32>
    %425 = vector.extract_strided_slice %298 {offsets = [17, 0, 0], sizes = [1, 6, 128], strides = [1, 1, 1]} : vector<26x6x128xf32> to vector<1x6x128xf32>
    %426 = vector.shape_cast %425 : vector<1x6x128xf32> to vector<6x128xf32>
    %427 = arith.maximumf %424, %426 : vector<6x128xf32>
    %428 = vector.extract_strided_slice %298 {offsets = [18, 0, 0], sizes = [1, 6, 128], strides = [1, 1, 1]} : vector<26x6x128xf32> to vector<1x6x128xf32>
    %429 = vector.shape_cast %428 : vector<1x6x128xf32> to vector<6x128xf32>
    %430 = vector.extract_strided_slice %298 {offsets = [19, 0, 0], sizes = [1, 6, 128], strides = [1, 1, 1]} : vector<26x6x128xf32> to vector<1x6x128xf32>
    %431 = vector.shape_cast %430 : vector<1x6x128xf32> to vector<6x128xf32>
    %432 = arith.maximumf %429, %431 : vector<6x128xf32>
    %433 = vector.extract_strided_slice %298 {offsets = [20, 0, 0], sizes = [1, 6, 128], strides = [1, 1, 1]} : vector<26x6x128xf32> to vector<1x6x128xf32>
    %434 = vector.shape_cast %433 : vector<1x6x128xf32> to vector<6x128xf32>
    %435 = vector.extract_strided_slice %298 {offsets = [21, 0, 0], sizes = [1, 6, 128], strides = [1, 1, 1]} : vector<26x6x128xf32> to vector<1x6x128xf32>
    %436 = vector.shape_cast %435 : vector<1x6x128xf32> to vector<6x128xf32>
    %437 = arith.maximumf %434, %436 : vector<6x128xf32>
    %438 = vector.extract_strided_slice %298 {offsets = [22, 0, 0], sizes = [1, 6, 128], strides = [1, 1, 1]} : vector<26x6x128xf32> to vector<1x6x128xf32>
    %439 = vector.shape_cast %438 : vector<1x6x128xf32> to vector<6x128xf32>
    %440 = vector.extract_strided_slice %298 {offsets = [23, 0, 0], sizes = [1, 6, 128], strides = [1, 1, 1]} : vector<26x6x128xf32> to vector<1x6x128xf32>
    %441 = vector.shape_cast %440 : vector<1x6x128xf32> to vector<6x128xf32>
    %442 = arith.maximumf %439, %441 : vector<6x128xf32>
    %443 = vector.extract_strided_slice %298 {offsets = [24, 0, 0], sizes = [1, 6, 128], strides = [1, 1, 1]} : vector<26x6x128xf32> to vector<1x6x128xf32>
    %444 = vector.shape_cast %443 : vector<1x6x128xf32> to vector<6x128xf32>
    %445 = vector.extract_strided_slice %298 {offsets = [25, 0, 0], sizes = [1, 6, 128], strides = [1, 1, 1]} : vector<26x6x128xf32> to vector<1x6x128xf32>
    %446 = vector.shape_cast %445 : vector<1x6x128xf32> to vector<6x128xf32>
    %447 = arith.maximumf %444, %446 : vector<6x128xf32>
    %448 = vector.shape_cast %387 : vector<6x128xf32> to vector<1x6x128xf32>
    %449 = vector.shape_cast %392 : vector<6x128xf32> to vector<1x6x128xf32>
    %450 = vector.shape_cast %397 : vector<6x128xf32> to vector<1x6x128xf32>
    %451 = vector.shape_cast %402 : vector<6x128xf32> to vector<1x6x128xf32>
    %452 = vector.shape_cast %407 : vector<6x128xf32> to vector<1x6x128xf32>
    %453 = vector.shape_cast %412 : vector<6x128xf32> to vector<1x6x128xf32>
    %454 = vector.shape_cast %417 : vector<6x128xf32> to vector<1x6x128xf32>
    %455 = vector.shape_cast %422 : vector<6x128xf32> to vector<1x6x128xf32>
    %456 = vector.shape_cast %427 : vector<6x128xf32> to vector<1x6x128xf32>
    %457 = vector.shape_cast %432 : vector<6x128xf32> to vector<1x6x128xf32>
    %458 = vector.shape_cast %437 : vector<6x128xf32> to vector<1x6x128xf32>
    %459 = vector.shape_cast %442 : vector<6x128xf32> to vector<1x6x128xf32>
    %460 = vector.shape_cast %447 : vector<6x128xf32> to vector<1x6x128xf32>
    %461 = tpu.concatenate %448, %449, %450, %451, %452, %453, %454, %455, %456, %457, %458, %459, %460 in 0 : vector<1x6x128xf32>, vector<1x6x128xf32>, vector<1x6x128xf32>, vector<1x6x128xf32>, vector<1x6x128xf32>, vector<1x6x128xf32>, vector<1x6x128xf32>, vector<1x6x128xf32>, vector<1x6x128xf32>, vector<1x6x128xf32>, vector<1x6x128xf32>, vector<1x6x128xf32>, vector<1x6x128xf32> -> vector<13x6x128xf32>
    %462 = vector.broadcast %299 : f32 to vector<13x6x128xf32>
    %463 = arith.addf %461, %462 : vector<13x6x128xf32>
    %cst_56 = arith.constant 0.000000e+00 : f32
    %464 = vector.broadcast %cst_56 : f32 to vector<13x6x128xf32>
    %465 = arith.maximumf %463, %464 : vector<13x6x128xf32>
    %c2_57 = arith.constant 2 : index
    %c0_58 = arith.constant 0 : index
    %466 = memref.load %arg2[%c2_57, %c0_58] : memref<3x4xf32, #tpu.memory_space<smem>>
    %c2_59 = arith.constant 2 : index
    %c1_60 = arith.constant 1 : index
    %467 = memref.load %arg2[%c2_59, %c1_60] : memref<3x4xf32, #tpu.memory_space<smem>>
    %c2_61 = arith.constant 2 : index
    %c2_62 = arith.constant 2 : index
    %468 = memref.load %arg2[%c2_61, %c2_62] : memref<3x4xf32, #tpu.memory_space<smem>>
    %c2_63 = arith.constant 2 : index
    %c3_64 = arith.constant 3 : index
    %469 = memref.load %arg2[%c2_63, %c3_64] : memref<3x4xf32, #tpu.memory_space<smem>>
    %470 = vector.broadcast %466 : f32 to vector<26x7x128xf32>
    %471 = arith.mulf %470, %1 : vector<26x7x128xf32>
    %472 = vector.broadcast %467 : f32 to vector<26x7x128xf32>
    %473 = arith.mulf %472, %5 : vector<26x7x128xf32>
    %474 = arith.addf %471, %473 : vector<26x7x128xf32>
    %475 = vector.broadcast %468 : f32 to vector<26x7x128xf32>
    %476 = arith.mulf %475, %3 : vector<26x7x128xf32>
    %477 = arith.addf %474, %476 : vector<26x7x128xf32>
    %478 = vector.broadcast %469 : f32 to vector<26x7x128xf32>
    %479 = arith.mulf %478, %7 : vector<26x7x128xf32>
    %480 = arith.addf %477, %479 : vector<26x7x128xf32>
    %481 = vector.broadcast %466 : f32 to vector<26x7x128xf32>
    %482 = arith.mulf %481, %5 : vector<26x7x128xf32>
    %483 = vector.broadcast %467 : f32 to vector<26x7x128xf32>
    %484 = arith.mulf %483, %9 : vector<26x7x128xf32>
    %485 = arith.addf %482, %484 : vector<26x7x128xf32>
    %486 = vector.broadcast %468 : f32 to vector<26x7x128xf32>
    %487 = arith.mulf %486, %7 : vector<26x7x128xf32>
    %488 = arith.addf %485, %487 : vector<26x7x128xf32>
    %489 = vector.broadcast %469 : f32 to vector<26x7x128xf32>
    %490 = arith.mulf %489, %11 : vector<26x7x128xf32>
    %491 = arith.addf %488, %490 : vector<26x7x128xf32>
    %492 = vector.extract_strided_slice %9 {offsets = [0, 0, 0], sizes = [26, 6, 128], strides = [1, 1, 1]} : vector<26x7x128xf32> to vector<26x6x128xf32>
    %493 = vector.broadcast %466 : f32 to vector<26x6x128xf32>
    %494 = arith.mulf %493, %492 : vector<26x6x128xf32>
    %495 = vector.extract_strided_slice %13 {offsets = [0, 0, 0], sizes = [26, 6, 128], strides = [1, 1, 1]} : vector<26x7x128xf32> to vector<26x6x128xf32>
    %496 = vector.broadcast %467 : f32 to vector<26x6x128xf32>
    %497 = arith.mulf %496, %495 : vector<26x6x128xf32>
    %498 = arith.addf %494, %497 : vector<26x6x128xf32>
    %499 = vector.extract_strided_slice %11 {offsets = [0, 0, 0], sizes = [26, 6, 128], strides = [1, 1, 1]} : vector<26x7x128xf32> to vector<26x6x128xf32>
    %500 = vector.broadcast %468 : f32 to vector<26x6x128xf32>
    %501 = arith.mulf %500, %499 : vector<26x6x128xf32>
    %502 = arith.addf %498, %501 : vector<26x6x128xf32>
    %503 = vector.extract_strided_slice %15 {offsets = [0, 0, 0], sizes = [26, 6, 128], strides = [1, 1, 1]} : vector<26x7x128xf32> to vector<26x6x128xf32>
    %504 = vector.broadcast %469 : f32 to vector<26x6x128xf32>
    %505 = arith.mulf %504, %503 : vector<26x6x128xf32>
    %506 = arith.addf %502, %505 : vector<26x6x128xf32>
    %507 = vector.extract_strided_slice %13 {offsets = [0, 0, 0], sizes = [26, 6, 128], strides = [1, 1, 1]} : vector<26x7x128xf32> to vector<26x6x128xf32>
    %508 = vector.broadcast %466 : f32 to vector<26x6x128xf32>
    %509 = arith.mulf %508, %507 : vector<26x6x128xf32>
    %510 = vector.broadcast %467 : f32 to vector<26x6x128xf32>
    %511 = arith.mulf %510, %17 : vector<26x6x128xf32>
    %512 = arith.addf %509, %511 : vector<26x6x128xf32>
    %513 = vector.extract_strided_slice %15 {offsets = [0, 0, 0], sizes = [26, 6, 128], strides = [1, 1, 1]} : vector<26x7x128xf32> to vector<26x6x128xf32>
    %514 = vector.broadcast %468 : f32 to vector<26x6x128xf32>
    %515 = arith.mulf %514, %513 : vector<26x6x128xf32>
    %516 = arith.addf %512, %515 : vector<26x6x128xf32>
    %517 = vector.broadcast %469 : f32 to vector<26x6x128xf32>
    %518 = arith.mulf %517, %19 : vector<26x6x128xf32>
    %519 = arith.addf %516, %518 : vector<26x6x128xf32>
    %520 = arith.maximumf %480, %491 : vector<26x7x128xf32>
    %521 = arith.maximumf %506, %519 : vector<26x6x128xf32>
    %c2_65 = arith.constant 2 : index
    %522 = memref.load %arg3[%c2_65] : memref<3xf32, #tpu.memory_space<smem>>
    %523 = vector.extract_strided_slice %520 {offsets = [0, 0, 0], sizes = [1, 7, 128], strides = [1, 1, 1]} : vector<26x7x128xf32> to vector<1x7x128xf32>
    %524 = vector.shape_cast %523 : vector<1x7x128xf32> to vector<7x128xf32>
    %525 = vector.extract_strided_slice %520 {offsets = [1, 0, 0], sizes = [1, 7, 128], strides = [1, 1, 1]} : vector<26x7x128xf32> to vector<1x7x128xf32>
    %526 = vector.shape_cast %525 : vector<1x7x128xf32> to vector<7x128xf32>
    %527 = arith.maximumf %524, %526 : vector<7x128xf32>
    %528 = vector.extract_strided_slice %520 {offsets = [2, 0, 0], sizes = [1, 7, 128], strides = [1, 1, 1]} : vector<26x7x128xf32> to vector<1x7x128xf32>
    %529 = vector.shape_cast %528 : vector<1x7x128xf32> to vector<7x128xf32>
    %530 = vector.extract_strided_slice %520 {offsets = [3, 0, 0], sizes = [1, 7, 128], strides = [1, 1, 1]} : vector<26x7x128xf32> to vector<1x7x128xf32>
    %531 = vector.shape_cast %530 : vector<1x7x128xf32> to vector<7x128xf32>
    %532 = arith.maximumf %529, %531 : vector<7x128xf32>
    %533 = vector.extract_strided_slice %520 {offsets = [4, 0, 0], sizes = [1, 7, 128], strides = [1, 1, 1]} : vector<26x7x128xf32> to vector<1x7x128xf32>
    %534 = vector.shape_cast %533 : vector<1x7x128xf32> to vector<7x128xf32>
    %535 = vector.extract_strided_slice %520 {offsets = [5, 0, 0], sizes = [1, 7, 128], strides = [1, 1, 1]} : vector<26x7x128xf32> to vector<1x7x128xf32>
    %536 = vector.shape_cast %535 : vector<1x7x128xf32> to vector<7x128xf32>
    %537 = arith.maximumf %534, %536 : vector<7x128xf32>
    %538 = vector.extract_strided_slice %520 {offsets = [6, 0, 0], sizes = [1, 7, 128], strides = [1, 1, 1]} : vector<26x7x128xf32> to vector<1x7x128xf32>
    %539 = vector.shape_cast %538 : vector<1x7x128xf32> to vector<7x128xf32>
    %540 = vector.extract_strided_slice %520 {offsets = [7, 0, 0], sizes = [1, 7, 128], strides = [1, 1, 1]} : vector<26x7x128xf32> to vector<1x7x128xf32>
    %541 = vector.shape_cast %540 : vector<1x7x128xf32> to vector<7x128xf32>
    %542 = arith.maximumf %539, %541 : vector<7x128xf32>
    %543 = vector.extract_strided_slice %520 {offsets = [8, 0, 0], sizes = [1, 7, 128], strides = [1, 1, 1]} : vector<26x7x128xf32> to vector<1x7x128xf32>
    %544 = vector.shape_cast %543 : vector<1x7x128xf32> to vector<7x128xf32>
    %545 = vector.extract_strided_slice %520 {offsets = [9, 0, 0], sizes = [1, 7, 128], strides = [1, 1, 1]} : vector<26x7x128xf32> to vector<1x7x128xf32>
    %546 = vector.shape_cast %545 : vector<1x7x128xf32> to vector<7x128xf32>
    %547 = arith.maximumf %544, %546 : vector<7x128xf32>
    %548 = vector.extract_strided_slice %520 {offsets = [10, 0, 0], sizes = [1, 7, 128], strides = [1, 1, 1]} : vector<26x7x128xf32> to vector<1x7x128xf32>
    %549 = vector.shape_cast %548 : vector<1x7x128xf32> to vector<7x128xf32>
    %550 = vector.extract_strided_slice %520 {offsets = [11, 0, 0], sizes = [1, 7, 128], strides = [1, 1, 1]} : vector<26x7x128xf32> to vector<1x7x128xf32>
    %551 = vector.shape_cast %550 : vector<1x7x128xf32> to vector<7x128xf32>
    %552 = arith.maximumf %549, %551 : vector<7x128xf32>
    %553 = vector.extract_strided_slice %520 {offsets = [12, 0, 0], sizes = [1, 7, 128], strides = [1, 1, 1]} : vector<26x7x128xf32> to vector<1x7x128xf32>
    %554 = vector.shape_cast %553 : vector<1x7x128xf32> to vector<7x128xf32>
    %555 = vector.extract_strided_slice %520 {offsets = [13, 0, 0], sizes = [1, 7, 128], strides = [1, 1, 1]} : vector<26x7x128xf32> to vector<1x7x128xf32>
    %556 = vector.shape_cast %555 : vector<1x7x128xf32> to vector<7x128xf32>
    %557 = arith.maximumf %554, %556 : vector<7x128xf32>
    %558 = vector.extract_strided_slice %520 {offsets = [14, 0, 0], sizes = [1, 7, 128], strides = [1, 1, 1]} : vector<26x7x128xf32> to vector<1x7x128xf32>
    %559 = vector.shape_cast %558 : vector<1x7x128xf32> to vector<7x128xf32>
    %560 = vector.extract_strided_slice %520 {offsets = [15, 0, 0], sizes = [1, 7, 128], strides = [1, 1, 1]} : vector<26x7x128xf32> to vector<1x7x128xf32>
    %561 = vector.shape_cast %560 : vector<1x7x128xf32> to vector<7x128xf32>
    %562 = arith.maximumf %559, %561 : vector<7x128xf32>
    %563 = vector.extract_strided_slice %520 {offsets = [16, 0, 0], sizes = [1, 7, 128], strides = [1, 1, 1]} : vector<26x7x128xf32> to vector<1x7x128xf32>
    %564 = vector.shape_cast %563 : vector<1x7x128xf32> to vector<7x128xf32>
    %565 = vector.extract_strided_slice %520 {offsets = [17, 0, 0], sizes = [1, 7, 128], strides = [1, 1, 1]} : vector<26x7x128xf32> to vector<1x7x128xf32>
    %566 = vector.shape_cast %565 : vector<1x7x128xf32> to vector<7x128xf32>
    %567 = arith.maximumf %564, %566 : vector<7x128xf32>
    %568 = vector.extract_strided_slice %520 {offsets = [18, 0, 0], sizes = [1, 7, 128], strides = [1, 1, 1]} : vector<26x7x128xf32> to vector<1x7x128xf32>
    %569 = vector.shape_cast %568 : vector<1x7x128xf32> to vector<7x128xf32>
    %570 = vector.extract_strided_slice %520 {offsets = [19, 0, 0], sizes = [1, 7, 128], strides = [1, 1, 1]} : vector<26x7x128xf32> to vector<1x7x128xf32>
    %571 = vector.shape_cast %570 : vector<1x7x128xf32> to vector<7x128xf32>
    %572 = arith.maximumf %569, %571 : vector<7x128xf32>
    %573 = vector.extract_strided_slice %520 {offsets = [20, 0, 0], sizes = [1, 7, 128], strides = [1, 1, 1]} : vector<26x7x128xf32> to vector<1x7x128xf32>
    %574 = vector.shape_cast %573 : vector<1x7x128xf32> to vector<7x128xf32>
    %575 = vector.extract_strided_slice %520 {offsets = [21, 0, 0], sizes = [1, 7, 128], strides = [1, 1, 1]} : vector<26x7x128xf32> to vector<1x7x128xf32>
    %576 = vector.shape_cast %575 : vector<1x7x128xf32> to vector<7x128xf32>
    %577 = arith.maximumf %574, %576 : vector<7x128xf32>
    %578 = vector.extract_strided_slice %520 {offsets = [22, 0, 0], sizes = [1, 7, 128], strides = [1, 1, 1]} : vector<26x7x128xf32> to vector<1x7x128xf32>
    %579 = vector.shape_cast %578 : vector<1x7x128xf32> to vector<7x128xf32>
    %580 = vector.extract_strided_slice %520 {offsets = [23, 0, 0], sizes = [1, 7, 128], strides = [1, 1, 1]} : vector<26x7x128xf32> to vector<1x7x128xf32>
    %581 = vector.shape_cast %580 : vector<1x7x128xf32> to vector<7x128xf32>
    %582 = arith.maximumf %579, %581 : vector<7x128xf32>
    %583 = vector.extract_strided_slice %520 {offsets = [24, 0, 0], sizes = [1, 7, 128], strides = [1, 1, 1]} : vector<26x7x128xf32> to vector<1x7x128xf32>
    %584 = vector.shape_cast %583 : vector<1x7x128xf32> to vector<7x128xf32>
    %585 = vector.extract_strided_slice %520 {offsets = [25, 0, 0], sizes = [1, 7, 128], strides = [1, 1, 1]} : vector<26x7x128xf32> to vector<1x7x128xf32>
    %586 = vector.shape_cast %585 : vector<1x7x128xf32> to vector<7x128xf32>
    %587 = arith.maximumf %584, %586 : vector<7x128xf32>
    %588 = vector.shape_cast %527 : vector<7x128xf32> to vector<1x7x128xf32>
    %589 = vector.shape_cast %532 : vector<7x128xf32> to vector<1x7x128xf32>
    %590 = vector.shape_cast %537 : vector<7x128xf32> to vector<1x7x128xf32>
    %591 = vector.shape_cast %542 : vector<7x128xf32> to vector<1x7x128xf32>
    %592 = vector.shape_cast %547 : vector<7x128xf32> to vector<1x7x128xf32>
    %593 = vector.shape_cast %552 : vector<7x128xf32> to vector<1x7x128xf32>
    %594 = vector.shape_cast %557 : vector<7x128xf32> to vector<1x7x128xf32>
    %595 = vector.shape_cast %562 : vector<7x128xf32> to vector<1x7x128xf32>
    %596 = vector.shape_cast %567 : vector<7x128xf32> to vector<1x7x128xf32>
    %597 = vector.shape_cast %572 : vector<7x128xf32> to vector<1x7x128xf32>
    %598 = vector.shape_cast %577 : vector<7x128xf32> to vector<1x7x128xf32>
    %599 = vector.shape_cast %582 : vector<7x128xf32> to vector<1x7x128xf32>
    %600 = vector.shape_cast %587 : vector<7x128xf32> to vector<1x7x128xf32>
    %601 = tpu.concatenate %588, %589, %590, %591, %592, %593, %594, %595, %596, %597, %598, %599, %600 in 0 : vector<1x7x128xf32>, vector<1x7x128xf32>, vector<1x7x128xf32>, vector<1x7x128xf32>, vector<1x7x128xf32>, vector<1x7x128xf32>, vector<1x7x128xf32>, vector<1x7x128xf32>, vector<1x7x128xf32>, vector<1x7x128xf32>, vector<1x7x128xf32>, vector<1x7x128xf32>, vector<1x7x128xf32> -> vector<13x7x128xf32>
    %602 = vector.broadcast %522 : f32 to vector<13x7x128xf32>
    %603 = arith.addf %601, %602 : vector<13x7x128xf32>
    %cst_66 = arith.constant 0.000000e+00 : f32
    %604 = vector.broadcast %cst_66 : f32 to vector<13x7x128xf32>
    %605 = arith.maximumf %603, %604 : vector<13x7x128xf32>
    %606 = vector.extract_strided_slice %521 {offsets = [0, 0, 0], sizes = [1, 6, 128], strides = [1, 1, 1]} : vector<26x6x128xf32> to vector<1x6x128xf32>
    %607 = vector.shape_cast %606 : vector<1x6x128xf32> to vector<6x128xf32>
    %608 = vector.extract_strided_slice %521 {offsets = [1, 0, 0], sizes = [1, 6, 128], strides = [1, 1, 1]} : vector<26x6x128xf32> to vector<1x6x128xf32>
    %609 = vector.shape_cast %608 : vector<1x6x128xf32> to vector<6x128xf32>
    %610 = arith.maximumf %607, %609 : vector<6x128xf32>
    %611 = vector.extract_strided_slice %521 {offsets = [2, 0, 0], sizes = [1, 6, 128], strides = [1, 1, 1]} : vector<26x6x128xf32> to vector<1x6x128xf32>
    %612 = vector.shape_cast %611 : vector<1x6x128xf32> to vector<6x128xf32>
    %613 = vector.extract_strided_slice %521 {offsets = [3, 0, 0], sizes = [1, 6, 128], strides = [1, 1, 1]} : vector<26x6x128xf32> to vector<1x6x128xf32>
    %614 = vector.shape_cast %613 : vector<1x6x128xf32> to vector<6x128xf32>
    %615 = arith.maximumf %612, %614 : vector<6x128xf32>
    %616 = vector.extract_strided_slice %521 {offsets = [4, 0, 0], sizes = [1, 6, 128], strides = [1, 1, 1]} : vector<26x6x128xf32> to vector<1x6x128xf32>
    %617 = vector.shape_cast %616 : vector<1x6x128xf32> to vector<6x128xf32>
    %618 = vector.extract_strided_slice %521 {offsets = [5, 0, 0], sizes = [1, 6, 128], strides = [1, 1, 1]} : vector<26x6x128xf32> to vector<1x6x128xf32>
    %619 = vector.shape_cast %618 : vector<1x6x128xf32> to vector<6x128xf32>
    %620 = arith.maximumf %617, %619 : vector<6x128xf32>
    %621 = vector.extract_strided_slice %521 {offsets = [6, 0, 0], sizes = [1, 6, 128], strides = [1, 1, 1]} : vector<26x6x128xf32> to vector<1x6x128xf32>
    %622 = vector.shape_cast %621 : vector<1x6x128xf32> to vector<6x128xf32>
    %623 = vector.extract_strided_slice %521 {offsets = [7, 0, 0], sizes = [1, 6, 128], strides = [1, 1, 1]} : vector<26x6x128xf32> to vector<1x6x128xf32>
    %624 = vector.shape_cast %623 : vector<1x6x128xf32> to vector<6x128xf32>
    %625 = arith.maximumf %622, %624 : vector<6x128xf32>
    %626 = vector.extract_strided_slice %521 {offsets = [8, 0, 0], sizes = [1, 6, 128], strides = [1, 1, 1]} : vector<26x6x128xf32> to vector<1x6x128xf32>
    %627 = vector.shape_cast %626 : vector<1x6x128xf32> to vector<6x128xf32>
    %628 = vector.extract_strided_slice %521 {offsets = [9, 0, 0], sizes = [1, 6, 128], strides = [1, 1, 1]} : vector<26x6x128xf32> to vector<1x6x128xf32>
    %629 = vector.shape_cast %628 : vector<1x6x128xf32> to vector<6x128xf32>
    %630 = arith.maximumf %627, %629 : vector<6x128xf32>
    %631 = vector.extract_strided_slice %521 {offsets = [10, 0, 0], sizes = [1, 6, 128], strides = [1, 1, 1]} : vector<26x6x128xf32> to vector<1x6x128xf32>
    %632 = vector.shape_cast %631 : vector<1x6x128xf32> to vector<6x128xf32>
    %633 = vector.extract_strided_slice %521 {offsets = [11, 0, 0], sizes = [1, 6, 128], strides = [1, 1, 1]} : vector<26x6x128xf32> to vector<1x6x128xf32>
    %634 = vector.shape_cast %633 : vector<1x6x128xf32> to vector<6x128xf32>
    %635 = arith.maximumf %632, %634 : vector<6x128xf32>
    %636 = vector.extract_strided_slice %521 {offsets = [12, 0, 0], sizes = [1, 6, 128], strides = [1, 1, 1]} : vector<26x6x128xf32> to vector<1x6x128xf32>
    %637 = vector.shape_cast %636 : vector<1x6x128xf32> to vector<6x128xf32>
    %638 = vector.extract_strided_slice %521 {offsets = [13, 0, 0], sizes = [1, 6, 128], strides = [1, 1, 1]} : vector<26x6x128xf32> to vector<1x6x128xf32>
    %639 = vector.shape_cast %638 : vector<1x6x128xf32> to vector<6x128xf32>
    %640 = arith.maximumf %637, %639 : vector<6x128xf32>
    %641 = vector.extract_strided_slice %521 {offsets = [14, 0, 0], sizes = [1, 6, 128], strides = [1, 1, 1]} : vector<26x6x128xf32> to vector<1x6x128xf32>
    %642 = vector.shape_cast %641 : vector<1x6x128xf32> to vector<6x128xf32>
    %643 = vector.extract_strided_slice %521 {offsets = [15, 0, 0], sizes = [1, 6, 128], strides = [1, 1, 1]} : vector<26x6x128xf32> to vector<1x6x128xf32>
    %644 = vector.shape_cast %643 : vector<1x6x128xf32> to vector<6x128xf32>
    %645 = arith.maximumf %642, %644 : vector<6x128xf32>
    %646 = vector.extract_strided_slice %521 {offsets = [16, 0, 0], sizes = [1, 6, 128], strides = [1, 1, 1]} : vector<26x6x128xf32> to vector<1x6x128xf32>
    %647 = vector.shape_cast %646 : vector<1x6x128xf32> to vector<6x128xf32>
    %648 = vector.extract_strided_slice %521 {offsets = [17, 0, 0], sizes = [1, 6, 128], strides = [1, 1, 1]} : vector<26x6x128xf32> to vector<1x6x128xf32>
    %649 = vector.shape_cast %648 : vector<1x6x128xf32> to vector<6x128xf32>
    %650 = arith.maximumf %647, %649 : vector<6x128xf32>
    %651 = vector.extract_strided_slice %521 {offsets = [18, 0, 0], sizes = [1, 6, 128], strides = [1, 1, 1]} : vector<26x6x128xf32> to vector<1x6x128xf32>
    %652 = vector.shape_cast %651 : vector<1x6x128xf32> to vector<6x128xf32>
    %653 = vector.extract_strided_slice %521 {offsets = [19, 0, 0], sizes = [1, 6, 128], strides = [1, 1, 1]} : vector<26x6x128xf32> to vector<1x6x128xf32>
    %654 = vector.shape_cast %653 : vector<1x6x128xf32> to vector<6x128xf32>
    %655 = arith.maximumf %652, %654 : vector<6x128xf32>
    %656 = vector.extract_strided_slice %521 {offsets = [20, 0, 0], sizes = [1, 6, 128], strides = [1, 1, 1]} : vector<26x6x128xf32> to vector<1x6x128xf32>
    %657 = vector.shape_cast %656 : vector<1x6x128xf32> to vector<6x128xf32>
    %658 = vector.extract_strided_slice %521 {offsets = [21, 0, 0], sizes = [1, 6, 128], strides = [1, 1, 1]} : vector<26x6x128xf32> to vector<1x6x128xf32>
    %659 = vector.shape_cast %658 : vector<1x6x128xf32> to vector<6x128xf32>
    %660 = arith.maximumf %657, %659 : vector<6x128xf32>
    %661 = vector.extract_strided_slice %521 {offsets = [22, 0, 0], sizes = [1, 6, 128], strides = [1, 1, 1]} : vector<26x6x128xf32> to vector<1x6x128xf32>
    %662 = vector.shape_cast %661 : vector<1x6x128xf32> to vector<6x128xf32>
    %663 = vector.extract_strided_slice %521 {offsets = [23, 0, 0], sizes = [1, 6, 128], strides = [1, 1, 1]} : vector<26x6x128xf32> to vector<1x6x128xf32>
    %664 = vector.shape_cast %663 : vector<1x6x128xf32> to vector<6x128xf32>
    %665 = arith.maximumf %662, %664 : vector<6x128xf32>
    %666 = vector.extract_strided_slice %521 {offsets = [24, 0, 0], sizes = [1, 6, 128], strides = [1, 1, 1]} : vector<26x6x128xf32> to vector<1x6x128xf32>
    %667 = vector.shape_cast %666 : vector<1x6x128xf32> to vector<6x128xf32>
    %668 = vector.extract_strided_slice %521 {offsets = [25, 0, 0], sizes = [1, 6, 128], strides = [1, 1, 1]} : vector<26x6x128xf32> to vector<1x6x128xf32>
    %669 = vector.shape_cast %668 : vector<1x6x128xf32> to vector<6x128xf32>
    %670 = arith.maximumf %667, %669 : vector<6x128xf32>
    %671 = vector.shape_cast %610 : vector<6x128xf32> to vector<1x6x128xf32>
    %672 = vector.shape_cast %615 : vector<6x128xf32> to vector<1x6x128xf32>
    %673 = vector.shape_cast %620 : vector<6x128xf32> to vector<1x6x128xf32>
    %674 = vector.shape_cast %625 : vector<6x128xf32> to vector<1x6x128xf32>
    %675 = vector.shape_cast %630 : vector<6x128xf32> to vector<1x6x128xf32>
    %676 = vector.shape_cast %635 : vector<6x128xf32> to vector<1x6x128xf32>
    %677 = vector.shape_cast %640 : vector<6x128xf32> to vector<1x6x128xf32>
    %678 = vector.shape_cast %645 : vector<6x128xf32> to vector<1x6x128xf32>
    %679 = vector.shape_cast %650 : vector<6x128xf32> to vector<1x6x128xf32>
    %680 = vector.shape_cast %655 : vector<6x128xf32> to vector<1x6x128xf32>
    %681 = vector.shape_cast %660 : vector<6x128xf32> to vector<1x6x128xf32>
    %682 = vector.shape_cast %665 : vector<6x128xf32> to vector<1x6x128xf32>
    %683 = vector.shape_cast %670 : vector<6x128xf32> to vector<1x6x128xf32>
    %684 = tpu.concatenate %671, %672, %673, %674, %675, %676, %677, %678, %679, %680, %681, %682, %683 in 0 : vector<1x6x128xf32>, vector<1x6x128xf32>, vector<1x6x128xf32>, vector<1x6x128xf32>, vector<1x6x128xf32>, vector<1x6x128xf32>, vector<1x6x128xf32>, vector<1x6x128xf32>, vector<1x6x128xf32>, vector<1x6x128xf32>, vector<1x6x128xf32>, vector<1x6x128xf32>, vector<1x6x128xf32> -> vector<13x6x128xf32>
    %685 = vector.broadcast %522 : f32 to vector<13x6x128xf32>
    %686 = arith.addf %684, %685 : vector<13x6x128xf32>
    %cst_67 = arith.constant 0.000000e+00 : f32
    %687 = vector.broadcast %cst_67 : f32 to vector<13x6x128xf32>
    %688 = arith.maximumf %686, %687 : vector<13x6x128xf32>
    %689 = vector.extract_strided_slice %159 {offsets = [0, 0, 0], sizes = [12, 6, 128], strides = [1, 1, 1]} : vector<13x7x128xf32> to vector<12x6x128xf32>
    %690 = vector.extract_strided_slice %382 {offsets = [0, 0, 0], sizes = [12, 6, 128], strides = [1, 1, 1]} : vector<13x7x128xf32> to vector<12x6x128xf32>
    %691 = vector.extract_strided_slice %605 {offsets = [0, 0, 0], sizes = [12, 6, 128], strides = [1, 1, 1]} : vector<13x7x128xf32> to vector<12x6x128xf32>
    %692 = vector.extract_strided_slice %159 {offsets = [1, 0, 0], sizes = [12, 6, 128], strides = [1, 1, 1]} : vector<13x7x128xf32> to vector<12x6x128xf32>
    %693 = vector.extract_strided_slice %382 {offsets = [1, 0, 0], sizes = [12, 6, 128], strides = [1, 1, 1]} : vector<13x7x128xf32> to vector<12x6x128xf32>
    %694 = vector.extract_strided_slice %605 {offsets = [1, 0, 0], sizes = [12, 6, 128], strides = [1, 1, 1]} : vector<13x7x128xf32> to vector<12x6x128xf32>
    %695 = vector.extract_strided_slice %159 {offsets = [0, 1, 0], sizes = [12, 6, 128], strides = [1, 1, 1]} : vector<13x7x128xf32> to vector<12x6x128xf32>
    %696 = vector.extract_strided_slice %382 {offsets = [0, 1, 0], sizes = [12, 6, 128], strides = [1, 1, 1]} : vector<13x7x128xf32> to vector<12x6x128xf32>
    %697 = vector.extract_strided_slice %605 {offsets = [0, 1, 0], sizes = [12, 6, 128], strides = [1, 1, 1]} : vector<13x7x128xf32> to vector<12x6x128xf32>
    %698 = vector.extract_strided_slice %159 {offsets = [1, 1, 0], sizes = [12, 6, 128], strides = [1, 1, 1]} : vector<13x7x128xf32> to vector<12x6x128xf32>
    %699 = vector.extract_strided_slice %382 {offsets = [1, 1, 0], sizes = [12, 6, 128], strides = [1, 1, 1]} : vector<13x7x128xf32> to vector<12x6x128xf32>
    %700 = vector.extract_strided_slice %605 {offsets = [1, 1, 0], sizes = [12, 6, 128], strides = [1, 1, 1]} : vector<13x7x128xf32> to vector<12x6x128xf32>
    %701 = vector.extract_strided_slice %242 {offsets = [0, 0, 0], sizes = [12, 6, 128], strides = [1, 1, 1]} : vector<13x6x128xf32> to vector<12x6x128xf32>
    %702 = vector.extract_strided_slice %465 {offsets = [0, 0, 0], sizes = [12, 6, 128], strides = [1, 1, 1]} : vector<13x6x128xf32> to vector<12x6x128xf32>
    %703 = vector.extract_strided_slice %688 {offsets = [0, 0, 0], sizes = [12, 6, 128], strides = [1, 1, 1]} : vector<13x6x128xf32> to vector<12x6x128xf32>
    %704 = vector.extract_strided_slice %242 {offsets = [1, 0, 0], sizes = [12, 6, 128], strides = [1, 1, 1]} : vector<13x6x128xf32> to vector<12x6x128xf32>
    %705 = vector.extract_strided_slice %465 {offsets = [1, 0, 0], sizes = [12, 6, 128], strides = [1, 1, 1]} : vector<13x6x128xf32> to vector<12x6x128xf32>
    %706 = vector.extract_strided_slice %688 {offsets = [1, 0, 0], sizes = [12, 6, 128], strides = [1, 1, 1]} : vector<13x6x128xf32> to vector<12x6x128xf32>
    %c0_68 = arith.constant 0 : index
    %c0_69 = arith.constant 0 : index
    %707 = memref.load %arg4[%c0_68, %c0_69] : memref<6x12xf32, #tpu.memory_space<smem>>
    %c0_70 = arith.constant 0 : index
    %c1_71 = arith.constant 1 : index
    %708 = memref.load %arg4[%c0_70, %c1_71] : memref<6x12xf32, #tpu.memory_space<smem>>
    %c0_72 = arith.constant 0 : index
    %c2_73 = arith.constant 2 : index
    %709 = memref.load %arg4[%c0_72, %c2_73] : memref<6x12xf32, #tpu.memory_space<smem>>
    %c0_74 = arith.constant 0 : index
    %c3_75 = arith.constant 3 : index
    %710 = memref.load %arg4[%c0_74, %c3_75] : memref<6x12xf32, #tpu.memory_space<smem>>
    %711 = vector.broadcast %707 : f32 to vector<12x6x128xf32>
    %712 = arith.mulf %711, %689 : vector<12x6x128xf32>
    %713 = vector.broadcast %708 : f32 to vector<12x6x128xf32>
    %714 = arith.mulf %713, %701 : vector<12x6x128xf32>
    %715 = arith.addf %712, %714 : vector<12x6x128xf32>
    %716 = vector.broadcast %709 : f32 to vector<12x6x128xf32>
    %717 = arith.mulf %716, %692 : vector<12x6x128xf32>
    %718 = arith.addf %715, %717 : vector<12x6x128xf32>
    %719 = vector.broadcast %710 : f32 to vector<12x6x128xf32>
    %720 = arith.mulf %719, %704 : vector<12x6x128xf32>
    %721 = arith.addf %718, %720 : vector<12x6x128xf32>
    %722 = vector.broadcast %707 : f32 to vector<12x6x128xf32>
    %723 = arith.mulf %722, %701 : vector<12x6x128xf32>
    %724 = vector.broadcast %708 : f32 to vector<12x6x128xf32>
    %725 = arith.mulf %724, %695 : vector<12x6x128xf32>
    %726 = arith.addf %723, %725 : vector<12x6x128xf32>
    %727 = vector.broadcast %709 : f32 to vector<12x6x128xf32>
    %728 = arith.mulf %727, %704 : vector<12x6x128xf32>
    %729 = arith.addf %726, %728 : vector<12x6x128xf32>
    %730 = vector.broadcast %710 : f32 to vector<12x6x128xf32>
    %731 = arith.mulf %730, %698 : vector<12x6x128xf32>
    %732 = arith.addf %729, %731 : vector<12x6x128xf32>
    %c0_76 = arith.constant 0 : index
    %c4 = arith.constant 4 : index
    %733 = memref.load %arg4[%c0_76, %c4] : memref<6x12xf32, #tpu.memory_space<smem>>
    %c0_77 = arith.constant 0 : index
    %c5 = arith.constant 5 : index
    %734 = memref.load %arg4[%c0_77, %c5] : memref<6x12xf32, #tpu.memory_space<smem>>
    %c0_78 = arith.constant 0 : index
    %c6 = arith.constant 6 : index
    %735 = memref.load %arg4[%c0_78, %c6] : memref<6x12xf32, #tpu.memory_space<smem>>
    %c0_79 = arith.constant 0 : index
    %c7 = arith.constant 7 : index
    %736 = memref.load %arg4[%c0_79, %c7] : memref<6x12xf32, #tpu.memory_space<smem>>
    %737 = vector.broadcast %733 : f32 to vector<12x6x128xf32>
    %738 = arith.mulf %737, %690 : vector<12x6x128xf32>
    %739 = vector.broadcast %734 : f32 to vector<12x6x128xf32>
    %740 = arith.mulf %739, %702 : vector<12x6x128xf32>
    %741 = arith.addf %738, %740 : vector<12x6x128xf32>
    %742 = vector.broadcast %735 : f32 to vector<12x6x128xf32>
    %743 = arith.mulf %742, %693 : vector<12x6x128xf32>
    %744 = arith.addf %741, %743 : vector<12x6x128xf32>
    %745 = vector.broadcast %736 : f32 to vector<12x6x128xf32>
    %746 = arith.mulf %745, %705 : vector<12x6x128xf32>
    %747 = arith.addf %744, %746 : vector<12x6x128xf32>
    %748 = vector.broadcast %733 : f32 to vector<12x6x128xf32>
    %749 = arith.mulf %748, %702 : vector<12x6x128xf32>
    %750 = vector.broadcast %734 : f32 to vector<12x6x128xf32>
    %751 = arith.mulf %750, %696 : vector<12x6x128xf32>
    %752 = arith.addf %749, %751 : vector<12x6x128xf32>
    %753 = vector.broadcast %735 : f32 to vector<12x6x128xf32>
    %754 = arith.mulf %753, %705 : vector<12x6x128xf32>
    %755 = arith.addf %752, %754 : vector<12x6x128xf32>
    %756 = vector.broadcast %736 : f32 to vector<12x6x128xf32>
    %757 = arith.mulf %756, %699 : vector<12x6x128xf32>
    %758 = arith.addf %755, %757 : vector<12x6x128xf32>
    %759 = arith.addf %721, %747 : vector<12x6x128xf32>
    %760 = arith.addf %732, %758 : vector<12x6x128xf32>
    %c0_80 = arith.constant 0 : index
    %c8 = arith.constant 8 : index
    %761 = memref.load %arg4[%c0_80, %c8] : memref<6x12xf32, #tpu.memory_space<smem>>
    %c0_81 = arith.constant 0 : index
    %c9 = arith.constant 9 : index
    %762 = memref.load %arg4[%c0_81, %c9] : memref<6x12xf32, #tpu.memory_space<smem>>
    %c0_82 = arith.constant 0 : index
    %c10 = arith.constant 10 : index
    %763 = memref.load %arg4[%c0_82, %c10] : memref<6x12xf32, #tpu.memory_space<smem>>
    %c0_83 = arith.constant 0 : index
    %c11 = arith.constant 11 : index
    %764 = memref.load %arg4[%c0_83, %c11] : memref<6x12xf32, #tpu.memory_space<smem>>
    %765 = vector.broadcast %761 : f32 to vector<12x6x128xf32>
    %766 = arith.mulf %765, %691 : vector<12x6x128xf32>
    %767 = vector.broadcast %762 : f32 to vector<12x6x128xf32>
    %768 = arith.mulf %767, %703 : vector<12x6x128xf32>
    %769 = arith.addf %766, %768 : vector<12x6x128xf32>
    %770 = vector.broadcast %763 : f32 to vector<12x6x128xf32>
    %771 = arith.mulf %770, %694 : vector<12x6x128xf32>
    %772 = arith.addf %769, %771 : vector<12x6x128xf32>
    %773 = vector.broadcast %764 : f32 to vector<12x6x128xf32>
    %774 = arith.mulf %773, %706 : vector<12x6x128xf32>
    %775 = arith.addf %772, %774 : vector<12x6x128xf32>
    %776 = vector.broadcast %761 : f32 to vector<12x6x128xf32>
    %777 = arith.mulf %776, %703 : vector<12x6x128xf32>
    %778 = vector.broadcast %762 : f32 to vector<12x6x128xf32>
    %779 = arith.mulf %778, %697 : vector<12x6x128xf32>
    %780 = arith.addf %777, %779 : vector<12x6x128xf32>
    %781 = vector.broadcast %763 : f32 to vector<12x6x128xf32>
    %782 = arith.mulf %781, %706 : vector<12x6x128xf32>
    %783 = arith.addf %780, %782 : vector<12x6x128xf32>
    %784 = vector.broadcast %764 : f32 to vector<12x6x128xf32>
    %785 = arith.mulf %784, %700 : vector<12x6x128xf32>
    %786 = arith.addf %783, %785 : vector<12x6x128xf32>
    %787 = arith.addf %759, %775 : vector<12x6x128xf32>
    %788 = arith.addf %760, %786 : vector<12x6x128xf32>
    %789 = arith.maximumf %787, %788 : vector<12x6x128xf32>
    %790 = vector.extract_strided_slice %789 {offsets = [0, 0, 0], sizes = [1, 6, 128], strides = [1, 1, 1]} : vector<12x6x128xf32> to vector<1x6x128xf32>
    %791 = vector.shape_cast %790 : vector<1x6x128xf32> to vector<6x128xf32>
    %792 = vector.extract_strided_slice %789 {offsets = [1, 0, 0], sizes = [1, 6, 128], strides = [1, 1, 1]} : vector<12x6x128xf32> to vector<1x6x128xf32>
    %793 = vector.shape_cast %792 : vector<1x6x128xf32> to vector<6x128xf32>
    %794 = arith.maximumf %791, %793 : vector<6x128xf32>
    %795 = vector.extract_strided_slice %789 {offsets = [2, 0, 0], sizes = [1, 6, 128], strides = [1, 1, 1]} : vector<12x6x128xf32> to vector<1x6x128xf32>
    %796 = vector.shape_cast %795 : vector<1x6x128xf32> to vector<6x128xf32>
    %797 = vector.extract_strided_slice %789 {offsets = [3, 0, 0], sizes = [1, 6, 128], strides = [1, 1, 1]} : vector<12x6x128xf32> to vector<1x6x128xf32>
    %798 = vector.shape_cast %797 : vector<1x6x128xf32> to vector<6x128xf32>
    %799 = arith.maximumf %796, %798 : vector<6x128xf32>
    %800 = vector.extract_strided_slice %789 {offsets = [4, 0, 0], sizes = [1, 6, 128], strides = [1, 1, 1]} : vector<12x6x128xf32> to vector<1x6x128xf32>
    %801 = vector.shape_cast %800 : vector<1x6x128xf32> to vector<6x128xf32>
    %802 = vector.extract_strided_slice %789 {offsets = [5, 0, 0], sizes = [1, 6, 128], strides = [1, 1, 1]} : vector<12x6x128xf32> to vector<1x6x128xf32>
    %803 = vector.shape_cast %802 : vector<1x6x128xf32> to vector<6x128xf32>
    %804 = arith.maximumf %801, %803 : vector<6x128xf32>
    %805 = vector.extract_strided_slice %789 {offsets = [6, 0, 0], sizes = [1, 6, 128], strides = [1, 1, 1]} : vector<12x6x128xf32> to vector<1x6x128xf32>
    %806 = vector.shape_cast %805 : vector<1x6x128xf32> to vector<6x128xf32>
    %807 = vector.extract_strided_slice %789 {offsets = [7, 0, 0], sizes = [1, 6, 128], strides = [1, 1, 1]} : vector<12x6x128xf32> to vector<1x6x128xf32>
    %808 = vector.shape_cast %807 : vector<1x6x128xf32> to vector<6x128xf32>
    %809 = arith.maximumf %806, %808 : vector<6x128xf32>
    %810 = vector.extract_strided_slice %789 {offsets = [8, 0, 0], sizes = [1, 6, 128], strides = [1, 1, 1]} : vector<12x6x128xf32> to vector<1x6x128xf32>
    %811 = vector.shape_cast %810 : vector<1x6x128xf32> to vector<6x128xf32>
    %812 = vector.extract_strided_slice %789 {offsets = [9, 0, 0], sizes = [1, 6, 128], strides = [1, 1, 1]} : vector<12x6x128xf32> to vector<1x6x128xf32>
    %813 = vector.shape_cast %812 : vector<1x6x128xf32> to vector<6x128xf32>
    %814 = arith.maximumf %811, %813 : vector<6x128xf32>
    %815 = vector.extract_strided_slice %789 {offsets = [10, 0, 0], sizes = [1, 6, 128], strides = [1, 1, 1]} : vector<12x6x128xf32> to vector<1x6x128xf32>
    %816 = vector.shape_cast %815 : vector<1x6x128xf32> to vector<6x128xf32>
    %817 = vector.extract_strided_slice %789 {offsets = [11, 0, 0], sizes = [1, 6, 128], strides = [1, 1, 1]} : vector<12x6x128xf32> to vector<1x6x128xf32>
    %818 = vector.shape_cast %817 : vector<1x6x128xf32> to vector<6x128xf32>
    %819 = arith.maximumf %816, %818 : vector<6x128xf32>
    %820 = vector.shape_cast %794 : vector<6x128xf32> to vector<1x6x128xf32>
    %821 = vector.shape_cast %799 : vector<6x128xf32> to vector<1x6x128xf32>
    %822 = vector.shape_cast %804 : vector<6x128xf32> to vector<1x6x128xf32>
    %823 = vector.shape_cast %809 : vector<6x128xf32> to vector<1x6x128xf32>
    %824 = vector.shape_cast %814 : vector<6x128xf32> to vector<1x6x128xf32>
    %825 = vector.shape_cast %819 : vector<6x128xf32> to vector<1x6x128xf32>
    %826 = tpu.concatenate %820, %821, %822, %823, %824, %825 in 0 : vector<1x6x128xf32>, vector<1x6x128xf32>, vector<1x6x128xf32>, vector<1x6x128xf32>, vector<1x6x128xf32>, vector<1x6x128xf32> -> vector<6x6x128xf32>
    %c0_84 = arith.constant 0 : index
    %827 = memref.load %arg5[%c0_84] : memref<6xf32, #tpu.memory_space<smem>>
    %828 = vector.broadcast %827 : f32 to vector<6x6x128xf32>
    %829 = arith.addf %826, %828 : vector<6x6x128xf32>
    %cst_85 = arith.constant 0.000000e+00 : f32
    %830 = vector.broadcast %cst_85 : f32 to vector<6x6x128xf32>
    %831 = arith.maximumf %829, %830 : vector<6x6x128xf32>
    %832 = vector.extract_strided_slice %831 {offsets = [0, 0, 0], sizes = [1, 6, 128], strides = [1, 1, 1]} : vector<6x6x128xf32> to vector<1x6x128xf32>
    %833 = vector.shape_cast %832 : vector<1x6x128xf32> to vector<6x128xf32>
    %834 = vector.extract_strided_slice %831 {offsets = [1, 0, 0], sizes = [1, 6, 128], strides = [1, 1, 1]} : vector<6x6x128xf32> to vector<1x6x128xf32>
    %835 = vector.shape_cast %834 : vector<1x6x128xf32> to vector<6x128xf32>
    %836 = vector.extract_strided_slice %831 {offsets = [2, 0, 0], sizes = [1, 6, 128], strides = [1, 1, 1]} : vector<6x6x128xf32> to vector<1x6x128xf32>
    %837 = vector.shape_cast %836 : vector<1x6x128xf32> to vector<6x128xf32>
    %838 = vector.extract_strided_slice %831 {offsets = [3, 0, 0], sizes = [1, 6, 128], strides = [1, 1, 1]} : vector<6x6x128xf32> to vector<1x6x128xf32>
    %839 = vector.shape_cast %838 : vector<1x6x128xf32> to vector<6x128xf32>
    %840 = vector.extract_strided_slice %831 {offsets = [4, 0, 0], sizes = [1, 6, 128], strides = [1, 1, 1]} : vector<6x6x128xf32> to vector<1x6x128xf32>
    %841 = vector.shape_cast %840 : vector<1x6x128xf32> to vector<6x128xf32>
    %842 = vector.extract_strided_slice %831 {offsets = [5, 0, 0], sizes = [1, 6, 128], strides = [1, 1, 1]} : vector<6x6x128xf32> to vector<1x6x128xf32>
    %843 = vector.shape_cast %842 : vector<1x6x128xf32> to vector<6x128xf32>
    %c1_86 = arith.constant 1 : index
    %c0_87 = arith.constant 0 : index
    %844 = memref.load %arg4[%c1_86, %c0_87] : memref<6x12xf32, #tpu.memory_space<smem>>
    %c1_88 = arith.constant 1 : index
    %c1_89 = arith.constant 1 : index
    %845 = memref.load %arg4[%c1_88, %c1_89] : memref<6x12xf32, #tpu.memory_space<smem>>
    %c1_90 = arith.constant 1 : index
    %c2_91 = arith.constant 2 : index
    %846 = memref.load %arg4[%c1_90, %c2_91] : memref<6x12xf32, #tpu.memory_space<smem>>
    %c1_92 = arith.constant 1 : index
    %c3_93 = arith.constant 3 : index
    %847 = memref.load %arg4[%c1_92, %c3_93] : memref<6x12xf32, #tpu.memory_space<smem>>
    %848 = vector.broadcast %844 : f32 to vector<12x6x128xf32>
    %849 = arith.mulf %848, %689 : vector<12x6x128xf32>
    %850 = vector.broadcast %845 : f32 to vector<12x6x128xf32>
    %851 = arith.mulf %850, %701 : vector<12x6x128xf32>
    %852 = arith.addf %849, %851 : vector<12x6x128xf32>
    %853 = vector.broadcast %846 : f32 to vector<12x6x128xf32>
    %854 = arith.mulf %853, %692 : vector<12x6x128xf32>
    %855 = arith.addf %852, %854 : vector<12x6x128xf32>
    %856 = vector.broadcast %847 : f32 to vector<12x6x128xf32>
    %857 = arith.mulf %856, %704 : vector<12x6x128xf32>
    %858 = arith.addf %855, %857 : vector<12x6x128xf32>
    %859 = vector.broadcast %844 : f32 to vector<12x6x128xf32>
    %860 = arith.mulf %859, %701 : vector<12x6x128xf32>
    %861 = vector.broadcast %845 : f32 to vector<12x6x128xf32>
    %862 = arith.mulf %861, %695 : vector<12x6x128xf32>
    %863 = arith.addf %860, %862 : vector<12x6x128xf32>
    %864 = vector.broadcast %846 : f32 to vector<12x6x128xf32>
    %865 = arith.mulf %864, %704 : vector<12x6x128xf32>
    %866 = arith.addf %863, %865 : vector<12x6x128xf32>
    %867 = vector.broadcast %847 : f32 to vector<12x6x128xf32>
    %868 = arith.mulf %867, %698 : vector<12x6x128xf32>
    %869 = arith.addf %866, %868 : vector<12x6x128xf32>
    %c1_94 = arith.constant 1 : index
    %c4_95 = arith.constant 4 : index
    %870 = memref.load %arg4[%c1_94, %c4_95] : memref<6x12xf32, #tpu.memory_space<smem>>
    %c1_96 = arith.constant 1 : index
    %c5_97 = arith.constant 5 : index
    %871 = memref.load %arg4[%c1_96, %c5_97] : memref<6x12xf32, #tpu.memory_space<smem>>
    %c1_98 = arith.constant 1 : index
    %c6_99 = arith.constant 6 : index
    %872 = memref.load %arg4[%c1_98, %c6_99] : memref<6x12xf32, #tpu.memory_space<smem>>
    %c1_100 = arith.constant 1 : index
    %c7_101 = arith.constant 7 : index
    %873 = memref.load %arg4[%c1_100, %c7_101] : memref<6x12xf32, #tpu.memory_space<smem>>
    %874 = vector.broadcast %870 : f32 to vector<12x6x128xf32>
    %875 = arith.mulf %874, %690 : vector<12x6x128xf32>
    %876 = vector.broadcast %871 : f32 to vector<12x6x128xf32>
    %877 = arith.mulf %876, %702 : vector<12x6x128xf32>
    %878 = arith.addf %875, %877 : vector<12x6x128xf32>
    %879 = vector.broadcast %872 : f32 to vector<12x6x128xf32>
    %880 = arith.mulf %879, %693 : vector<12x6x128xf32>
    %881 = arith.addf %878, %880 : vector<12x6x128xf32>
    %882 = vector.broadcast %873 : f32 to vector<12x6x128xf32>
    %883 = arith.mulf %882, %705 : vector<12x6x128xf32>
    %884 = arith.addf %881, %883 : vector<12x6x128xf32>
    %885 = vector.broadcast %870 : f32 to vector<12x6x128xf32>
    %886 = arith.mulf %885, %702 : vector<12x6x128xf32>
    %887 = vector.broadcast %871 : f32 to vector<12x6x128xf32>
    %888 = arith.mulf %887, %696 : vector<12x6x128xf32>
    %889 = arith.addf %886, %888 : vector<12x6x128xf32>
    %890 = vector.broadcast %872 : f32 to vector<12x6x128xf32>
    %891 = arith.mulf %890, %705 : vector<12x6x128xf32>
    %892 = arith.addf %889, %891 : vector<12x6x128xf32>
    %893 = vector.broadcast %873 : f32 to vector<12x6x128xf32>
    %894 = arith.mulf %893, %699 : vector<12x6x128xf32>
    %895 = arith.addf %892, %894 : vector<12x6x128xf32>
    %896 = arith.addf %858, %884 : vector<12x6x128xf32>
    %897 = arith.addf %869, %895 : vector<12x6x128xf32>
    %c1_102 = arith.constant 1 : index
    %c8_103 = arith.constant 8 : index
    %898 = memref.load %arg4[%c1_102, %c8_103] : memref<6x12xf32, #tpu.memory_space<smem>>
    %c1_104 = arith.constant 1 : index
    %c9_105 = arith.constant 9 : index
    %899 = memref.load %arg4[%c1_104, %c9_105] : memref<6x12xf32, #tpu.memory_space<smem>>
    %c1_106 = arith.constant 1 : index
    %c10_107 = arith.constant 10 : index
    %900 = memref.load %arg4[%c1_106, %c10_107] : memref<6x12xf32, #tpu.memory_space<smem>>
    %c1_108 = arith.constant 1 : index
    %c11_109 = arith.constant 11 : index
    %901 = memref.load %arg4[%c1_108, %c11_109] : memref<6x12xf32, #tpu.memory_space<smem>>
    %902 = vector.broadcast %898 : f32 to vector<12x6x128xf32>
    %903 = arith.mulf %902, %691 : vector<12x6x128xf32>
    %904 = vector.broadcast %899 : f32 to vector<12x6x128xf32>
    %905 = arith.mulf %904, %703 : vector<12x6x128xf32>
    %906 = arith.addf %903, %905 : vector<12x6x128xf32>
    %907 = vector.broadcast %900 : f32 to vector<12x6x128xf32>
    %908 = arith.mulf %907, %694 : vector<12x6x128xf32>
    %909 = arith.addf %906, %908 : vector<12x6x128xf32>
    %910 = vector.broadcast %901 : f32 to vector<12x6x128xf32>
    %911 = arith.mulf %910, %706 : vector<12x6x128xf32>
    %912 = arith.addf %909, %911 : vector<12x6x128xf32>
    %913 = vector.broadcast %898 : f32 to vector<12x6x128xf32>
    %914 = arith.mulf %913, %703 : vector<12x6x128xf32>
    %915 = vector.broadcast %899 : f32 to vector<12x6x128xf32>
    %916 = arith.mulf %915, %697 : vector<12x6x128xf32>
    %917 = arith.addf %914, %916 : vector<12x6x128xf32>
    %918 = vector.broadcast %900 : f32 to vector<12x6x128xf32>
    %919 = arith.mulf %918, %706 : vector<12x6x128xf32>
    %920 = arith.addf %917, %919 : vector<12x6x128xf32>
    %921 = vector.broadcast %901 : f32 to vector<12x6x128xf32>
    %922 = arith.mulf %921, %700 : vector<12x6x128xf32>
    %923 = arith.addf %920, %922 : vector<12x6x128xf32>
    %924 = arith.addf %896, %912 : vector<12x6x128xf32>
    %925 = arith.addf %897, %923 : vector<12x6x128xf32>
    %926 = arith.maximumf %924, %925 : vector<12x6x128xf32>
    %927 = vector.extract_strided_slice %926 {offsets = [0, 0, 0], sizes = [1, 6, 128], strides = [1, 1, 1]} : vector<12x6x128xf32> to vector<1x6x128xf32>
    %928 = vector.shape_cast %927 : vector<1x6x128xf32> to vector<6x128xf32>
    %929 = vector.extract_strided_slice %926 {offsets = [1, 0, 0], sizes = [1, 6, 128], strides = [1, 1, 1]} : vector<12x6x128xf32> to vector<1x6x128xf32>
    %930 = vector.shape_cast %929 : vector<1x6x128xf32> to vector<6x128xf32>
    %931 = arith.maximumf %928, %930 : vector<6x128xf32>
    %932 = vector.extract_strided_slice %926 {offsets = [2, 0, 0], sizes = [1, 6, 128], strides = [1, 1, 1]} : vector<12x6x128xf32> to vector<1x6x128xf32>
    %933 = vector.shape_cast %932 : vector<1x6x128xf32> to vector<6x128xf32>
    %934 = vector.extract_strided_slice %926 {offsets = [3, 0, 0], sizes = [1, 6, 128], strides = [1, 1, 1]} : vector<12x6x128xf32> to vector<1x6x128xf32>
    %935 = vector.shape_cast %934 : vector<1x6x128xf32> to vector<6x128xf32>
    %936 = arith.maximumf %933, %935 : vector<6x128xf32>
    %937 = vector.extract_strided_slice %926 {offsets = [4, 0, 0], sizes = [1, 6, 128], strides = [1, 1, 1]} : vector<12x6x128xf32> to vector<1x6x128xf32>
    %938 = vector.shape_cast %937 : vector<1x6x128xf32> to vector<6x128xf32>
    %939 = vector.extract_strided_slice %926 {offsets = [5, 0, 0], sizes = [1, 6, 128], strides = [1, 1, 1]} : vector<12x6x128xf32> to vector<1x6x128xf32>
    %940 = vector.shape_cast %939 : vector<1x6x128xf32> to vector<6x128xf32>
    %941 = arith.maximumf %938, %940 : vector<6x128xf32>
    %942 = vector.extract_strided_slice %926 {offsets = [6, 0, 0], sizes = [1, 6, 128], strides = [1, 1, 1]} : vector<12x6x128xf32> to vector<1x6x128xf32>
    %943 = vector.shape_cast %942 : vector<1x6x128xf32> to vector<6x128xf32>
    %944 = vector.extract_strided_slice %926 {offsets = [7, 0, 0], sizes = [1, 6, 128], strides = [1, 1, 1]} : vector<12x6x128xf32> to vector<1x6x128xf32>
    %945 = vector.shape_cast %944 : vector<1x6x128xf32> to vector<6x128xf32>
    %946 = arith.maximumf %943, %945 : vector<6x128xf32>
    %947 = vector.extract_strided_slice %926 {offsets = [8, 0, 0], sizes = [1, 6, 128], strides = [1, 1, 1]} : vector<12x6x128xf32> to vector<1x6x128xf32>
    %948 = vector.shape_cast %947 : vector<1x6x128xf32> to vector<6x128xf32>
    %949 = vector.extract_strided_slice %926 {offsets = [9, 0, 0], sizes = [1, 6, 128], strides = [1, 1, 1]} : vector<12x6x128xf32> to vector<1x6x128xf32>
    %950 = vector.shape_cast %949 : vector<1x6x128xf32> to vector<6x128xf32>
    %951 = arith.maximumf %948, %950 : vector<6x128xf32>
    %952 = vector.extract_strided_slice %926 {offsets = [10, 0, 0], sizes = [1, 6, 128], strides = [1, 1, 1]} : vector<12x6x128xf32> to vector<1x6x128xf32>
    %953 = vector.shape_cast %952 : vector<1x6x128xf32> to vector<6x128xf32>
    %954 = vector.extract_strided_slice %926 {offsets = [11, 0, 0], sizes = [1, 6, 128], strides = [1, 1, 1]} : vector<12x6x128xf32> to vector<1x6x128xf32>
    %955 = vector.shape_cast %954 : vector<1x6x128xf32> to vector<6x128xf32>
    %956 = arith.maximumf %953, %955 : vector<6x128xf32>
    %957 = vector.shape_cast %931 : vector<6x128xf32> to vector<1x6x128xf32>
    %958 = vector.shape_cast %936 : vector<6x128xf32> to vector<1x6x128xf32>
    %959 = vector.shape_cast %941 : vector<6x128xf32> to vector<1x6x128xf32>
    %960 = vector.shape_cast %946 : vector<6x128xf32> to vector<1x6x128xf32>
    %961 = vector.shape_cast %951 : vector<6x128xf32> to vector<1x6x128xf32>
    %962 = vector.shape_cast %956 : vector<6x128xf32> to vector<1x6x128xf32>
    %963 = tpu.concatenate %957, %958, %959, %960, %961, %962 in 0 : vector<1x6x128xf32>, vector<1x6x128xf32>, vector<1x6x128xf32>, vector<1x6x128xf32>, vector<1x6x128xf32>, vector<1x6x128xf32> -> vector<6x6x128xf32>
    %c1_110 = arith.constant 1 : index
    %964 = memref.load %arg5[%c1_110] : memref<6xf32, #tpu.memory_space<smem>>
    %965 = vector.broadcast %964 : f32 to vector<6x6x128xf32>
    %966 = arith.addf %963, %965 : vector<6x6x128xf32>
    %cst_111 = arith.constant 0.000000e+00 : f32
    %967 = vector.broadcast %cst_111 : f32 to vector<6x6x128xf32>
    %968 = arith.maximumf %966, %967 : vector<6x6x128xf32>
    %969 = vector.extract_strided_slice %968 {offsets = [0, 0, 0], sizes = [1, 6, 128], strides = [1, 1, 1]} : vector<6x6x128xf32> to vector<1x6x128xf32>
    %970 = vector.shape_cast %969 : vector<1x6x128xf32> to vector<6x128xf32>
    %971 = vector.extract_strided_slice %968 {offsets = [1, 0, 0], sizes = [1, 6, 128], strides = [1, 1, 1]} : vector<6x6x128xf32> to vector<1x6x128xf32>
    %972 = vector.shape_cast %971 : vector<1x6x128xf32> to vector<6x128xf32>
    %973 = vector.extract_strided_slice %968 {offsets = [2, 0, 0], sizes = [1, 6, 128], strides = [1, 1, 1]} : vector<6x6x128xf32> to vector<1x6x128xf32>
    %974 = vector.shape_cast %973 : vector<1x6x128xf32> to vector<6x128xf32>
    %975 = vector.extract_strided_slice %968 {offsets = [3, 0, 0], sizes = [1, 6, 128], strides = [1, 1, 1]} : vector<6x6x128xf32> to vector<1x6x128xf32>
    %976 = vector.shape_cast %975 : vector<1x6x128xf32> to vector<6x128xf32>
    %977 = vector.extract_strided_slice %968 {offsets = [4, 0, 0], sizes = [1, 6, 128], strides = [1, 1, 1]} : vector<6x6x128xf32> to vector<1x6x128xf32>
    %978 = vector.shape_cast %977 : vector<1x6x128xf32> to vector<6x128xf32>
    %979 = vector.extract_strided_slice %968 {offsets = [5, 0, 0], sizes = [1, 6, 128], strides = [1, 1, 1]} : vector<6x6x128xf32> to vector<1x6x128xf32>
    %980 = vector.shape_cast %979 : vector<1x6x128xf32> to vector<6x128xf32>
    %c2_112 = arith.constant 2 : index
    %c0_113 = arith.constant 0 : index
    %981 = memref.load %arg4[%c2_112, %c0_113] : memref<6x12xf32, #tpu.memory_space<smem>>
    %c2_114 = arith.constant 2 : index
    %c1_115 = arith.constant 1 : index
    %982 = memref.load %arg4[%c2_114, %c1_115] : memref<6x12xf32, #tpu.memory_space<smem>>
    %c2_116 = arith.constant 2 : index
    %c2_117 = arith.constant 2 : index
    %983 = memref.load %arg4[%c2_116, %c2_117] : memref<6x12xf32, #tpu.memory_space<smem>>
    %c2_118 = arith.constant 2 : index
    %c3_119 = arith.constant 3 : index
    %984 = memref.load %arg4[%c2_118, %c3_119] : memref<6x12xf32, #tpu.memory_space<smem>>
    %985 = vector.broadcast %981 : f32 to vector<12x6x128xf32>
    %986 = arith.mulf %985, %689 : vector<12x6x128xf32>
    %987 = vector.broadcast %982 : f32 to vector<12x6x128xf32>
    %988 = arith.mulf %987, %701 : vector<12x6x128xf32>
    %989 = arith.addf %986, %988 : vector<12x6x128xf32>
    %990 = vector.broadcast %983 : f32 to vector<12x6x128xf32>
    %991 = arith.mulf %990, %692 : vector<12x6x128xf32>
    %992 = arith.addf %989, %991 : vector<12x6x128xf32>
    %993 = vector.broadcast %984 : f32 to vector<12x6x128xf32>
    %994 = arith.mulf %993, %704 : vector<12x6x128xf32>
    %995 = arith.addf %992, %994 : vector<12x6x128xf32>
    %996 = vector.broadcast %981 : f32 to vector<12x6x128xf32>
    %997 = arith.mulf %996, %701 : vector<12x6x128xf32>
    %998 = vector.broadcast %982 : f32 to vector<12x6x128xf32>
    %999 = arith.mulf %998, %695 : vector<12x6x128xf32>
    %1000 = arith.addf %997, %999 : vector<12x6x128xf32>
    %1001 = vector.broadcast %983 : f32 to vector<12x6x128xf32>
    %1002 = arith.mulf %1001, %704 : vector<12x6x128xf32>
    %1003 = arith.addf %1000, %1002 : vector<12x6x128xf32>
    %1004 = vector.broadcast %984 : f32 to vector<12x6x128xf32>
    %1005 = arith.mulf %1004, %698 : vector<12x6x128xf32>
    %1006 = arith.addf %1003, %1005 : vector<12x6x128xf32>
    %c2_120 = arith.constant 2 : index
    %c4_121 = arith.constant 4 : index
    %1007 = memref.load %arg4[%c2_120, %c4_121] : memref<6x12xf32, #tpu.memory_space<smem>>
    %c2_122 = arith.constant 2 : index
    %c5_123 = arith.constant 5 : index
    %1008 = memref.load %arg4[%c2_122, %c5_123] : memref<6x12xf32, #tpu.memory_space<smem>>
    %c2_124 = arith.constant 2 : index
    %c6_125 = arith.constant 6 : index
    %1009 = memref.load %arg4[%c2_124, %c6_125] : memref<6x12xf32, #tpu.memory_space<smem>>
    %c2_126 = arith.constant 2 : index
    %c7_127 = arith.constant 7 : index
    %1010 = memref.load %arg4[%c2_126, %c7_127] : memref<6x12xf32, #tpu.memory_space<smem>>
    %1011 = vector.broadcast %1007 : f32 to vector<12x6x128xf32>
    %1012 = arith.mulf %1011, %690 : vector<12x6x128xf32>
    %1013 = vector.broadcast %1008 : f32 to vector<12x6x128xf32>
    %1014 = arith.mulf %1013, %702 : vector<12x6x128xf32>
    %1015 = arith.addf %1012, %1014 : vector<12x6x128xf32>
    %1016 = vector.broadcast %1009 : f32 to vector<12x6x128xf32>
    %1017 = arith.mulf %1016, %693 : vector<12x6x128xf32>
    %1018 = arith.addf %1015, %1017 : vector<12x6x128xf32>
    %1019 = vector.broadcast %1010 : f32 to vector<12x6x128xf32>
    %1020 = arith.mulf %1019, %705 : vector<12x6x128xf32>
    %1021 = arith.addf %1018, %1020 : vector<12x6x128xf32>
    %1022 = vector.broadcast %1007 : f32 to vector<12x6x128xf32>
    %1023 = arith.mulf %1022, %702 : vector<12x6x128xf32>
    %1024 = vector.broadcast %1008 : f32 to vector<12x6x128xf32>
    %1025 = arith.mulf %1024, %696 : vector<12x6x128xf32>
    %1026 = arith.addf %1023, %1025 : vector<12x6x128xf32>
    %1027 = vector.broadcast %1009 : f32 to vector<12x6x128xf32>
    %1028 = arith.mulf %1027, %705 : vector<12x6x128xf32>
    %1029 = arith.addf %1026, %1028 : vector<12x6x128xf32>
    %1030 = vector.broadcast %1010 : f32 to vector<12x6x128xf32>
    %1031 = arith.mulf %1030, %699 : vector<12x6x128xf32>
    %1032 = arith.addf %1029, %1031 : vector<12x6x128xf32>
    %1033 = arith.addf %995, %1021 : vector<12x6x128xf32>
    %1034 = arith.addf %1006, %1032 : vector<12x6x128xf32>
    %c2_128 = arith.constant 2 : index
    %c8_129 = arith.constant 8 : index
    %1035 = memref.load %arg4[%c2_128, %c8_129] : memref<6x12xf32, #tpu.memory_space<smem>>
    %c2_130 = arith.constant 2 : index
    %c9_131 = arith.constant 9 : index
    %1036 = memref.load %arg4[%c2_130, %c9_131] : memref<6x12xf32, #tpu.memory_space<smem>>
    %c2_132 = arith.constant 2 : index
    %c10_133 = arith.constant 10 : index
    %1037 = memref.load %arg4[%c2_132, %c10_133] : memref<6x12xf32, #tpu.memory_space<smem>>
    %c2_134 = arith.constant 2 : index
    %c11_135 = arith.constant 11 : index
    %1038 = memref.load %arg4[%c2_134, %c11_135] : memref<6x12xf32, #tpu.memory_space<smem>>
    %1039 = vector.broadcast %1035 : f32 to vector<12x6x128xf32>
    %1040 = arith.mulf %1039, %691 : vector<12x6x128xf32>
    %1041 = vector.broadcast %1036 : f32 to vector<12x6x128xf32>
    %1042 = arith.mulf %1041, %703 : vector<12x6x128xf32>
    %1043 = arith.addf %1040, %1042 : vector<12x6x128xf32>
    %1044 = vector.broadcast %1037 : f32 to vector<12x6x128xf32>
    %1045 = arith.mulf %1044, %694 : vector<12x6x128xf32>
    %1046 = arith.addf %1043, %1045 : vector<12x6x128xf32>
    %1047 = vector.broadcast %1038 : f32 to vector<12x6x128xf32>
    %1048 = arith.mulf %1047, %706 : vector<12x6x128xf32>
    %1049 = arith.addf %1046, %1048 : vector<12x6x128xf32>
    %1050 = vector.broadcast %1035 : f32 to vector<12x6x128xf32>
    %1051 = arith.mulf %1050, %703 : vector<12x6x128xf32>
    %1052 = vector.broadcast %1036 : f32 to vector<12x6x128xf32>
    %1053 = arith.mulf %1052, %697 : vector<12x6x128xf32>
    %1054 = arith.addf %1051, %1053 : vector<12x6x128xf32>
    %1055 = vector.broadcast %1037 : f32 to vector<12x6x128xf32>
    %1056 = arith.mulf %1055, %706 : vector<12x6x128xf32>
    %1057 = arith.addf %1054, %1056 : vector<12x6x128xf32>
    %1058 = vector.broadcast %1038 : f32 to vector<12x6x128xf32>
    %1059 = arith.mulf %1058, %700 : vector<12x6x128xf32>
    %1060 = arith.addf %1057, %1059 : vector<12x6x128xf32>
    %1061 = arith.addf %1033, %1049 : vector<12x6x128xf32>
    %1062 = arith.addf %1034, %1060 : vector<12x6x128xf32>
    %1063 = arith.maximumf %1061, %1062 : vector<12x6x128xf32>
    %1064 = vector.extract_strided_slice %1063 {offsets = [0, 0, 0], sizes = [1, 6, 128], strides = [1, 1, 1]} : vector<12x6x128xf32> to vector<1x6x128xf32>
    %1065 = vector.shape_cast %1064 : vector<1x6x128xf32> to vector<6x128xf32>
    %1066 = vector.extract_strided_slice %1063 {offsets = [1, 0, 0], sizes = [1, 6, 128], strides = [1, 1, 1]} : vector<12x6x128xf32> to vector<1x6x128xf32>
    %1067 = vector.shape_cast %1066 : vector<1x6x128xf32> to vector<6x128xf32>
    %1068 = arith.maximumf %1065, %1067 : vector<6x128xf32>
    %1069 = vector.extract_strided_slice %1063 {offsets = [2, 0, 0], sizes = [1, 6, 128], strides = [1, 1, 1]} : vector<12x6x128xf32> to vector<1x6x128xf32>
    %1070 = vector.shape_cast %1069 : vector<1x6x128xf32> to vector<6x128xf32>
    %1071 = vector.extract_strided_slice %1063 {offsets = [3, 0, 0], sizes = [1, 6, 128], strides = [1, 1, 1]} : vector<12x6x128xf32> to vector<1x6x128xf32>
    %1072 = vector.shape_cast %1071 : vector<1x6x128xf32> to vector<6x128xf32>
    %1073 = arith.maximumf %1070, %1072 : vector<6x128xf32>
    %1074 = vector.extract_strided_slice %1063 {offsets = [4, 0, 0], sizes = [1, 6, 128], strides = [1, 1, 1]} : vector<12x6x128xf32> to vector<1x6x128xf32>
    %1075 = vector.shape_cast %1074 : vector<1x6x128xf32> to vector<6x128xf32>
    %1076 = vector.extract_strided_slice %1063 {offsets = [5, 0, 0], sizes = [1, 6, 128], strides = [1, 1, 1]} : vector<12x6x128xf32> to vector<1x6x128xf32>
    %1077 = vector.shape_cast %1076 : vector<1x6x128xf32> to vector<6x128xf32>
    %1078 = arith.maximumf %1075, %1077 : vector<6x128xf32>
    %1079 = vector.extract_strided_slice %1063 {offsets = [6, 0, 0], sizes = [1, 6, 128], strides = [1, 1, 1]} : vector<12x6x128xf32> to vector<1x6x128xf32>
    %1080 = vector.shape_cast %1079 : vector<1x6x128xf32> to vector<6x128xf32>
    %1081 = vector.extract_strided_slice %1063 {offsets = [7, 0, 0], sizes = [1, 6, 128], strides = [1, 1, 1]} : vector<12x6x128xf32> to vector<1x6x128xf32>
    %1082 = vector.shape_cast %1081 : vector<1x6x128xf32> to vector<6x128xf32>
    %1083 = arith.maximumf %1080, %1082 : vector<6x128xf32>
    %1084 = vector.extract_strided_slice %1063 {offsets = [8, 0, 0], sizes = [1, 6, 128], strides = [1, 1, 1]} : vector<12x6x128xf32> to vector<1x6x128xf32>
    %1085 = vector.shape_cast %1084 : vector<1x6x128xf32> to vector<6x128xf32>
    %1086 = vector.extract_strided_slice %1063 {offsets = [9, 0, 0], sizes = [1, 6, 128], strides = [1, 1, 1]} : vector<12x6x128xf32> to vector<1x6x128xf32>
    %1087 = vector.shape_cast %1086 : vector<1x6x128xf32> to vector<6x128xf32>
    %1088 = arith.maximumf %1085, %1087 : vector<6x128xf32>
    %1089 = vector.extract_strided_slice %1063 {offsets = [10, 0, 0], sizes = [1, 6, 128], strides = [1, 1, 1]} : vector<12x6x128xf32> to vector<1x6x128xf32>
    %1090 = vector.shape_cast %1089 : vector<1x6x128xf32> to vector<6x128xf32>
    %1091 = vector.extract_strided_slice %1063 {offsets = [11, 0, 0], sizes = [1, 6, 128], strides = [1, 1, 1]} : vector<12x6x128xf32> to vector<1x6x128xf32>
    %1092 = vector.shape_cast %1091 : vector<1x6x128xf32> to vector<6x128xf32>
    %1093 = arith.maximumf %1090, %1092 : vector<6x128xf32>
    %1094 = vector.shape_cast %1068 : vector<6x128xf32> to vector<1x6x128xf32>
    %1095 = vector.shape_cast %1073 : vector<6x128xf32> to vector<1x6x128xf32>
    %1096 = vector.shape_cast %1078 : vector<6x128xf32> to vector<1x6x128xf32>
    %1097 = vector.shape_cast %1083 : vector<6x128xf32> to vector<1x6x128xf32>
    %1098 = vector.shape_cast %1088 : vector<6x128xf32> to vector<1x6x128xf32>
    %1099 = vector.shape_cast %1093 : vector<6x128xf32> to vector<1x6x128xf32>
    %1100 = tpu.concatenate %1094, %1095, %1096, %1097, %1098, %1099 in 0 : vector<1x6x128xf32>, vector<1x6x128xf32>, vector<1x6x128xf32>, vector<1x6x128xf32>, vector<1x6x128xf32>, vector<1x6x128xf32> -> vector<6x6x128xf32>
    %c2_136 = arith.constant 2 : index
    %1101 = memref.load %arg5[%c2_136] : memref<6xf32, #tpu.memory_space<smem>>
    %1102 = vector.broadcast %1101 : f32 to vector<6x6x128xf32>
    %1103 = arith.addf %1100, %1102 : vector<6x6x128xf32>
    %cst_137 = arith.constant 0.000000e+00 : f32
    %1104 = vector.broadcast %cst_137 : f32 to vector<6x6x128xf32>
    %1105 = arith.maximumf %1103, %1104 : vector<6x6x128xf32>
    %1106 = vector.extract_strided_slice %1105 {offsets = [0, 0, 0], sizes = [1, 6, 128], strides = [1, 1, 1]} : vector<6x6x128xf32> to vector<1x6x128xf32>
    %1107 = vector.shape_cast %1106 : vector<1x6x128xf32> to vector<6x128xf32>
    %1108 = vector.extract_strided_slice %1105 {offsets = [1, 0, 0], sizes = [1, 6, 128], strides = [1, 1, 1]} : vector<6x6x128xf32> to vector<1x6x128xf32>
    %1109 = vector.shape_cast %1108 : vector<1x6x128xf32> to vector<6x128xf32>
    %1110 = vector.extract_strided_slice %1105 {offsets = [2, 0, 0], sizes = [1, 6, 128], strides = [1, 1, 1]} : vector<6x6x128xf32> to vector<1x6x128xf32>
    %1111 = vector.shape_cast %1110 : vector<1x6x128xf32> to vector<6x128xf32>
    %1112 = vector.extract_strided_slice %1105 {offsets = [3, 0, 0], sizes = [1, 6, 128], strides = [1, 1, 1]} : vector<6x6x128xf32> to vector<1x6x128xf32>
    %1113 = vector.shape_cast %1112 : vector<1x6x128xf32> to vector<6x128xf32>
    %1114 = vector.extract_strided_slice %1105 {offsets = [4, 0, 0], sizes = [1, 6, 128], strides = [1, 1, 1]} : vector<6x6x128xf32> to vector<1x6x128xf32>
    %1115 = vector.shape_cast %1114 : vector<1x6x128xf32> to vector<6x128xf32>
    %1116 = vector.extract_strided_slice %1105 {offsets = [5, 0, 0], sizes = [1, 6, 128], strides = [1, 1, 1]} : vector<6x6x128xf32> to vector<1x6x128xf32>
    %1117 = vector.shape_cast %1116 : vector<1x6x128xf32> to vector<6x128xf32>
    %c3_138 = arith.constant 3 : index
    %c0_139 = arith.constant 0 : index
    %1118 = memref.load %arg4[%c3_138, %c0_139] : memref<6x12xf32, #tpu.memory_space<smem>>
    %c3_140 = arith.constant 3 : index
    %c1_141 = arith.constant 1 : index
    %1119 = memref.load %arg4[%c3_140, %c1_141] : memref<6x12xf32, #tpu.memory_space<smem>>
    %c3_142 = arith.constant 3 : index
    %c2_143 = arith.constant 2 : index
    %1120 = memref.load %arg4[%c3_142, %c2_143] : memref<6x12xf32, #tpu.memory_space<smem>>
    %c3_144 = arith.constant 3 : index
    %c3_145 = arith.constant 3 : index
    %1121 = memref.load %arg4[%c3_144, %c3_145] : memref<6x12xf32, #tpu.memory_space<smem>>
    %1122 = vector.broadcast %1118 : f32 to vector<12x6x128xf32>
    %1123 = arith.mulf %1122, %689 : vector<12x6x128xf32>
    %1124 = vector.broadcast %1119 : f32 to vector<12x6x128xf32>
    %1125 = arith.mulf %1124, %701 : vector<12x6x128xf32>
    %1126 = arith.addf %1123, %1125 : vector<12x6x128xf32>
    %1127 = vector.broadcast %1120 : f32 to vector<12x6x128xf32>
    %1128 = arith.mulf %1127, %692 : vector<12x6x128xf32>
    %1129 = arith.addf %1126, %1128 : vector<12x6x128xf32>
    %1130 = vector.broadcast %1121 : f32 to vector<12x6x128xf32>
    %1131 = arith.mulf %1130, %704 : vector<12x6x128xf32>
    %1132 = arith.addf %1129, %1131 : vector<12x6x128xf32>
    %1133 = vector.broadcast %1118 : f32 to vector<12x6x128xf32>
    %1134 = arith.mulf %1133, %701 : vector<12x6x128xf32>
    %1135 = vector.broadcast %1119 : f32 to vector<12x6x128xf32>
    %1136 = arith.mulf %1135, %695 : vector<12x6x128xf32>
    %1137 = arith.addf %1134, %1136 : vector<12x6x128xf32>
    %1138 = vector.broadcast %1120 : f32 to vector<12x6x128xf32>
    %1139 = arith.mulf %1138, %704 : vector<12x6x128xf32>
    %1140 = arith.addf %1137, %1139 : vector<12x6x128xf32>
    %1141 = vector.broadcast %1121 : f32 to vector<12x6x128xf32>
    %1142 = arith.mulf %1141, %698 : vector<12x6x128xf32>
    %1143 = arith.addf %1140, %1142 : vector<12x6x128xf32>
    %c3_146 = arith.constant 3 : index
    %c4_147 = arith.constant 4 : index
    %1144 = memref.load %arg4[%c3_146, %c4_147] : memref<6x12xf32, #tpu.memory_space<smem>>
    %c3_148 = arith.constant 3 : index
    %c5_149 = arith.constant 5 : index
    %1145 = memref.load %arg4[%c3_148, %c5_149] : memref<6x12xf32, #tpu.memory_space<smem>>
    %c3_150 = arith.constant 3 : index
    %c6_151 = arith.constant 6 : index
    %1146 = memref.load %arg4[%c3_150, %c6_151] : memref<6x12xf32, #tpu.memory_space<smem>>
    %c3_152 = arith.constant 3 : index
    %c7_153 = arith.constant 7 : index
    %1147 = memref.load %arg4[%c3_152, %c7_153] : memref<6x12xf32, #tpu.memory_space<smem>>
    %1148 = vector.broadcast %1144 : f32 to vector<12x6x128xf32>
    %1149 = arith.mulf %1148, %690 : vector<12x6x128xf32>
    %1150 = vector.broadcast %1145 : f32 to vector<12x6x128xf32>
    %1151 = arith.mulf %1150, %702 : vector<12x6x128xf32>
    %1152 = arith.addf %1149, %1151 : vector<12x6x128xf32>
    %1153 = vector.broadcast %1146 : f32 to vector<12x6x128xf32>
    %1154 = arith.mulf %1153, %693 : vector<12x6x128xf32>
    %1155 = arith.addf %1152, %1154 : vector<12x6x128xf32>
    %1156 = vector.broadcast %1147 : f32 to vector<12x6x128xf32>
    %1157 = arith.mulf %1156, %705 : vector<12x6x128xf32>
    %1158 = arith.addf %1155, %1157 : vector<12x6x128xf32>
    %1159 = vector.broadcast %1144 : f32 to vector<12x6x128xf32>
    %1160 = arith.mulf %1159, %702 : vector<12x6x128xf32>
    %1161 = vector.broadcast %1145 : f32 to vector<12x6x128xf32>
    %1162 = arith.mulf %1161, %696 : vector<12x6x128xf32>
    %1163 = arith.addf %1160, %1162 : vector<12x6x128xf32>
    %1164 = vector.broadcast %1146 : f32 to vector<12x6x128xf32>
    %1165 = arith.mulf %1164, %705 : vector<12x6x128xf32>
    %1166 = arith.addf %1163, %1165 : vector<12x6x128xf32>
    %1167 = vector.broadcast %1147 : f32 to vector<12x6x128xf32>
    %1168 = arith.mulf %1167, %699 : vector<12x6x128xf32>
    %1169 = arith.addf %1166, %1168 : vector<12x6x128xf32>
    %1170 = arith.addf %1132, %1158 : vector<12x6x128xf32>
    %1171 = arith.addf %1143, %1169 : vector<12x6x128xf32>
    %c3_154 = arith.constant 3 : index
    %c8_155 = arith.constant 8 : index
    %1172 = memref.load %arg4[%c3_154, %c8_155] : memref<6x12xf32, #tpu.memory_space<smem>>
    %c3_156 = arith.constant 3 : index
    %c9_157 = arith.constant 9 : index
    %1173 = memref.load %arg4[%c3_156, %c9_157] : memref<6x12xf32, #tpu.memory_space<smem>>
    %c3_158 = arith.constant 3 : index
    %c10_159 = arith.constant 10 : index
    %1174 = memref.load %arg4[%c3_158, %c10_159] : memref<6x12xf32, #tpu.memory_space<smem>>
    %c3_160 = arith.constant 3 : index
    %c11_161 = arith.constant 11 : index
    %1175 = memref.load %arg4[%c3_160, %c11_161] : memref<6x12xf32, #tpu.memory_space<smem>>
    %1176 = vector.broadcast %1172 : f32 to vector<12x6x128xf32>
    %1177 = arith.mulf %1176, %691 : vector<12x6x128xf32>
    %1178 = vector.broadcast %1173 : f32 to vector<12x6x128xf32>
    %1179 = arith.mulf %1178, %703 : vector<12x6x128xf32>
    %1180 = arith.addf %1177, %1179 : vector<12x6x128xf32>
    %1181 = vector.broadcast %1174 : f32 to vector<12x6x128xf32>
    %1182 = arith.mulf %1181, %694 : vector<12x6x128xf32>
    %1183 = arith.addf %1180, %1182 : vector<12x6x128xf32>
    %1184 = vector.broadcast %1175 : f32 to vector<12x6x128xf32>
    %1185 = arith.mulf %1184, %706 : vector<12x6x128xf32>
    %1186 = arith.addf %1183, %1185 : vector<12x6x128xf32>
    %1187 = vector.broadcast %1172 : f32 to vector<12x6x128xf32>
    %1188 = arith.mulf %1187, %703 : vector<12x6x128xf32>
    %1189 = vector.broadcast %1173 : f32 to vector<12x6x128xf32>
    %1190 = arith.mulf %1189, %697 : vector<12x6x128xf32>
    %1191 = arith.addf %1188, %1190 : vector<12x6x128xf32>
    %1192 = vector.broadcast %1174 : f32 to vector<12x6x128xf32>
    %1193 = arith.mulf %1192, %706 : vector<12x6x128xf32>
    %1194 = arith.addf %1191, %1193 : vector<12x6x128xf32>
    %1195 = vector.broadcast %1175 : f32 to vector<12x6x128xf32>
    %1196 = arith.mulf %1195, %700 : vector<12x6x128xf32>
    %1197 = arith.addf %1194, %1196 : vector<12x6x128xf32>
    %1198 = arith.addf %1170, %1186 : vector<12x6x128xf32>
    %1199 = arith.addf %1171, %1197 : vector<12x6x128xf32>
    %1200 = arith.maximumf %1198, %1199 : vector<12x6x128xf32>
    %1201 = vector.extract_strided_slice %1200 {offsets = [0, 0, 0], sizes = [1, 6, 128], strides = [1, 1, 1]} : vector<12x6x128xf32> to vector<1x6x128xf32>
    %1202 = vector.shape_cast %1201 : vector<1x6x128xf32> to vector<6x128xf32>
    %1203 = vector.extract_strided_slice %1200 {offsets = [1, 0, 0], sizes = [1, 6, 128], strides = [1, 1, 1]} : vector<12x6x128xf32> to vector<1x6x128xf32>
    %1204 = vector.shape_cast %1203 : vector<1x6x128xf32> to vector<6x128xf32>
    %1205 = arith.maximumf %1202, %1204 : vector<6x128xf32>
    %1206 = vector.extract_strided_slice %1200 {offsets = [2, 0, 0], sizes = [1, 6, 128], strides = [1, 1, 1]} : vector<12x6x128xf32> to vector<1x6x128xf32>
    %1207 = vector.shape_cast %1206 : vector<1x6x128xf32> to vector<6x128xf32>
    %1208 = vector.extract_strided_slice %1200 {offsets = [3, 0, 0], sizes = [1, 6, 128], strides = [1, 1, 1]} : vector<12x6x128xf32> to vector<1x6x128xf32>
    %1209 = vector.shape_cast %1208 : vector<1x6x128xf32> to vector<6x128xf32>
    %1210 = arith.maximumf %1207, %1209 : vector<6x128xf32>
    %1211 = vector.extract_strided_slice %1200 {offsets = [4, 0, 0], sizes = [1, 6, 128], strides = [1, 1, 1]} : vector<12x6x128xf32> to vector<1x6x128xf32>
    %1212 = vector.shape_cast %1211 : vector<1x6x128xf32> to vector<6x128xf32>
    %1213 = vector.extract_strided_slice %1200 {offsets = [5, 0, 0], sizes = [1, 6, 128], strides = [1, 1, 1]} : vector<12x6x128xf32> to vector<1x6x128xf32>
    %1214 = vector.shape_cast %1213 : vector<1x6x128xf32> to vector<6x128xf32>
    %1215 = arith.maximumf %1212, %1214 : vector<6x128xf32>
    %1216 = vector.extract_strided_slice %1200 {offsets = [6, 0, 0], sizes = [1, 6, 128], strides = [1, 1, 1]} : vector<12x6x128xf32> to vector<1x6x128xf32>
    %1217 = vector.shape_cast %1216 : vector<1x6x128xf32> to vector<6x128xf32>
    %1218 = vector.extract_strided_slice %1200 {offsets = [7, 0, 0], sizes = [1, 6, 128], strides = [1, 1, 1]} : vector<12x6x128xf32> to vector<1x6x128xf32>
    %1219 = vector.shape_cast %1218 : vector<1x6x128xf32> to vector<6x128xf32>
    %1220 = arith.maximumf %1217, %1219 : vector<6x128xf32>
    %1221 = vector.extract_strided_slice %1200 {offsets = [8, 0, 0], sizes = [1, 6, 128], strides = [1, 1, 1]} : vector<12x6x128xf32> to vector<1x6x128xf32>
    %1222 = vector.shape_cast %1221 : vector<1x6x128xf32> to vector<6x128xf32>
    %1223 = vector.extract_strided_slice %1200 {offsets = [9, 0, 0], sizes = [1, 6, 128], strides = [1, 1, 1]} : vector<12x6x128xf32> to vector<1x6x128xf32>
    %1224 = vector.shape_cast %1223 : vector<1x6x128xf32> to vector<6x128xf32>
    %1225 = arith.maximumf %1222, %1224 : vector<6x128xf32>
    %1226 = vector.extract_strided_slice %1200 {offsets = [10, 0, 0], sizes = [1, 6, 128], strides = [1, 1, 1]} : vector<12x6x128xf32> to vector<1x6x128xf32>
    %1227 = vector.shape_cast %1226 : vector<1x6x128xf32> to vector<6x128xf32>
    %1228 = vector.extract_strided_slice %1200 {offsets = [11, 0, 0], sizes = [1, 6, 128], strides = [1, 1, 1]} : vector<12x6x128xf32> to vector<1x6x128xf32>
    %1229 = vector.shape_cast %1228 : vector<1x6x128xf32> to vector<6x128xf32>
    %1230 = arith.maximumf %1227, %1229 : vector<6x128xf32>
    %1231 = vector.shape_cast %1205 : vector<6x128xf32> to vector<1x6x128xf32>
    %1232 = vector.shape_cast %1210 : vector<6x128xf32> to vector<1x6x128xf32>
    %1233 = vector.shape_cast %1215 : vector<6x128xf32> to vector<1x6x128xf32>
    %1234 = vector.shape_cast %1220 : vector<6x128xf32> to vector<1x6x128xf32>
    %1235 = vector.shape_cast %1225 : vector<6x128xf32> to vector<1x6x128xf32>
    %1236 = vector.shape_cast %1230 : vector<6x128xf32> to vector<1x6x128xf32>
    %1237 = tpu.concatenate %1231, %1232, %1233, %1234, %1235, %1236 in 0 : vector<1x6x128xf32>, vector<1x6x128xf32>, vector<1x6x128xf32>, vector<1x6x128xf32>, vector<1x6x128xf32>, vector<1x6x128xf32> -> vector<6x6x128xf32>
    %c3_162 = arith.constant 3 : index
    %1238 = memref.load %arg5[%c3_162] : memref<6xf32, #tpu.memory_space<smem>>
    %1239 = vector.broadcast %1238 : f32 to vector<6x6x128xf32>
    %1240 = arith.addf %1237, %1239 : vector<6x6x128xf32>
    %cst_163 = arith.constant 0.000000e+00 : f32
    %1241 = vector.broadcast %cst_163 : f32 to vector<6x6x128xf32>
    %1242 = arith.maximumf %1240, %1241 : vector<6x6x128xf32>
    %1243 = vector.extract_strided_slice %1242 {offsets = [0, 0, 0], sizes = [1, 6, 128], strides = [1, 1, 1]} : vector<6x6x128xf32> to vector<1x6x128xf32>
    %1244 = vector.shape_cast %1243 : vector<1x6x128xf32> to vector<6x128xf32>
    %1245 = vector.extract_strided_slice %1242 {offsets = [1, 0, 0], sizes = [1, 6, 128], strides = [1, 1, 1]} : vector<6x6x128xf32> to vector<1x6x128xf32>
    %1246 = vector.shape_cast %1245 : vector<1x6x128xf32> to vector<6x128xf32>
    %1247 = vector.extract_strided_slice %1242 {offsets = [2, 0, 0], sizes = [1, 6, 128], strides = [1, 1, 1]} : vector<6x6x128xf32> to vector<1x6x128xf32>
    %1248 = vector.shape_cast %1247 : vector<1x6x128xf32> to vector<6x128xf32>
    %1249 = vector.extract_strided_slice %1242 {offsets = [3, 0, 0], sizes = [1, 6, 128], strides = [1, 1, 1]} : vector<6x6x128xf32> to vector<1x6x128xf32>
    %1250 = vector.shape_cast %1249 : vector<1x6x128xf32> to vector<6x128xf32>
    %1251 = vector.extract_strided_slice %1242 {offsets = [4, 0, 0], sizes = [1, 6, 128], strides = [1, 1, 1]} : vector<6x6x128xf32> to vector<1x6x128xf32>
    %1252 = vector.shape_cast %1251 : vector<1x6x128xf32> to vector<6x128xf32>
    %1253 = vector.extract_strided_slice %1242 {offsets = [5, 0, 0], sizes = [1, 6, 128], strides = [1, 1, 1]} : vector<6x6x128xf32> to vector<1x6x128xf32>
    %1254 = vector.shape_cast %1253 : vector<1x6x128xf32> to vector<6x128xf32>
    %c4_164 = arith.constant 4 : index
    %c0_165 = arith.constant 0 : index
    %1255 = memref.load %arg4[%c4_164, %c0_165] : memref<6x12xf32, #tpu.memory_space<smem>>
    %c4_166 = arith.constant 4 : index
    %c1_167 = arith.constant 1 : index
    %1256 = memref.load %arg4[%c4_166, %c1_167] : memref<6x12xf32, #tpu.memory_space<smem>>
    %c4_168 = arith.constant 4 : index
    %c2_169 = arith.constant 2 : index
    %1257 = memref.load %arg4[%c4_168, %c2_169] : memref<6x12xf32, #tpu.memory_space<smem>>
    %c4_170 = arith.constant 4 : index
    %c3_171 = arith.constant 3 : index
    %1258 = memref.load %arg4[%c4_170, %c3_171] : memref<6x12xf32, #tpu.memory_space<smem>>
    %1259 = vector.broadcast %1255 : f32 to vector<12x6x128xf32>
    %1260 = arith.mulf %1259, %689 : vector<12x6x128xf32>
    %1261 = vector.broadcast %1256 : f32 to vector<12x6x128xf32>
    %1262 = arith.mulf %1261, %701 : vector<12x6x128xf32>
    %1263 = arith.addf %1260, %1262 : vector<12x6x128xf32>
    %1264 = vector.broadcast %1257 : f32 to vector<12x6x128xf32>
    %1265 = arith.mulf %1264, %692 : vector<12x6x128xf32>
    %1266 = arith.addf %1263, %1265 : vector<12x6x128xf32>
    %1267 = vector.broadcast %1258 : f32 to vector<12x6x128xf32>
    %1268 = arith.mulf %1267, %704 : vector<12x6x128xf32>
    %1269 = arith.addf %1266, %1268 : vector<12x6x128xf32>
    %1270 = vector.broadcast %1255 : f32 to vector<12x6x128xf32>
    %1271 = arith.mulf %1270, %701 : vector<12x6x128xf32>
    %1272 = vector.broadcast %1256 : f32 to vector<12x6x128xf32>
    %1273 = arith.mulf %1272, %695 : vector<12x6x128xf32>
    %1274 = arith.addf %1271, %1273 : vector<12x6x128xf32>
    %1275 = vector.broadcast %1257 : f32 to vector<12x6x128xf32>
    %1276 = arith.mulf %1275, %704 : vector<12x6x128xf32>
    %1277 = arith.addf %1274, %1276 : vector<12x6x128xf32>
    %1278 = vector.broadcast %1258 : f32 to vector<12x6x128xf32>
    %1279 = arith.mulf %1278, %698 : vector<12x6x128xf32>
    %1280 = arith.addf %1277, %1279 : vector<12x6x128xf32>
    %c4_172 = arith.constant 4 : index
    %c4_173 = arith.constant 4 : index
    %1281 = memref.load %arg4[%c4_172, %c4_173] : memref<6x12xf32, #tpu.memory_space<smem>>
    %c4_174 = arith.constant 4 : index
    %c5_175 = arith.constant 5 : index
    %1282 = memref.load %arg4[%c4_174, %c5_175] : memref<6x12xf32, #tpu.memory_space<smem>>
    %c4_176 = arith.constant 4 : index
    %c6_177 = arith.constant 6 : index
    %1283 = memref.load %arg4[%c4_176, %c6_177] : memref<6x12xf32, #tpu.memory_space<smem>>
    %c4_178 = arith.constant 4 : index
    %c7_179 = arith.constant 7 : index
    %1284 = memref.load %arg4[%c4_178, %c7_179] : memref<6x12xf32, #tpu.memory_space<smem>>
    %1285 = vector.broadcast %1281 : f32 to vector<12x6x128xf32>
    %1286 = arith.mulf %1285, %690 : vector<12x6x128xf32>
    %1287 = vector.broadcast %1282 : f32 to vector<12x6x128xf32>
    %1288 = arith.mulf %1287, %702 : vector<12x6x128xf32>
    %1289 = arith.addf %1286, %1288 : vector<12x6x128xf32>
    %1290 = vector.broadcast %1283 : f32 to vector<12x6x128xf32>
    %1291 = arith.mulf %1290, %693 : vector<12x6x128xf32>
    %1292 = arith.addf %1289, %1291 : vector<12x6x128xf32>
    %1293 = vector.broadcast %1284 : f32 to vector<12x6x128xf32>
    %1294 = arith.mulf %1293, %705 : vector<12x6x128xf32>
    %1295 = arith.addf %1292, %1294 : vector<12x6x128xf32>
    %1296 = vector.broadcast %1281 : f32 to vector<12x6x128xf32>
    %1297 = arith.mulf %1296, %702 : vector<12x6x128xf32>
    %1298 = vector.broadcast %1282 : f32 to vector<12x6x128xf32>
    %1299 = arith.mulf %1298, %696 : vector<12x6x128xf32>
    %1300 = arith.addf %1297, %1299 : vector<12x6x128xf32>
    %1301 = vector.broadcast %1283 : f32 to vector<12x6x128xf32>
    %1302 = arith.mulf %1301, %705 : vector<12x6x128xf32>
    %1303 = arith.addf %1300, %1302 : vector<12x6x128xf32>
    %1304 = vector.broadcast %1284 : f32 to vector<12x6x128xf32>
    %1305 = arith.mulf %1304, %699 : vector<12x6x128xf32>
    %1306 = arith.addf %1303, %1305 : vector<12x6x128xf32>
    %1307 = arith.addf %1269, %1295 : vector<12x6x128xf32>
    %1308 = arith.addf %1280, %1306 : vector<12x6x128xf32>
    %c4_180 = arith.constant 4 : index
    %c8_181 = arith.constant 8 : index
    %1309 = memref.load %arg4[%c4_180, %c8_181] : memref<6x12xf32, #tpu.memory_space<smem>>
    %c4_182 = arith.constant 4 : index
    %c9_183 = arith.constant 9 : index
    %1310 = memref.load %arg4[%c4_182, %c9_183] : memref<6x12xf32, #tpu.memory_space<smem>>
    %c4_184 = arith.constant 4 : index
    %c10_185 = arith.constant 10 : index
    %1311 = memref.load %arg4[%c4_184, %c10_185] : memref<6x12xf32, #tpu.memory_space<smem>>
    %c4_186 = arith.constant 4 : index
    %c11_187 = arith.constant 11 : index
    %1312 = memref.load %arg4[%c4_186, %c11_187] : memref<6x12xf32, #tpu.memory_space<smem>>
    %1313 = vector.broadcast %1309 : f32 to vector<12x6x128xf32>
    %1314 = arith.mulf %1313, %691 : vector<12x6x128xf32>
    %1315 = vector.broadcast %1310 : f32 to vector<12x6x128xf32>
    %1316 = arith.mulf %1315, %703 : vector<12x6x128xf32>
    %1317 = arith.addf %1314, %1316 : vector<12x6x128xf32>
    %1318 = vector.broadcast %1311 : f32 to vector<12x6x128xf32>
    %1319 = arith.mulf %1318, %694 : vector<12x6x128xf32>
    %1320 = arith.addf %1317, %1319 : vector<12x6x128xf32>
    %1321 = vector.broadcast %1312 : f32 to vector<12x6x128xf32>
    %1322 = arith.mulf %1321, %706 : vector<12x6x128xf32>
    %1323 = arith.addf %1320, %1322 : vector<12x6x128xf32>
    %1324 = vector.broadcast %1309 : f32 to vector<12x6x128xf32>
    %1325 = arith.mulf %1324, %703 : vector<12x6x128xf32>
    %1326 = vector.broadcast %1310 : f32 to vector<12x6x128xf32>
    %1327 = arith.mulf %1326, %697 : vector<12x6x128xf32>
    %1328 = arith.addf %1325, %1327 : vector<12x6x128xf32>
    %1329 = vector.broadcast %1311 : f32 to vector<12x6x128xf32>
    %1330 = arith.mulf %1329, %706 : vector<12x6x128xf32>
    %1331 = arith.addf %1328, %1330 : vector<12x6x128xf32>
    %1332 = vector.broadcast %1312 : f32 to vector<12x6x128xf32>
    %1333 = arith.mulf %1332, %700 : vector<12x6x128xf32>
    %1334 = arith.addf %1331, %1333 : vector<12x6x128xf32>
    %1335 = arith.addf %1307, %1323 : vector<12x6x128xf32>
    %1336 = arith.addf %1308, %1334 : vector<12x6x128xf32>
    %1337 = arith.maximumf %1335, %1336 : vector<12x6x128xf32>
    %1338 = vector.extract_strided_slice %1337 {offsets = [0, 0, 0], sizes = [1, 6, 128], strides = [1, 1, 1]} : vector<12x6x128xf32> to vector<1x6x128xf32>
    %1339 = vector.shape_cast %1338 : vector<1x6x128xf32> to vector<6x128xf32>
    %1340 = vector.extract_strided_slice %1337 {offsets = [1, 0, 0], sizes = [1, 6, 128], strides = [1, 1, 1]} : vector<12x6x128xf32> to vector<1x6x128xf32>
    %1341 = vector.shape_cast %1340 : vector<1x6x128xf32> to vector<6x128xf32>
    %1342 = arith.maximumf %1339, %1341 : vector<6x128xf32>
    %1343 = vector.extract_strided_slice %1337 {offsets = [2, 0, 0], sizes = [1, 6, 128], strides = [1, 1, 1]} : vector<12x6x128xf32> to vector<1x6x128xf32>
    %1344 = vector.shape_cast %1343 : vector<1x6x128xf32> to vector<6x128xf32>
    %1345 = vector.extract_strided_slice %1337 {offsets = [3, 0, 0], sizes = [1, 6, 128], strides = [1, 1, 1]} : vector<12x6x128xf32> to vector<1x6x128xf32>
    %1346 = vector.shape_cast %1345 : vector<1x6x128xf32> to vector<6x128xf32>
    %1347 = arith.maximumf %1344, %1346 : vector<6x128xf32>
    %1348 = vector.extract_strided_slice %1337 {offsets = [4, 0, 0], sizes = [1, 6, 128], strides = [1, 1, 1]} : vector<12x6x128xf32> to vector<1x6x128xf32>
    %1349 = vector.shape_cast %1348 : vector<1x6x128xf32> to vector<6x128xf32>
    %1350 = vector.extract_strided_slice %1337 {offsets = [5, 0, 0], sizes = [1, 6, 128], strides = [1, 1, 1]} : vector<12x6x128xf32> to vector<1x6x128xf32>
    %1351 = vector.shape_cast %1350 : vector<1x6x128xf32> to vector<6x128xf32>
    %1352 = arith.maximumf %1349, %1351 : vector<6x128xf32>
    %1353 = vector.extract_strided_slice %1337 {offsets = [6, 0, 0], sizes = [1, 6, 128], strides = [1, 1, 1]} : vector<12x6x128xf32> to vector<1x6x128xf32>
    %1354 = vector.shape_cast %1353 : vector<1x6x128xf32> to vector<6x128xf32>
    %1355 = vector.extract_strided_slice %1337 {offsets = [7, 0, 0], sizes = [1, 6, 128], strides = [1, 1, 1]} : vector<12x6x128xf32> to vector<1x6x128xf32>
    %1356 = vector.shape_cast %1355 : vector<1x6x128xf32> to vector<6x128xf32>
    %1357 = arith.maximumf %1354, %1356 : vector<6x128xf32>
    %1358 = vector.extract_strided_slice %1337 {offsets = [8, 0, 0], sizes = [1, 6, 128], strides = [1, 1, 1]} : vector<12x6x128xf32> to vector<1x6x128xf32>
    %1359 = vector.shape_cast %1358 : vector<1x6x128xf32> to vector<6x128xf32>
    %1360 = vector.extract_strided_slice %1337 {offsets = [9, 0, 0], sizes = [1, 6, 128], strides = [1, 1, 1]} : vector<12x6x128xf32> to vector<1x6x128xf32>
    %1361 = vector.shape_cast %1360 : vector<1x6x128xf32> to vector<6x128xf32>
    %1362 = arith.maximumf %1359, %1361 : vector<6x128xf32>
    %1363 = vector.extract_strided_slice %1337 {offsets = [10, 0, 0], sizes = [1, 6, 128], strides = [1, 1, 1]} : vector<12x6x128xf32> to vector<1x6x128xf32>
    %1364 = vector.shape_cast %1363 : vector<1x6x128xf32> to vector<6x128xf32>
    %1365 = vector.extract_strided_slice %1337 {offsets = [11, 0, 0], sizes = [1, 6, 128], strides = [1, 1, 1]} : vector<12x6x128xf32> to vector<1x6x128xf32>
    %1366 = vector.shape_cast %1365 : vector<1x6x128xf32> to vector<6x128xf32>
    %1367 = arith.maximumf %1364, %1366 : vector<6x128xf32>
    %1368 = vector.shape_cast %1342 : vector<6x128xf32> to vector<1x6x128xf32>
    %1369 = vector.shape_cast %1347 : vector<6x128xf32> to vector<1x6x128xf32>
    %1370 = vector.shape_cast %1352 : vector<6x128xf32> to vector<1x6x128xf32>
    %1371 = vector.shape_cast %1357 : vector<6x128xf32> to vector<1x6x128xf32>
    %1372 = vector.shape_cast %1362 : vector<6x128xf32> to vector<1x6x128xf32>
    %1373 = vector.shape_cast %1367 : vector<6x128xf32> to vector<1x6x128xf32>
    %1374 = tpu.concatenate %1368, %1369, %1370, %1371, %1372, %1373 in 0 : vector<1x6x128xf32>, vector<1x6x128xf32>, vector<1x6x128xf32>, vector<1x6x128xf32>, vector<1x6x128xf32>, vector<1x6x128xf32> -> vector<6x6x128xf32>
    %c4_188 = arith.constant 4 : index
    %1375 = memref.load %arg5[%c4_188] : memref<6xf32, #tpu.memory_space<smem>>
    %1376 = vector.broadcast %1375 : f32 to vector<6x6x128xf32>
    %1377 = arith.addf %1374, %1376 : vector<6x6x128xf32>
    %cst_189 = arith.constant 0.000000e+00 : f32
    %1378 = vector.broadcast %cst_189 : f32 to vector<6x6x128xf32>
    %1379 = arith.maximumf %1377, %1378 : vector<6x6x128xf32>
    %1380 = vector.extract_strided_slice %1379 {offsets = [0, 0, 0], sizes = [1, 6, 128], strides = [1, 1, 1]} : vector<6x6x128xf32> to vector<1x6x128xf32>
    %1381 = vector.shape_cast %1380 : vector<1x6x128xf32> to vector<6x128xf32>
    %1382 = vector.extract_strided_slice %1379 {offsets = [1, 0, 0], sizes = [1, 6, 128], strides = [1, 1, 1]} : vector<6x6x128xf32> to vector<1x6x128xf32>
    %1383 = vector.shape_cast %1382 : vector<1x6x128xf32> to vector<6x128xf32>
    %1384 = vector.extract_strided_slice %1379 {offsets = [2, 0, 0], sizes = [1, 6, 128], strides = [1, 1, 1]} : vector<6x6x128xf32> to vector<1x6x128xf32>
    %1385 = vector.shape_cast %1384 : vector<1x6x128xf32> to vector<6x128xf32>
    %1386 = vector.extract_strided_slice %1379 {offsets = [3, 0, 0], sizes = [1, 6, 128], strides = [1, 1, 1]} : vector<6x6x128xf32> to vector<1x6x128xf32>
    %1387 = vector.shape_cast %1386 : vector<1x6x128xf32> to vector<6x128xf32>
    %1388 = vector.extract_strided_slice %1379 {offsets = [4, 0, 0], sizes = [1, 6, 128], strides = [1, 1, 1]} : vector<6x6x128xf32> to vector<1x6x128xf32>
    %1389 = vector.shape_cast %1388 : vector<1x6x128xf32> to vector<6x128xf32>
    %1390 = vector.extract_strided_slice %1379 {offsets = [5, 0, 0], sizes = [1, 6, 128], strides = [1, 1, 1]} : vector<6x6x128xf32> to vector<1x6x128xf32>
    %1391 = vector.shape_cast %1390 : vector<1x6x128xf32> to vector<6x128xf32>
    %c5_190 = arith.constant 5 : index
    %c0_191 = arith.constant 0 : index
    %1392 = memref.load %arg4[%c5_190, %c0_191] : memref<6x12xf32, #tpu.memory_space<smem>>
    %c5_192 = arith.constant 5 : index
    %c1_193 = arith.constant 1 : index
    %1393 = memref.load %arg4[%c5_192, %c1_193] : memref<6x12xf32, #tpu.memory_space<smem>>
    %c5_194 = arith.constant 5 : index
    %c2_195 = arith.constant 2 : index
    %1394 = memref.load %arg4[%c5_194, %c2_195] : memref<6x12xf32, #tpu.memory_space<smem>>
    %c5_196 = arith.constant 5 : index
    %c3_197 = arith.constant 3 : index
    %1395 = memref.load %arg4[%c5_196, %c3_197] : memref<6x12xf32, #tpu.memory_space<smem>>
    %1396 = vector.broadcast %1392 : f32 to vector<12x6x128xf32>
    %1397 = arith.mulf %1396, %689 : vector<12x6x128xf32>
    %1398 = vector.broadcast %1393 : f32 to vector<12x6x128xf32>
    %1399 = arith.mulf %1398, %701 : vector<12x6x128xf32>
    %1400 = arith.addf %1397, %1399 : vector<12x6x128xf32>
    %1401 = vector.broadcast %1394 : f32 to vector<12x6x128xf32>
    %1402 = arith.mulf %1401, %692 : vector<12x6x128xf32>
    %1403 = arith.addf %1400, %1402 : vector<12x6x128xf32>
    %1404 = vector.broadcast %1395 : f32 to vector<12x6x128xf32>
    %1405 = arith.mulf %1404, %704 : vector<12x6x128xf32>
    %1406 = arith.addf %1403, %1405 : vector<12x6x128xf32>
    %1407 = vector.broadcast %1392 : f32 to vector<12x6x128xf32>
    %1408 = arith.mulf %1407, %701 : vector<12x6x128xf32>
    %1409 = vector.broadcast %1393 : f32 to vector<12x6x128xf32>
    %1410 = arith.mulf %1409, %695 : vector<12x6x128xf32>
    %1411 = arith.addf %1408, %1410 : vector<12x6x128xf32>
    %1412 = vector.broadcast %1394 : f32 to vector<12x6x128xf32>
    %1413 = arith.mulf %1412, %704 : vector<12x6x128xf32>
    %1414 = arith.addf %1411, %1413 : vector<12x6x128xf32>
    %1415 = vector.broadcast %1395 : f32 to vector<12x6x128xf32>
    %1416 = arith.mulf %1415, %698 : vector<12x6x128xf32>
    %1417 = arith.addf %1414, %1416 : vector<12x6x128xf32>
    %c5_198 = arith.constant 5 : index
    %c4_199 = arith.constant 4 : index
    %1418 = memref.load %arg4[%c5_198, %c4_199] : memref<6x12xf32, #tpu.memory_space<smem>>
    %c5_200 = arith.constant 5 : index
    %c5_201 = arith.constant 5 : index
    %1419 = memref.load %arg4[%c5_200, %c5_201] : memref<6x12xf32, #tpu.memory_space<smem>>
    %c5_202 = arith.constant 5 : index
    %c6_203 = arith.constant 6 : index
    %1420 = memref.load %arg4[%c5_202, %c6_203] : memref<6x12xf32, #tpu.memory_space<smem>>
    %c5_204 = arith.constant 5 : index
    %c7_205 = arith.constant 7 : index
    %1421 = memref.load %arg4[%c5_204, %c7_205] : memref<6x12xf32, #tpu.memory_space<smem>>
    %1422 = vector.broadcast %1418 : f32 to vector<12x6x128xf32>
    %1423 = arith.mulf %1422, %690 : vector<12x6x128xf32>
    %1424 = vector.broadcast %1419 : f32 to vector<12x6x128xf32>
    %1425 = arith.mulf %1424, %702 : vector<12x6x128xf32>
    %1426 = arith.addf %1423, %1425 : vector<12x6x128xf32>
    %1427 = vector.broadcast %1420 : f32 to vector<12x6x128xf32>
    %1428 = arith.mulf %1427, %693 : vector<12x6x128xf32>
    %1429 = arith.addf %1426, %1428 : vector<12x6x128xf32>
    %1430 = vector.broadcast %1421 : f32 to vector<12x6x128xf32>
    %1431 = arith.mulf %1430, %705 : vector<12x6x128xf32>
    %1432 = arith.addf %1429, %1431 : vector<12x6x128xf32>
    %1433 = vector.broadcast %1418 : f32 to vector<12x6x128xf32>
    %1434 = arith.mulf %1433, %702 : vector<12x6x128xf32>
    %1435 = vector.broadcast %1419 : f32 to vector<12x6x128xf32>
    %1436 = arith.mulf %1435, %696 : vector<12x6x128xf32>
    %1437 = arith.addf %1434, %1436 : vector<12x6x128xf32>
    %1438 = vector.broadcast %1420 : f32 to vector<12x6x128xf32>
    %1439 = arith.mulf %1438, %705 : vector<12x6x128xf32>
    %1440 = arith.addf %1437, %1439 : vector<12x6x128xf32>
    %1441 = vector.broadcast %1421 : f32 to vector<12x6x128xf32>
    %1442 = arith.mulf %1441, %699 : vector<12x6x128xf32>
    %1443 = arith.addf %1440, %1442 : vector<12x6x128xf32>
    %1444 = arith.addf %1406, %1432 : vector<12x6x128xf32>
    %1445 = arith.addf %1417, %1443 : vector<12x6x128xf32>
    %c5_206 = arith.constant 5 : index
    %c8_207 = arith.constant 8 : index
    %1446 = memref.load %arg4[%c5_206, %c8_207] : memref<6x12xf32, #tpu.memory_space<smem>>
    %c5_208 = arith.constant 5 : index
    %c9_209 = arith.constant 9 : index
    %1447 = memref.load %arg4[%c5_208, %c9_209] : memref<6x12xf32, #tpu.memory_space<smem>>
    %c5_210 = arith.constant 5 : index
    %c10_211 = arith.constant 10 : index
    %1448 = memref.load %arg4[%c5_210, %c10_211] : memref<6x12xf32, #tpu.memory_space<smem>>
    %c5_212 = arith.constant 5 : index
    %c11_213 = arith.constant 11 : index
    %1449 = memref.load %arg4[%c5_212, %c11_213] : memref<6x12xf32, #tpu.memory_space<smem>>
    %1450 = vector.broadcast %1446 : f32 to vector<12x6x128xf32>
    %1451 = arith.mulf %1450, %691 : vector<12x6x128xf32>
    %1452 = vector.broadcast %1447 : f32 to vector<12x6x128xf32>
    %1453 = arith.mulf %1452, %703 : vector<12x6x128xf32>
    %1454 = arith.addf %1451, %1453 : vector<12x6x128xf32>
    %1455 = vector.broadcast %1448 : f32 to vector<12x6x128xf32>
    %1456 = arith.mulf %1455, %694 : vector<12x6x128xf32>
    %1457 = arith.addf %1454, %1456 : vector<12x6x128xf32>
    %1458 = vector.broadcast %1449 : f32 to vector<12x6x128xf32>
    %1459 = arith.mulf %1458, %706 : vector<12x6x128xf32>
    %1460 = arith.addf %1457, %1459 : vector<12x6x128xf32>
    %1461 = vector.broadcast %1446 : f32 to vector<12x6x128xf32>
    %1462 = arith.mulf %1461, %703 : vector<12x6x128xf32>
    %1463 = vector.broadcast %1447 : f32 to vector<12x6x128xf32>
    %1464 = arith.mulf %1463, %697 : vector<12x6x128xf32>
    %1465 = arith.addf %1462, %1464 : vector<12x6x128xf32>
    %1466 = vector.broadcast %1448 : f32 to vector<12x6x128xf32>
    %1467 = arith.mulf %1466, %706 : vector<12x6x128xf32>
    %1468 = arith.addf %1465, %1467 : vector<12x6x128xf32>
    %1469 = vector.broadcast %1449 : f32 to vector<12x6x128xf32>
    %1470 = arith.mulf %1469, %700 : vector<12x6x128xf32>
    %1471 = arith.addf %1468, %1470 : vector<12x6x128xf32>
    %1472 = arith.addf %1444, %1460 : vector<12x6x128xf32>
    %1473 = arith.addf %1445, %1471 : vector<12x6x128xf32>
    %1474 = arith.maximumf %1472, %1473 : vector<12x6x128xf32>
    %1475 = vector.extract_strided_slice %1474 {offsets = [0, 0, 0], sizes = [1, 6, 128], strides = [1, 1, 1]} : vector<12x6x128xf32> to vector<1x6x128xf32>
    %1476 = vector.shape_cast %1475 : vector<1x6x128xf32> to vector<6x128xf32>
    %1477 = vector.extract_strided_slice %1474 {offsets = [1, 0, 0], sizes = [1, 6, 128], strides = [1, 1, 1]} : vector<12x6x128xf32> to vector<1x6x128xf32>
    %1478 = vector.shape_cast %1477 : vector<1x6x128xf32> to vector<6x128xf32>
    %1479 = arith.maximumf %1476, %1478 : vector<6x128xf32>
    %1480 = vector.extract_strided_slice %1474 {offsets = [2, 0, 0], sizes = [1, 6, 128], strides = [1, 1, 1]} : vector<12x6x128xf32> to vector<1x6x128xf32>
    %1481 = vector.shape_cast %1480 : vector<1x6x128xf32> to vector<6x128xf32>
    %1482 = vector.extract_strided_slice %1474 {offsets = [3, 0, 0], sizes = [1, 6, 128], strides = [1, 1, 1]} : vector<12x6x128xf32> to vector<1x6x128xf32>
    %1483 = vector.shape_cast %1482 : vector<1x6x128xf32> to vector<6x128xf32>
    %1484 = arith.maximumf %1481, %1483 : vector<6x128xf32>
    %1485 = vector.extract_strided_slice %1474 {offsets = [4, 0, 0], sizes = [1, 6, 128], strides = [1, 1, 1]} : vector<12x6x128xf32> to vector<1x6x128xf32>
    %1486 = vector.shape_cast %1485 : vector<1x6x128xf32> to vector<6x128xf32>
    %1487 = vector.extract_strided_slice %1474 {offsets = [5, 0, 0], sizes = [1, 6, 128], strides = [1, 1, 1]} : vector<12x6x128xf32> to vector<1x6x128xf32>
    %1488 = vector.shape_cast %1487 : vector<1x6x128xf32> to vector<6x128xf32>
    %1489 = arith.maximumf %1486, %1488 : vector<6x128xf32>
    %1490 = vector.extract_strided_slice %1474 {offsets = [6, 0, 0], sizes = [1, 6, 128], strides = [1, 1, 1]} : vector<12x6x128xf32> to vector<1x6x128xf32>
    %1491 = vector.shape_cast %1490 : vector<1x6x128xf32> to vector<6x128xf32>
    %1492 = vector.extract_strided_slice %1474 {offsets = [7, 0, 0], sizes = [1, 6, 128], strides = [1, 1, 1]} : vector<12x6x128xf32> to vector<1x6x128xf32>
    %1493 = vector.shape_cast %1492 : vector<1x6x128xf32> to vector<6x128xf32>
    %1494 = arith.maximumf %1491, %1493 : vector<6x128xf32>
    %1495 = vector.extract_strided_slice %1474 {offsets = [8, 0, 0], sizes = [1, 6, 128], strides = [1, 1, 1]} : vector<12x6x128xf32> to vector<1x6x128xf32>
    %1496 = vector.shape_cast %1495 : vector<1x6x128xf32> to vector<6x128xf32>
    %1497 = vector.extract_strided_slice %1474 {offsets = [9, 0, 0], sizes = [1, 6, 128], strides = [1, 1, 1]} : vector<12x6x128xf32> to vector<1x6x128xf32>
    %1498 = vector.shape_cast %1497 : vector<1x6x128xf32> to vector<6x128xf32>
    %1499 = arith.maximumf %1496, %1498 : vector<6x128xf32>
    %1500 = vector.extract_strided_slice %1474 {offsets = [10, 0, 0], sizes = [1, 6, 128], strides = [1, 1, 1]} : vector<12x6x128xf32> to vector<1x6x128xf32>
    %1501 = vector.shape_cast %1500 : vector<1x6x128xf32> to vector<6x128xf32>
    %1502 = vector.extract_strided_slice %1474 {offsets = [11, 0, 0], sizes = [1, 6, 128], strides = [1, 1, 1]} : vector<12x6x128xf32> to vector<1x6x128xf32>
    %1503 = vector.shape_cast %1502 : vector<1x6x128xf32> to vector<6x128xf32>
    %1504 = arith.maximumf %1501, %1503 : vector<6x128xf32>
    %1505 = vector.shape_cast %1479 : vector<6x128xf32> to vector<1x6x128xf32>
    %1506 = vector.shape_cast %1484 : vector<6x128xf32> to vector<1x6x128xf32>
    %1507 = vector.shape_cast %1489 : vector<6x128xf32> to vector<1x6x128xf32>
    %1508 = vector.shape_cast %1494 : vector<6x128xf32> to vector<1x6x128xf32>
    %1509 = vector.shape_cast %1499 : vector<6x128xf32> to vector<1x6x128xf32>
    %1510 = vector.shape_cast %1504 : vector<6x128xf32> to vector<1x6x128xf32>
    %1511 = tpu.concatenate %1505, %1506, %1507, %1508, %1509, %1510 in 0 : vector<1x6x128xf32>, vector<1x6x128xf32>, vector<1x6x128xf32>, vector<1x6x128xf32>, vector<1x6x128xf32>, vector<1x6x128xf32> -> vector<6x6x128xf32>
    %c5_214 = arith.constant 5 : index
    %1512 = memref.load %arg5[%c5_214] : memref<6xf32, #tpu.memory_space<smem>>
    %1513 = vector.broadcast %1512 : f32 to vector<6x6x128xf32>
    %1514 = arith.addf %1511, %1513 : vector<6x6x128xf32>
    %cst_215 = arith.constant 0.000000e+00 : f32
    %1515 = vector.broadcast %cst_215 : f32 to vector<6x6x128xf32>
    %1516 = arith.maximumf %1514, %1515 : vector<6x6x128xf32>
    %1517 = vector.extract_strided_slice %1516 {offsets = [0, 0, 0], sizes = [1, 6, 128], strides = [1, 1, 1]} : vector<6x6x128xf32> to vector<1x6x128xf32>
    %1518 = vector.shape_cast %1517 : vector<1x6x128xf32> to vector<6x128xf32>
    %1519 = vector.extract_strided_slice %1516 {offsets = [1, 0, 0], sizes = [1, 6, 128], strides = [1, 1, 1]} : vector<6x6x128xf32> to vector<1x6x128xf32>
    %1520 = vector.shape_cast %1519 : vector<1x6x128xf32> to vector<6x128xf32>
    %1521 = vector.extract_strided_slice %1516 {offsets = [2, 0, 0], sizes = [1, 6, 128], strides = [1, 1, 1]} : vector<6x6x128xf32> to vector<1x6x128xf32>
    %1522 = vector.shape_cast %1521 : vector<1x6x128xf32> to vector<6x128xf32>
    %1523 = vector.extract_strided_slice %1516 {offsets = [3, 0, 0], sizes = [1, 6, 128], strides = [1, 1, 1]} : vector<6x6x128xf32> to vector<1x6x128xf32>
    %1524 = vector.shape_cast %1523 : vector<1x6x128xf32> to vector<6x128xf32>
    %1525 = vector.extract_strided_slice %1516 {offsets = [4, 0, 0], sizes = [1, 6, 128], strides = [1, 1, 1]} : vector<6x6x128xf32> to vector<1x6x128xf32>
    %1526 = vector.shape_cast %1525 : vector<1x6x128xf32> to vector<6x128xf32>
    %1527 = vector.extract_strided_slice %1516 {offsets = [5, 0, 0], sizes = [1, 6, 128], strides = [1, 1, 1]} : vector<6x6x128xf32> to vector<1x6x128xf32>
    %1528 = vector.shape_cast %1527 : vector<1x6x128xf32> to vector<6x128xf32>
    %1529 = tpu.concatenate %833, %835, %837, %839, %841, %843, %970, %972, %974, %976, %978, %980, %1107, %1109, %1111, %1113 in 0 : vector<6x128xf32>, vector<6x128xf32>, vector<6x128xf32>, vector<6x128xf32>, vector<6x128xf32>, vector<6x128xf32>, vector<6x128xf32>, vector<6x128xf32>, vector<6x128xf32>, vector<6x128xf32>, vector<6x128xf32>, vector<6x128xf32>, vector<6x128xf32>, vector<6x128xf32>, vector<6x128xf32>, vector<6x128xf32> -> vector<96x128xf32>
    %1530 = tpu.concatenate %1115, %1117, %1244, %1246, %1248, %1250, %1252, %1254, %1381, %1383, %1385, %1387, %1389, %1391, %1518, %1520 in 0 : vector<6x128xf32>, vector<6x128xf32>, vector<6x128xf32>, vector<6x128xf32>, vector<6x128xf32>, vector<6x128xf32>, vector<6x128xf32>, vector<6x128xf32>, vector<6x128xf32>, vector<6x128xf32>, vector<6x128xf32>, vector<6x128xf32>, vector<6x128xf32>, vector<6x128xf32>, vector<6x128xf32>, vector<6x128xf32> -> vector<96x128xf32>
    %1531 = tpu.concatenate %1522, %1524, %1526, %1528 in 0 : vector<6x128xf32>, vector<6x128xf32>, vector<6x128xf32>, vector<6x128xf32> -> vector<24x128xf32>
    %1532 = tpu.concatenate %1529, %1530, %1531 in 0 : vector<96x128xf32>, vector<96x128xf32>, vector<24x128xf32> -> vector<216x128xf32>
    %c0_216 = arith.constant 0 : index
    %c0_217 = arith.constant 0 : index
    %1533 = vector.load %arg6[%c0_216, %c0_217] : memref<32x216xbf16, #tpu.memory_space<vmem>>, vector<32x216xbf16>
    %1534 = arith.truncf %1532 : vector<216x128xf32> to vector<216x128xbf16>
    %cst_218 = arith.constant dense<0.000000e+00> : vector<32x128xf32>
    %1535 = tpu.matmul %1533, %1534, %cst_218 {dimension_numbers = #tpu.dot_dimension_numbers<[1], [0], [0], [1], [0, 0, 1, 1], [], []>} : vector<32x216xbf16>, vector<216x128xbf16>, vector<32x128xf32> -> vector<32x128xf32>
    %c0_219 = arith.constant 0 : index
    %c0_220 = arith.constant 0 : index
    %1536 = vector.load %arg7[%c0_219, %c0_220] : memref<32x1xf32, #tpu.memory_space<vmem>>, vector<32x1xf32>
    %1537 = vector.broadcast %1536 : vector<32x1xf32> to vector<32x128xf32>
    %1538 = arith.addf %1535, %1537 : vector<32x128xf32>
    %1539 = math.tanh %1538 : vector<32x128xf32>
    %c0_221 = arith.constant 0 : index
    %c0_222 = arith.constant 0 : index
    %1540 = vector.load %arg8[%c0_221, %c0_222] : memref<32x128xf32, #tpu.memory_space<vmem>>, vector<32x128xf32>
    tpu.vector_store %arg8[%c0_221, %c0_222], %1539 {strides = array<i32>} : memref<32x128xf32, #tpu.memory_space<vmem>>, vector<32x128xf32>,
    return
  }
  func.func @transform_0(%arg0: i32) -> (i32, i32, i32, i32) {
    %c0_i32 = arith.constant 0 : i32
    %c0_i32_0 = arith.constant 0 : i32
    %c0_i32_1 = arith.constant 0 : i32
    %c0_i32_2 = arith.constant 0 : i32
    return %c0_i32, %c0_i32_0, %c0_i32_1, %arg0 : i32, i32, i32, i32
  }
  func.func @transform_1(%arg0: i32) -> (i32, i32) {
    %c0_i32 = arith.constant 0 : i32
    %c0_i32_0 = arith.constant 0 : i32
    %c0_i32_1 = arith.constant 0 : i32
    return %c0_i32, %c0_i32_0 : i32, i32
  }
  func.func @transform_2(%arg0: i32) -> i32 {
    %c0_i32 = arith.constant 0 : i32
    %c0_i32_0 = arith.constant 0 : i32
    return %c0_i32 : i32
  }
  func.func @transform_3(%arg0: i32) -> (i32, i32) {
    %c0_i32 = arith.constant 0 : i32
    %c0_i32_0 = arith.constant 0 : i32
    %c0_i32_1 = arith.constant 0 : i32
    return %c0_i32, %c0_i32_0 : i32, i32
  }
  func.func @transform_4(%arg0: i32) -> i32 {
    %c0_i32 = arith.constant 0 : i32
    %c0_i32_0 = arith.constant 0 : i32
    return %c0_i32 : i32
  }
  func.func @transform_5(%arg0: i32) -> (i32, i32) {
    %c0_i32 = arith.constant 0 : i32
    %c0_i32_0 = arith.constant 0 : i32
    %c0_i32_1 = arith.constant 0 : i32
    return %c0_i32, %c0_i32_0 : i32, i32
  }
  func.func @transform_6(%arg0: i32) -> (i32, i32) {
    %c0_i32 = arith.constant 0 : i32
    %c0_i32_0 = arith.constant 0 : i32
    %c0_i32_1 = arith.constant 0 : i32
    return %c0_i32, %c0_i32_0 : i32, i32
  }
  func.func @transform_7(%arg0: i32) -> (i32, i32) {
    %c0_i32 = arith.constant 0 : i32
    %c0_i32_0 = arith.constant 0 : i32
    return %c0_i32, %arg0 : i32, i32
  }
}

</mosaic_0001>

<llo_original>
// kernel: lenet_forward.1
$region0: #{lenet_forward.1}
  #allocation0 [shape = 'u32[]', space=smem, size = 0x4, offset = 0x4, fixed_abs, tag = 'smem constant byte address 0x4 - core index']
  #allocation1 [shape = 'u32[144,128]{1,0:T(1,128)}', space=vmem, size = 0x12000, scoped, tag = 'internal scratch']
  %s0 = inlined_call_operand.vmem [shape: f32[4,28,7,128], index: 0, kind: input, shape index: {}]
  %s1 = inlined_call_operand.vmem [shape: f32[3,4], index: 1, kind: input, shape index: {}]
  %s2 = inlined_call_operand.vmem [shape: f32[3], index: 2, kind: input, shape index: {}]
  %s3 = inlined_call_operand.vmem [shape: f32[6,12], index: 3, kind: input, shape index: {}]
  %s4 = inlined_call_operand.vmem [shape: f32[6], index: 4, kind: input, shape index: {}]
  %s5 = inlined_call_operand.vmem [shape: bf16[32,216], index: 5, kind: input, shape index: {}]
  %s6 = inlined_call_operand.vmem [shape: f32[32,1], index: 6, kind: input, shape index: {}]
  %s7 = inlined_call_operand.vmem [shape: f32[32,128], index: 7, kind: output, shape index: {}]
  %s8 = sld [smem:[#allocation0]]
  $region54: #{lenet_forward.1} parent=0
    _
  %s10 = ssub.s32 1, %s8
  %s11 = scalar_select 0, %s10, %s8
  $region1: #{lenet_forward.1} parent=0
    #allocation2 [shape = 'u8[2048]{0}', space=smem, size = 0x800, scoped, tag = 'input window, operand 1, single buffered']
    #allocation3 [shape = 's32[1]{0}', space=sflag, size = 0x4, scoped, tag = 'scoped memory for lenet_forward.1']
    #allocation4 [shape = 'u8[512]{0}', space=smem, size = 0x200, scoped, tag = 'input window, operand 2, single buffered']
    #allocation5 [shape = 's32[1]{0}', space=sflag, size = 0x4, scoped, tag = 'scoped memory for lenet_forward.1']
    #allocation6 [shape = 'u8[4096]{0}', space=smem, size = 0x1000, scoped, tag = 'input window, operand 3, single buffered']
    #allocation7 [shape = 'u8[512]{0}', space=smem, size = 0x200, scoped, tag = 'input window, operand 4, single buffered']
    #allocation8 [shape = 's32[1]{0}', space=sflag, size = 0x4, scoped, tag = 'scoped memory for lenet_forward.1']
    %12 = vsyncpa [#allocation3], 0
    %13 = vsyncpa [#allocation5], 0
    %14 = vsyncpa [#allocation8], 0
    // Predicated region
    $region2: #{lenet_forward.1} parent=1 // pred_check
      _
    $region3: #{lenet_forward.1} parent=1 // pred_check_branch
      %16 = sbr.rel (0) target = $region5
    $region4: #{lenet_forward.1} parent=1 // pred_region
      _
    $region5: #{lenet_forward.1} parent=1 // pred_fallthru
      _
    // Predicated region
    $region6: #{lenet_forward.1} parent=1 // pred_check
      _
    $region7: #{lenet_forward.1} parent=1 // pred_check_branch
      %18 = sbr.rel (0) target = $region9
    $region8: #{lenet_forward.1} parent=1 // pred_region
      %s20 = ssub.s32 64, 64
      %21 = vsyncadd [#allocation3], %s20
      %s23 = sshll.u32 %s1, 4
      %s24 = int_to_ptr.vmem [resolvable:$true] %s23
      %26 = dma.vmem_to_smem %s24, 64, [#allocation2], [#allocation3]
    $region9: #{lenet_forward.1} parent=1 // pred_fallthru
      _
    // Predicated region
    $region10: #{lenet_forward.1} parent=1 // pred_check
      _
    $region11: #{lenet_forward.1} parent=1 // pred_check_branch
      %28 = sbr.rel (0) target = $region13
    $region12: #{lenet_forward.1} parent=1 // pred_region
      %s30 = ssub.s32 16, 16
      %31 = vsyncadd [#allocation5], %s30
      %s33 = sshll.u32 %s2, 4
      %s34 = int_to_ptr.vmem [resolvable:$true] %s33
      %36 = dma.vmem_to_smem %s34, 16, [#allocation4], [#allocation5]
    $region13: #{lenet_forward.1} parent=1 // pred_fallthru
      _
    // Predicated region
    $region14: #{lenet_forward.1} parent=1 // pred_check
      _
    $region15: #{lenet_forward.1} parent=1 // pred_check_branch
      %38 = sbr.rel (0) target = $region17
    $region16: #{lenet_forward.1} parent=1 // pred_region
      %s40 = ssub.s32 128, 128
      %41 = vsyncadd [#allocation5], %s40
      %s43 = sshll.u32 %s3, 4
      %s44 = int_to_ptr.vmem [resolvable:$true] %s43
      %46 = dma.vmem_to_smem %s44, 128, [#allocation6], [#allocation5]
    $region17: #{lenet_forward.1} parent=1 // pred_fallthru
      _
    // Predicated region
    $region18: #{lenet_forward.1} parent=1 // pred_check
      _
    $region19: #{lenet_forward.1} parent=1 // pred_check_branch
      %48 = sbr.rel (0) target = $region21
    $region20: #{lenet_forward.1} parent=1 // pred_region
      %s50 = ssub.s32 16, 16
      %51 = vsyncadd [#allocation8], %s50
      %s53 = sshll.u32 %s4, 4
      %s54 = int_to_ptr.vmem [resolvable:$true] %s53
      %56 = dma.vmem_to_smem %s54, 16, [#allocation7], [#allocation8]
    $region21: #{lenet_forward.1} parent=1 // pred_fallthru
      _
    // Predicated region
    $region22: #{lenet_forward.1} parent=1 // pred_check
      _
    $region23: #{lenet_forward.1} parent=1 // pred_check_branch
      %58 = sbr.rel (0) target = $region25
    $region24: #{lenet_forward.1} parent=1 // pred_region
      _
    $region25: #{lenet_forward.1} parent=1 // pred_fallthru
      _
    // Predicated region
    $region26: #{lenet_forward.1} parent=1 // pred_check
      _
    $region27: #{lenet_forward.1} parent=1 // pred_check_branch
      %60 = sbr.rel (0) target = $region29
    $region28: #{lenet_forward.1} parent=1 // pred_region
      _
    $region29: #{lenet_forward.1} parent=1 // pred_fallthru
      _
    // Predicated region
    $region30: #{lenet_forward.1} parent=1 // pred_check
      _
    $region31: #{lenet_forward.1} parent=1 // pred_check_branch
      %62 = sbr.rel (0) target = $region33
    $region32: #{lenet_forward.1} parent=1 // pred_region
      %63 = dma.done [#allocation3], 64
    $region33: #{lenet_forward.1} parent=1 // pred_fallthru
      _
    // Predicated region
    $region34: #{lenet_forward.1} parent=1 // pred_check
      _
    $region35: #{lenet_forward.1} parent=1 // pred_check_branch
      %65 = sbr.rel (0) target = $region37
    $region36: #{lenet_forward.1} parent=1 // pred_region
      %66 = dma.done [#allocation5], 16
    $region37: #{lenet_forward.1} parent=1 // pred_fallthru
      _
    // Predicated region
    $region38: #{lenet_forward.1} parent=1 // pred_check
      _
    $region39: #{lenet_forward.1} parent=1 // pred_check_branch
      %68 = sbr.rel (0) target = $region41
    $region40: #{lenet_forward.1} parent=1 // pred_region
      %69 = dma.done [#allocation5], 128
    $region41: #{lenet_forward.1} parent=1 // pred_fallthru
      _
    // Predicated region
    $region42: #{lenet_forward.1} parent=1 // pred_check
      _
    $region43: #{lenet_forward.1} parent=1 // pred_check_branch
      %71 = sbr.rel (0) target = $region45
    $region44: #{lenet_forward.1} parent=1 // pred_region
      %72 = dma.done [#allocation8], 16
    $region45: #{lenet_forward.1} parent=1 // pred_fallthru
      _
    %73 = sfence
    %v75 = vld [vmem:[%s0] sm:$0x7f]
    %v76 = vld [vmem:[%s0 + $0x8] sm:$0x7f]
    %v77 = vld [vmem:[%s0 + $0x10] sm:$0x7f]
    %v78 = vld [vmem:[%s0 + $0x18] sm:$0x7f]
    %v79 = vld [vmem:[%s0 + $0x20] sm:$0x7f]
    %v80 = vld [vmem:[%s0 + $0x28] sm:$0x7f]
    %v81 = vld [vmem:[%s0 + $0x30] sm:$0x7f]
    %v82 = vld [vmem:[%s0 + $0x38] sm:$0x7f]
    %v83 = vld [vmem:[%s0 + $0x40] sm:$0x7f]
    %v84 = vld [vmem:[%s0 + $0x48] sm:$0x7f]
    %v85 = vld [vmem:[%s0 + $0x50] sm:$0x7f]
    %v86 = vld [vmem:[%s0 + $0x58] sm:$0x7f]
    %v87 = vld [vmem:[%s0 + $0x60] sm:$0x7f]
    %v88 = vld [vmem:[%s0 + $0x68] sm:$0x7f]
    %v89 = vld [vmem:[%s0 + $0x70] sm:$0x7f]
    %v90 = vld [vmem:[%s0 + $0x78] sm:$0x7f]
    %v91 = vld [vmem:[%s0 + $0x80] sm:$0x7f]
    %v92 = vld [vmem:[%s0 + $0x88] sm:$0x7f]
    %v93 = vld [vmem:[%s0 + $0x90] sm:$0x7f]
    %v94 = vld [vmem:[%s0 + $0x98] sm:$0x7f]
    %v95 = vld [vmem:[%s0 + $0xa0] sm:$0x7f]
    %v96 = vld [vmem:[%s0 + $0xa8] sm:$0x7f]
    %v97 = vld [vmem:[%s0 + $0xb0] sm:$0x7f]
    %v98 = vld [vmem:[%s0 + $0xb8] sm:$0x7f]
    %v99 = vld [vmem:[%s0 + $0xc0] sm:$0x7f]
    %v100 = vld [vmem:[%s0 + $0xc8] sm:$0x7f]
    %s101 = scalar_lea.vmem %s0, 8
    %v102 = vld [vmem:[%s101] sm:$0x7f]
    %v103 = vld [vmem:[%s101 + $0x8] sm:$0x7f]
    %v104 = vld [vmem:[%s101 + $0x10] sm:$0x7f]
    %v105 = vld [vmem:[%s101 + $0x18] sm:$0x7f]
    %v106 = vld [vmem:[%s101 + $0x20] sm:$0x7f]
    %v107 = vld [vmem:[%s101 + $0x28] sm:$0x7f]
    %v108 = vld [vmem:[%s101 + $0x30] sm:$0x7f]
    %v109 = vld [vmem:[%s101 + $0x38] sm:$0x7f]
    %v110 = vld [vmem:[%s101 + $0x40] sm:$0x7f]
    %v111 = vld [vmem:[%s101 + $0x48] sm:$0x7f]
    %v112 = vld [vmem:[%s101 + $0x50] sm:$0x7f]
    %v113 = vld [vmem:[%s101 + $0x58] sm:$0x7f]
    %v114 = vld [vmem:[%s101 + $0x60] sm:$0x7f]
    %v115 = vld [vmem:[%s101 + $0x68] sm:$0x7f]
    %v116 = vld [vmem:[%s101 + $0x70] sm:$0x7f]
    %v117 = vld [vmem:[%s101 + $0x78] sm:$0x7f]
    %v118 = vld [vmem:[%s101 + $0x80] sm:$0x7f]
    %v119 = vld [vmem:[%s101 + $0x88] sm:$0x7f]
    %v120 = vld [vmem:[%s101 + $0x90] sm:$0x7f]
    %v121 = vld [vmem:[%s101 + $0x98] sm:$0x7f]
    %v122 = vld [vmem:[%s101 + $0xa0] sm:$0x7f]
    %v123 = vld [vmem:[%s101 + $0xa8] sm:$0x7f]
    %v124 = vld [vmem:[%s101 + $0xb0] sm:$0x7f]
    %v125 = vld [vmem:[%s101 + $0xb8] sm:$0x7f]
    %v126 = vld [vmem:[%s101 + $0xc0] sm:$0x7f]
    %v127 = vld [vmem:[%s101 + $0xc8] sm:$0x7f]
    %s128 = scalar_lea.vmem %s0, 224
    %v129 = vld [vmem:[%s128] sm:$0x7f]
    %v130 = vld [vmem:[%s128 + $0x8] sm:$0x7f]
    %v131 = vld [vmem:[%s128 + $0x10] sm:$0x7f]
    %v132 = vld [vmem:[%s128 + $0x18] sm:$0x7f]
    %v133 = vld [vmem:[%s128 + $0x20] sm:$0x7f]
    %v134 = vld [vmem:[%s128 + $0x28] sm:$0x7f]
    %v135 = vld [vmem:[%s128 + $0x30] sm:$0x7f]
    %v136 = vld [vmem:[%s128 + $0x38] sm:$0x7f]
    %v137 = vld [vmem:[%s128 + $0x40] sm:$0x7f]
    %v138 = vld [vmem:[%s128 + $0x48] sm:$0x7f]
    %v139 = vld [vmem:[%s128 + $0x50] sm:$0x7f]
    %v140 = vld [vmem:[%s128 + $0x58] sm:$0x7f]
    %v141 = vld [vmem:[%s128 + $0x60] sm:$0x7f]
    %v142 = vld [vmem:[%s128 + $0x68] sm:$0x7f]
    %v143 = vld [vmem:[%s128 + $0x70] sm:$0x7f]
    %v144 = vld [vmem:[%s128 + $0x78] sm:$0x7f]
    %v145 = vld [vmem:[%s128 + $0x80] sm:$0x7f]
    %v146 = vld [vmem:[%s128 + $0x88] sm:$0x7f]
    %v147 = vld [vmem:[%s128 + $0x90] sm:$0x7f]
    %v148 = vld [vmem:[%s128 + $0x98] sm:$0x7f]
    %v149 = vld [vmem:[%s128 + $0xa0] sm:$0x7f]
    %v150 = vld [vmem:[%s128 + $0xa8] sm:$0x7f]
    %v151 = vld [vmem:[%s128 + $0xb0] sm:$0x7f]
    %v152 = vld [vmem:[%s128 + $0xb8] sm:$0x7f]
    %v153 = vld [vmem:[%s128 + $0xc0] sm:$0x7f]
    %v154 = vld [vmem:[%s128 + $0xc8] sm:$0x7f]
    %s155 = scalar_lea.vmem %s0, 232
    %v156 = vld [vmem:[%s155] sm:$0x7f]
    %v157 = vld [vmem:[%s155 + $0x8] sm:$0x7f]
    %v158 = vld [vmem:[%s155 + $0x10] sm:$0x7f]
    %v159 = vld [vmem:[%s155 + $0x18] sm:$0x7f]
    %v160 = vld [vmem:[%s155 + $0x20] sm:$0x7f]
    %v161 = vld [vmem:[%s155 + $0x28] sm:$0x7f]
    %v162 = vld [vmem:[%s155 + $0x30] sm:$0x7f]
    %v163 = vld [vmem:[%s155 + $0x38] sm:$0x7f]
    %v164 = vld [vmem:[%s155 + $0x40] sm:$0x7f]
    %v165 = vld [vmem:[%s155 + $0x48] sm:$0x7f]
    %v166 = vld [vmem:[%s155 + $0x50] sm:$0x7f]
    %v167 = vld [vmem:[%s155 + $0x58] sm:$0x7f]
    %v168 = vld [vmem:[%s155 + $0x60] sm:$0x7f]
    %v169 = vld [vmem:[%s155 + $0x68] sm:$0x7f]
    %v170 = vld [vmem:[%s155 + $0x70] sm:$0x7f]
    %v171 = vld [vmem:[%s155 + $0x78] sm:$0x7f]
    %v172 = vld [vmem:[%s155 + $0x80] sm:$0x7f]
    %v173 = vld [vmem:[%s155 + $0x88] sm:$0x7f]
    %v174 = vld [vmem:[%s155 + $0x90] sm:$0x7f]
    %v175 = vld [vmem:[%s155 + $0x98] sm:$0x7f]
    %v176 = vld [vmem:[%s155 + $0xa0] sm:$0x7f]
    %v177 = vld [vmem:[%s155 + $0xa8] sm:$0x7f]
    %v178 = vld [vmem:[%s155 + $0xb0] sm:$0x7f]
    %v179 = vld [vmem:[%s155 + $0xb8] sm:$0x7f]
    %v180 = vld [vmem:[%s155 + $0xc0] sm:$0x7f]
    %v181 = vld [vmem:[%s155 + $0xc8] sm:$0x7f]
    %s182 = scalar_lea.vmem %s0, 448
    %v183 = vld [vmem:[%s182] sm:$0x7f]
    %v184 = vld [vmem:[%s182 + $0x8] sm:$0x7f]
    %v185 = vld [vmem:[%s182 + $0x10] sm:$0x7f]
    %v186 = vld [vmem:[%s182 + $0x18] sm:$0x7f]
    %v187 = vld [vmem:[%s182 + $0x20] sm:$0x7f]
    %v188 = vld [vmem:[%s182 + $0x28] sm:$0x7f]
    %v189 = vld [vmem:[%s182 + $0x30] sm:$0x7f]
    %v190 = vld [vmem:[%s182 + $0x38] sm:$0x7f]
    %v191 = vld [vmem:[%s182 + $0x40] sm:$0x7f]
    %v192 = vld [vmem:[%s182 + $0x48] sm:$0x7f]
    %v193 = vld [vmem:[%s182 + $0x50] sm:$0x7f]
    %v194 = vld [vmem:[%s182 + $0x58] sm:$0x7f]
    %v195 = vld [vmem:[%s182 + $0x60] sm:$0x7f]
    %v196 = vld [vmem:[%s182 + $0x68] sm:$0x7f]
    %v197 = vld [vmem:[%s182 + $0x70] sm:$0x7f]
    %v198 = vld [vmem:[%s182 + $0x78] sm:$0x7f]
    %v199 = vld [vmem:[%s182 + $0x80] sm:$0x7f]
    %v200 = vld [vmem:[%s182 + $0x88] sm:$0x7f]
    %v201 = vld [vmem:[%s182 + $0x90] sm:$0x7f]
    %v202 = vld [vmem:[%s182 + $0x98] sm:$0x7f]
    %v203 = vld [vmem:[%s182 + $0xa0] sm:$0x7f]
    %v204 = vld [vmem:[%s182 + $0xa8] sm:$0x7f]
    %v205 = vld [vmem:[%s182 + $0xb0] sm:$0x7f]
    %v206 = vld [vmem:[%s182 + $0xb8] sm:$0x7f]
    %v207 = vld [vmem:[%s182 + $0xc0] sm:$0x7f]
    %v208 = vld [vmem:[%s182 + $0xc8] sm:$0x7f]
    %s209 = scalar_lea.vmem %s0, 456
    %v210 = vld [vmem:[%s209] sm:$0x7f]
    %v211 = vld [vmem:[%s209 + $0x8] sm:$0x7f]
    %v212 = vld [vmem:[%s209 + $0x10] sm:$0x7f]
    %v213 = vld [vmem:[%s209 + $0x18] sm:$0x7f]
    %v214 = vld [vmem:[%s209 + $0x20] sm:$0x7f]
    %v215 = vld [vmem:[%s209 + $0x28] sm:$0x7f]
    %v216 = vld [vmem:[%s209 + $0x30] sm:$0x7f]
    %v217 = vld [vmem:[%s209 + $0x38] sm:$0x7f]
    %v218 = vld [vmem:[%s209 + $0x40] sm:$0x7f]
    %v219 = vld [vmem:[%s209 + $0x48] sm:$0x7f]
    %v220 = vld [vmem:[%s209 + $0x50] sm:$0x7f]
    %v221 = vld [vmem:[%s209 + $0x58] sm:$0x7f]
    %v222 = vld [vmem:[%s209 + $0x60] sm:$0x7f]
    %v223 = vld [vmem:[%s209 + $0x68] sm:$0x7f]
    %v224 = vld [vmem:[%s209 + $0x70] sm:$0x7f]
    %v225 = vld [vmem:[%s209 + $0x78] sm:$0x7f]
    %v226 = vld [vmem:[%s209 + $0x80] sm:$0x7f]
    %v227 = vld [vmem:[%s209 + $0x88] sm:$0x7f]
    %v228 = vld [vmem:[%s209 + $0x90] sm:$0x7f]
    %v229 = vld [vmem:[%s209 + $0x98] sm:$0x7f]
    %v230 = vld [vmem:[%s209 + $0xa0] sm:$0x7f]
    %v231 = vld [vmem:[%s209 + $0xa8] sm:$0x7f]
    %v232 = vld [vmem:[%s209 + $0xb0] sm:$0x7f]
    %v233 = vld [vmem:[%s209 + $0xb8] sm:$0x7f]
    %v234 = vld [vmem:[%s209 + $0xc0] sm:$0x7f]
    %v235 = vld [vmem:[%s209 + $0xc8] sm:$0x7f]
    %s236 = scalar_lea.vmem %s0, 672
    %v237 = vld [vmem:[%s236] sm:$0x7f]
    %v238 = vld [vmem:[%s236 + $0x8] sm:$0x7f]
    %v239 = vld [vmem:[%s236 + $0x10] sm:$0x7f]
    %v240 = vld [vmem:[%s236 + $0x18] sm:$0x7f]
    %v241 = vld [vmem:[%s236 + $0x20] sm:$0x7f]
    %v242 = vld [vmem:[%s236 + $0x28] sm:$0x7f]
    %v243 = vld [vmem:[%s236 + $0x30] sm:$0x7f]
    %v244 = vld [vmem:[%s236 + $0x38] sm:$0x7f]
    %v245 = vld [vmem:[%s236 + $0x40] sm:$0x7f]
    %v246 = vld [vmem:[%s236 + $0x48] sm:$0x7f]
    %v247 = vld [vmem:[%s236 + $0x50] sm:$0x7f]
    %v248 = vld [vmem:[%s236 + $0x58] sm:$0x7f]
    %v249 = vld [vmem:[%s236 + $0x60] sm:$0x7f]
    %v250 = vld [vmem:[%s236 + $0x68] sm:$0x7f]
    %v251 = vld [vmem:[%s236 + $0x70] sm:$0x7f]
    %v252 = vld [vmem:[%s236 + $0x78] sm:$0x7f]
    %v253 = vld [vmem:[%s236 + $0x80] sm:$0x7f]
    %v254 = vld [vmem:[%s236 + $0x88] sm:$0x7f]
    %v255 = vld [vmem:[%s236 + $0x90] sm:$0x7f]
    %v256 = vld [vmem:[%s236 + $0x98] sm:$0x7f]
    %v257 = vld [vmem:[%s236 + $0xa0] sm:$0x7f]
    %v258 = vld [vmem:[%s236 + $0xa8] sm:$0x7f]
    %v259 = vld [vmem:[%s236 + $0xb0] sm:$0x7f]
    %v260 = vld [vmem:[%s236 + $0xb8] sm:$0x7f]
    %v261 = vld [vmem:[%s236 + $0xc0] sm:$0x7f]
    %v262 = vld [vmem:[%s236 + $0xc8] sm:$0x7f]
    %s263 = scalar_lea.vmem %s0, 680
    %v264 = vld [vmem:[%s263] sm:$0x7f]
    %v265 = vld [vmem:[%s263 + $0x8] sm:$0x7f]
    %v266 = vld [vmem:[%s263 + $0x10] sm:$0x7f]
    %v267 = vld [vmem:[%s263 + $0x18] sm:$0x7f]
    %v268 = vld [vmem:[%s263 + $0x20] sm:$0x7f]
    %v269 = vld [vmem:[%s263 + $0x28] sm:$0x7f]
    %v270 = vld [vmem:[%s263 + $0x30] sm:$0x7f]
    %v271 = vld [vmem:[%s263 + $0x38] sm:$0x7f]
    %v272 = vld [vmem:[%s263 + $0x40] sm:$0x7f]
    %v273 = vld [vmem:[%s263 + $0x48] sm:$0x7f]
    %v274 = vld [vmem:[%s263 + $0x50] sm:$0x7f]
    %v275 = vld [vmem:[%s263 + $0x58] sm:$0x7f]
    %v276 = vld [vmem:[%s263 + $0x60] sm:$0x7f]
    %v277 = vld [vmem:[%s263 + $0x68] sm:$0x7f]
    %v278 = vld [vmem:[%s263 + $0x70] sm:$0x7f]
    %v279 = vld [vmem:[%s263 + $0x78] sm:$0x7f]
    %v280 = vld [vmem:[%s263 + $0x80] sm:$0x7f]
    %v281 = vld [vmem:[%s263 + $0x88] sm:$0x7f]
    %v282 = vld [vmem:[%s263 + $0x90] sm:$0x7f]
    %v283 = vld [vmem:[%s263 + $0x98] sm:$0x7f]
    %v284 = vld [vmem:[%s263 + $0xa0] sm:$0x7f]
    %v285 = vld [vmem:[%s263 + $0xa8] sm:$0x7f]
    %v286 = vld [vmem:[%s263 + $0xb0] sm:$0x7f]
    %v287 = vld [vmem:[%s263 + $0xb8] sm:$0x7f]
    %v288 = vld [vmem:[%s263 + $0xc0] sm:$0x7f]
    %v289 = vld [vmem:[%s263 + $0xc8] sm:$0x7f]
    %v290 = vld [vmem:[%s0 + $0x1] sm:$0x3f]
    %v291 = vld [vmem:[%s0 + $0x9] sm:$0x3f]
    %v292 = vld [vmem:[%s0 + $0x11] sm:$0x3f]
    %v293 = vld [vmem:[%s0 + $0x19] sm:$0x3f]
    %v294 = vld [vmem:[%s0 + $0x21] sm:$0x3f]
    %v295 = vld [vmem:[%s0 + $0x29] sm:$0x3f]
    %v296 = vld [vmem:[%s0 + $0x31] sm:$0x3f]
    %v297 = vld [vmem:[%s0 + $0x39] sm:$0x3f]
    %v298 = vld [vmem:[%s0 + $0x41] sm:$0x3f]
    %v299 = vld [vmem:[%s0 + $0x49] sm:$0x3f]
    %v300 = vld [vmem:[%s0 + $0x51] sm:$0x3f]
    %v301 = vld [vmem:[%s0 + $0x59] sm:$0x3f]
    %v302 = vld [vmem:[%s0 + $0x61] sm:$0x3f]
    %v303 = vld [vmem:[%s0 + $0x69] sm:$0x3f]
    %v304 = vld [vmem:[%s0 + $0x71] sm:$0x3f]
    %v305 = vld [vmem:[%s0 + $0x79] sm:$0x3f]
    %v306 = vld [vmem:[%s0 + $0x81] sm:$0x3f]
    %v307 = vld [vmem:[%s0 + $0x89] sm:$0x3f]
    %v308 = vld [vmem:[%s0 + $0x91] sm:$0x3f]
    %v309 = vld [vmem:[%s0 + $0x99] sm:$0x3f]
    %v310 = vld [vmem:[%s0 + $0xa1] sm:$0x3f]
    %v311 = vld [vmem:[%s0 + $0xa9] sm:$0x3f]
    %v312 = vld [vmem:[%s0 + $0xb1] sm:$0x3f]
    %v313 = vld [vmem:[%s0 + $0xb9] sm:$0x3f]
    %v314 = vld [vmem:[%s0 + $0xc1] sm:$0x3f]
    %v315 = vld [vmem:[%s0 + $0xc9] sm:$0x3f]
    %v316 = vld [vmem:[%s101 + $0x1] sm:$0x3f]
    %v317 = vld [vmem:[%s101 + $0x9] sm:$0x3f]
    %v318 = vld [vmem:[%s101 + $0x11] sm:$0x3f]
    %v319 = vld [vmem:[%s101 + $0x19] sm:$0x3f]
    %v320 = vld [vmem:[%s101 + $0x21] sm:$0x3f]
    %v321 = vld [vmem:[%s101 + $0x29] sm:$0x3f]
    %v322 = vld [vmem:[%s101 + $0x31] sm:$0x3f]
    %v323 = vld [vmem:[%s101 + $0x39] sm:$0x3f]
    %v324 = vld [vmem:[%s101 + $0x41] sm:$0x3f]
    %v325 = vld [vmem:[%s101 + $0x49] sm:$0x3f]
    %v326 = vld [vmem:[%s101 + $0x51] sm:$0x3f]
    %v327 = vld [vmem:[%s101 + $0x59] sm:$0x3f]
    %v328 = vld [vmem:[%s101 + $0x61] sm:$0x3f]
    %v329 = vld [vmem:[%s101 + $0x69] sm:$0x3f]
    %v330 = vld [vmem:[%s101 + $0x71] sm:$0x3f]
    %v331 = vld [vmem:[%s101 + $0x79] sm:$0x3f]
    %v332 = vld [vmem:[%s101 + $0x81] sm:$0x3f]
    %v333 = vld [vmem:[%s101 + $0x89] sm:$0x3f]
    %v334 = vld [vmem:[%s101 + $0x91] sm:$0x3f]
    %v335 = vld [vmem:[%s101 + $0x99] sm:$0x3f]
    %v336 = vld [vmem:[%s101 + $0xa1] sm:$0x3f]
    %v337 = vld [vmem:[%s101 + $0xa9] sm:$0x3f]
    %v338 = vld [vmem:[%s101 + $0xb1] sm:$0x3f]
    %v339 = vld [vmem:[%s101 + $0xb9] sm:$0x3f]
    %v340 = vld [vmem:[%s101 + $0xc1] sm:$0x3f]
    %v341 = vld [vmem:[%s101 + $0xc9] sm:$0x3f]
    %s342 = sld [smem:[#allocation2]]
    %s343 = sld [smem:[#allocation2 + $0x1]]
    %s344 = sld [smem:[#allocation2 + $0x2]]
    %s345 = sld [smem:[#allocation2 + $0x3]]
    %v346 = vstv %s342
    %v347 = vmul.f32 %v346, %v75
    %v348 = vmul.f32 %v346, %v76
    %v349 = vmul.f32 %v346, %v77
    %v350 = vmul.f32 %v346, %v78
    %v351 = vmul.f32 %v346, %v79
    %v352 = vmul.f32 %v346, %v80
    %v353 = vmul.f32 %v346, %v81
    %v354 = vmul.f32 %v346, %v82
    %v355 = vmul.f32 %v346, %v83
    %v356 = vmul.f32 %v346, %v84
    %v357 = vmul.f32 %v346, %v85
    %v358 = vmul.f32 %v346, %v86
    %v359 = vmul.f32 %v346, %v87
    %v360 = vmul.f32 %v346, %v88
    %v361 = vmul.f32 %v346, %v89
    %v362 = vmul.f32 %v346, %v90
    %v363 = vmul.f32 %v346, %v91
    %v364 = vmul.f32 %v346, %v92
    %v365 = vmul.f32 %v346, %v93
    %v366 = vmul.f32 %v346, %v94
    %v367 = vmul.f32 %v346, %v95
    %v368 = vmul.f32 %v346, %v96
    %v369 = vmul.f32 %v346, %v97
    %v370 = vmul.f32 %v346, %v98
    %v371 = vmul.f32 %v346, %v99
    %v372 = vmul.f32 %v346, %v100
    %v373 = vstv %s343
    %v374 = vmul.f32 %v373, %v129
    %v375 = vmul.f32 %v373, %v130
    %v376 = vmul.f32 %v373, %v131
    %v377 = vmul.f32 %v373, %v132
    %v378 = vmul.f32 %v373, %v133
    %v379 = vmul.f32 %v373, %v134
    %v380 = vmul.f32 %v373, %v135
    %v381 = vmul.f32 %v373, %v136
    %v382 = vmul.f32 %v373, %v137
    %v383 = vmul.f32 %v373, %v138
    %v384 = vmul.f32 %v373, %v139
    %v385 = vmul.f32 %v373, %v140
    %v386 = vmul.f32 %v373, %v141
    %v387 = vmul.f32 %v373, %v142
    %v388 = vmul.f32 %v373, %v143
    %v389 = vmul.f32 %v373, %v144
    %v390 = vmul.f32 %v373, %v145
    %v391 = vmul.f32 %v373, %v146
    %v392 = vmul.f32 %v373, %v147
    %v393 = vmul.f32 %v373, %v148
    %v394 = vmul.f32 %v373, %v149
    %v395 = vmul.f32 %v373, %v150
    %v396 = vmul.f32 %v373, %v151
    %v397 = vmul.f32 %v373, %v152
    %v398 = vmul.f32 %v373, %v153
    %v399 = vmul.f32 %v373, %v154
    %v400 = vadd.f32 %v347, %v374
    %v401 = vadd.f32 %v348, %v375
    %v402 = vadd.f32 %v349, %v376
    %v403 = vadd.f32 %v350, %v377
    %v404 = vadd.f32 %v351, %v378
    %v405 = vadd.f32 %v352, %v379
    %v406 = vadd.f32 %v353, %v380
    %v407 = vadd.f32 %v354, %v381
    %v408 = vadd.f32 %v355, %v382
    %v409 = vadd.f32 %v356, %v383
    %v410 = vadd.f32 %v357, %v384
    %v411 = vadd.f32 %v358, %v385
    %v412 = vadd.f32 %v359, %v386
    %v413 = vadd.f32 %v360, %v387
    %v414 = vadd.f32 %v361, %v388
    %v415 = vadd.f32 %v362, %v389
    %v416 = vadd.f32 %v363, %v390
    %v417 = vadd.f32 %v364, %v391
    %v418 = vadd.f32 %v365, %v392
    %v419 = vadd.f32 %v366, %v393
    %v420 = vadd.f32 %v367, %v394
    %v421 = vadd.f32 %v368, %v395
    %v422 = vadd.f32 %v369, %v396
    %v423 = vadd.f32 %v370, %v397
    %v424 = vadd.f32 %v371, %v398
    %v425 = vadd.f32 %v372, %v399
    %v426 = vstv %s344
    %v427 = vmul.f32 %v426, %v102
    %v428 = vmul.f32 %v426, %v103
    %v429 = vmul.f32 %v426, %v104
    %v430 = vmul.f32 %v426, %v105
    %v431 = vmul.f32 %v426, %v106
    %v432 = vmul.f32 %v426, %v107
    %v433 = vmul.f32 %v426, %v108
    %v434 = vmul.f32 %v426, %v109
    %v435 = vmul.f32 %v426, %v110
    %v436 = vmul.f32 %v426, %v111
    %v437 = vmul.f32 %v426, %v112
    %v438 = vmul.f32 %v426, %v113
    %v439 = vmul.f32 %v426, %v114
    %v440 = vmul.f32 %v426, %v115
    %v441 = vmul.f32 %v426, %v116
    %v442 = vmul.f32 %v426, %v117
    %v443 = vmul.f32 %v426, %v118
    %v444 = vmul.f32 %v426, %v119
    %v445 = vmul.f32 %v426, %v120
    %v446 = vmul.f32 %v426, %v121
    %v447 = vmul.f32 %v426, %v122
    %v448 = vmul.f32 %v426, %v123
    %v449 = vmul.f32 %v426, %v124
    %v450 = vmul.f32 %v426, %v125
    %v451 = vmul.f32 %v426, %v126
    %v452 = vmul.f32 %v426, %v127
    %v453 = vadd.f32 %v400, %v427
    %v454 = vadd.f32 %v401, %v428
    %v455 = vadd.f32 %v402, %v429
    %v456 = vadd.f32 %v403, %v430
    %v457 = vadd.f32 %v404, %v431
    %v458 = vadd.f32 %v405, %v432
    %v459 = vadd.f32 %v406, %v433
    %v460 = vadd.f32 %v407, %v434
    %v461 = vadd.f32 %v408, %v435
    %v462 = vadd.f32 %v409, %v436
    %v463 = vadd.f32 %v410, %v437
    %v464 = vadd.f32 %v411, %v438
    %v465 = vadd.f32 %v412, %v439
    %v466 = vadd.f32 %v413, %v440
    %v467 = vadd.f32 %v414, %v441
    %v468 = vadd.f32 %v415, %v442
    %v469 = vadd.f32 %v416, %v443
    %v470 = vadd.f32 %v417, %v444
    %v471 = vadd.f32 %v418, %v445
    %v472 = vadd.f32 %v419, %v446
    %v473 = vadd.f32 %v420, %v447
    %v474 = vadd.f32 %v421, %v448
    %v475 = vadd.f32 %v422, %v449
    %v476 = vadd.f32 %v423, %v450
    %v477 = vadd.f32 %v424, %v451
    %v478 = vadd.f32 %v425, %v452
    %v479 = vstv %s345
    %v480 = vmul.f32 %v479, %v156
    %v481 = vmul.f32 %v479, %v157
    %v482 = vmul.f32 %v479, %v158
    %v483 = vmul.f32 %v479, %v159
    %v484 = vmul.f32 %v479, %v160
    %v485 = vmul.f32 %v479, %v161
    %v486 = vmul.f32 %v479, %v162
    %v487 = vmul.f32 %v479, %v163
    %v488 = vmul.f32 %v479, %v164
    %v489 = vmul.f32 %v479, %v165
    %v490 = vmul.f32 %v479, %v166
    %v491 = vmul.f32 %v479, %v167
    %v492 = vmul.f32 %v479, %v168
    %v493 = vmul.f32 %v479, %v169
    %v494 = vmul.f32 %v479, %v170
    %v495 = vmul.f32 %v479, %v171
    %v496 = vmul.f32 %v479, %v172
    %v497 = vmul.f32 %v479, %v173
    %v498 = vmul.f32 %v479, %v174
    %v499 = vmul.f32 %v479, %v175
    %v500 = vmul.f32 %v479, %v176
    %v501 = vmul.f32 %v479, %v177
    %v502 = vmul.f32 %v479, %v178
    %v503 = vmul.f32 %v479, %v179
    %v504 = vmul.f32 %v479, %v180
    %v505 = vmul.f32 %v479, %v181
    %v506 = vadd.f32 %v453, %v480
    %v507 = vadd.f32 %v454, %v481
    %v508 = vadd.f32 %v455, %v482
    %v509 = vadd.f32 %v456, %v483
    %v510 = vadd.f32 %v457, %v484
    %v511 = vadd.f32 %v458, %v485
    %v512 = vadd.f32 %v459, %v486
    %v513 = vadd.f32 %v460, %v487
    %v514 = vadd.f32 %v461, %v488
    %v515 = vadd.f32 %v462, %v489
    %v516 = vadd.f32 %v463, %v490
    %v517 = vadd.f32 %v464, %v491
    %v518 = vadd.f32 %v465, %v492
    %v519 = vadd.f32 %v466, %v493
    %v520 = vadd.f32 %v467, %v494
    %v521 = vadd.f32 %v468, %v495
    %v522 = vadd.f32 %v469, %v496
    %v523 = vadd.f32 %v470, %v497
    %v524 = vadd.f32 %v471, %v498
    %v525 = vadd.f32 %v472, %v499
    %v526 = vadd.f32 %v473, %v500
    %v527 = vadd.f32 %v474, %v501
    %v528 = vadd.f32 %v475, %v502
    %v529 = vadd.f32 %v476, %v503
    %v530 = vadd.f32 %v477, %v504
    %v531 = vadd.f32 %v478, %v505
    %v532 = vmul.f32 %v346, %v129
    %v533 = vmul.f32 %v346, %v130
    %v534 = vmul.f32 %v346, %v131
    %v535 = vmul.f32 %v346, %v132
    %v536 = vmul.f32 %v346, %v133
    %v537 = vmul.f32 %v346, %v134
    %v538 = vmul.f32 %v346, %v135
    %v539 = vmul.f32 %v346, %v136
    %v540 = vmul.f32 %v346, %v137
    %v541 = vmul.f32 %v346, %v138
    %v542 = vmul.f32 %v346, %v139
    %v543 = vmul.f32 %v346, %v140
    %v544 = vmul.f32 %v346, %v141
    %v545 = vmul.f32 %v346, %v142
    %v546 = vmul.f32 %v346, %v143
    %v547 = vmul.f32 %v346, %v144
    %v548 = vmul.f32 %v346, %v145
    %v549 = vmul.f32 %v346, %v146
    %v550 = vmul.f32 %v346, %v147
    %v551 = vmul.f32 %v346, %v148
    %v552 = vmul.f32 %v346, %v149
    %v553 = vmul.f32 %v346, %v150
    %v554 = vmul.f32 %v346, %v151
    %v555 = vmul.f32 %v346, %v152
    %v556 = vmul.f32 %v346, %v153
    %v557 = vmul.f32 %v346, %v154
    %v558 = vmul.f32 %v373, %v183
    %v559 = vmul.f32 %v373, %v184
    %v560 = vmul.f32 %v373, %v185
    %v561 = vmul.f32 %v373, %v186
    %v562 = vmul.f32 %v373, %v187
    %v563 = vmul.f32 %v373, %v188
    %v564 = vmul.f32 %v373, %v189
    %v565 = vmul.f32 %v373, %v190
    %v566 = vmul.f32 %v373, %v191
    %v567 = vmul.f32 %v373, %v192
    %v568 = vmul.f32 %v373, %v193
    %v569 = vmul.f32 %v373, %v194
    %v570 = vmul.f32 %v373, %v195
    %v571 = vmul.f32 %v373, %v196
    %v572 = vmul.f32 %v373, %v197
    %v573 = vmul.f32 %v373, %v198
    %v574 = vmul.f32 %v373, %v199
    %v575 = vmul.f32 %v373, %v200
    %v576 = vmul.f32 %v373, %v201
    %v577 = vmul.f32 %v373, %v202
    %v578 = vmul.f32 %v373, %v203
    %v579 = vmul.f32 %v373, %v204
    %v580 = vmul.f32 %v373, %v205
    %v581 = vmul.f32 %v373, %v206
    %v582 = vmul.f32 %v373, %v207
    %v583 = vmul.f32 %v373, %v208
    %v584 = vadd.f32 %v532, %v558
    %v585 = vadd.f32 %v533, %v559
    %v586 = vadd.f32 %v534, %v560
    %v587 = vadd.f32 %v535, %v561
    %v588 = vadd.f32 %v536, %v562
    %v589 = vadd.f32 %v537, %v563
    %v590 = vadd.f32 %v538, %v564
    %v591 = vadd.f32 %v539, %v565
    %v592 = vadd.f32 %v540, %v566
    %v593 = vadd.f32 %v541, %v567
    %v594 = vadd.f32 %v542, %v568
    %v595 = vadd.f32 %v543, %v569
    %v596 = vadd.f32 %v544, %v570
    %v597 = vadd.f32 %v545, %v571
    %v598 = vadd.f32 %v546, %v572
    %v599 = vadd.f32 %v547, %v573
    %v600 = vadd.f32 %v548, %v574
    %v601 = vadd.f32 %v549, %v575
    %v602 = vadd.f32 %v550, %v576
    %v603 = vadd.f32 %v551, %v577
    %v604 = vadd.f32 %v552, %v578
    %v605 = vadd.f32 %v553, %v579
    %v606 = vadd.f32 %v554, %v580
    %v607 = vadd.f32 %v555, %v581
    %v608 = vadd.f32 %v556, %v582
    %v609 = vadd.f32 %v557, %v583
    %v610 = vmul.f32 %v426, %v156
    %v611 = vmul.f32 %v426, %v157
    %v612 = vmul.f32 %v426, %v158
    %v613 = vmul.f32 %v426, %v159
    %v614 = vmul.f32 %v426, %v160
    %v615 = vmul.f32 %v426, %v161
    %v616 = vmul.f32 %v426, %v162
    %v617 = vmul.f32 %v426, %v163
    %v618 = vmul.f32 %v426, %v164
    %v619 = vmul.f32 %v426, %v165
    %v620 = vmul.f32 %v426, %v166
    %v621 = vmul.f32 %v426, %v167
    %v622 = vmul.f32 %v426, %v168
    %v623 = vmul.f32 %v426, %v169
    %v624 = vmul.f32 %v426, %v170
    %v625 = vmul.f32 %v426, %v171
    %v626 = vmul.f32 %v426, %v172
    %v627 = vmul.f32 %v426, %v173
    %v628 = vmul.f32 %v426, %v174
    %v629 = vmul.f32 %v426, %v175
    %v630 = vmul.f32 %v426, %v176
    %v631 = vmul.f32 %v426, %v177
    %v632 = vmul.f32 %v426, %v178
    %v633 = vmul.f32 %v426, %v179
    %v634 = vmul.f32 %v426, %v180
    %v635 = vmul.f32 %v426, %v181
    %v636 = vadd.f32 %v584, %v610
    %v637 = vadd.f32 %v585, %v611
    %v638 = vadd.f32 %v586, %v612
    %v639 = vadd.f32 %v587, %v613
    %v640 = vadd.f32 %v588, %v614
    %v641 = vadd.f32 %v589, %v615
    %v642 = vadd.f32 %v590, %v616
    %v643 = vadd.f32 %v591, %v617
    %v644 = vadd.f32 %v592, %v618
    %v645 = vadd.f32 %v593, %v619
    %v646 = vadd.f32 %v594, %v620
    %v647 = vadd.f32 %v595, %v621
    %v648 = vadd.f32 %v596, %v622
    %v649 = vadd.f32 %v597, %v623
    %v650 = vadd.f32 %v598, %v624
    %v651 = vadd.f32 %v599, %v625
    %v652 = vadd.f32 %v600, %v626
    %v653 = vadd.f32 %v601, %v627
    %v654 = vadd.f32 %v602, %v628
    %v655 = vadd.f32 %v603, %v629
    %v656 = vadd.f32 %v604, %v630
    %v657 = vadd.f32 %v605, %v631
    %v658 = vadd.f32 %v606, %v632
    %v659 = vadd.f32 %v607, %v633
    %v660 = vadd.f32 %v608, %v634
    %v661 = vadd.f32 %v609, %v635
    %v662 = vmul.f32 %v479, %v210
    %v663 = vmul.f32 %v479, %v211
    %v664 = vmul.f32 %v479, %v212
    %v665 = vmul.f32 %v479, %v213
    %v666 = vmul.f32 %v479, %v214
    %v667 = vmul.f32 %v479, %v215
    %v668 = vmul.f32 %v479, %v216
    %v669 = vmul.f32 %v479, %v217
    %v670 = vmul.f32 %v479, %v218
    %v671 = vmul.f32 %v479, %v219
    %v672 = vmul.f32 %v479, %v220
    %v673 = vmul.f32 %v479, %v221
    %v674 = vmul.f32 %v479, %v222
    %v675 = vmul.f32 %v479, %v223
    %v676 = vmul.f32 %v479, %v224
    %v677 = vmul.f32 %v479, %v225
    %v678 = vmul.f32 %v479, %v226
    %v679 = vmul.f32 %v479, %v227
    %v680 = vmul.f32 %v479, %v228
    %v681 = vmul.f32 %v479, %v229
    %v682 = vmul.f32 %v479, %v230
    %v683 = vmul.f32 %v479, %v231
    %v684 = vmul.f32 %v479, %v232
    %v685 = vmul.f32 %v479, %v233
    %v686 = vmul.f32 %v479, %v234
    %v687 = vmul.f32 %v479, %v235
    %v688 = vadd.f32 %v636, %v662
    %v689 = vadd.f32 %v637, %v663
    %v690 = vadd.f32 %v638, %v664
    %v691 = vadd.f32 %v639, %v665
    %v692 = vadd.f32 %v640, %v666
    %v693 = vadd.f32 %v641, %v667
    %v694 = vadd.f32 %v642, %v668
    %v695 = vadd.f32 %v643, %v669
    %v696 = vadd.f32 %v644, %v670
    %v697 = vadd.f32 %v645, %v671
    %v698 = vadd.f32 %v646, %v672
    %v699 = vadd.f32 %v647, %v673
    %v700 = vadd.f32 %v648, %v674
    %v701 = vadd.f32 %v649, %v675
    %v702 = vadd.f32 %v650, %v676
    %v703 = vadd.f32 %v651, %v677
    %v704 = vadd.f32 %v652, %v678
    %v705 = vadd.f32 %v653, %v679
    %v706 = vadd.f32 %v654, %v680
    %v707 = vadd.f32 %v655, %v681
    %v708 = vadd.f32 %v656, %v682
    %v709 = vadd.f32 %v657, %v683
    %v710 = vadd.f32 %v658, %v684
    %v711 = vadd.f32 %v659, %v685
    %v712 = vadd.f32 %v660, %v686
    %v713 = vadd.f32 %v661, %v687
    %v714 = vmul.f32 %v346, %v183
    %v715 = vmul.f32 %v346, %v184
    %v716 = vmul.f32 %v346, %v185
    %v717 = vmul.f32 %v346, %v186
    %v718 = vmul.f32 %v346, %v187
    %v719 = vmul.f32 %v346, %v188
    %v720 = vmul.f32 %v346, %v189
    %v721 = vmul.f32 %v346, %v190
    %v722 = vmul.f32 %v346, %v191
    %v723 = vmul.f32 %v346, %v192
    %v724 = vmul.f32 %v346, %v193
    %v725 = vmul.f32 %v346, %v194
    %v726 = vmul.f32 %v346, %v195
    %v727 = vmul.f32 %v346, %v196
    %v728 = vmul.f32 %v346, %v197
    %v729 = vmul.f32 %v346, %v198
    %v730 = vmul.f32 %v346, %v199
    %v731 = vmul.f32 %v346, %v200
    %v732 = vmul.f32 %v346, %v201
    %v733 = vmul.f32 %v346, %v202
    %v734 = vmul.f32 %v346, %v203
    %v735 = vmul.f32 %v346, %v204
    %v736 = vmul.f32 %v346, %v205
    %v737 = vmul.f32 %v346, %v206
    %v738 = vmul.f32 %v346, %v207
    %v739 = vmul.f32 %v346, %v208
    %v740 = vmul.f32 %v373, %v237
    %v741 = vmul.f32 %v373, %v238
    %v742 = vmul.f32 %v373, %v239
    %v743 = vmul.f32 %v373, %v240
    %v744 = vmul.f32 %v373, %v241
    %v745 = vmul.f32 %v373, %v242
    %v746 = vmul.f32 %v373, %v243
    %v747 = vmul.f32 %v373, %v244
    %v748 = vmul.f32 %v373, %v245
    %v749 = vmul.f32 %v373, %v246
    %v750 = vmul.f32 %v373, %v247
    %v751 = vmul.f32 %v373, %v248
    %v752 = vmul.f32 %v373, %v249
    %v753 = vmul.f32 %v373, %v250
    %v754 = vmul.f32 %v373, %v251
    %v755 = vmul.f32 %v373, %v252
    %v756 = vmul.f32 %v373, %v253
    %v757 = vmul.f32 %v373, %v254
    %v758 = vmul.f32 %v373, %v255
    %v759 = vmul.f32 %v373, %v256
    %v760 = vmul.f32 %v373, %v257
    %v761 = vmul.f32 %v373, %v258
    %v762 = vmul.f32 %v373, %v259
    %v763 = vmul.f32 %v373, %v260
    %v764 = vmul.f32 %v373, %v261
    %v765 = vmul.f32 %v373, %v262
    %v766 = vadd.f32 %v714, %v740
    %v767 = vadd.f32 %v715, %v741
    %v768 = vadd.f32 %v716, %v742
    %v769 = vadd.f32 %v717, %v743
    %v770 = vadd.f32 %v718, %v744
    %v771 = vadd.f32 %v719, %v745
    %v772 = vadd.f32 %v720, %v746
    %v773 = vadd.f32 %v721, %v747
    %v774 = vadd.f32 %v722, %v748
    %v775 = vadd.f32 %v723, %v749
    %v776 = vadd.f32 %v724, %v750
    %v777 = vadd.f32 %v725, %v751
    %v778 = vadd.f32 %v726, %v752
    %v779 = vadd.f32 %v727, %v753
    %v780 = vadd.f32 %v728, %v754
    %v781 = vadd.f32 %v729, %v755
    %v782 = vadd.f32 %v730, %v756
    %v783 = vadd.f32 %v731, %v757
    %v784 = vadd.f32 %v732, %v758
    %v785 = vadd.f32 %v733, %v759
    %v786 = vadd.f32 %v734, %v760
    %v787 = vadd.f32 %v735, %v761
    %v788 = vadd.f32 %v736, %v762
    %v789 = vadd.f32 %v737, %v763
    %v790 = vadd.f32 %v738, %v764
    %v791 = vadd.f32 %v739, %v765
    %v792 = vmul.f32 %v426, %v210
    %v793 = vmul.f32 %v426, %v211
    %v794 = vmul.f32 %v426, %v212
    %v795 = vmul.f32 %v426, %v213
    %v796 = vmul.f32 %v426, %v214
    %v797 = vmul.f32 %v426, %v215
    %v798 = vmul.f32 %v426, %v216
    %v799 = vmul.f32 %v426, %v217
    %v800 = vmul.f32 %v426, %v218
    %v801 = vmul.f32 %v426, %v219
    %v802 = vmul.f32 %v426, %v220
    %v803 = vmul.f32 %v426, %v221
    %v804 = vmul.f32 %v426, %v222
    %v805 = vmul.f32 %v426, %v223
    %v806 = vmul.f32 %v426, %v224
    %v807 = vmul.f32 %v426, %v225
    %v808 = vmul.f32 %v426, %v226
    %v809 = vmul.f32 %v426, %v227
    %v810 = vmul.f32 %v426, %v228
    %v811 = vmul.f32 %v426, %v229
    %v812 = vmul.f32 %v426, %v230
    %v813 = vmul.f32 %v426, %v231
    %v814 = vmul.f32 %v426, %v232
    %v815 = vmul.f32 %v426, %v233
    %v816 = vmul.f32 %v426, %v234
    %v817 = vmul.f32 %v426, %v235
    %v818 = vadd.f32 %v766, %v792
    %v819 = vadd.f32 %v767, %v793
    %v820 = vadd.f32 %v768, %v794
    %v821 = vadd.f32 %v769, %v795
    %v822 = vadd.f32 %v770, %v796
    %v823 = vadd.f32 %v771, %v797
    %v824 = vadd.f32 %v772, %v798
    %v825 = vadd.f32 %v773, %v799
    %v826 = vadd.f32 %v774, %v800
    %v827 = vadd.f32 %v775, %v801
    %v828 = vadd.f32 %v776, %v802
    %v829 = vadd.f32 %v777, %v803
    %v830 = vadd.f32 %v778, %v804
    %v831 = vadd.f32 %v779, %v805
    %v832 = vadd.f32 %v780, %v806
    %v833 = vadd.f32 %v781, %v807
    %v834 = vadd.f32 %v782, %v808
    %v835 = vadd.f32 %v783, %v809
    %v836 = vadd.f32 %v784, %v810
    %v837 = vadd.f32 %v785, %v811
    %v838 = vadd.f32 %v786, %v812
    %v839 = vadd.f32 %v787, %v813
    %v840 = vadd.f32 %v788, %v814
    %v841 = vadd.f32 %v789, %v815
    %v842 = vadd.f32 %v790, %v816
    %v843 = vadd.f32 %v791, %v817
    %v844 = vmul.f32 %v479, %v264
    %v845 = vmul.f32 %v479, %v265
    %v846 = vmul.f32 %v479, %v266
    %v847 = vmul.f32 %v479, %v267
    %v848 = vmul.f32 %v479, %v268
    %v849 = vmul.f32 %v479, %v269
    %v850 = vmul.f32 %v479, %v270
    %v851 = vmul.f32 %v479, %v271
    %v852 = vmul.f32 %v479, %v272
    %v853 = vmul.f32 %v479, %v273
    %v854 = vmul.f32 %v479, %v274
    %v855 = vmul.f32 %v479, %v275
    %v856 = vmul.f32 %v479, %v276
    %v857 = vmul.f32 %v479, %v277
    %v858 = vmul.f32 %v479, %v278
    %v859 = vmul.f32 %v479, %v279
    %v860 = vmul.f32 %v479, %v280
    %v861 = vmul.f32 %v479, %v281
    %v862 = vmul.f32 %v479, %v282
    %v863 = vmul.f32 %v479, %v283
    %v864 = vmul.f32 %v479, %v284
    %v865 = vmul.f32 %v479, %v285
    %v866 = vmul.f32 %v479, %v286
    %v867 = vmul.f32 %v479, %v287
    %v868 = vmul.f32 %v479, %v288
    %v869 = vmul.f32 %v479, %v289
    %v870 = vadd.f32 %v818, %v844
    %v871 = vadd.f32 %v819, %v845
    %v872 = vadd.f32 %v820, %v846
    %v873 = vadd.f32 %v821, %v847
    %v874 = vadd.f32 %v822, %v848
    %v875 = vadd.f32 %v823, %v849
    %v876 = vadd.f32 %v824, %v850
    %v877 = vadd.f32 %v825, %v851
    %v878 = vadd.f32 %v826, %v852
    %v879 = vadd.f32 %v827, %v853
    %v880 = vadd.f32 %v828, %v854
    %v881 = vadd.f32 %v829, %v855
    %v882 = vadd.f32 %v830, %v856
    %v883 = vadd.f32 %v831, %v857
    %v884 = vadd.f32 %v832, %v858
    %v885 = vadd.f32 %v833, %v859
    %v886 = vadd.f32 %v834, %v860
    %v887 = vadd.f32 %v835, %v861
    %v888 = vadd.f32 %v836, %v862
    %v889 = vadd.f32 %v837, %v863
    %v890 = vadd.f32 %v838, %v864
    %v891 = vadd.f32 %v839, %v865
    %v892 = vadd.f32 %v840, %v866
    %v893 = vadd.f32 %v841, %v867
    %v894 = vadd.f32 %v842, %v868
    %v895 = vadd.f32 %v843, %v869
    %v896 = vmul.f32 %v346, %v237
    %v897 = vmul.f32 %v346, %v238
    %v898 = vmul.f32 %v346, %v239
    %v899 = vmul.f32 %v346, %v240
    %v900 = vmul.f32 %v346, %v241
    %v901 = vmul.f32 %v346, %v242
    %v902 = vmul.f32 %v346, %v243
    %v903 = vmul.f32 %v346, %v244
    %v904 = vmul.f32 %v346, %v245
    %v905 = vmul.f32 %v346, %v246
    %v906 = vmul.f32 %v346, %v247
    %v907 = vmul.f32 %v346, %v248
    %v908 = vmul.f32 %v346, %v249
    %v909 = vmul.f32 %v346, %v250
    %v910 = vmul.f32 %v346, %v251
    %v911 = vmul.f32 %v346, %v252
    %v912 = vmul.f32 %v346, %v253
    %v913 = vmul.f32 %v346, %v254
    %v914 = vmul.f32 %v346, %v255
    %v915 = vmul.f32 %v346, %v256
    %v916 = vmul.f32 %v346, %v257
    %v917 = vmul.f32 %v346, %v258
    %v918 = vmul.f32 %v346, %v259
    %v919 = vmul.f32 %v346, %v260
    %v920 = vmul.f32 %v346, %v261
    %v921 = vmul.f32 %v346, %v262
    %v922 = vmul.f32 %v373, %v290
    %v923 = vmul.f32 %v373, %v291
    %v924 = vmul.f32 %v373, %v292
    %v925 = vmul.f32 %v373, %v293
    %v926 = vmul.f32 %v373, %v294
    %v927 = vmul.f32 %v373, %v295
    %v928 = vmul.f32 %v373, %v296
    %v929 = vmul.f32 %v373, %v297
    %v930 = vmul.f32 %v373, %v298
    %v931 = vmul.f32 %v373, %v299
    %v932 = vmul.f32 %v373, %v300
    %v933 = vmul.f32 %v373, %v301
    %v934 = vmul.f32 %v373, %v302
    %v935 = vmul.f32 %v373, %v303
    %v936 = vmul.f32 %v373, %v304
    %v937 = vmul.f32 %v373, %v305
    %v938 = vmul.f32 %v373, %v306
    %v939 = vmul.f32 %v373, %v307
    %v940 = vmul.f32 %v373, %v308
    %v941 = vmul.f32 %v373, %v309
    %v942 = vmul.f32 %v373, %v310
    %v943 = vmul.f32 %v373, %v311
    %v944 = vmul.f32 %v373, %v312
    %v945 = vmul.f32 %v373, %v313
    %v946 = vmul.f32 %v373, %v314
    %v947 = vmul.f32 %v373, %v315
    %v948 = vadd.f32 %v896, %v922
    %v949 = vadd.f32 %v897, %v923
    %v950 = vadd.f32 %v898, %v924
    %v951 = vadd.f32 %v899, %v925
    %v952 = vadd.f32 %v900, %v926
    %v953 = vadd.f32 %v901, %v927
    %v954 = vadd.f32 %v902, %v928
    %v955 = vadd.f32 %v903, %v929
    %v956 = vadd.f32 %v904, %v930
    %v957 = vadd.f32 %v905, %v931
    %v958 = vadd.f32 %v906, %v932
    %v959 = vadd.f32 %v907, %v933
    %v960 = vadd.f32 %v908, %v934
    %v961 = vadd.f32 %v909, %v935
    %v962 = vadd.f32 %v910, %v936
    %v963 = vadd.f32 %v911, %v937
    %v964 = vadd.f32 %v912, %v938
    %v965 = vadd.f32 %v913, %v939
    %v966 = vadd.f32 %v914, %v940
    %v967 = vadd.f32 %v915, %v941
    %v968 = vadd.f32 %v916, %v942
    %v969 = vadd.f32 %v917, %v943
    %v970 = vadd.f32 %v918, %v944
    %v971 = vadd.f32 %v919, %v945
    %v972 = vadd.f32 %v920, %v946
    %v973 = vadd.f32 %v921, %v947
    %v974 = vmul.f32 %v426, %v264
    %v975 = vmul.f32 %v426, %v265
    %v976 = vmul.f32 %v426, %v266
    %v977 = vmul.f32 %v426, %v267
    %v978 = vmul.f32 %v426, %v268
    %v979 = vmul.f32 %v426, %v269
    %v980 = vmul.f32 %v426, %v270
    %v981 = vmul.f32 %v426, %v271
    %v982 = vmul.f32 %v426, %v272
    %v983 = vmul.f32 %v426, %v273
    %v984 = vmul.f32 %v426, %v274
    %v985 = vmul.f32 %v426, %v275
    %v986 = vmul.f32 %v426, %v276
    %v987 = vmul.f32 %v426, %v277
    %v988 = vmul.f32 %v426, %v278
    %v989 = vmul.f32 %v426, %v279
    %v990 = vmul.f32 %v426, %v280
    %v991 = vmul.f32 %v426, %v281
    %v992 = vmul.f32 %v426, %v282
    %v993 = vmul.f32 %v426, %v283
    %v994 = vmul.f32 %v426, %v284
    %v995 = vmul.f32 %v426, %v285
    %v996 = vmul.f32 %v426, %v286
    %v997 = vmul.f32 %v426, %v287
    %v998 = vmul.f32 %v426, %v288
    %v999 = vmul.f32 %v426, %v289
    %v1000 = vadd.f32 %v948, %v974
    %v1001 = vadd.f32 %v949, %v975
    %v1002 = vadd.f32 %v950, %v976
    %v1003 = vadd.f32 %v951, %v977
    %v1004 = vadd.f32 %v952, %v978
    %v1005 = vadd.f32 %v953, %v979
    %v1006 = vadd.f32 %v954, %v980
    %v1007 = vadd.f32 %v955, %v981
    %v1008 = vadd.f32 %v956, %v982
    %v1009 = vadd.f32 %v957, %v983
    %v1010 = vadd.f32 %v958, %v984
    %v1011 = vadd.f32 %v959, %v985
    %v1012 = vadd.f32 %v960, %v986
    %v1013 = vadd.f32 %v961, %v987
    %v1014 = vadd.f32 %v962, %v988
    %v1015 = vadd.f32 %v963, %v989
    %v1016 = vadd.f32 %v964, %v990
    %v1017 = vadd.f32 %v965, %v991
    %v1018 = vadd.f32 %v966, %v992
    %v1019 = vadd.f32 %v967, %v993
    %v1020 = vadd.f32 %v968, %v994
    %v1021 = vadd.f32 %v969, %v995
    %v1022 = vadd.f32 %v970, %v996
    %v1023 = vadd.f32 %v971, %v997
    %v1024 = vadd.f32 %v972, %v998
    %v1025 = vadd.f32 %v973, %v999
    %v1026 = vmul.f32 %v479, %v316
    %v1027 = vmul.f32 %v479, %v317
    %v1028 = vmul.f32 %v479, %v318
    %v1029 = vmul.f32 %v479, %v319
    %v1030 = vmul.f32 %v479, %v320
    %v1031 = vmul.f32 %v479, %v321
    %v1032 = vmul.f32 %v479, %v322
    %v1033 = vmul.f32 %v479, %v323
    %v1034 = vmul.f32 %v479, %v324
    %v1035 = vmul.f32 %v479, %v325
    %v1036 = vmul.f32 %v479, %v326
    %v1037 = vmul.f32 %v479, %v327
    %v1038 = vmul.f32 %v479, %v328
    %v1039 = vmul.f32 %v479, %v329
    %v1040 = vmul.f32 %v479, %v330
    %v1041 = vmul.f32 %v479, %v331
    %v1042 = vmul.f32 %v479, %v332
    %v1043 = vmul.f32 %v479, %v333
    %v1044 = vmul.f32 %v479, %v334
    %v1045 = vmul.f32 %v479, %v335
    %v1046 = vmul.f32 %v479, %v336
    %v1047 = vmul.f32 %v479, %v337
    %v1048 = vmul.f32 %v479, %v338
    %v1049 = vmul.f32 %v479, %v339
    %v1050 = vmul.f32 %v479, %v340
    %v1051 = vmul.f32 %v479, %v341
    %v1052 = vadd.f32 %v1000, %v1026
    %v1053 = vadd.f32 %v1001, %v1027
    %v1054 = vadd.f32 %v1002, %v1028
    %v1055 = vadd.f32 %v1003, %v1029
    %v1056 = vadd.f32 %v1004, %v1030
    %v1057 = vadd.f32 %v1005, %v1031
    %v1058 = vadd.f32 %v1006, %v1032
    %v1059 = vadd.f32 %v1007, %v1033
    %v1060 = vadd.f32 %v1008, %v1034
    %v1061 = vadd.f32 %v1009, %v1035
    %v1062 = vadd.f32 %v1010, %v1036
    %v1063 = vadd.f32 %v1011, %v1037
    %v1064 = vadd.f32 %v1012, %v1038
    %v1065 = vadd.f32 %v1013, %v1039
    %v1066 = vadd.f32 %v1014, %v1040
    %v1067 = vadd.f32 %v1015, %v1041
    %v1068 = vadd.f32 %v1016, %v1042
    %v1069 = vadd.f32 %v1017, %v1043
    %v1070 = vadd.f32 %v1018, %v1044
    %v1071 = vadd.f32 %v1019, %v1045
    %v1072 = vadd.f32 %v1020, %v1046
    %v1073 = vadd.f32 %v1021, %v1047
    %v1074 = vadd.f32 %v1022, %v1048
    %v1075 = vadd.f32 %v1023, %v1049
    %v1076 = vadd.f32 %v1024, %v1050
    %v1077 = vadd.f32 %v1025, %v1051
    %v1078 = vmax.f32 %v506, %v688
    %v1079 = vmax.f32 %v507, %v689
    %v1080 = vmax.f32 %v508, %v690
    %v1081 = vmax.f32 %v509, %v691
    %v1082 = vmax.f32 %v510, %v692
    %v1083 = vmax.f32 %v511, %v693
    %v1084 = vmax.f32 %v512, %v694
    %v1085 = vmax.f32 %v513, %v695
    %v1086 = vmax.f32 %v514, %v696
    %v1087 = vmax.f32 %v515, %v697
    %v1088 = vmax.f32 %v516, %v698
    %v1089 = vmax.f32 %v517, %v699
    %v1090 = vmax.f32 %v518, %v700
    %v1091 = vmax.f32 %v519, %v701
    %v1092 = vmax.f32 %v520, %v702
    %v1093 = vmax.f32 %v521, %v703
    %v1094 = vmax.f32 %v522, %v704
    %v1095 = vmax.f32 %v523, %v705
    %v1096 = vmax.f32 %v524, %v706
    %v1097 = vmax.f32 %v525, %v707
    %v1098 = vmax.f32 %v526, %v708
    %v1099 = vmax.f32 %v527, %v709
    %v1100 = vmax.f32 %v528, %v710
    %v1101 = vmax.f32 %v529, %v711
    %v1102 = vmax.f32 %v530, %v712
    %v1103 = vmax.f32 %v531, %v713
    %v1104 = vmax.f32 %v870, %v1052
    %v1105 = vmax.f32 %v871, %v1053
    %v1106 = vmax.f32 %v872, %v1054
    %v1107 = vmax.f32 %v873, %v1055
    %v1108 = vmax.f32 %v874, %v1056
    %v1109 = vmax.f32 %v875, %v1057
    %v1110 = vmax.f32 %v876, %v1058
    %v1111 = vmax.f32 %v877, %v1059
    %v1112 = vmax.f32 %v878, %v1060
    %v1113 = vmax.f32 %v879, %v1061
    %v1114 = vmax.f32 %v880, %v1062
    %v1115 = vmax.f32 %v881, %v1063
    %v1116 = vmax.f32 %v882, %v1064
    %v1117 = vmax.f32 %v883, %v1065
    %v1118 = vmax.f32 %v884, %v1066
    %v1119 = vmax.f32 %v885, %v1067
    %v1120 = vmax.f32 %v886, %v1068
    %v1121 = vmax.f32 %v887, %v1069
    %v1122 = vmax.f32 %v888, %v1070
    %v1123 = vmax.f32 %v889, %v1071
    %v1124 = vmax.f32 %v890, %v1072
    %v1125 = vmax.f32 %v891, %v1073
    %v1126 = vmax.f32 %v892, %v1074
    %v1127 = vmax.f32 %v893, %v1075
    %v1128 = vmax.f32 %v894, %v1076
    %v1129 = vmax.f32 %v895, %v1077
    %s1130 = sld [smem:[#allocation4]]
    %v1131 = vmax.f32 %v1078, %v1079
    %v1132 = vmax.f32 %v1080, %v1081
    %v1133 = vmax.f32 %v1082, %v1083
    %v1134 = vmax.f32 %v1084, %v1085
    %v1135 = vmax.f32 %v1086, %v1087
    %v1136 = vmax.f32 %v1088, %v1089
    %v1137 = vmax.f32 %v1090, %v1091
    %v1138 = vmax.f32 %v1092, %v1093
    %v1139 = vmax.f32 %v1094, %v1095
    %v1140 = vmax.f32 %v1096, %v1097
    %v1141 = vmax.f32 %v1098, %v1099
    %v1142 = vmax.f32 %v1100, %v1101
    %v1143 = vmax.f32 %v1102, %v1103
    %v1144 = vstv %s1130
    %v1145 = vadd.f32 %v1131, %v1144
    %v1146 = vadd.f32 %v1132, %v1144
    %v1147 = vadd.f32 %v1133, %v1144
    %v1148 = vadd.f32 %v1134, %v1144
    %v1149 = vadd.f32 %v1135, %v1144
    %v1150 = vadd.f32 %v1136, %v1144
    %v1151 = vadd.f32 %v1137, %v1144
    %v1152 = vadd.f32 %v1138, %v1144
    %v1153 = vadd.f32 %v1139, %v1144
    %v1154 = vadd.f32 %v1140, %v1144
    %v1155 = vadd.f32 %v1141, %v1144
    %v1156 = vadd.f32 %v1142, %v1144
    %v1157 = vadd.f32 %v1143, %v1144
    %v1158 = vmax.f32 %v1145, 0.0
    %v1159 = vmax.f32 %v1146, 0.0
    %v1160 = vmax.f32 %v1147, 0.0
    %v1161 = vmax.f32 %v1148, 0.0
    %v1162 = vmax.f32 %v1149, 0.0
    %v1163 = vmax.f32 %v1150, 0.0
    %v1164 = vmax.f32 %v1151, 0.0
    %v1165 = vmax.f32 %v1152, 0.0
    %v1166 = vmax.f32 %v1153, 0.0
    %v1167 = vmax.f32 %v1154, 0.0
    %v1168 = vmax.f32 %v1155, 0.0
    %v1169 = vmax.f32 %v1156, 0.0
    %v1170 = vmax.f32 %v1157, 0.0
    %v1171 = vmax.f32 %v1104, %v1105
    %v1172 = vmax.f32 %v1106, %v1107
    %v1173 = vmax.f32 %v1108, %v1109
    %v1174 = vmax.f32 %v1110, %v1111
    %v1175 = vmax.f32 %v1112, %v1113
    %v1176 = vmax.f32 %v1114, %v1115
    %v1177 = vmax.f32 %v1116, %v1117
    %v1178 = vmax.f32 %v1118, %v1119
    %v1179 = vmax.f32 %v1120, %v1121
    %v1180 = vmax.f32 %v1122, %v1123
    %v1181 = vmax.f32 %v1124, %v1125
    %v1182 = vmax.f32 %v1126, %v1127
    %v1183 = vmax.f32 %v1128, %v1129
    %v1184 = vadd.f32 %v1171, %v1144
    %v1185 = vadd.f32 %v1172, %v1144
    %v1186 = vadd.f32 %v1173, %v1144
    %v1187 = vadd.f32 %v1174, %v1144
    %v1188 = vadd.f32 %v1175, %v1144
    %v1189 = vadd.f32 %v1176, %v1144
    %v1190 = vadd.f32 %v1177, %v1144
    %v1191 = vadd.f32 %v1178, %v1144
    %v1192 = vadd.f32 %v1179, %v1144
    %v1193 = vadd.f32 %v1180, %v1144
    %v1194 = vadd.f32 %v1181, %v1144
    %v1195 = vadd.f32 %v1182, %v1144
    %v1196 = vadd.f32 %v1183, %v1144
    %v1197 = vmax.f32 %v1184, 0.0
    %v1198 = vmax.f32 %v1185, 0.0
    %v1199 = vmax.f32 %v1186, 0.0
    %v1200 = vmax.f32 %v1187, 0.0
    %v1201 = vmax.f32 %v1188, 0.0
    %v1202 = vmax.f32 %v1189, 0.0
    %v1203 = vmax.f32 %v1190, 0.0
    %v1204 = vmax.f32 %v1191, 0.0
    %v1205 = vmax.f32 %v1192, 0.0
    %v1206 = vmax.f32 %v1193, 0.0
    %v1207 = vmax.f32 %v1194, 0.0
    %v1208 = vmax.f32 %v1195, 0.0
    %v1209 = vmax.f32 %v1196, 0.0
    %s1210 = sld [smem:[#allocation2 + $0x80]]
    %s1211 = sld [smem:[#allocation2 + $0x81]]
    %s1212 = sld [smem:[#allocation2 + $0x82]]
    %s1213 = sld [smem:[#allocation2 + $0x83]]
    %v1214 = vstv %s1210
    %v1215 = vmul.f32 %v1214, %v75
    %v1216 = vmul.f32 %v1214, %v76
    %v1217 = vmul.f32 %v1214, %v77
    %v1218 = vmul.f32 %v1214, %v78
    %v1219 = vmul.f32 %v1214, %v79
    %v1220 = vmul.f32 %v1214, %v80
    %v1221 = vmul.f32 %v1214, %v81
    %v1222 = vmul.f32 %v1214, %v82
    %v1223 = vmul.f32 %v1214, %v83
    %v1224 = vmul.f32 %v1214, %v84
    %v1225 = vmul.f32 %v1214, %v85
    %v1226 = vmul.f32 %v1214, %v86
    %v1227 = vmul.f32 %v1214, %v87
    %v1228 = vmul.f32 %v1214, %v88
    %v1229 = vmul.f32 %v1214, %v89
    %v1230 = vmul.f32 %v1214, %v90
    %v1231 = vmul.f32 %v1214, %v91
    %v1232 = vmul.f32 %v1214, %v92
    %v1233 = vmul.f32 %v1214, %v93
    %v1234 = vmul.f32 %v1214, %v94
    %v1235 = vmul.f32 %v1214, %v95
    %v1236 = vmul.f32 %v1214, %v96
    %v1237 = vmul.f32 %v1214, %v97
    %v1238 = vmul.f32 %v1214, %v98
    %v1239 = vmul.f32 %v1214, %v99
    %v1240 = vmul.f32 %v1214, %v100
    %v1241 = vstv %s1211
    %v1242 = vmul.f32 %v1241, %v129
    %v1243 = vmul.f32 %v1241, %v130
    %v1244 = vmul.f32 %v1241, %v131
    %v1245 = vmul.f32 %v1241, %v132
    %v1246 = vmul.f32 %v1241, %v133
    %v1247 = vmul.f32 %v1241, %v134
    %v1248 = vmul.f32 %v1241, %v135
    %v1249 = vmul.f32 %v1241, %v136
    %v1250 = vmul.f32 %v1241, %v137
    %v1251 = vmul.f32 %v1241, %v138
    %v1252 = vmul.f32 %v1241, %v139
    %v1253 = vmul.f32 %v1241, %v140
    %v1254 = vmul.f32 %v1241, %v141
    %v1255 = vmul.f32 %v1241, %v142
    %v1256 = vmul.f32 %v1241, %v143
    %v1257 = vmul.f32 %v1241, %v144
    %v1258 = vmul.f32 %v1241, %v145
    %v1259 = vmul.f32 %v1241, %v146
    %v1260 = vmul.f32 %v1241, %v147
    %v1261 = vmul.f32 %v1241, %v148
    %v1262 = vmul.f32 %v1241, %v149
    %v1263 = vmul.f32 %v1241, %v150
    %v1264 = vmul.f32 %v1241, %v151
    %v1265 = vmul.f32 %v1241, %v152
    %v1266 = vmul.f32 %v1241, %v153
    %v1267 = vmul.f32 %v1241, %v154
    %v1268 = vadd.f32 %v1215, %v1242
    %v1269 = vadd.f32 %v1216, %v1243
    %v1270 = vadd.f32 %v1217, %v1244
    %v1271 = vadd.f32 %v1218, %v1245
    %v1272 = vadd.f32 %v1219, %v1246
    %v1273 = vadd.f32 %v1220, %v1247
    %v1274 = vadd.f32 %v1221, %v1248
    %v1275 = vadd.f32 %v1222, %v1249
    %v1276 = vadd.f32 %v1223, %v1250
    %v1277 = vadd.f32 %v1224, %v1251
    %v1278 = vadd.f32 %v1225, %v1252
    %v1279 = vadd.f32 %v1226, %v1253
    %v1280 = vadd.f32 %v1227, %v1254
    %v1281 = vadd.f32 %v1228, %v1255
    %v1282 = vadd.f32 %v1229, %v1256
    %v1283 = vadd.f32 %v1230, %v1257
    %v1284 = vadd.f32 %v1231, %v1258
    %v1285 = vadd.f32 %v1232, %v1259
    %v1286 = vadd.f32 %v1233, %v1260
    %v1287 = vadd.f32 %v1234, %v1261
    %v1288 = vadd.f32 %v1235, %v1262
    %v1289 = vadd.f32 %v1236, %v1263
    %v1290 = vadd.f32 %v1237, %v1264
    %v1291 = vadd.f32 %v1238, %v1265
    %v1292 = vadd.f32 %v1239, %v1266
    %v1293 = vadd.f32 %v1240, %v1267
    %v1294 = vstv %s1212
    %v1295 = vmul.f32 %v1294, %v102
    %v1296 = vmul.f32 %v1294, %v103
    %v1297 = vmul.f32 %v1294, %v104
    %v1298 = vmul.f32 %v1294, %v105
    %v1299 = vmul.f32 %v1294, %v106
    %v1300 = vmul.f32 %v1294, %v107
    %v1301 = vmul.f32 %v1294, %v108
    %v1302 = vmul.f32 %v1294, %v109
    %v1303 = vmul.f32 %v1294, %v110
    %v1304 = vmul.f32 %v1294, %v111
    %v1305 = vmul.f32 %v1294, %v112
    %v1306 = vmul.f32 %v1294, %v113
    %v1307 = vmul.f32 %v1294, %v114
    %v1308 = vmul.f32 %v1294, %v115
    %v1309 = vmul.f32 %v1294, %v116
    %v1310 = vmul.f32 %v1294, %v117
    %v1311 = vmul.f32 %v1294, %v118
    %v1312 = vmul.f32 %v1294, %v119
    %v1313 = vmul.f32 %v1294, %v120
    %v1314 = vmul.f32 %v1294, %v121
    %v1315 = vmul.f32 %v1294, %v122
    %v1316 = vmul.f32 %v1294, %v123
    %v1317 = vmul.f32 %v1294, %v124
    %v1318 = vmul.f32 %v1294, %v125
    %v1319 = vmul.f32 %v1294, %v126
    %v1320 = vmul.f32 %v1294, %v127
    %v1321 = vadd.f32 %v1268, %v1295
    %v1322 = vadd.f32 %v1269, %v1296
    %v1323 = vadd.f32 %v1270, %v1297
    %v1324 = vadd.f32 %v1271, %v1298
    %v1325 = vadd.f32 %v1272, %v1299
    %v1326 = vadd.f32 %v1273, %v1300
    %v1327 = vadd.f32 %v1274, %v1301
    %v1328 = vadd.f32 %v1275, %v1302
    %v1329 = vadd.f32 %v1276, %v1303
    %v1330 = vadd.f32 %v1277, %v1304
    %v1331 = vadd.f32 %v1278, %v1305
    %v1332 = vadd.f32 %v1279, %v1306
    %v1333 = vadd.f32 %v1280, %v1307
    %v1334 = vadd.f32 %v1281, %v1308
    %v1335 = vadd.f32 %v1282, %v1309
    %v1336 = vadd.f32 %v1283, %v1310
    %v1337 = vadd.f32 %v1284, %v1311
    %v1338 = vadd.f32 %v1285, %v1312
    %v1339 = vadd.f32 %v1286, %v1313
    %v1340 = vadd.f32 %v1287, %v1314
    %v1341 = vadd.f32 %v1288, %v1315
    %v1342 = vadd.f32 %v1289, %v1316
    %v1343 = vadd.f32 %v1290, %v1317
    %v1344 = vadd.f32 %v1291, %v1318
    %v1345 = vadd.f32 %v1292, %v1319
    %v1346 = vadd.f32 %v1293, %v1320
    %v1347 = vstv %s1213
    %v1348 = vmul.f32 %v1347, %v156
    %v1349 = vmul.f32 %v1347, %v157
    %v1350 = vmul.f32 %v1347, %v158
    %v1351 = vmul.f32 %v1347, %v159
    %v1352 = vmul.f32 %v1347, %v160
    %v1353 = vmul.f32 %v1347, %v161
    %v1354 = vmul.f32 %v1347, %v162
    %v1355 = vmul.f32 %v1347, %v163
    %v1356 = vmul.f32 %v1347, %v164
    %v1357 = vmul.f32 %v1347, %v165
    %v1358 = vmul.f32 %v1347, %v166
    %v1359 = vmul.f32 %v1347, %v167
    %v1360 = vmul.f32 %v1347, %v168
    %v1361 = vmul.f32 %v1347, %v169
    %v1362 = vmul.f32 %v1347, %v170
    %v1363 = vmul.f32 %v1347, %v171
    %v1364 = vmul.f32 %v1347, %v172
    %v1365 = vmul.f32 %v1347, %v173
    %v1366 = vmul.f32 %v1347, %v174
    %v1367 = vmul.f32 %v1347, %v175
    %v1368 = vmul.f32 %v1347, %v176
    %v1369 = vmul.f32 %v1347, %v177
    %v1370 = vmul.f32 %v1347, %v178
    %v1371 = vmul.f32 %v1347, %v179
    %v1372 = vmul.f32 %v1347, %v180
    %v1373 = vmul.f32 %v1347, %v181
    %v1374 = vadd.f32 %v1321, %v1348
    %v1375 = vadd.f32 %v1322, %v1349
    %v1376 = vadd.f32 %v1323, %v1350
    %v1377 = vadd.f32 %v1324, %v1351
    %v1378 = vadd.f32 %v1325, %v1352
    %v1379 = vadd.f32 %v1326, %v1353
    %v1380 = vadd.f32 %v1327, %v1354
    %v1381 = vadd.f32 %v1328, %v1355
    %v1382 = vadd.f32 %v1329, %v1356
    %v1383 = vadd.f32 %v1330, %v1357
    %v1384 = vadd.f32 %v1331, %v1358
    %v1385 = vadd.f32 %v1332, %v1359
    %v1386 = vadd.f32 %v1333, %v1360
    %v1387 = vadd.f32 %v1334, %v1361
    %v1388 = vadd.f32 %v1335, %v1362
    %v1389 = vadd.f32 %v1336, %v1363
    %v1390 = vadd.f32 %v1337, %v1364
    %v1391 = vadd.f32 %v1338, %v1365
    %v1392 = vadd.f32 %v1339, %v1366
    %v1393 = vadd.f32 %v1340, %v1367
    %v1394 = vadd.f32 %v1341, %v1368
    %v1395 = vadd.f32 %v1342, %v1369
    %v1396 = vadd.f32 %v1343, %v1370
    %v1397 = vadd.f32 %v1344, %v1371
    %v1398 = vadd.f32 %v1345, %v1372
    %v1399 = vadd.f32 %v1346, %v1373
    %v1400 = vmul.f32 %v1214, %v129
    %v1401 = vmul.f32 %v1214, %v130
    %v1402 = vmul.f32 %v1214, %v131
    %v1403 = vmul.f32 %v1214, %v132
    %v1404 = vmul.f32 %v1214, %v133
    %v1405 = vmul.f32 %v1214, %v134
    %v1406 = vmul.f32 %v1214, %v135
    %v1407 = vmul.f32 %v1214, %v136
    %v1408 = vmul.f32 %v1214, %v137
    %v1409 = vmul.f32 %v1214, %v138
    %v1410 = vmul.f32 %v1214, %v139
    %v1411 = vmul.f32 %v1214, %v140
    %v1412 = vmul.f32 %v1214, %v141
    %v1413 = vmul.f32 %v1214, %v142
    %v1414 = vmul.f32 %v1214, %v143
    %v1415 = vmul.f32 %v1214, %v144
    %v1416 = vmul.f32 %v1214, %v145
    %v1417 = vmul.f32 %v1214, %v146
    %v1418 = vmul.f32 %v1214, %v147
    %v1419 = vmul.f32 %v1214, %v148
    %v1420 = vmul.f32 %v1214, %v149
    %v1421 = vmul.f32 %v1214, %v150
    %v1422 = vmul.f32 %v1214, %v151
    %v1423 = vmul.f32 %v1214, %v152
    %v1424 = vmul.f32 %v1214, %v153
    %v1425 = vmul.f32 %v1214, %v154
    %v1426 = vmul.f32 %v1241, %v183
    %v1427 = vmul.f32 %v1241, %v184
    %v1428 = vmul.f32 %v1241, %v185
    %v1429 = vmul.f32 %v1241, %v186
    %v1430 = vmul.f32 %v1241, %v187
    %v1431 = vmul.f32 %v1241, %v188
    %v1432 = vmul.f32 %v1241, %v189
    %v1433 = vmul.f32 %v1241, %v190
    %v1434 = vmul.f32 %v1241, %v191
    %v1435 = vmul.f32 %v1241, %v192
    %v1436 = vmul.f32 %v1241, %v193
    %v1437 = vmul.f32 %v1241, %v194
    %v1438 = vmul.f32 %v1241, %v195
    %v1439 = vmul.f32 %v1241, %v196
    %v1440 = vmul.f32 %v1241, %v197
    %v1441 = vmul.f32 %v1241, %v198
    %v1442 = vmul.f32 %v1241, %v199
    %v1443 = vmul.f32 %v1241, %v200
    %v1444 = vmul.f32 %v1241, %v201
    %v1445 = vmul.f32 %v1241, %v202
    %v1446 = vmul.f32 %v1241, %v203
    %v1447 = vmul.f32 %v1241, %v204
    %v1448 = vmul.f32 %v1241, %v205
    %v1449 = vmul.f32 %v1241, %v206
    %v1450 = vmul.f32 %v1241, %v207
    %v1451 = vmul.f32 %v1241, %v208
    %v1452 = vadd.f32 %v1400, %v1426
    %v1453 = vadd.f32 %v1401, %v1427
    %v1454 = vadd.f32 %v1402, %v1428
    %v1455 = vadd.f32 %v1403, %v1429
    %v1456 = vadd.f32 %v1404, %v1430
    %v1457 = vadd.f32 %v1405, %v1431
    %v1458 = vadd.f32 %v1406, %v1432
    %v1459 = vadd.f32 %v1407, %v1433
    %v1460 = vadd.f32 %v1408, %v1434
    %v1461 = vadd.f32 %v1409, %v1435
    %v1462 = vadd.f32 %v1410, %v1436
    %v1463 = vadd.f32 %v1411, %v1437
    %v1464 = vadd.f32 %v1412, %v1438
    %v1465 = vadd.f32 %v1413, %v1439
    %v1466 = vadd.f32 %v1414, %v1440
    %v1467 = vadd.f32 %v1415, %v1441
    %v1468 = vadd.f32 %v1416, %v1442
    %v1469 = vadd.f32 %v1417, %v1443
    %v1470 = vadd.f32 %v1418, %v1444
    %v1471 = vadd.f32 %v1419, %v1445
    %v1472 = vadd.f32 %v1420, %v1446
    %v1473 = vadd.f32 %v1421, %v1447
    %v1474 = vadd.f32 %v1422, %v1448
    %v1475 = vadd.f32 %v1423, %v1449
    %v1476 = vadd.f32 %v1424, %v1450
    %v1477 = vadd.f32 %v1425, %v1451
    %v1478 = vmul.f32 %v1294, %v156
    %v1479 = vmul.f32 %v1294, %v157
    %v1480 = vmul.f32 %v1294, %v158
    %v1481 = vmul.f32 %v1294, %v159
    %v1482 = vmul.f32 %v1294, %v160
    %v1483 = vmul.f32 %v1294, %v161
    %v1484 = vmul.f32 %v1294, %v162
    %v1485 = vmul.f32 %v1294, %v163
    %v1486 = vmul.f32 %v1294, %v164
    %v1487 = vmul.f32 %v1294, %v165
    %v1488 = vmul.f32 %v1294, %v166
    %v1489 = vmul.f32 %v1294, %v167
    %v1490 = vmul.f32 %v1294, %v168
    %v1491 = vmul.f32 %v1294, %v169
    %v1492 = vmul.f32 %v1294, %v170
    %v1493 = vmul.f32 %v1294, %v171
    %v1494 = vmul.f32 %v1294, %v172
    %v1495 = vmul.f32 %v1294, %v173
    %v1496 = vmul.f32 %v1294, %v174
    %v1497 = vmul.f32 %v1294, %v175
    %v1498 = vmul.f32 %v1294, %v176
    %v1499 = vmul.f32 %v1294, %v177
    %v1500 = vmul.f32 %v1294, %v178
    %v1501 = vmul.f32 %v1294, %v179
    %v1502 = vmul.f32 %v1294, %v180
    %v1503 = vmul.f32 %v1294, %v181
    %v1504 = vadd.f32 %v1452, %v1478
    %v1505 = vadd.f32 %v1453, %v1479
    %v1506 = vadd.f32 %v1454, %v1480
    %v1507 = vadd.f32 %v1455, %v1481
    %v1508 = vadd.f32 %v1456, %v1482
    %v1509 = vadd.f32 %v1457, %v1483
    %v1510 = vadd.f32 %v1458, %v1484
    %v1511 = vadd.f32 %v1459, %v1485
    %v1512 = vadd.f32 %v1460, %v1486
    %v1513 = vadd.f32 %v1461, %v1487
    %v1514 = vadd.f32 %v1462, %v1488
    %v1515 = vadd.f32 %v1463, %v1489
    %v1516 = vadd.f32 %v1464, %v1490
    %v1517 = vadd.f32 %v1465, %v1491
    %v1518 = vadd.f32 %v1466, %v1492
    %v1519 = vadd.f32 %v1467, %v1493
    %v1520 = vadd.f32 %v1468, %v1494
    %v1521 = vadd.f32 %v1469, %v1495
    %v1522 = vadd.f32 %v1470, %v1496
    %v1523 = vadd.f32 %v1471, %v1497
    %v1524 = vadd.f32 %v1472, %v1498
    %v1525 = vadd.f32 %v1473, %v1499
    %v1526 = vadd.f32 %v1474, %v1500
    %v1527 = vadd.f32 %v1475, %v1501
    %v1528 = vadd.f32 %v1476, %v1502
    %v1529 = vadd.f32 %v1477, %v1503
    %v1530 = vmul.f32 %v1347, %v210
    %v1531 = vmul.f32 %v1347, %v211
    %v1532 = vmul.f32 %v1347, %v212
    %v1533 = vmul.f32 %v1347, %v213
    %v1534 = vmul.f32 %v1347, %v214
    %v1535 = vmul.f32 %v1347, %v215
    %v1536 = vmul.f32 %v1347, %v216
    %v1537 = vmul.f32 %v1347, %v217
    %v1538 = vmul.f32 %v1347, %v218
    %v1539 = vmul.f32 %v1347, %v219
    %v1540 = vmul.f32 %v1347, %v220
    %v1541 = vmul.f32 %v1347, %v221
    %v1542 = vmul.f32 %v1347, %v222
    %v1543 = vmul.f32 %v1347, %v223
    %v1544 = vmul.f32 %v1347, %v224
    %v1545 = vmul.f32 %v1347, %v225
    %v1546 = vmul.f32 %v1347, %v226
    %v1547 = vmul.f32 %v1347, %v227
    %v1548 = vmul.f32 %v1347, %v228
    %v1549 = vmul.f32 %v1347, %v229
    %v1550 = vmul.f32 %v1347, %v230
    %v1551 = vmul.f32 %v1347, %v231
    %v1552 = vmul.f32 %v1347, %v232
    %v1553 = vmul.f32 %v1347, %v233
    %v1554 = vmul.f32 %v1347, %v234
    %v1555 = vmul.f32 %v1347, %v235
    %v1556 = vadd.f32 %v1504, %v1530
    %v1557 = vadd.f32 %v1505, %v1531
    %v1558 = vadd.f32 %v1506, %v1532
    %v1559 = vadd.f32 %v1507, %v1533
    %v1560 = vadd.f32 %v1508, %v1534
    %v1561 = vadd.f32 %v1509, %v1535
    %v1562 = vadd.f32 %v1510, %v1536
    %v1563 = vadd.f32 %v1511, %v1537
    %v1564 = vadd.f32 %v1512, %v1538
    %v1565 = vadd.f32 %v1513, %v1539
    %v1566 = vadd.f32 %v1514, %v1540
    %v1567 = vadd.f32 %v1515, %v1541
    %v1568 = vadd.f32 %v1516, %v1542
    %v1569 = vadd.f32 %v1517, %v1543
    %v1570 = vadd.f32 %v1518, %v1544
    %v1571 = vadd.f32 %v1519, %v1545
    %v1572 = vadd.f32 %v1520, %v1546
    %v1573 = vadd.f32 %v1521, %v1547
    %v1574 = vadd.f32 %v1522, %v1548
    %v1575 = vadd.f32 %v1523, %v1549
    %v1576 = vadd.f32 %v1524, %v1550
    %v1577 = vadd.f32 %v1525, %v1551
    %v1578 = vadd.f32 %v1526, %v1552
    %v1579 = vadd.f32 %v1527, %v1553
    %v1580 = vadd.f32 %v1528, %v1554
    %v1581 = vadd.f32 %v1529, %v1555
    %v1582 = vmul.f32 %v1214, %v183
    %v1583 = vmul.f32 %v1214, %v184
    %v1584 = vmul.f32 %v1214, %v185
    %v1585 = vmul.f32 %v1214, %v186
    %v1586 = vmul.f32 %v1214, %v187
    %v1587 = vmul.f32 %v1214, %v188
    %v1588 = vmul.f32 %v1214, %v189
    %v1589 = vmul.f32 %v1214, %v190
    %v1590 = vmul.f32 %v1214, %v191
    %v1591 = vmul.f32 %v1214, %v192
    %v1592 = vmul.f32 %v1214, %v193
    %v1593 = vmul.f32 %v1214, %v194
    %v1594 = vmul.f32 %v1214, %v195
    %v1595 = vmul.f32 %v1214, %v196
    %v1596 = vmul.f32 %v1214, %v197
    %v1597 = vmul.f32 %v1214, %v198
    %v1598 = vmul.f32 %v1214, %v199
    %v1599 = vmul.f32 %v1214, %v200
    %v1600 = vmul.f32 %v1214, %v201
    %v1601 = vmul.f32 %v1214, %v202
    %v1602 = vmul.f32 %v1214, %v203
    %v1603 = vmul.f32 %v1214, %v204
    %v1604 = vmul.f32 %v1214, %v205
    %v1605 = vmul.f32 %v1214, %v206
    %v1606 = vmul.f32 %v1214, %v207
    %v1607 = vmul.f32 %v1214, %v208
    %v1608 = vmul.f32 %v1241, %v237
    %v1609 = vmul.f32 %v1241, %v238
    %v1610 = vmul.f32 %v1241, %v239
    %v1611 = vmul.f32 %v1241, %v240
    %v1612 = vmul.f32 %v1241, %v241
    %v1613 = vmul.f32 %v1241, %v242
    %v1614 = vmul.f32 %v1241, %v243
    %v1615 = vmul.f32 %v1241, %v244
    %v1616 = vmul.f32 %v1241, %v245
    %v1617 = vmul.f32 %v1241, %v246
    %v1618 = vmul.f32 %v1241, %v247
    %v1619 = vmul.f32 %v1241, %v248
    %v1620 = vmul.f32 %v1241, %v249
    %v1621 = vmul.f32 %v1241, %v250
    %v1622 = vmul.f32 %v1241, %v251
    %v1623 = vmul.f32 %v1241, %v252
    %v1624 = vmul.f32 %v1241, %v253
    %v1625 = vmul.f32 %v1241, %v254
    %v1626 = vmul.f32 %v1241, %v255
    %v1627 = vmul.f32 %v1241, %v256
    %v1628 = vmul.f32 %v1241, %v257
    %v1629 = vmul.f32 %v1241, %v258
    %v1630 = vmul.f32 %v1241, %v259
    %v1631 = vmul.f32 %v1241, %v260
    %v1632 = vmul.f32 %v1241, %v261
    %v1633 = vmul.f32 %v1241, %v262
    %v1634 = vadd.f32 %v1582, %v1608
    %v1635 = vadd.f32 %v1583, %v1609
    %v1636 = vadd.f32 %v1584, %v1610
    %v1637 = vadd.f32 %v1585, %v1611
    %v1638 = vadd.f32 %v1586, %v1612
    %v1639 = vadd.f32 %v1587, %v1613
    %v1640 = vadd.f32 %v1588, %v1614
    %v1641 = vadd.f32 %v1589, %v1615
    %v1642 = vadd.f32 %v1590, %v1616
    %v1643 = vadd.f32 %v1591, %v1617
    %v1644 = vadd.f32 %v1592, %v1618
    %v1645 = vadd.f32 %v1593, %v1619
    %v1646 = vadd.f32 %v1594, %v1620
    %v1647 = vadd.f32 %v1595, %v1621
    %v1648 = vadd.f32 %v1596, %v1622
    %v1649 = vadd.f32 %v1597, %v1623
    %v1650 = vadd.f32 %v1598, %v1624
    %v1651 = vadd.f32 %v1599, %v1625
    %v1652 = vadd.f32 %v1600, %v1626
    %v1653 = vadd.f32 %v1601, %v1627
    %v1654 = vadd.f32 %v1602, %v1628
    %v1655 = vadd.f32 %v1603, %v1629
    %v1656 = vadd.f32 %v1604, %v1630
    %v1657 = vadd.f32 %v1605, %v1631
    %v1658 = vadd.f32 %v1606, %v1632
    %v1659 = vadd.f32 %v1607, %v1633
    %v1660 = vmul.f32 %v1294, %v210
    %v1661 = vmul.f32 %v1294, %v211
    %v1662 = vmul.f32 %v1294, %v212
    %v1663 = vmul.f32 %v1294, %v213
    %v1664 = vmul.f32 %v1294, %v214
    %v1665 = vmul.f32 %v1294, %v215
    %v1666 = vmul.f32 %v1294, %v216
    %v1667 = vmul.f32 %v1294, %v217
    %v1668 = vmul.f32 %v1294, %v218
    %v1669 = vmul.f32 %v1294, %v219
    %v1670 = vmul.f32 %v1294, %v220
    %v1671 = vmul.f32 %v1294, %v221
    %v1672 = vmul.f32 %v1294, %v222
    %v1673 = vmul.f32 %v1294, %v223
    %v1674 = vmul.f32 %v1294, %v224
    %v1675 = vmul.f32 %v1294, %v225
    %v1676 = vmul.f32 %v1294, %v226
    %v1677 = vmul.f32 %v1294, %v227
    %v1678 = vmul.f32 %v1294, %v228
    %v1679 = vmul.f32 %v1294, %v229
    %v1680 = vmul.f32 %v1294, %v230
    %v1681 = vmul.f32 %v1294, %v231
    %v1682 = vmul.f32 %v1294, %v232
    %v1683 = vmul.f32 %v1294, %v233
    %v1684 = vmul.f32 %v1294, %v234
    %v1685 = vmul.f32 %v1294, %v235
    %v1686 = vadd.f32 %v1634, %v1660
    %v1687 = vadd.f32 %v1635, %v1661
    %v1688 = vadd.f32 %v1636, %v1662
    %v1689 = vadd.f32 %v1637, %v1663
    %v1690 = vadd.f32 %v1638, %v1664
    %v1691 = vadd.f32 %v1639, %v1665
    %v1692 = vadd.f32 %v1640, %v1666
    %v1693 = vadd.f32 %v1641, %v1667
    %v1694 = vadd.f32 %v1642, %v1668
    %v1695 = vadd.f32 %v1643, %v1669
    %v1696 = vadd.f32 %v1644, %v1670
    %v1697 = vadd.f32 %v1645, %v1671
    %v1698 = vadd.f32 %v1646, %v1672
    %v1699 = vadd.f32 %v1647, %v1673
    %v1700 = vadd.f32 %v1648, %v1674
    %v1701 = vadd.f32 %v1649, %v1675
    %v1702 = vadd.f32 %v1650, %v1676
    %v1703 = vadd.f32 %v1651, %v1677
    %v1704 = vadd.f32 %v1652, %v1678
    %v1705 = vadd.f32 %v1653, %v1679
    %v1706 = vadd.f32 %v1654, %v1680
    %v1707 = vadd.f32 %v1655, %v1681
    %v1708 = vadd.f32 %v1656, %v1682
    %v1709 = vadd.f32 %v1657, %v1683
    %v1710 = vadd.f32 %v1658, %v1684
    %v1711 = vadd.f32 %v1659, %v1685
    %v1712 = vmul.f32 %v1347, %v264
    %v1713 = vmul.f32 %v1347, %v265
    %v1714 = vmul.f32 %v1347, %v266
    %v1715 = vmul.f32 %v1347, %v267
    %v1716 = vmul.f32 %v1347, %v268
    %v1717 = vmul.f32 %v1347, %v269
    %v1718 = vmul.f32 %v1347, %v270
    %v1719 = vmul.f32 %v1347, %v271
    %v1720 = vmul.f32 %v1347, %v272
    %v1721 = vmul.f32 %v1347, %v273
    %v1722 = vmul.f32 %v1347, %v274
    %v1723 = vmul.f32 %v1347, %v275
    %v1724 = vmul.f32 %v1347, %v276
    %v1725 = vmul.f32 %v1347, %v277
    %v1726 = vmul.f32 %v1347, %v278
    %v1727 = vmul.f32 %v1347, %v279
    %v1728 = vmul.f32 %v1347, %v280
    %v1729 = vmul.f32 %v1347, %v281
    %v1730 = vmul.f32 %v1347, %v282
    %v1731 = vmul.f32 %v1347, %v283
    %v1732 = vmul.f32 %v1347, %v284
    %v1733 = vmul.f32 %v1347, %v285
    %v1734 = vmul.f32 %v1347, %v286
    %v1735 = vmul.f32 %v1347, %v287
    %v1736 = vmul.f32 %v1347, %v288
    %v1737 = vmul.f32 %v1347, %v289
    %v1738 = vadd.f32 %v1686, %v1712
    %v1739 = vadd.f32 %v1687, %v1713
    %v1740 = vadd.f32 %v1688, %v1714
    %v1741 = vadd.f32 %v1689, %v1715
    %v1742 = vadd.f32 %v1690, %v1716
    %v1743 = vadd.f32 %v1691, %v1717
    %v1744 = vadd.f32 %v1692, %v1718
    %v1745 = vadd.f32 %v1693, %v1719
    %v1746 = vadd.f32 %v1694, %v1720
    %v1747 = vadd.f32 %v1695, %v1721
    %v1748 = vadd.f32 %v1696, %v1722
    %v1749 = vadd.f32 %v1697, %v1723
    %v1750 = vadd.f32 %v1698, %v1724
    %v1751 = vadd.f32 %v1699, %v1725
    %v1752 = vadd.f32 %v1700, %v1726
    %v1753 = vadd.f32 %v1701, %v1727
    %v1754 = vadd.f32 %v1702, %v1728
    %v1755 = vadd.f32 %v1703, %v1729
    %v1756 = vadd.f32 %v1704, %v1730
    %v1757 = vadd.f32 %v1705, %v1731
    %v1758 = vadd.f32 %v1706, %v1732
    %v1759 = vadd.f32 %v1707, %v1733
    %v1760 = vadd.f32 %v1708, %v1734
    %v1761 = vadd.f32 %v1709, %v1735
    %v1762 = vadd.f32 %v1710, %v1736
    %v1763 = vadd.f32 %v1711, %v1737
    %v1764 = vmul.f32 %v1214, %v237
    %v1765 = vmul.f32 %v1214, %v238
    %v1766 = vmul.f32 %v1214, %v239
    %v1767 = vmul.f32 %v1214, %v240
    %v1768 = vmul.f32 %v1214, %v241
    %v1769 = vmul.f32 %v1214, %v242
    %v1770 = vmul.f32 %v1214, %v243
    %v1771 = vmul.f32 %v1214, %v244
    %v1772 = vmul.f32 %v1214, %v245
    %v1773 = vmul.f32 %v1214, %v246
    %v1774 = vmul.f32 %v1214, %v247
    %v1775 = vmul.f32 %v1214, %v248
    %v1776 = vmul.f32 %v1214, %v249
    %v1777 = vmul.f32 %v1214, %v250
    %v1778 = vmul.f32 %v1214, %v251
    %v1779 = vmul.f32 %v1214, %v252
    %v1780 = vmul.f32 %v1214, %v253
    %v1781 = vmul.f32 %v1214, %v254
    %v1782 = vmul.f32 %v1214, %v255
    %v1783 = vmul.f32 %v1214, %v256
    %v1784 = vmul.f32 %v1214, %v257
    %v1785 = vmul.f32 %v1214, %v258
    %v1786 = vmul.f32 %v1214, %v259
    %v1787 = vmul.f32 %v1214, %v260
    %v1788 = vmul.f32 %v1214, %v261
    %v1789 = vmul.f32 %v1214, %v262
    %v1790 = vmul.f32 %v1241, %v290
    %v1791 = vmul.f32 %v1241, %v291
    %v1792 = vmul.f32 %v1241, %v292
    %v1793 = vmul.f32 %v1241, %v293
    %v1794 = vmul.f32 %v1241, %v294
    %v1795 = vmul.f32 %v1241, %v295
    %v1796 = vmul.f32 %v1241, %v296
    %v1797 = vmul.f32 %v1241, %v297
    %v1798 = vmul.f32 %v1241, %v298
    %v1799 = vmul.f32 %v1241, %v299
    %v1800 = vmul.f32 %v1241, %v300
    %v1801 = vmul.f32 %v1241, %v301
    %v1802 = vmul.f32 %v1241, %v302
    %v1803 = vmul.f32 %v1241, %v303
    %v1804 = vmul.f32 %v1241, %v304
    %v1805 = vmul.f32 %v1241, %v305
    %v1806 = vmul.f32 %v1241, %v306
    %v1807 = vmul.f32 %v1241, %v307
    %v1808 = vmul.f32 %v1241, %v308
    %v1809 = vmul.f32 %v1241, %v309
    %v1810 = vmul.f32 %v1241, %v310
    %v1811 = vmul.f32 %v1241, %v311
    %v1812 = vmul.f32 %v1241, %v312
    %v1813 = vmul.f32 %v1241, %v313
    %v1814 = vmul.f32 %v1241, %v314
    %v1815 = vmul.f32 %v1241, %v315
    %v1816 = vadd.f32 %v1764, %v1790
    %v1817 = vadd.f32 %v1765, %v1791
    %v1818 = vadd.f32 %v1766, %v1792
    %v1819 = vadd.f32 %v1767, %v1793
    %v1820 = vadd.f32 %v1768, %v1794
    %v1821 = vadd.f32 %v1769, %v1795
    %v1822 = vadd.f32 %v1770, %v1796
    %v1823 = vadd.f32 %v1771, %v1797
    %v1824 = vadd.f32 %v1772, %v1798
    %v1825 = vadd.f32 %v1773, %v1799
    %v1826 = vadd.f32 %v1774, %v1800
    %v1827 = vadd.f32 %v1775, %v1801
    %v1828 = vadd.f32 %v1776, %v1802
    %v1829 = vadd.f32 %v1777, %v1803
    %v1830 = vadd.f32 %v1778, %v1804
    %v1831 = vadd.f32 %v1779, %v1805
    %v1832 = vadd.f32 %v1780, %v1806
    %v1833 = vadd.f32 %v1781, %v1807
    %v1834 = vadd.f32 %v1782, %v1808
    %v1835 = vadd.f32 %v1783, %v1809
    %v1836 = vadd.f32 %v1784, %v1810
    %v1837 = vadd.f32 %v1785, %v1811
    %v1838 = vadd.f32 %v1786, %v1812
    %v1839 = vadd.f32 %v1787, %v1813
    %v1840 = vadd.f32 %v1788, %v1814
    %v1841 = vadd.f32 %v1789, %v1815
    %v1842 = vmul.f32 %v1294, %v264
    %v1843 = vmul.f32 %v1294, %v265
    %v1844 = vmul.f32 %v1294, %v266
    %v1845 = vmul.f32 %v1294, %v267
    %v1846 = vmul.f32 %v1294, %v268
    %v1847 = vmul.f32 %v1294, %v269
    %v1848 = vmul.f32 %v1294, %v270
    %v1849 = vmul.f32 %v1294, %v271
    %v1850 = vmul.f32 %v1294, %v272
    %v1851 = vmul.f32 %v1294, %v273
    %v1852 = vmul.f32 %v1294, %v274
    %v1853 = vmul.f32 %v1294, %v275
    %v1854 = vmul.f32 %v1294, %v276
    %v1855 = vmul.f32 %v1294, %v277
    %v1856 = vmul.f32 %v1294, %v278
    %v1857 = vmul.f32 %v1294, %v279
    %v1858 = vmul.f32 %v1294, %v280
    %v1859 = vmul.f32 %v1294, %v281
    %v1860 = vmul.f32 %v1294, %v282
    %v1861 = vmul.f32 %v1294, %v283
    %v1862 = vmul.f32 %v1294, %v284
    %v1863 = vmul.f32 %v1294, %v285
    %v1864 = vmul.f32 %v1294, %v286
    %v1865 = vmul.f32 %v1294, %v287
    %v1866 = vmul.f32 %v1294, %v288
    %v1867 = vmul.f32 %v1294, %v289
    %v1868 = vadd.f32 %v1816, %v1842
    %v1869 = vadd.f32 %v1817, %v1843
    %v1870 = vadd.f32 %v1818, %v1844
    %v1871 = vadd.f32 %v1819, %v1845
    %v1872 = vadd.f32 %v1820, %v1846
    %v1873 = vadd.f32 %v1821, %v1847
    %v1874 = vadd.f32 %v1822, %v1848
    %v1875 = vadd.f32 %v1823, %v1849
    %v1876 = vadd.f32 %v1824, %v1850
    %v1877 = vadd.f32 %v1825, %v1851
    %v1878 = vadd.f32 %v1826, %v1852
    %v1879 = vadd.f32 %v1827, %v1853
    %v1880 = vadd.f32 %v1828, %v1854
    %v1881 = vadd.f32 %v1829, %v1855
    %v1882 = vadd.f32 %v1830, %v1856
    %v1883 = vadd.f32 %v1831, %v1857
    %v1884 = vadd.f32 %v1832, %v1858
    %v1885 = vadd.f32 %v1833, %v1859
    %v1886 = vadd.f32 %v1834, %v1860
    %v1887 = vadd.f32 %v1835, %v1861
    %v1888 = vadd.f32 %v1836, %v1862
    %v1889 = vadd.f32 %v1837, %v1863
    %v1890 = vadd.f32 %v1838, %v1864
    %v1891 = vadd.f32 %v1839, %v1865
    %v1892 = vadd.f32 %v1840, %v1866
    %v1893 = vadd.f32 %v1841, %v1867
    %v1894 = vmul.f32 %v1347, %v316
    %v1895 = vmul.f32 %v1347, %v317
    %v1896 = vmul.f32 %v1347, %v318
    %v1897 = vmul.f32 %v1347, %v319
    %v1898 = vmul.f32 %v1347, %v320
    %v1899 = vmul.f32 %v1347, %v321
    %v1900 = vmul.f32 %v1347, %v322
    %v1901 = vmul.f32 %v1347, %v323
    %v1902 = vmul.f32 %v1347, %v324
    %v1903 = vmul.f32 %v1347, %v325
    %v1904 = vmul.f32 %v1347, %v326
    %v1905 = vmul.f32 %v1347, %v327
    %v1906 = vmul.f32 %v1347, %v328
    %v1907 = vmul.f32 %v1347, %v329
    %v1908 = vmul.f32 %v1347, %v330
    %v1909 = vmul.f32 %v1347, %v331
    %v1910 = vmul.f32 %v1347, %v332
    %v1911 = vmul.f32 %v1347, %v333
    %v1912 = vmul.f32 %v1347, %v334
    %v1913 = vmul.f32 %v1347, %v335
    %v1914 = vmul.f32 %v1347, %v336
    %v1915 = vmul.f32 %v1347, %v337
    %v1916 = vmul.f32 %v1347, %v338
    %v1917 = vmul.f32 %v1347, %v339
    %v1918 = vmul.f32 %v1347, %v340
    %v1919 = vmul.f32 %v1347, %v341
    %v1920 = vadd.f32 %v1868, %v1894
    %v1921 = vadd.f32 %v1869, %v1895
    %v1922 = vadd.f32 %v1870, %v1896
    %v1923 = vadd.f32 %v1871, %v1897
    %v1924 = vadd.f32 %v1872, %v1898
    %v1925 = vadd.f32 %v1873, %v1899
    %v1926 = vadd.f32 %v1874, %v1900
    %v1927 = vadd.f32 %v1875, %v1901
    %v1928 = vadd.f32 %v1876, %v1902
    %v1929 = vadd.f32 %v1877, %v1903
    %v1930 = vadd.f32 %v1878, %v1904
    %v1931 = vadd.f32 %v1879, %v1905
    %v1932 = vadd.f32 %v1880, %v1906
    %v1933 = vadd.f32 %v1881, %v1907
    %v1934 = vadd.f32 %v1882, %v1908
    %v1935 = vadd.f32 %v1883, %v1909
    %v1936 = vadd.f32 %v1884, %v1910
    %v1937 = vadd.f32 %v1885, %v1911
    %v1938 = vadd.f32 %v1886, %v1912
    %v1939 = vadd.f32 %v1887, %v1913
    %v1940 = vadd.f32 %v1888, %v1914
    %v1941 = vadd.f32 %v1889, %v1915
    %v1942 = vadd.f32 %v1890, %v1916
    %v1943 = vadd.f32 %v1891, %v1917
    %v1944 = vadd.f32 %v1892, %v1918
    %v1945 = vadd.f32 %v1893, %v1919
    %v1946 = vmax.f32 %v1374, %v1556
    %v1947 = vmax.f32 %v1375, %v1557
    %v1948 = vmax.f32 %v1376, %v1558
    %v1949 = vmax.f32 %v1377, %v1559
    %v1950 = vmax.f32 %v1378, %v1560
    %v1951 = vmax.f32 %v1379, %v1561
    %v1952 = vmax.f32 %v1380, %v1562
    %v1953 = vmax.f32 %v1381, %v1563
    %v1954 = vmax.f32 %v1382, %v1564
    %v1955 = vmax.f32 %v1383, %v1565
    %v1956 = vmax.f32 %v1384, %v1566
    %v1957 = vmax.f32 %v1385, %v1567
    %v1958 = vmax.f32 %v1386, %v1568
    %v1959 = vmax.f32 %v1387, %v1569
    %v1960 = vmax.f32 %v1388, %v1570
    %v1961 = vmax.f32 %v1389, %v1571
    %v1962 = vmax.f32 %v1390, %v1572
    %v1963 = vmax.f32 %v1391, %v1573
    %v1964 = vmax.f32 %v1392, %v1574
    %v1965 = vmax.f32 %v1393, %v1575
    %v1966 = vmax.f32 %v1394, %v1576
    %v1967 = vmax.f32 %v1395, %v1577
    %v1968 = vmax.f32 %v1396, %v1578
    %v1969 = vmax.f32 %v1397, %v1579
    %v1970 = vmax.f32 %v1398, %v1580
    %v1971 = vmax.f32 %v1399, %v1581
    %v1972 = vmax.f32 %v1738, %v1920
    %v1973 = vmax.f32 %v1739, %v1921
    %v1974 = vmax.f32 %v1740, %v1922
    %v1975 = vmax.f32 %v1741, %v1923
    %v1976 = vmax.f32 %v1742, %v1924
    %v1977 = vmax.f32 %v1743, %v1925
    %v1978 = vmax.f32 %v1744, %v1926
    %v1979 = vmax.f32 %v1745, %v1927
    %v1980 = vmax.f32 %v1746, %v1928
    %v1981 = vmax.f32 %v1747, %v1929
    %v1982 = vmax.f32 %v1748, %v1930
    %v1983 = vmax.f32 %v1749, %v1931
    %v1984 = vmax.f32 %v1750, %v1932
    %v1985 = vmax.f32 %v1751, %v1933
    %v1986 = vmax.f32 %v1752, %v1934
    %v1987 = vmax.f32 %v1753, %v1935
    %v1988 = vmax.f32 %v1754, %v1936
    %v1989 = vmax.f32 %v1755, %v1937
    %v1990 = vmax.f32 %v1756, %v1938
    %v1991 = vmax.f32 %v1757, %v1939
    %v1992 = vmax.f32 %v1758, %v1940
    %v1993 = vmax.f32 %v1759, %v1941
    %v1994 = vmax.f32 %v1760, %v1942
    %v1995 = vmax.f32 %v1761, %v1943
    %v1996 = vmax.f32 %v1762, %v1944
    %v1997 = vmax.f32 %v1763, %v1945
    %s1998 = sld [smem:[#allocation4 + $0x1]]
    %v1999 = vmax.f32 %v1946, %v1947
    %v2000 = vmax.f32 %v1948, %v1949
    %v2001 = vmax.f32 %v1950, %v1951
    %v2002 = vmax.f32 %v1952, %v1953
    %v2003 = vmax.f32 %v1954, %v1955
    %v2004 = vmax.f32 %v1956, %v1957
    %v2005 = vmax.f32 %v1958, %v1959
    %v2006 = vmax.f32 %v1960, %v1961
    %v2007 = vmax.f32 %v1962, %v1963
    %v2008 = vmax.f32 %v1964, %v1965
    %v2009 = vmax.f32 %v1966, %v1967
    %v2010 = vmax.f32 %v1968, %v1969
    %v2011 = vmax.f32 %v1970, %v1971
    %v2012 = vstv %s1998
    %v2013 = vadd.f32 %v1999, %v2012
    %v2014 = vadd.f32 %v2000, %v2012
    %v2015 = vadd.f32 %v2001, %v2012
    %v2016 = vadd.f32 %v2002, %v2012
    %v2017 = vadd.f32 %v2003, %v2012
    %v2018 = vadd.f32 %v2004, %v2012
    %v2019 = vadd.f32 %v2005, %v2012
    %v2020 = vadd.f32 %v2006, %v2012
    %v2021 = vadd.f32 %v2007, %v2012
    %v2022 = vadd.f32 %v2008, %v2012
    %v2023 = vadd.f32 %v2009, %v2012
    %v2024 = vadd.f32 %v2010, %v2012
    %v2025 = vadd.f32 %v2011, %v2012
    %v2026 = vmax.f32 %v2013, 0.0
    %v2027 = vmax.f32 %v2014, 0.0
    %v2028 = vmax.f32 %v2015, 0.0
    %v2029 = vmax.f32 %v2016, 0.0
    %v2030 = vmax.f32 %v2017, 0.0
    %v2031 = vmax.f32 %v2018, 0.0
    %v2032 = vmax.f32 %v2019, 0.0
    %v2033 = vmax.f32 %v2020, 0.0
    %v2034 = vmax.f32 %v2021, 0.0
    %v2035 = vmax.f32 %v2022, 0.0
    %v2036 = vmax.f32 %v2023, 0.0
    %v2037 = vmax.f32 %v2024, 0.0
    %v2038 = vmax.f32 %v2025, 0.0
    %v2039 = vmax.f32 %v1972, %v1973
    %v2040 = vmax.f32 %v1974, %v1975
    %v2041 = vmax.f32 %v1976, %v1977
    %v2042 = vmax.f32 %v1978, %v1979
    %v2043 = vmax.f32 %v1980, %v1981
    %v2044 = vmax.f32 %v1982, %v1983
    %v2045 = vmax.f32 %v1984, %v1985
    %v2046 = vmax.f32 %v1986, %v1987
    %v2047 = vmax.f32 %v1988, %v1989
    %v2048 = vmax.f32 %v1990, %v1991
    %v2049 = vmax.f32 %v1992, %v1993
    %v2050 = vmax.f32 %v1994, %v1995
    %v2051 = vmax.f32 %v1996, %v1997
    %v2052 = vadd.f32 %v2039, %v2012
    %v2053 = vadd.f32 %v2040, %v2012
    %v2054 = vadd.f32 %v2041, %v2012
    %v2055 = vadd.f32 %v2042, %v2012
    %v2056 = vadd.f32 %v2043, %v2012
    %v2057 = vadd.f32 %v2044, %v2012
    %v2058 = vadd.f32 %v2045, %v2012
    %v2059 = vadd.f32 %v2046, %v2012
    %v2060 = vadd.f32 %v2047, %v2012
    %v2061 = vadd.f32 %v2048, %v2012
    %v2062 = vadd.f32 %v2049, %v2012
    %v2063 = vadd.f32 %v2050, %v2012
    %v2064 = vadd.f32 %v2051, %v2012
    %v2065 = vmax.f32 %v2052, 0.0
    %v2066 = vmax.f32 %v2053, 0.0
    %v2067 = vmax.f32 %v2054, 0.0
    %v2068 = vmax.f32 %v2055, 0.0
    %v2069 = vmax.f32 %v2056, 0.0
    %v2070 = vmax.f32 %v2057, 0.0
    %v2071 = vmax.f32 %v2058, 0.0
    %v2072 = vmax.f32 %v2059, 0.0
    %v2073 = vmax.f32 %v2060, 0.0
    %v2074 = vmax.f32 %v2061, 0.0
    %v2075 = vmax.f32 %v2062, 0.0
    %v2076 = vmax.f32 %v2063, 0.0
    %v2077 = vmax.f32 %v2064, 0.0
    %s2078 = sld [smem:[#allocation2 + $0x100]]
    %s2079 = sld [smem:[#allocation2 + $0x101]]
    %s2080 = sld [smem:[#allocation2 + $0x102]]
    %s2081 = sld [smem:[#allocation2 + $0x103]]
    %v2082 = vstv %s2078
    %v2083 = vmul.f32 %v2082, %v75
    %v2084 = vmul.f32 %v2082, %v76
    %v2085 = vmul.f32 %v2082, %v77
    %v2086 = vmul.f32 %v2082, %v78
    %v2087 = vmul.f32 %v2082, %v79
    %v2088 = vmul.f32 %v2082, %v80
    %v2089 = vmul.f32 %v2082, %v81
    %v2090 = vmul.f32 %v2082, %v82
    %v2091 = vmul.f32 %v2082, %v83
    %v2092 = vmul.f32 %v2082, %v84
    %v2093 = vmul.f32 %v2082, %v85
    %v2094 = vmul.f32 %v2082, %v86
    %v2095 = vmul.f32 %v2082, %v87
    %v2096 = vmul.f32 %v2082, %v88
    %v2097 = vmul.f32 %v2082, %v89
    %v2098 = vmul.f32 %v2082, %v90
    %v2099 = vmul.f32 %v2082, %v91
    %v2100 = vmul.f32 %v2082, %v92
    %v2101 = vmul.f32 %v2082, %v93
    %v2102 = vmul.f32 %v2082, %v94
    %v2103 = vmul.f32 %v2082, %v95
    %v2104 = vmul.f32 %v2082, %v96
    %v2105 = vmul.f32 %v2082, %v97
    %v2106 = vmul.f32 %v2082, %v98
    %v2107 = vmul.f32 %v2082, %v99
    %v2108 = vmul.f32 %v2082, %v100
    %v2109 = vstv %s2079
    %v2110 = vmul.f32 %v2109, %v129
    %v2111 = vmul.f32 %v2109, %v130
    %v2112 = vmul.f32 %v2109, %v131
    %v2113 = vmul.f32 %v2109, %v132
    %v2114 = vmul.f32 %v2109, %v133
    %v2115 = vmul.f32 %v2109, %v134
    %v2116 = vmul.f32 %v2109, %v135
    %v2117 = vmul.f32 %v2109, %v136
    %v2118 = vmul.f32 %v2109, %v137
    %v2119 = vmul.f32 %v2109, %v138
    %v2120 = vmul.f32 %v2109, %v139
    %v2121 = vmul.f32 %v2109, %v140
    %v2122 = vmul.f32 %v2109, %v141
    %v2123 = vmul.f32 %v2109, %v142
    %v2124 = vmul.f32 %v2109, %v143
    %v2125 = vmul.f32 %v2109, %v144
    %v2126 = vmul.f32 %v2109, %v145
    %v2127 = vmul.f32 %v2109, %v146
    %v2128 = vmul.f32 %v2109, %v147
    %v2129 = vmul.f32 %v2109, %v148
    %v2130 = vmul.f32 %v2109, %v149
    %v2131 = vmul.f32 %v2109, %v150
    %v2132 = vmul.f32 %v2109, %v151
    %v2133 = vmul.f32 %v2109, %v152
    %v2134 = vmul.f32 %v2109, %v153
    %v2135 = vmul.f32 %v2109, %v154
    %v2136 = vadd.f32 %v2083, %v2110
    %v2137 = vadd.f32 %v2084, %v2111
    %v2138 = vadd.f32 %v2085, %v2112
    %v2139 = vadd.f32 %v2086, %v2113
    %v2140 = vadd.f32 %v2087, %v2114
    %v2141 = vadd.f32 %v2088, %v2115
    %v2142 = vadd.f32 %v2089, %v2116
    %v2143 = vadd.f32 %v2090, %v2117
    %v2144 = vadd.f32 %v2091, %v2118
    %v2145 = vadd.f32 %v2092, %v2119
    %v2146 = vadd.f32 %v2093, %v2120
    %v2147 = vadd.f32 %v2094, %v2121
    %v2148 = vadd.f32 %v2095, %v2122
    %v2149 = vadd.f32 %v2096, %v2123
    %v2150 = vadd.f32 %v2097, %v2124
    %v2151 = vadd.f32 %v2098, %v2125
    %v2152 = vadd.f32 %v2099, %v2126
    %v2153 = vadd.f32 %v2100, %v2127
    %v2154 = vadd.f32 %v2101, %v2128
    %v2155 = vadd.f32 %v2102, %v2129
    %v2156 = vadd.f32 %v2103, %v2130
    %v2157 = vadd.f32 %v2104, %v2131
    %v2158 = vadd.f32 %v2105, %v2132
    %v2159 = vadd.f32 %v2106, %v2133
    %v2160 = vadd.f32 %v2107, %v2134
    %v2161 = vadd.f32 %v2108, %v2135
    %v2162 = vstv %s2080
    %v2163 = vmul.f32 %v2162, %v102
    %v2164 = vmul.f32 %v2162, %v103
    %v2165 = vmul.f32 %v2162, %v104
    %v2166 = vmul.f32 %v2162, %v105
    %v2167 = vmul.f32 %v2162, %v106
    %v2168 = vmul.f32 %v2162, %v107
    %v2169 = vmul.f32 %v2162, %v108
    %v2170 = vmul.f32 %v2162, %v109
    %v2171 = vmul.f32 %v2162, %v110
    %v2172 = vmul.f32 %v2162, %v111
    %v2173 = vmul.f32 %v2162, %v112
    %v2174 = vmul.f32 %v2162, %v113
    %v2175 = vmul.f32 %v2162, %v114
    %v2176 = vmul.f32 %v2162, %v115
    %v2177 = vmul.f32 %v2162, %v116
    %v2178 = vmul.f32 %v2162, %v117
    %v2179 = vmul.f32 %v2162, %v118
    %v2180 = vmul.f32 %v2162, %v119
    %v2181 = vmul.f32 %v2162, %v120
    %v2182 = vmul.f32 %v2162, %v121
    %v2183 = vmul.f32 %v2162, %v122
    %v2184 = vmul.f32 %v2162, %v123
    %v2185 = vmul.f32 %v2162, %v124
    %v2186 = vmul.f32 %v2162, %v125
    %v2187 = vmul.f32 %v2162, %v126
    %v2188 = vmul.f32 %v2162, %v127
    %v2189 = vadd.f32 %v2136, %v2163
    %v2190 = vadd.f32 %v2137, %v2164
    %v2191 = vadd.f32 %v2138, %v2165
    %v2192 = vadd.f32 %v2139, %v2166
    %v2193 = vadd.f32 %v2140, %v2167
    %v2194 = vadd.f32 %v2141, %v2168
    %v2195 = vadd.f32 %v2142, %v2169
    %v2196 = vadd.f32 %v2143, %v2170
    %v2197 = vadd.f32 %v2144, %v2171
    %v2198 = vadd.f32 %v2145, %v2172
    %v2199 = vadd.f32 %v2146, %v2173
    %v2200 = vadd.f32 %v2147, %v2174
    %v2201 = vadd.f32 %v2148, %v2175
    %v2202 = vadd.f32 %v2149, %v2176
    %v2203 = vadd.f32 %v2150, %v2177
    %v2204 = vadd.f32 %v2151, %v2178
    %v2205 = vadd.f32 %v2152, %v2179
    %v2206 = vadd.f32 %v2153, %v2180
    %v2207 = vadd.f32 %v2154, %v2181
    %v2208 = vadd.f32 %v2155, %v2182
    %v2209 = vadd.f32 %v2156, %v2183
    %v2210 = vadd.f32 %v2157, %v2184
    %v2211 = vadd.f32 %v2158, %v2185
    %v2212 = vadd.f32 %v2159, %v2186
    %v2213 = vadd.f32 %v2160, %v2187
    %v2214 = vadd.f32 %v2161, %v2188
    %v2215 = vstv %s2081
    %v2216 = vmul.f32 %v2215, %v156
    %v2217 = vmul.f32 %v2215, %v157
    %v2218 = vmul.f32 %v2215, %v158
    %v2219 = vmul.f32 %v2215, %v159
    %v2220 = vmul.f32 %v2215, %v160
    %v2221 = vmul.f32 %v2215, %v161
    %v2222 = vmul.f32 %v2215, %v162
    %v2223 = vmul.f32 %v2215, %v163
    %v2224 = vmul.f32 %v2215, %v164
    %v2225 = vmul.f32 %v2215, %v165
    %v2226 = vmul.f32 %v2215, %v166
    %v2227 = vmul.f32 %v2215, %v167
    %v2228 = vmul.f32 %v2215, %v168
    %v2229 = vmul.f32 %v2215, %v169
    %v2230 = vmul.f32 %v2215, %v170
    %v2231 = vmul.f32 %v2215, %v171
    %v2232 = vmul.f32 %v2215, %v172
    %v2233 = vmul.f32 %v2215, %v173
    %v2234 = vmul.f32 %v2215, %v174
    %v2235 = vmul.f32 %v2215, %v175
    %v2236 = vmul.f32 %v2215, %v176
    %v2237 = vmul.f32 %v2215, %v177
    %v2238 = vmul.f32 %v2215, %v178
    %v2239 = vmul.f32 %v2215, %v179
    %v2240 = vmul.f32 %v2215, %v180
    %v2241 = vmul.f32 %v2215, %v181
    %v2242 = vadd.f32 %v2189, %v2216
    %v2243 = vadd.f32 %v2190, %v2217
    %v2244 = vadd.f32 %v2191, %v2218
    %v2245 = vadd.f32 %v2192, %v2219
    %v2246 = vadd.f32 %v2193, %v2220
    %v2247 = vadd.f32 %v2194, %v2221
    %v2248 = vadd.f32 %v2195, %v2222
    %v2249 = vadd.f32 %v2196, %v2223
    %v2250 = vadd.f32 %v2197, %v2224
    %v2251 = vadd.f32 %v2198, %v2225
    %v2252 = vadd.f32 %v2199, %v2226
    %v2253 = vadd.f32 %v2200, %v2227
    %v2254 = vadd.f32 %v2201, %v2228
    %v2255 = vadd.f32 %v2202, %v2229
    %v2256 = vadd.f32 %v2203, %v2230
    %v2257 = vadd.f32 %v2204, %v2231
    %v2258 = vadd.f32 %v2205, %v2232
    %v2259 = vadd.f32 %v2206, %v2233
    %v2260 = vadd.f32 %v2207, %v2234
    %v2261 = vadd.f32 %v2208, %v2235
    %v2262 = vadd.f32 %v2209, %v2236
    %v2263 = vadd.f32 %v2210, %v2237
    %v2264 = vadd.f32 %v2211, %v2238
    %v2265 = vadd.f32 %v2212, %v2239
    %v2266 = vadd.f32 %v2213, %v2240
    %v2267 = vadd.f32 %v2214, %v2241
    %v2268 = vmul.f32 %v2082, %v129
    %v2269 = vmul.f32 %v2082, %v130
    %v2270 = vmul.f32 %v2082, %v131
    %v2271 = vmul.f32 %v2082, %v132
    %v2272 = vmul.f32 %v2082, %v133
    %v2273 = vmul.f32 %v2082, %v134
    %v2274 = vmul.f32 %v2082, %v135
    %v2275 = vmul.f32 %v2082, %v136
    %v2276 = vmul.f32 %v2082, %v137
    %v2277 = vmul.f32 %v2082, %v138
    %v2278 = vmul.f32 %v2082, %v139
    %v2279 = vmul.f32 %v2082, %v140
    %v2280 = vmul.f32 %v2082, %v141
    %v2281 = vmul.f32 %v2082, %v142
    %v2282 = vmul.f32 %v2082, %v143
    %v2283 = vmul.f32 %v2082, %v144
    %v2284 = vmul.f32 %v2082, %v145
    %v2285 = vmul.f32 %v2082, %v146
    %v2286 = vmul.f32 %v2082, %v147
    %v2287 = vmul.f32 %v2082, %v148
    %v2288 = vmul.f32 %v2082, %v149
    %v2289 = vmul.f32 %v2082, %v150
    %v2290 = vmul.f32 %v2082, %v151
    %v2291 = vmul.f32 %v2082, %v152
    %v2292 = vmul.f32 %v2082, %v153
    %v2293 = vmul.f32 %v2082, %v154
    %v2294 = vmul.f32 %v2109, %v183
    %v2295 = vmul.f32 %v2109, %v184
    %v2296 = vmul.f32 %v2109, %v185
    %v2297 = vmul.f32 %v2109, %v186
    %v2298 = vmul.f32 %v2109, %v187
    %v2299 = vmul.f32 %v2109, %v188
    %v2300 = vmul.f32 %v2109, %v189
    %v2301 = vmul.f32 %v2109, %v190
    %v2302 = vmul.f32 %v2109, %v191
    %v2303 = vmul.f32 %v2109, %v192
    %v2304 = vmul.f32 %v2109, %v193
    %v2305 = vmul.f32 %v2109, %v194
    %v2306 = vmul.f32 %v2109, %v195
    %v2307 = vmul.f32 %v2109, %v196
    %v2308 = vmul.f32 %v2109, %v197
    %v2309 = vmul.f32 %v2109, %v198
    %v2310 = vmul.f32 %v2109, %v199
    %v2311 = vmul.f32 %v2109, %v200
    %v2312 = vmul.f32 %v2109, %v201
    %v2313 = vmul.f32 %v2109, %v202
    %v2314 = vmul.f32 %v2109, %v203
    %v2315 = vmul.f32 %v2109, %v204
    %v2316 = vmul.f32 %v2109, %v205
    %v2317 = vmul.f32 %v2109, %v206
    %v2318 = vmul.f32 %v2109, %v207
    %v2319 = vmul.f32 %v2109, %v208
    %v2320 = vadd.f32 %v2268, %v2294
    %v2321 = vadd.f32 %v2269, %v2295
    %v2322 = vadd.f32 %v2270, %v2296
    %v2323 = vadd.f32 %v2271, %v2297
    %v2324 = vadd.f32 %v2272, %v2298
    %v2325 = vadd.f32 %v2273, %v2299
    %v2326 = vadd.f32 %v2274, %v2300
    %v2327 = vadd.f32 %v2275, %v2301
    %v2328 = vadd.f32 %v2276, %v2302
    %v2329 = vadd.f32 %v2277, %v2303
    %v2330 = vadd.f32 %v2278, %v2304
    %v2331 = vadd.f32 %v2279, %v2305
    %v2332 = vadd.f32 %v2280, %v2306
    %v2333 = vadd.f32 %v2281, %v2307
    %v2334 = vadd.f32 %v2282, %v2308
    %v2335 = vadd.f32 %v2283, %v2309
    %v2336 = vadd.f32 %v2284, %v2310
    %v2337 = vadd.f32 %v2285, %v2311
    %v2338 = vadd.f32 %v2286, %v2312
    %v2339 = vadd.f32 %v2287, %v2313
    %v2340 = vadd.f32 %v2288, %v2314
    %v2341 = vadd.f32 %v2289, %v2315
    %v2342 = vadd.f32 %v2290, %v2316
    %v2343 = vadd.f32 %v2291, %v2317
    %v2344 = vadd.f32 %v2292, %v2318
    %v2345 = vadd.f32 %v2293, %v2319
    %v2346 = vmul.f32 %v2162, %v156
    %v2347 = vmul.f32 %v2162, %v157
    %v2348 = vmul.f32 %v2162, %v158
    %v2349 = vmul.f32 %v2162, %v159
    %v2350 = vmul.f32 %v2162, %v160
    %v2351 = vmul.f32 %v2162, %v161
    %v2352 = vmul.f32 %v2162, %v162
    %v2353 = vmul.f32 %v2162, %v163
    %v2354 = vmul.f32 %v2162, %v164
    %v2355 = vmul.f32 %v2162, %v165
    %v2356 = vmul.f32 %v2162, %v166
    %v2357 = vmul.f32 %v2162, %v167
    %v2358 = vmul.f32 %v2162, %v168
    %v2359 = vmul.f32 %v2162, %v169
    %v2360 = vmul.f32 %v2162, %v170
    %v2361 = vmul.f32 %v2162, %v171
    %v2362 = vmul.f32 %v2162, %v172
    %v2363 = vmul.f32 %v2162, %v173
    %v2364 = vmul.f32 %v2162, %v174
    %v2365 = vmul.f32 %v2162, %v175
    %v2366 = vmul.f32 %v2162, %v176
    %v2367 = vmul.f32 %v2162, %v177
    %v2368 = vmul.f32 %v2162, %v178
    %v2369 = vmul.f32 %v2162, %v179
    %v2370 = vmul.f32 %v2162, %v180
    %v2371 = vmul.f32 %v2162, %v181
    %v2372 = vadd.f32 %v2320, %v2346
    %v2373 = vadd.f32 %v2321, %v2347
    %v2374 = vadd.f32 %v2322, %v2348
    %v2375 = vadd.f32 %v2323, %v2349
    %v2376 = vadd.f32 %v2324, %v2350
    %v2377 = vadd.f32 %v2325, %v2351
    %v2378 = vadd.f32 %v2326, %v2352
    %v2379 = vadd.f32 %v2327, %v2353
    %v2380 = vadd.f32 %v2328, %v2354
    %v2381 = vadd.f32 %v2329, %v2355
    %v2382 = vadd.f32 %v2330, %v2356
    %v2383 = vadd.f32 %v2331, %v2357
    %v2384 = vadd.f32 %v2332, %v2358
    %v2385 = vadd.f32 %v2333, %v2359
    %v2386 = vadd.f32 %v2334, %v2360
    %v2387 = vadd.f32 %v2335, %v2361
    %v2388 = vadd.f32 %v2336, %v2362
    %v2389 = vadd.f32 %v2337, %v2363
    %v2390 = vadd.f32 %v2338, %v2364
    %v2391 = vadd.f32 %v2339, %v2365
    %v2392 = vadd.f32 %v2340, %v2366
    %v2393 = vadd.f32 %v2341, %v2367
    %v2394 = vadd.f32 %v2342, %v2368
    %v2395 = vadd.f32 %v2343, %v2369
    %v2396 = vadd.f32 %v2344, %v2370
    %v2397 = vadd.f32 %v2345, %v2371
    %v2398 = vmul.f32 %v2215, %v210
    %v2399 = vmul.f32 %v2215, %v211
    %v2400 = vmul.f32 %v2215, %v212
    %v2401 = vmul.f32 %v2215, %v213
    %v2402 = vmul.f32 %v2215, %v214
    %v2403 = vmul.f32 %v2215, %v215
    %v2404 = vmul.f32 %v2215, %v216
    %v2405 = vmul.f32 %v2215, %v217
    %v2406 = vmul.f32 %v2215, %v218
    %v2407 = vmul.f32 %v2215, %v219
    %v2408 = vmul.f32 %v2215, %v220
    %v2409 = vmul.f32 %v2215, %v221
    %v2410 = vmul.f32 %v2215, %v222
    %v2411 = vmul.f32 %v2215, %v223
    %v2412 = vmul.f32 %v2215, %v224
    %v2413 = vmul.f32 %v2215, %v225
    %v2414 = vmul.f32 %v2215, %v226
    %v2415 = vmul.f32 %v2215, %v227
    %v2416 = vmul.f32 %v2215, %v228
    %v2417 = vmul.f32 %v2215, %v229
    %v2418 = vmul.f32 %v2215, %v230
    %v2419 = vmul.f32 %v2215, %v231
    %v2420 = vmul.f32 %v2215, %v232
    %v2421 = vmul.f32 %v2215, %v233
    %v2422 = vmul.f32 %v2215, %v234
    %v2423 = vmul.f32 %v2215, %v235
    %v2424 = vadd.f32 %v2372, %v2398
    %v2425 = vadd.f32 %v2373, %v2399
    %v2426 = vadd.f32 %v2374, %v2400
    %v2427 = vadd.f32 %v2375, %v2401
    %v2428 = vadd.f32 %v2376, %v2402
    %v2429 = vadd.f32 %v2377, %v2403
    %v2430 = vadd.f32 %v2378, %v2404
    %v2431 = vadd.f32 %v2379, %v2405
    %v2432 = vadd.f32 %v2380, %v2406
    %v2433 = vadd.f32 %v2381, %v2407
    %v2434 = vadd.f32 %v2382, %v2408
    %v2435 = vadd.f32 %v2383, %v2409
    %v2436 = vadd.f32 %v2384, %v2410
    %v2437 = vadd.f32 %v2385, %v2411
    %v2438 = vadd.f32 %v2386, %v2412
    %v2439 = vadd.f32 %v2387, %v2413
    %v2440 = vadd.f32 %v2388, %v2414
    %v2441 = vadd.f32 %v2389, %v2415
    %v2442 = vadd.f32 %v2390, %v2416
    %v2443 = vadd.f32 %v2391, %v2417
    %v2444 = vadd.f32 %v2392, %v2418
    %v2445 = vadd.f32 %v2393, %v2419
    %v2446 = vadd.f32 %v2394, %v2420
    %v2447 = vadd.f32 %v2395, %v2421
    %v2448 = vadd.f32 %v2396, %v2422
    %v2449 = vadd.f32 %v2397, %v2423
    %v2450 = vmul.f32 %v2082, %v183
    %v2451 = vmul.f32 %v2082, %v184
    %v2452 = vmul.f32 %v2082, %v185
    %v2453 = vmul.f32 %v2082, %v186
    %v2454 = vmul.f32 %v2082, %v187
    %v2455 = vmul.f32 %v2082, %v188
    %v2456 = vmul.f32 %v2082, %v189
    %v2457 = vmul.f32 %v2082, %v190
    %v2458 = vmul.f32 %v2082, %v191
    %v2459 = vmul.f32 %v2082, %v192
    %v2460 = vmul.f32 %v2082, %v193
    %v2461 = vmul.f32 %v2082, %v194
    %v2462 = vmul.f32 %v2082, %v195
    %v2463 = vmul.f32 %v2082, %v196
    %v2464 = vmul.f32 %v2082, %v197
    %v2465 = vmul.f32 %v2082, %v198
    %v2466 = vmul.f32 %v2082, %v199
    %v2467 = vmul.f32 %v2082, %v200
    %v2468 = vmul.f32 %v2082, %v201
    %v2469 = vmul.f32 %v2082, %v202
    %v2470 = vmul.f32 %v2082, %v203
    %v2471 = vmul.f32 %v2082, %v204
    %v2472 = vmul.f32 %v2082, %v205
    %v2473 = vmul.f32 %v2082, %v206
    %v2474 = vmul.f32 %v2082, %v207
    %v2475 = vmul.f32 %v2082, %v208
    %v2476 = vmul.f32 %v2109, %v237
    %v2477 = vmul.f32 %v2109, %v238
    %v2478 = vmul.f32 %v2109, %v239
    %v2479 = vmul.f32 %v2109, %v240
    %v2480 = vmul.f32 %v2109, %v241
    %v2481 = vmul.f32 %v2109, %v242
    %v2482 = vmul.f32 %v2109, %v243
    %v2483 = vmul.f32 %v2109, %v244
    %v2484 = vmul.f32 %v2109, %v245
    %v2485 = vmul.f32 %v2109, %v246
    %v2486 = vmul.f32 %v2109, %v247
    %v2487 = vmul.f32 %v2109, %v248
    %v2488 = vmul.f32 %v2109, %v249
    %v2489 = vmul.f32 %v2109, %v250
    %v2490 = vmul.f32 %v2109, %v251
    %v2491 = vmul.f32 %v2109, %v252
    %v2492 = vmul.f32 %v2109, %v253
    %v2493 = vmul.f32 %v2109, %v254
    %v2494 = vmul.f32 %v2109, %v255
    %v2495 = vmul.f32 %v2109, %v256
    %v2496 = vmul.f32 %v2109, %v257
    %v2497 = vmul.f32 %v2109, %v258
    %v2498 = vmul.f32 %v2109, %v259
    %v2499 = vmul.f32 %v2109, %v260
    %v2500 = vmul.f32 %v2109, %v261
    %v2501 = vmul.f32 %v2109, %v262
    %v2502 = vadd.f32 %v2450, %v2476
    %v2503 = vadd.f32 %v2451, %v2477
    %v2504 = vadd.f32 %v2452, %v2478
    %v2505 = vadd.f32 %v2453, %v2479
    %v2506 = vadd.f32 %v2454, %v2480
    %v2507 = vadd.f32 %v2455, %v2481
    %v2508 = vadd.f32 %v2456, %v2482
    %v2509 = vadd.f32 %v2457, %v2483
    %v2510 = vadd.f32 %v2458, %v2484
    %v2511 = vadd.f32 %v2459, %v2485
    %v2512 = vadd.f32 %v2460, %v2486
    %v2513 = vadd.f32 %v2461, %v2487
    %v2514 = vadd.f32 %v2462, %v2488
    %v2515 = vadd.f32 %v2463, %v2489
    %v2516 = vadd.f32 %v2464, %v2490
    %v2517 = vadd.f32 %v2465, %v2491
    %v2518 = vadd.f32 %v2466, %v2492
    %v2519 = vadd.f32 %v2467, %v2493
    %v2520 = vadd.f32 %v2468, %v2494
    %v2521 = vadd.f32 %v2469, %v2495
    %v2522 = vadd.f32 %v2470, %v2496
    %v2523 = vadd.f32 %v2471, %v2497
    %v2524 = vadd.f32 %v2472, %v2498
    %v2525 = vadd.f32 %v2473, %v2499
    %v2526 = vadd.f32 %v2474, %v2500
    %v2527 = vadd.f32 %v2475, %v2501
    %v2528 = vmul.f32 %v2162, %v210
    %v2529 = vmul.f32 %v2162, %v211
    %v2530 = vmul.f32 %v2162, %v212
    %v2531 = vmul.f32 %v2162, %v213
    %v2532 = vmul.f32 %v2162, %v214
    %v2533 = vmul.f32 %v2162, %v215
    %v2534 = vmul.f32 %v2162, %v216
    %v2535 = vmul.f32 %v2162, %v217
    %v2536 = vmul.f32 %v2162, %v218
    %v2537 = vmul.f32 %v2162, %v219
    %v2538 = vmul.f32 %v2162, %v220
    %v2539 = vmul.f32 %v2162, %v221
    %v2540 = vmul.f32 %v2162, %v222
    %v2541 = vmul.f32 %v2162, %v223
    %v2542 = vmul.f32 %v2162, %v224
    %v2543 = vmul.f32 %v2162, %v225
    %v2544 = vmul.f32 %v2162, %v226
    %v2545 = vmul.f32 %v2162, %v227
    %v2546 = vmul.f32 %v2162, %v228
    %v2547 = vmul.f32 %v2162, %v229
    %v2548 = vmul.f32 %v2162, %v230
    %v2549 = vmul.f32 %v2162, %v231
    %v2550 = vmul.f32 %v2162, %v232
    %v2551 = vmul.f32 %v2162, %v233
    %v2552 = vmul.f32 %v2162, %v234
    %v2553 = vmul.f32 %v2162, %v235
    %v2554 = vadd.f32 %v2502, %v2528
    %v2555 = vadd.f32 %v2503, %v2529
    %v2556 = vadd.f32 %v2504, %v2530
    %v2557 = vadd.f32 %v2505, %v2531
    %v2558 = vadd.f32 %v2506, %v2532
    %v2559 = vadd.f32 %v2507, %v2533
    %v2560 = vadd.f32 %v2508, %v2534
    %v2561 = vadd.f32 %v2509, %v2535
    %v2562 = vadd.f32 %v2510, %v2536
    %v2563 = vadd.f32 %v2511, %v2537
    %v2564 = vadd.f32 %v2512, %v2538
    %v2565 = vadd.f32 %v2513, %v2539
    %v2566 = vadd.f32 %v2514, %v2540
    %v2567 = vadd.f32 %v2515, %v2541
    %v2568 = vadd.f32 %v2516, %v2542
    %v2569 = vadd.f32 %v2517, %v2543
    %v2570 = vadd.f32 %v2518, %v2544
    %v2571 = vadd.f32 %v2519, %v2545
    %v2572 = vadd.f32 %v2520, %v2546
    %v2573 = vadd.f32 %v2521, %v2547
    %v2574 = vadd.f32 %v2522, %v2548
    %v2575 = vadd.f32 %v2523, %v2549
    %v2576 = vadd.f32 %v2524, %v2550
    %v2577 = vadd.f32 %v2525, %v2551
    %v2578 = vadd.f32 %v2526, %v2552
    %v2579 = vadd.f32 %v2527, %v2553
    %v2580 = vmul.f32 %v2215, %v264
    %v2581 = vmul.f32 %v2215, %v265
    %v2582 = vmul.f32 %v2215, %v266
    %v2583 = vmul.f32 %v2215, %v267
    %v2584 = vmul.f32 %v2215, %v268
    %v2585 = vmul.f32 %v2215, %v269
    %v2586 = vmul.f32 %v2215, %v270
    %v2587 = vmul.f32 %v2215, %v271
    %v2588 = vmul.f32 %v2215, %v272
    %v2589 = vmul.f32 %v2215, %v273
    %v2590 = vmul.f32 %v2215, %v274
    %v2591 = vmul.f32 %v2215, %v275
    %v2592 = vmul.f32 %v2215, %v276
    %v2593 = vmul.f32 %v2215, %v277
    %v2594 = vmul.f32 %v2215, %v278
    %v2595 = vmul.f32 %v2215, %v279
    %v2596 = vmul.f32 %v2215, %v280
    %v2597 = vmul.f32 %v2215, %v281
    %v2598 = vmul.f32 %v2215, %v282
    %v2599 = vmul.f32 %v2215, %v283
    %v2600 = vmul.f32 %v2215, %v284
    %v2601 = vmul.f32 %v2215, %v285
    %v2602 = vmul.f32 %v2215, %v286
    %v2603 = vmul.f32 %v2215, %v287
    %v2604 = vmul.f32 %v2215, %v288
    %v2605 = vmul.f32 %v2215, %v289
    %v2606 = vadd.f32 %v2554, %v2580
    %v2607 = vadd.f32 %v2555, %v2581
    %v2608 = vadd.f32 %v2556, %v2582
    %v2609 = vadd.f32 %v2557, %v2583
    %v2610 = vadd.f32 %v2558, %v2584
    %v2611 = vadd.f32 %v2559, %v2585
    %v2612 = vadd.f32 %v2560, %v2586
    %v2613 = vadd.f32 %v2561, %v2587
    %v2614 = vadd.f32 %v2562, %v2588
    %v2615 = vadd.f32 %v2563, %v2589
    %v2616 = vadd.f32 %v2564, %v2590
    %v2617 = vadd.f32 %v2565, %v2591
    %v2618 = vadd.f32 %v2566, %v2592
    %v2619 = vadd.f32 %v2567, %v2593
    %v2620 = vadd.f32 %v2568, %v2594
    %v2621 = vadd.f32 %v2569, %v2595
    %v2622 = vadd.f32 %v2570, %v2596
    %v2623 = vadd.f32 %v2571, %v2597
    %v2624 = vadd.f32 %v2572, %v2598
    %v2625 = vadd.f32 %v2573, %v2599
    %v2626 = vadd.f32 %v2574, %v2600
    %v2627 = vadd.f32 %v2575, %v2601
    %v2628 = vadd.f32 %v2576, %v2602
    %v2629 = vadd.f32 %v2577, %v2603
    %v2630 = vadd.f32 %v2578, %v2604
    %v2631 = vadd.f32 %v2579, %v2605
    %v2632 = vmul.f32 %v2082, %v237
    %v2633 = vmul.f32 %v2082, %v238
    %v2634 = vmul.f32 %v2082, %v239
    %v2635 = vmul.f32 %v2082, %v240
    %v2636 = vmul.f32 %v2082, %v241
    %v2637 = vmul.f32 %v2082, %v242
    %v2638 = vmul.f32 %v2082, %v243
    %v2639 = vmul.f32 %v2082, %v244
    %v2640 = vmul.f32 %v2082, %v245
    %v2641 = vmul.f32 %v2082, %v246
    %v2642 = vmul.f32 %v2082, %v247
    %v2643 = vmul.f32 %v2082, %v248
    %v2644 = vmul.f32 %v2082, %v249
    %v2645 = vmul.f32 %v2082, %v250
    %v2646 = vmul.f32 %v2082, %v251
    %v2647 = vmul.f32 %v2082, %v252
    %v2648 = vmul.f32 %v2082, %v253
    %v2649 = vmul.f32 %v2082, %v254
    %v2650 = vmul.f32 %v2082, %v255
    %v2651 = vmul.f32 %v2082, %v256
    %v2652 = vmul.f32 %v2082, %v257
    %v2653 = vmul.f32 %v2082, %v258
    %v2654 = vmul.f32 %v2082, %v259
    %v2655 = vmul.f32 %v2082, %v260
    %v2656 = vmul.f32 %v2082, %v261
    %v2657 = vmul.f32 %v2082, %v262
    %v2658 = vmul.f32 %v2109, %v290
    %v2659 = vmul.f32 %v2109, %v291
    %v2660 = vmul.f32 %v2109, %v292
    %v2661 = vmul.f32 %v2109, %v293
    %v2662 = vmul.f32 %v2109, %v294
    %v2663 = vmul.f32 %v2109, %v295
    %v2664 = vmul.f32 %v2109, %v296
    %v2665 = vmul.f32 %v2109, %v297
    %v2666 = vmul.f32 %v2109, %v298
    %v2667 = vmul.f32 %v2109, %v299
    %v2668 = vmul.f32 %v2109, %v300
    %v2669 = vmul.f32 %v2109, %v301
    %v2670 = vmul.f32 %v2109, %v302
    %v2671 = vmul.f32 %v2109, %v303
    %v2672 = vmul.f32 %v2109, %v304
    %v2673 = vmul.f32 %v2109, %v305
    %v2674 = vmul.f32 %v2109, %v306
    %v2675 = vmul.f32 %v2109, %v307
    %v2676 = vmul.f32 %v2109, %v308
    %v2677 = vmul.f32 %v2109, %v309
    %v2678 = vmul.f32 %v2109, %v310
    %v2679 = vmul.f32 %v2109, %v311
    %v2680 = vmul.f32 %v2109, %v312
    %v2681 = vmul.f32 %v2109, %v313
    %v2682 = vmul.f32 %v2109, %v314
    %v2683 = vmul.f32 %v2109, %v315
    %v2684 = vadd.f32 %v2632, %v2658
    %v2685 = vadd.f32 %v2633, %v2659
    %v2686 = vadd.f32 %v2634, %v2660
    %v2687 = vadd.f32 %v2635, %v2661
    %v2688 = vadd.f32 %v2636, %v2662
    %v2689 = vadd.f32 %v2637, %v2663
    %v2690 = vadd.f32 %v2638, %v2664
    %v2691 = vadd.f32 %v2639, %v2665
    %v2692 = vadd.f32 %v2640, %v2666
    %v2693 = vadd.f32 %v2641, %v2667
    %v2694 = vadd.f32 %v2642, %v2668
    %v2695 = vadd.f32 %v2643, %v2669
    %v2696 = vadd.f32 %v2644, %v2670
    %v2697 = vadd.f32 %v2645, %v2671
    %v2698 = vadd.f32 %v2646, %v2672
    %v2699 = vadd.f32 %v2647, %v2673
    %v2700 = vadd.f32 %v2648, %v2674
    %v2701 = vadd.f32 %v2649, %v2675
    %v2702 = vadd.f32 %v2650, %v2676
    %v2703 = vadd.f32 %v2651, %v2677
    %v2704 = vadd.f32 %v2652, %v2678
    %v2705 = vadd.f32 %v2653, %v2679
    %v2706 = vadd.f32 %v2654, %v2680
    %v2707 = vadd.f32 %v2655, %v2681
    %v2708 = vadd.f32 %v2656, %v2682
    %v2709 = vadd.f32 %v2657, %v2683
    %v2710 = vmul.f32 %v2162, %v264
    %v2711 = vmul.f32 %v2162, %v265
    %v2712 = vmul.f32 %v2162, %v266
    %v2713 = vmul.f32 %v2162, %v267
    %v2714 = vmul.f32 %v2162, %v268
    %v2715 = vmul.f32 %v2162, %v269
    %v2716 = vmul.f32 %v2162, %v270
    %v2717 = vmul.f32 %v2162, %v271
    %v2718 = vmul.f32 %v2162, %v272
    %v2719 = vmul.f32 %v2162, %v273
    %v2720 = vmul.f32 %v2162, %v274
    %v2721 = vmul.f32 %v2162, %v275
    %v2722 = vmul.f32 %v2162, %v276
    %v2723 = vmul.f32 %v2162, %v277
    %v2724 = vmul.f32 %v2162, %v278
    %v2725 = vmul.f32 %v2162, %v279
    %v2726 = vmul.f32 %v2162, %v280
    %v2727 = vmul.f32 %v2162, %v281
    %v2728 = vmul.f32 %v2162, %v282
    %v2729 = vmul.f32 %v2162, %v283
    %v2730 = vmul.f32 %v2162, %v284
    %v2731 = vmul.f32 %v2162, %v285
    %v2732 = vmul.f32 %v2162, %v286
    %v2733 = vmul.f32 %v2162, %v287
    %v2734 = vmul.f32 %v2162, %v288
    %v2735 = vmul.f32 %v2162, %v289
    %v2736 = vadd.f32 %v2684, %v2710
    %v2737 = vadd.f32 %v2685, %v2711
    %v2738 = vadd.f32 %v2686, %v2712
    %v2739 = vadd.f32 %v2687, %v2713
    %v2740 = vadd.f32 %v2688, %v2714
    %v2741 = vadd.f32 %v2689, %v2715
    %v2742 = vadd.f32 %v2690, %v2716
    %v2743 = vadd.f32 %v2691, %v2717
    %v2744 = vadd.f32 %v2692, %v2718
    %v2745 = vadd.f32 %v2693, %v2719
    %v2746 = vadd.f32 %v2694, %v2720
    %v2747 = vadd.f32 %v2695, %v2721
    %v2748 = vadd.f32 %v2696, %v2722
    %v2749 = vadd.f32 %v2697, %v2723
    %v2750 = vadd.f32 %v2698, %v2724
    %v2751 = vadd.f32 %v2699, %v2725
    %v2752 = vadd.f32 %v2700, %v2726
    %v2753 = vadd.f32 %v2701, %v2727
    %v2754 = vadd.f32 %v2702, %v2728
    %v2755 = vadd.f32 %v2703, %v2729
    %v2756 = vadd.f32 %v2704, %v2730
    %v2757 = vadd.f32 %v2705, %v2731
    %v2758 = vadd.f32 %v2706, %v2732
    %v2759 = vadd.f32 %v2707, %v2733
    %v2760 = vadd.f32 %v2708, %v2734
    %v2761 = vadd.f32 %v2709, %v2735
    %v2762 = vmul.f32 %v2215, %v316
    %v2763 = vmul.f32 %v2215, %v317
    %v2764 = vmul.f32 %v2215, %v318
    %v2765 = vmul.f32 %v2215, %v319
    %v2766 = vmul.f32 %v2215, %v320
    %v2767 = vmul.f32 %v2215, %v321
    %v2768 = vmul.f32 %v2215, %v322
    %v2769 = vmul.f32 %v2215, %v323
    %v2770 = vmul.f32 %v2215, %v324
    %v2771 = vmul.f32 %v2215, %v325
    %v2772 = vmul.f32 %v2215, %v326
    %v2773 = vmul.f32 %v2215, %v327
    %v2774 = vmul.f32 %v2215, %v328
    %v2775 = vmul.f32 %v2215, %v329
    %v2776 = vmul.f32 %v2215, %v330
    %v2777 = vmul.f32 %v2215, %v331
    %v2778 = vmul.f32 %v2215, %v332
    %v2779 = vmul.f32 %v2215, %v333
    %v2780 = vmul.f32 %v2215, %v334
    %v2781 = vmul.f32 %v2215, %v335
    %v2782 = vmul.f32 %v2215, %v336
    %v2783 = vmul.f32 %v2215, %v337
    %v2784 = vmul.f32 %v2215, %v338
    %v2785 = vmul.f32 %v2215, %v339
    %v2786 = vmul.f32 %v2215, %v340
    %v2787 = vmul.f32 %v2215, %v341
    %v2788 = vadd.f32 %v2736, %v2762
    %v2789 = vadd.f32 %v2737, %v2763
    %v2790 = vadd.f32 %v2738, %v2764
    %v2791 = vadd.f32 %v2739, %v2765
    %v2792 = vadd.f32 %v2740, %v2766
    %v2793 = vadd.f32 %v2741, %v2767
    %v2794 = vadd.f32 %v2742, %v2768
    %v2795 = vadd.f32 %v2743, %v2769
    %v2796 = vadd.f32 %v2744, %v2770
    %v2797 = vadd.f32 %v2745, %v2771
    %v2798 = vadd.f32 %v2746, %v2772
    %v2799 = vadd.f32 %v2747, %v2773
    %v2800 = vadd.f32 %v2748, %v2774
    %v2801 = vadd.f32 %v2749, %v2775
    %v2802 = vadd.f32 %v2750, %v2776
    %v2803 = vadd.f32 %v2751, %v2777
    %v2804 = vadd.f32 %v2752, %v2778
    %v2805 = vadd.f32 %v2753, %v2779
    %v2806 = vadd.f32 %v2754, %v2780
    %v2807 = vadd.f32 %v2755, %v2781
    %v2808 = vadd.f32 %v2756, %v2782
    %v2809 = vadd.f32 %v2757, %v2783
    %v2810 = vadd.f32 %v2758, %v2784
    %v2811 = vadd.f32 %v2759, %v2785
    %v2812 = vadd.f32 %v2760, %v2786
    %v2813 = vadd.f32 %v2761, %v2787
    %v2814 = vmax.f32 %v2242, %v2424
    %v2815 = vmax.f32 %v2243, %v2425
    %v2816 = vmax.f32 %v2244, %v2426
    %v2817 = vmax.f32 %v2245, %v2427
    %v2818 = vmax.f32 %v2246, %v2428
    %v2819 = vmax.f32 %v2247, %v2429
    %v2820 = vmax.f32 %v2248, %v2430
    %v2821 = vmax.f32 %v2249, %v2431
    %v2822 = vmax.f32 %v2250, %v2432
    %v2823 = vmax.f32 %v2251, %v2433
    %v2824 = vmax.f32 %v2252, %v2434
    %v2825 = vmax.f32 %v2253, %v2435
    %v2826 = vmax.f32 %v2254, %v2436
    %v2827 = vmax.f32 %v2255, %v2437
    %v2828 = vmax.f32 %v2256, %v2438
    %v2829 = vmax.f32 %v2257, %v2439
    %v2830 = vmax.f32 %v2258, %v2440
    %v2831 = vmax.f32 %v2259, %v2441
    %v2832 = vmax.f32 %v2260, %v2442
    %v2833 = vmax.f32 %v2261, %v2443
    %v2834 = vmax.f32 %v2262, %v2444
    %v2835 = vmax.f32 %v2263, %v2445
    %v2836 = vmax.f32 %v2264, %v2446
    %v2837 = vmax.f32 %v2265, %v2447
    %v2838 = vmax.f32 %v2266, %v2448
    %v2839 = vmax.f32 %v2267, %v2449
    %v2840 = vmax.f32 %v2606, %v2788
    %v2841 = vmax.f32 %v2607, %v2789
    %v2842 = vmax.f32 %v2608, %v2790
    %v2843 = vmax.f32 %v2609, %v2791
    %v2844 = vmax.f32 %v2610, %v2792
    %v2845 = vmax.f32 %v2611, %v2793
    %v2846 = vmax.f32 %v2612, %v2794
    %v2847 = vmax.f32 %v2613, %v2795
    %v2848 = vmax.f32 %v2614, %v2796
    %v2849 = vmax.f32 %v2615, %v2797
    %v2850 = vmax.f32 %v2616, %v2798
    %v2851 = vmax.f32 %v2617, %v2799
    %v2852 = vmax.f32 %v2618, %v2800
    %v2853 = vmax.f32 %v2619, %v2801
    %v2854 = vmax.f32 %v2620, %v2802
    %v2855 = vmax.f32 %v2621, %v2803
    %v2856 = vmax.f32 %v2622, %v2804
    %v2857 = vmax.f32 %v2623, %v2805
    %v2858 = vmax.f32 %v2624, %v2806
    %v2859 = vmax.f32 %v2625, %v2807
    %v2860 = vmax.f32 %v2626, %v2808
    %v2861 = vmax.f32 %v2627, %v2809
    %v2862 = vmax.f32 %v2628, %v2810
    %v2863 = vmax.f32 %v2629, %v2811
    %v2864 = vmax.f32 %v2630, %v2812
    %v2865 = vmax.f32 %v2631, %v2813
    %s2866 = sld [smem:[#allocation4 + $0x2]]
    %v2867 = vmax.f32 %v2814, %v2815
    %v2868 = vmax.f32 %v2816, %v2817
    %v2869 = vmax.f32 %v2818, %v2819
    %v2870 = vmax.f32 %v2820, %v2821
    %v2871 = vmax.f32 %v2822, %v2823
    %v2872 = vmax.f32 %v2824, %v2825
    %v2873 = vmax.f32 %v2826, %v2827
    %v2874 = vmax.f32 %v2828, %v2829
    %v2875 = vmax.f32 %v2830, %v2831
    %v2876 = vmax.f32 %v2832, %v2833
    %v2877 = vmax.f32 %v2834, %v2835
    %v2878 = vmax.f32 %v2836, %v2837
    %v2879 = vmax.f32 %v2838, %v2839
    %v2880 = vstv %s2866
    %v2881 = vadd.f32 %v2867, %v2880
    %v2882 = vadd.f32 %v2868, %v2880
    %v2883 = vadd.f32 %v2869, %v2880
    %v2884 = vadd.f32 %v2870, %v2880
    %v2885 = vadd.f32 %v2871, %v2880
    %v2886 = vadd.f32 %v2872, %v2880
    %v2887 = vadd.f32 %v2873, %v2880
    %v2888 = vadd.f32 %v2874, %v2880
    %v2889 = vadd.f32 %v2875, %v2880
    %v2890 = vadd.f32 %v2876, %v2880
    %v2891 = vadd.f32 %v2877, %v2880
    %v2892 = vadd.f32 %v2878, %v2880
    %v2893 = vadd.f32 %v2879, %v2880
    %v2894 = vmax.f32 %v2881, 0.0
    %v2895 = vmax.f32 %v2882, 0.0
    %v2896 = vmax.f32 %v2883, 0.0
    %v2897 = vmax.f32 %v2884, 0.0
    %v2898 = vmax.f32 %v2885, 0.0
    %v2899 = vmax.f32 %v2886, 0.0
    %v2900 = vmax.f32 %v2887, 0.0
    %v2901 = vmax.f32 %v2888, 0.0
    %v2902 = vmax.f32 %v2889, 0.0
    %v2903 = vmax.f32 %v2890, 0.0
    %v2904 = vmax.f32 %v2891, 0.0
    %v2905 = vmax.f32 %v2892, 0.0
    %v2906 = vmax.f32 %v2893, 0.0
    %v2907 = vmax.f32 %v2840, %v2841
    %v2908 = vmax.f32 %v2842, %v2843
    %v2909 = vmax.f32 %v2844, %v2845
    %v2910 = vmax.f32 %v2846, %v2847
    %v2911 = vmax.f32 %v2848, %v2849
    %v2912 = vmax.f32 %v2850, %v2851
    %v2913 = vmax.f32 %v2852, %v2853
    %v2914 = vmax.f32 %v2854, %v2855
    %v2915 = vmax.f32 %v2856, %v2857
    %v2916 = vmax.f32 %v2858, %v2859
    %v2917 = vmax.f32 %v2860, %v2861
    %v2918 = vmax.f32 %v2862, %v2863
    %v2919 = vmax.f32 %v2864, %v2865
    %v2920 = vadd.f32 %v2907, %v2880
    %v2921 = vadd.f32 %v2908, %v2880
    %v2922 = vadd.f32 %v2909, %v2880
    %v2923 = vadd.f32 %v2910, %v2880
    %v2924 = vadd.f32 %v2911, %v2880
    %v2925 = vadd.f32 %v2912, %v2880
    %v2926 = vadd.f32 %v2913, %v2880
    %v2927 = vadd.f32 %v2914, %v2880
    %v2928 = vadd.f32 %v2915, %v2880
    %v2929 = vadd.f32 %v2916, %v2880
    %v2930 = vadd.f32 %v2917, %v2880
    %v2931 = vadd.f32 %v2918, %v2880
    %v2932 = vadd.f32 %v2919, %v2880
    %v2933 = vmax.f32 %v2920, 0.0
    %v2934 = vmax.f32 %v2921, 0.0
    %v2935 = vmax.f32 %v2922, 0.0
    %v2936 = vmax.f32 %v2923, 0.0
    %v2937 = vmax.f32 %v2924, 0.0
    %v2938 = vmax.f32 %v2925, 0.0
    %v2939 = vmax.f32 %v2926, 0.0
    %v2940 = vmax.f32 %v2927, 0.0
    %v2941 = vmax.f32 %v2928, 0.0
    %v2942 = vmax.f32 %v2929, 0.0
    %v2943 = vmax.f32 %v2930, 0.0
    %v2944 = vmax.f32 %v2931, 0.0
    %v2945 = vmax.f32 %v2932, 0.0
    %s2946 = sld [smem:[#allocation6]]
    %s2947 = sld [smem:[#allocation6 + $0x1]]
    %s2948 = sld [smem:[#allocation6 + $0x2]]
    %s2949 = sld [smem:[#allocation6 + $0x3]]
    %v2950 = vstv %s2946
    %v2951 = vmul.f32 %v2950, %v1158
    %v2952 = vmul.f32 %v2950, %v1159
    %v2953 = vmul.f32 %v2950, %v1160
    %v2954 = vmul.f32 %v2950, %v1161
    %v2955 = vmul.f32 %v2950, %v1162
    %v2956 = vmul.f32 %v2950, %v1163
    %v2957 = vmul.f32 %v2950, %v1164
    %v2958 = vmul.f32 %v2950, %v1165
    %v2959 = vmul.f32 %v2950, %v1166
    %v2960 = vmul.f32 %v2950, %v1167
    %v2961 = vmul.f32 %v2950, %v1168
    %v2962 = vmul.f32 %v2950, %v1169
    %v2963 = vstv %s2947
    %v2964 = vmul.f32 %v2963, %v1197
    %v2965 = vmul.f32 %v2963, %v1198
    %v2966 = vmul.f32 %v2963, %v1199
    %v2967 = vmul.f32 %v2963, %v1200
    %v2968 = vmul.f32 %v2963, %v1201
    %v2969 = vmul.f32 %v2963, %v1202
    %v2970 = vmul.f32 %v2963, %v1203
    %v2971 = vmul.f32 %v2963, %v1204
    %v2972 = vmul.f32 %v2963, %v1205
    %v2973 = vmul.f32 %v2963, %v1206
    %v2974 = vmul.f32 %v2963, %v1207
    %v2975 = vmul.f32 %v2963, %v1208
    %v2976 = vadd.f32 %v2951, %v2964
    %v2977 = vadd.f32 %v2952, %v2965
    %v2978 = vadd.f32 %v2953, %v2966
    %v2979 = vadd.f32 %v2954, %v2967
    %v2980 = vadd.f32 %v2955, %v2968
    %v2981 = vadd.f32 %v2956, %v2969
    %v2982 = vadd.f32 %v2957, %v2970
    %v2983 = vadd.f32 %v2958, %v2971
    %v2984 = vadd.f32 %v2959, %v2972
    %v2985 = vadd.f32 %v2960, %v2973
    %v2986 = vadd.f32 %v2961, %v2974
    %v2987 = vadd.f32 %v2962, %v2975
    %v2988 = vstv %s2948
    %v2989 = vmul.f32 %v2988, %v1159
    %v2990 = vmul.f32 %v2988, %v1160
    %v2991 = vmul.f32 %v2988, %v1161
    %v2992 = vmul.f32 %v2988, %v1162
    %v2993 = vmul.f32 %v2988, %v1163
    %v2994 = vmul.f32 %v2988, %v1164
    %v2995 = vmul.f32 %v2988, %v1165
    %v2996 = vmul.f32 %v2988, %v1166
    %v2997 = vmul.f32 %v2988, %v1167
    %v2998 = vmul.f32 %v2988, %v1168
    %v2999 = vmul.f32 %v2988, %v1169
    %v3000 = vmul.f32 %v2988, %v1170
    %v3001 = vadd.f32 %v2976, %v2989
    %v3002 = vadd.f32 %v2977, %v2990
    %v3003 = vadd.f32 %v2978, %v2991
    %v3004 = vadd.f32 %v2979, %v2992
    %v3005 = vadd.f32 %v2980, %v2993
    %v3006 = vadd.f32 %v2981, %v2994
    %v3007 = vadd.f32 %v2982, %v2995
    %v3008 = vadd.f32 %v2983, %v2996
    %v3009 = vadd.f32 %v2984, %v2997
    %v3010 = vadd.f32 %v2985, %v2998
    %v3011 = vadd.f32 %v2986, %v2999
    %v3012 = vadd.f32 %v2987, %v3000
    %v3013 = vstv %s2949
    %v3014 = vmul.f32 %v3013, %v1198
    %v3015 = vmul.f32 %v3013, %v1199
    %v3016 = vmul.f32 %v3013, %v1200
    %v3017 = vmul.f32 %v3013, %v1201
    %v3018 = vmul.f32 %v3013, %v1202
    %v3019 = vmul.f32 %v3013, %v1203
    %v3020 = vmul.f32 %v3013, %v1204
    %v3021 = vmul.f32 %v3013, %v1205
    %v3022 = vmul.f32 %v3013, %v1206
    %v3023 = vmul.f32 %v3013, %v1207
    %v3024 = vmul.f32 %v3013, %v1208
    %v3025 = vmul.f32 %v3013, %v1209
    %v3026 = vadd.f32 %v3001, %v3014
    %v3027 = vadd.f32 %v3002, %v3015
    %v3028 = vadd.f32 %v3003, %v3016
    %v3029 = vadd.f32 %v3004, %v3017
    %v3030 = vadd.f32 %v3005, %v3018
    %v3031 = vadd.f32 %v3006, %v3019
    %v3032 = vadd.f32 %v3007, %v3020
    %v3033 = vadd.f32 %v3008, %v3021
    %v3034 = vadd.f32 %v3009, %v3022
    %v3035 = vadd.f32 %v3010, %v3023
    %v3036 = vadd.f32 %v3011, %v3024
    %v3037 = vadd.f32 %v3012, %v3025
    %v3038 = vmul.f32 %v2950, %v1197
    %v3039 = vmul.f32 %v2950, %v1198
    %v3040 = vmul.f32 %v2950, %v1199
    %v3041 = vmul.f32 %v2950, %v1200
    %v3042 = vmul.f32 %v2950, %v1201
    %v3043 = vmul.f32 %v2950, %v1202
    %v3044 = vmul.f32 %v2950, %v1203
    %v3045 = vmul.f32 %v2950, %v1204
    %v3046 = vmul.f32 %v2950, %v1205
    %v3047 = vmul.f32 %v2950, %v1206
    %v3048 = vmul.f32 %v2950, %v1207
    %v3049 = vmul.f32 %v2950, %v1208
    %v3050 = vmul.f32 %v2963, %v1158
    %v3051 = vmul.f32 %v2963, %v1159
    %v3052 = vmul.f32 %v2963, %v1160
    %v3053 = vmul.f32 %v2963, %v1161
    %v3054 = vmul.f32 %v2963, %v1162
    %v3055 = vmul.f32 %v2963, %v1163
    %v3056 = vmul.f32 %v2963, %v1164
    %v3057 = vmul.f32 %v2963, %v1165
    %v3058 = vmul.f32 %v2963, %v1166
    %v3059 = vmul.f32 %v2963, %v1167
    %v3060 = vmul.f32 %v2963, %v1168
    %v3061 = vmul.f32 %v2963, %v1169
    %v3074 = vrot.slane %v3050, 1
    %v3075 = vrot.slane %v3051, 1
    %v3076 = vrot.slane %v3052, 1
    %v3077 = vrot.slane %v3053, 1
    %v3078 = vrot.slane %v3054, 1
    %v3079 = vrot.slane %v3055, 1
    %v3080 = vrot.slane %v3056, 1
    %v3081 = vrot.slane %v3057, 1
    %v3082 = vrot.slane %v3058, 1
    %v3083 = vrot.slane %v3059, 1
    %v3084 = vrot.slane %v3060, 1
    %v3085 = vrot.slane %v3061, 1
    %v3098 = vadd.f32 %v3038, %v3074
    %v3099 = vadd.f32 %v3039, %v3075
    %v3100 = vadd.f32 %v3040, %v3076
    %v3101 = vadd.f32 %v3041, %v3077
    %v3102 = vadd.f32 %v3042, %v3078
    %v3103 = vadd.f32 %v3043, %v3079
    %v3104 = vadd.f32 %v3044, %v3080
    %v3105 = vadd.f32 %v3045, %v3081
    %v3106 = vadd.f32 %v3046, %v3082
    %v3107 = vadd.f32 %v3047, %v3083
    %v3108 = vadd.f32 %v3048, %v3084
    %v3109 = vadd.f32 %v3049, %v3085
    %v3110 = vmul.f32 %v2988, %v1198
    %v3111 = vmul.f32 %v2988, %v1199
    %v3112 = vmul.f32 %v2988, %v1200
    %v3113 = vmul.f32 %v2988, %v1201
    %v3114 = vmul.f32 %v2988, %v1202
    %v3115 = vmul.f32 %v2988, %v1203
    %v3116 = vmul.f32 %v2988, %v1204
    %v3117 = vmul.f32 %v2988, %v1205
    %v3118 = vmul.f32 %v2988, %v1206
    %v3119 = vmul.f32 %v2988, %v1207
    %v3120 = vmul.f32 %v2988, %v1208
    %v3121 = vmul.f32 %v2988, %v1209
    %v3122 = vadd.f32 %v3098, %v3110
    %v3123 = vadd.f32 %v3099, %v3111
    %v3124 = vadd.f32 %v3100, %v3112
    %v3125 = vadd.f32 %v3101, %v3113
    %v3126 = vadd.f32 %v3102, %v3114
    %v3127 = vadd.f32 %v3103, %v3115
    %v3128 = vadd.f32 %v3104, %v3116
    %v3129 = vadd.f32 %v3105, %v3117
    %v3130 = vadd.f32 %v3106, %v3118
    %v3131 = vadd.f32 %v3107, %v3119
    %v3132 = vadd.f32 %v3108, %v3120
    %v3133 = vadd.f32 %v3109, %v3121
    %v3134 = vmul.f32 %v3013, %v1159
    %v3135 = vmul.f32 %v3013, %v1160
    %v3136 = vmul.f32 %v3013, %v1161
    %v3137 = vmul.f32 %v3013, %v1162
    %v3138 = vmul.f32 %v3013, %v1163
    %v3139 = vmul.f32 %v3013, %v1164
    %v3140 = vmul.f32 %v3013, %v1165
    %v3141 = vmul.f32 %v3013, %v1166
    %v3142 = vmul.f32 %v3013, %v1167
    %v3143 = vmul.f32 %v3013, %v1168
    %v3144 = vmul.f32 %v3013, %v1169
    %v3145 = vmul.f32 %v3013, %v1170
    %v3158 = vrot.slane %v3134, 1
    %v3159 = vrot.slane %v3135, 1
    %v3160 = vrot.slane %v3136, 1
    %v3161 = vrot.slane %v3137, 1
    %v3162 = vrot.slane %v3138, 1
    %v3163 = vrot.slane %v3139, 1
    %v3164 = vrot.slane %v3140, 1
    %v3165 = vrot.slane %v3141, 1
    %v3166 = vrot.slane %v3142, 1
    %v3167 = vrot.slane %v3143, 1
    %v3168 = vrot.slane %v3144, 1
    %v3169 = vrot.slane %v3145, 1
    %v3182 = vadd.f32 %v3122, %v3158
    %v3183 = vadd.f32 %v3123, %v3159
    %v3184 = vadd.f32 %v3124, %v3160
    %v3185 = vadd.f32 %v3125, %v3161
    %v3186 = vadd.f32 %v3126, %v3162
    %v3187 = vadd.f32 %v3127, %v3163
    %v3188 = vadd.f32 %v3128, %v3164
    %v3189 = vadd.f32 %v3129, %v3165
    %v3190 = vadd.f32 %v3130, %v3166
    %v3191 = vadd.f32 %v3131, %v3167
    %v3192 = vadd.f32 %v3132, %v3168
    %v3193 = vadd.f32 %v3133, %v3169
    %s3194 = sld [smem:[#allocation6 + $0x4]]
    %s3195 = sld [smem:[#allocation6 + $0x5]]
    %s3196 = sld [smem:[#allocation6 + $0x6]]
    %s3197 = sld [smem:[#allocation6 + $0x7]]
    %v3198 = vstv %s3194
    %v3199 = vmul.f32 %v3198, %v2026
    %v3200 = vmul.f32 %v3198, %v2027
    %v3201 = vmul.f32 %v3198, %v2028
    %v3202 = vmul.f32 %v3198, %v2029
    %v3203 = vmul.f32 %v3198, %v2030
    %v3204 = vmul.f32 %v3198, %v2031
    %v3205 = vmul.f32 %v3198, %v2032
    %v3206 = vmul.f32 %v3198, %v2033
    %v3207 = vmul.f32 %v3198, %v2034
    %v3208 = vmul.f32 %v3198, %v2035
    %v3209 = vmul.f32 %v3198, %v2036
    %v3210 = vmul.f32 %v3198, %v2037
    %v3211 = vstv %s3195
    %v3212 = vmul.f32 %v3211, %v2065
    %v3213 = vmul.f32 %v3211, %v2066
    %v3214 = vmul.f32 %v3211, %v2067
    %v3215 = vmul.f32 %v3211, %v2068
    %v3216 = vmul.f32 %v3211, %v2069
    %v3217 = vmul.f32 %v3211, %v2070
    %v3218 = vmul.f32 %v3211, %v2071
    %v3219 = vmul.f32 %v3211, %v2072
    %v3220 = vmul.f32 %v3211, %v2073
    %v3221 = vmul.f32 %v3211, %v2074
    %v3222 = vmul.f32 %v3211, %v2075
    %v3223 = vmul.f32 %v3211, %v2076
    %v3224 = vadd.f32 %v3199, %v3212
    %v3225 = vadd.f32 %v3200, %v3213
    %v3226 = vadd.f32 %v3201, %v3214
    %v3227 = vadd.f32 %v3202, %v3215
    %v3228 = vadd.f32 %v3203, %v3216
    %v3229 = vadd.f32 %v3204, %v3217
    %v3230 = vadd.f32 %v3205, %v3218
    %v3231 = vadd.f32 %v3206, %v3219
    %v3232 = vadd.f32 %v3207, %v3220
    %v3233 = vadd.f32 %v3208, %v3221
    %v3234 = vadd.f32 %v3209, %v3222
    %v3235 = vadd.f32 %v3210, %v3223
    %v3236 = vstv %s3196
    %v3237 = vmul.f32 %v3236, %v2027
    %v3238 = vmul.f32 %v3236, %v2028
    %v3239 = vmul.f32 %v3236, %v2029
    %v3240 = vmul.f32 %v3236, %v2030
    %v3241 = vmul.f32 %v3236, %v2031
    %v3242 = vmul.f32 %v3236, %v2032
    %v3243 = vmul.f32 %v3236, %v2033
    %v3244 = vmul.f32 %v3236, %v2034
    %v3245 = vmul.f32 %v3236, %v2035
    %v3246 = vmul.f32 %v3236, %v2036
    %v3247 = vmul.f32 %v3236, %v2037
    %v3248 = vmul.f32 %v3236, %v2038
    %v3249 = vadd.f32 %v3224, %v3237
    %v3250 = vadd.f32 %v3225, %v3238
    %v3251 = vadd.f32 %v3226, %v3239
    %v3252 = vadd.f32 %v3227, %v3240
    %v3253 = vadd.f32 %v3228, %v3241
    %v3254 = vadd.f32 %v3229, %v3242
    %v3255 = vadd.f32 %v3230, %v3243
    %v3256 = vadd.f32 %v3231, %v3244
    %v3257 = vadd.f32 %v3232, %v3245
    %v3258 = vadd.f32 %v3233, %v3246
    %v3259 = vadd.f32 %v3234, %v3247
    %v3260 = vadd.f32 %v3235, %v3248
    %v3261 = vstv %s3197
    %v3262 = vmul.f32 %v3261, %v2066
    %v3263 = vmul.f32 %v3261, %v2067
    %v3264 = vmul.f32 %v3261, %v2068
    %v3265 = vmul.f32 %v3261, %v2069
    %v3266 = vmul.f32 %v3261, %v2070
    %v3267 = vmul.f32 %v3261, %v2071
    %v3268 = vmul.f32 %v3261, %v2072
    %v3269 = vmul.f32 %v3261, %v2073
    %v3270 = vmul.f32 %v3261, %v2074
    %v3271 = vmul.f32 %v3261, %v2075
    %v3272 = vmul.f32 %v3261, %v2076
    %v3273 = vmul.f32 %v3261, %v2077
    %v3274 = vadd.f32 %v3249, %v3262
    %v3275 = vadd.f32 %v3250, %v3263
    %v3276 = vadd.f32 %v3251, %v3264
    %v3277 = vadd.f32 %v3252, %v3265
    %v3278 = vadd.f32 %v3253, %v3266
    %v3279 = vadd.f32 %v3254, %v3267
    %v3280 = vadd.f32 %v3255, %v3268
    %v3281 = vadd.f32 %v3256, %v3269
    %v3282 = vadd.f32 %v3257, %v3270
    %v3283 = vadd.f32 %v3258, %v3271
    %v3284 = vadd.f32 %v3259, %v3272
    %v3285 = vadd.f32 %v3260, %v3273
    %v3286 = vmul.f32 %v3198, %v2065
    %v3287 = vmul.f32 %v3198, %v2066
    %v3288 = vmul.f32 %v3198, %v2067
    %v3289 = vmul.f32 %v3198, %v2068
    %v3290 = vmul.f32 %v3198, %v2069
    %v3291 = vmul.f32 %v3198, %v2070
    %v3292 = vmul.f32 %v3198, %v2071
    %v3293 = vmul.f32 %v3198, %v2072
    %v3294 = vmul.f32 %v3198, %v2073
    %v3295 = vmul.f32 %v3198, %v2074
    %v3296 = vmul.f32 %v3198, %v2075
    %v3297 = vmul.f32 %v3198, %v2076
    %v3298 = vmul.f32 %v3211, %v2026
    %v3299 = vmul.f32 %v3211, %v2027
    %v3300 = vmul.f32 %v3211, %v2028
    %v3301 = vmul.f32 %v3211, %v2029
    %v3302 = vmul.f32 %v3211, %v2030
    %v3303 = vmul.f32 %v3211, %v2031
    %v3304 = vmul.f32 %v3211, %v2032
    %v3305 = vmul.f32 %v3211, %v2033
    %v3306 = vmul.f32 %v3211, %v2034
    %v3307 = vmul.f32 %v3211, %v2035
    %v3308 = vmul.f32 %v3211, %v2036
    %v3309 = vmul.f32 %v3211, %v2037
    %v3322 = vrot.slane %v3298, 1
    %v3323 = vrot.slane %v3299, 1
    %v3324 = vrot.slane %v3300, 1
    %v3325 = vrot.slane %v3301, 1
    %v3326 = vrot.slane %v3302, 1
    %v3327 = vrot.slane %v3303, 1
    %v3328 = vrot.slane %v3304, 1
    %v3329 = vrot.slane %v3305, 1
    %v3330 = vrot.slane %v3306, 1
    %v3331 = vrot.slane %v3307, 1
    %v3332 = vrot.slane %v3308, 1
    %v3333 = vrot.slane %v3309, 1
    %v3346 = vadd.f32 %v3286, %v3322
    %v3347 = vadd.f32 %v3287, %v3323
    %v3348 = vadd.f32 %v3288, %v3324
    %v3349 = vadd.f32 %v3289, %v3325
    %v3350 = vadd.f32 %v3290, %v3326
    %v3351 = vadd.f32 %v3291, %v3327
    %v3352 = vadd.f32 %v3292, %v3328
    %v3353 = vadd.f32 %v3293, %v3329
    %v3354 = vadd.f32 %v3294, %v3330
    %v3355 = vadd.f32 %v3295, %v3331
    %v3356 = vadd.f32 %v3296, %v3332
    %v3357 = vadd.f32 %v3297, %v3333
    %v3358 = vmul.f32 %v3236, %v2066
    %v3359 = vmul.f32 %v3236, %v2067
    %v3360 = vmul.f32 %v3236, %v2068
    %v3361 = vmul.f32 %v3236, %v2069
    %v3362 = vmul.f32 %v3236, %v2070
    %v3363 = vmul.f32 %v3236, %v2071
    %v3364 = vmul.f32 %v3236, %v2072
    %v3365 = vmul.f32 %v3236, %v2073
    %v3366 = vmul.f32 %v3236, %v2074
    %v3367 = vmul.f32 %v3236, %v2075
    %v3368 = vmul.f32 %v3236, %v2076
    %v3369 = vmul.f32 %v3236, %v2077
    %v3370 = vadd.f32 %v3346, %v3358
    %v3371 = vadd.f32 %v3347, %v3359
    %v3372 = vadd.f32 %v3348, %v3360
    %v3373 = vadd.f32 %v3349, %v3361
    %v3374 = vadd.f32 %v3350, %v3362
    %v3375 = vadd.f32 %v3351, %v3363
    %v3376 = vadd.f32 %v3352, %v3364
    %v3377 = vadd.f32 %v3353, %v3365
    %v3378 = vadd.f32 %v3354, %v3366
    %v3379 = vadd.f32 %v3355, %v3367
    %v3380 = vadd.f32 %v3356, %v3368
    %v3381 = vadd.f32 %v3357, %v3369
    %v3382 = vmul.f32 %v3261, %v2027
    %v3383 = vmul.f32 %v3261, %v2028
    %v3384 = vmul.f32 %v3261, %v2029
    %v3385 = vmul.f32 %v3261, %v2030
    %v3386 = vmul.f32 %v3261, %v2031
    %v3387 = vmul.f32 %v3261, %v2032
    %v3388 = vmul.f32 %v3261, %v2033
    %v3389 = vmul.f32 %v3261, %v2034
    %v3390 = vmul.f32 %v3261, %v2035
    %v3391 = vmul.f32 %v3261, %v2036
    %v3392 = vmul.f32 %v3261, %v2037
    %v3393 = vmul.f32 %v3261, %v2038
    %v3406 = vrot.slane %v3382, 1
    %v3407 = vrot.slane %v3383, 1
    %v3408 = vrot.slane %v3384, 1
    %v3409 = vrot.slane %v3385, 1
    %v3410 = vrot.slane %v3386, 1
    %v3411 = vrot.slane %v3387, 1
    %v3412 = vrot.slane %v3388, 1
    %v3413 = vrot.slane %v3389, 1
    %v3414 = vrot.slane %v3390, 1
    %v3415 = vrot.slane %v3391, 1
    %v3416 = vrot.slane %v3392, 1
    %v3417 = vrot.slane %v3393, 1
    %v3430 = vadd.f32 %v3370, %v3406
    %v3431 = vadd.f32 %v3371, %v3407
    %v3432 = vadd.f32 %v3372, %v3408
    %v3433 = vadd.f32 %v3373, %v3409
    %v3434 = vadd.f32 %v3374, %v3410
    %v3435 = vadd.f32 %v3375, %v3411
    %v3436 = vadd.f32 %v3376, %v3412
    %v3437 = vadd.f32 %v3377, %v3413
    %v3438 = vadd.f32 %v3378, %v3414
    %v3439 = vadd.f32 %v3379, %v3415
    %v3440 = vadd.f32 %v3380, %v3416
    %v3441 = vadd.f32 %v3381, %v3417
    %v3442 = vadd.f32 %v3026, %v3274
    %v3443 = vadd.f32 %v3027, %v3275
    %v3444 = vadd.f32 %v3028, %v3276
    %v3445 = vadd.f32 %v3029, %v3277
    %v3446 = vadd.f32 %v3030, %v3278
    %v3447 = vadd.f32 %v3031, %v3279
    %v3448 = vadd.f32 %v3032, %v3280
    %v3449 = vadd.f32 %v3033, %v3281
    %v3450 = vadd.f32 %v3034, %v3282
    %v3451 = vadd.f32 %v3035, %v3283
    %v3452 = vadd.f32 %v3036, %v3284
    %v3453 = vadd.f32 %v3037, %v3285
    %v3454 = vadd.f32 %v3182, %v3430
    %v3455 = vadd.f32 %v3183, %v3431
    %v3456 = vadd.f32 %v3184, %v3432
    %v3457 = vadd.f32 %v3185, %v3433
    %v3458 = vadd.f32 %v3186, %v3434
    %v3459 = vadd.f32 %v3187, %v3435
    %v3460 = vadd.f32 %v3188, %v3436
    %v3461 = vadd.f32 %v3189, %v3437
    %v3462 = vadd.f32 %v3190, %v3438
    %v3463 = vadd.f32 %v3191, %v3439
    %v3464 = vadd.f32 %v3192, %v3440
    %v3465 = vadd.f32 %v3193, %v3441
    %s3466 = sld [smem:[#allocation6 + $0x8]]
    %s3467 = sld [smem:[#allocation6 + $0x9]]
    %s3468 = sld [smem:[#allocation6 + $0xa]]
    %s3469 = sld [smem:[#allocation6 + $0xb]]
    %v3470 = vstv %s3466
    %v3471 = vmul.f32 %v3470, %v2894
    %v3472 = vmul.f32 %v3470, %v2895
    %v3473 = vmul.f32 %v3470, %v2896
    %v3474 = vmul.f32 %v3470, %v2897
    %v3475 = vmul.f32 %v3470, %v2898
    %v3476 = vmul.f32 %v3470, %v2899
    %v3477 = vmul.f32 %v3470, %v2900
    %v3478 = vmul.f32 %v3470, %v2901
    %v3479 = vmul.f32 %v3470, %v2902
    %v3480 = vmul.f32 %v3470, %v2903
    %v3481 = vmul.f32 %v3470, %v2904
    %v3482 = vmul.f32 %v3470, %v2905
    %v3483 = vstv %s3467
    %v3484 = vmul.f32 %v3483, %v2933
    %v3485 = vmul.f32 %v3483, %v2934
    %v3486 = vmul.f32 %v3483, %v2935
    %v3487 = vmul.f32 %v3483, %v2936
    %v3488 = vmul.f32 %v3483, %v2937
    %v3489 = vmul.f32 %v3483, %v2938
    %v3490 = vmul.f32 %v3483, %v2939
    %v3491 = vmul.f32 %v3483, %v2940
    %v3492 = vmul.f32 %v3483, %v2941
    %v3493 = vmul.f32 %v3483, %v2942
    %v3494 = vmul.f32 %v3483, %v2943
    %v3495 = vmul.f32 %v3483, %v2944
    %v3496 = vadd.f32 %v3471, %v3484
    %v3497 = vadd.f32 %v3472, %v3485
    %v3498 = vadd.f32 %v3473, %v3486
    %v3499 = vadd.f32 %v3474, %v3487
    %v3500 = vadd.f32 %v3475, %v3488
    %v3501 = vadd.f32 %v3476, %v3489
    %v3502 = vadd.f32 %v3477, %v3490
    %v3503 = vadd.f32 %v3478, %v3491
    %v3504 = vadd.f32 %v3479, %v3492
    %v3505 = vadd.f32 %v3480, %v3493
    %v3506 = vadd.f32 %v3481, %v3494
    %v3507 = vadd.f32 %v3482, %v3495
    %v3508 = vstv %s3468
    %v3509 = vmul.f32 %v3508, %v2895
    %v3510 = vmul.f32 %v3508, %v2896
    %v3511 = vmul.f32 %v3508, %v2897
    %v3512 = vmul.f32 %v3508, %v2898
    %v3513 = vmul.f32 %v3508, %v2899
    %v3514 = vmul.f32 %v3508, %v2900
    %v3515 = vmul.f32 %v3508, %v2901
    %v3516 = vmul.f32 %v3508, %v2902
    %v3517 = vmul.f32 %v3508, %v2903
    %v3518 = vmul.f32 %v3508, %v2904
    %v3519 = vmul.f32 %v3508, %v2905
    %v3520 = vmul.f32 %v3508, %v2906
    %v3521 = vadd.f32 %v3496, %v3509
    %v3522 = vadd.f32 %v3497, %v3510
    %v3523 = vadd.f32 %v3498, %v3511
    %v3524 = vadd.f32 %v3499, %v3512
    %v3525 = vadd.f32 %v3500, %v3513
    %v3526 = vadd.f32 %v3501, %v3514
    %v3527 = vadd.f32 %v3502, %v3515
    %v3528 = vadd.f32 %v3503, %v3516
    %v3529 = vadd.f32 %v3504, %v3517
    %v3530 = vadd.f32 %v3505, %v3518
    %v3531 = vadd.f32 %v3506, %v3519
    %v3532 = vadd.f32 %v3507, %v3520
    %v3533 = vstv %s3469
    %v3534 = vmul.f32 %v3533, %v2934
    %v3535 = vmul.f32 %v3533, %v2935
    %v3536 = vmul.f32 %v3533, %v2936
    %v3537 = vmul.f32 %v3533, %v2937
    %v3538 = vmul.f32 %v3533, %v2938
    %v3539 = vmul.f32 %v3533, %v2939
    %v3540 = vmul.f32 %v3533, %v2940
    %v3541 = vmul.f32 %v3533, %v2941
    %v3542 = vmul.f32 %v3533, %v2942
    %v3543 = vmul.f32 %v3533, %v2943
    %v3544 = vmul.f32 %v3533, %v2944
    %v3545 = vmul.f32 %v3533, %v2945
    %v3546 = vadd.f32 %v3521, %v3534
    %v3547 = vadd.f32 %v3522, %v3535
    %v3548 = vadd.f32 %v3523, %v3536
    %v3549 = vadd.f32 %v3524, %v3537
    %v3550 = vadd.f32 %v3525, %v3538
    %v3551 = vadd.f32 %v3526, %v3539
    %v3552 = vadd.f32 %v3527, %v3540
    %v3553 = vadd.f32 %v3528, %v3541
    %v3554 = vadd.f32 %v3529, %v3542
    %v3555 = vadd.f32 %v3530, %v3543
    %v3556 = vadd.f32 %v3531, %v3544
    %v3557 = vadd.f32 %v3532, %v3545
    %v3558 = vmul.f32 %v3470, %v2933
    %v3559 = vmul.f32 %v3470, %v2934
    %v3560 = vmul.f32 %v3470, %v2935
    %v3561 = vmul.f32 %v3470, %v2936
    %v3562 = vmul.f32 %v3470, %v2937
    %v3563 = vmul.f32 %v3470, %v2938
    %v3564 = vmul.f32 %v3470, %v2939
    %v3565 = vmul.f32 %v3470, %v2940
    %v3566 = vmul.f32 %v3470, %v2941
    %v3567 = vmul.f32 %v3470, %v2942
    %v3568 = vmul.f32 %v3470, %v2943
    %v3569 = vmul.f32 %v3470, %v2944
    %v3570 = vmul.f32 %v3483, %v2894
    %v3571 = vmul.f32 %v3483, %v2895
    %v3572 = vmul.f32 %v3483, %v2896
    %v3573 = vmul.f32 %v3483, %v2897
    %v3574 = vmul.f32 %v3483, %v2898
    %v3575 = vmul.f32 %v3483, %v2899
    %v3576 = vmul.f32 %v3483, %v2900
    %v3577 = vmul.f32 %v3483, %v2901
    %v3578 = vmul.f32 %v3483, %v2902
    %v3579 = vmul.f32 %v3483, %v2903
    %v3580 = vmul.f32 %v3483, %v2904
    %v3581 = vmul.f32 %v3483, %v2905
    %v3594 = vrot.slane %v3570, 1
    %v3595 = vrot.slane %v3571, 1
    %v3596 = vrot.slane %v3572, 1
    %v3597 = vrot.slane %v3573, 1
    %v3598 = vrot.slane %v3574, 1
    %v3599 = vrot.slane %v3575, 1
    %v3600 = vrot.slane %v3576, 1
    %v3601 = vrot.slane %v3577, 1
    %v3602 = vrot.slane %v3578, 1
    %v3603 = vrot.slane %v3579, 1
    %v3604 = vrot.slane %v3580, 1
    %v3605 = vrot.slane %v3581, 1
    %v3618 = vadd.f32 %v3558, %v3594
    %v3619 = vadd.f32 %v3559, %v3595
    %v3620 = vadd.f32 %v3560, %v3596
    %v3621 = vadd.f32 %v3561, %v3597
    %v3622 = vadd.f32 %v3562, %v3598
    %v3623 = vadd.f32 %v3563, %v3599
    %v3624 = vadd.f32 %v3564, %v3600
    %v3625 = vadd.f32 %v3565, %v3601
    %v3626 = vadd.f32 %v3566, %v3602
    %v3627 = vadd.f32 %v3567, %v3603
    %v3628 = vadd.f32 %v3568, %v3604
    %v3629 = vadd.f32 %v3569, %v3605
    %v3630 = vmul.f32 %v3508, %v2934
    %v3631 = vmul.f32 %v3508, %v2935
    %v3632 = vmul.f32 %v3508, %v2936
    %v3633 = vmul.f32 %v3508, %v2937
    %v3634 = vmul.f32 %v3508, %v2938
    %v3635 = vmul.f32 %v3508, %v2939
    %v3636 = vmul.f32 %v3508, %v2940
    %v3637 = vmul.f32 %v3508, %v2941
    %v3638 = vmul.f32 %v3508, %v2942
    %v3639 = vmul.f32 %v3508, %v2943
    %v3640 = vmul.f32 %v3508, %v2944
    %v3641 = vmul.f32 %v3508, %v2945
    %v3642 = vadd.f32 %v3618, %v3630
    %v3643 = vadd.f32 %v3619, %v3631
    %v3644 = vadd.f32 %v3620, %v3632
    %v3645 = vadd.f32 %v3621, %v3633
    %v3646 = vadd.f32 %v3622, %v3634
    %v3647 = vadd.f32 %v3623, %v3635
    %v3648 = vadd.f32 %v3624, %v3636
    %v3649 = vadd.f32 %v3625, %v3637
    %v3650 = vadd.f32 %v3626, %v3638
    %v3651 = vadd.f32 %v3627, %v3639
    %v3652 = vadd.f32 %v3628, %v3640
    %v3653 = vadd.f32 %v3629, %v3641
    %v3654 = vmul.f32 %v3533, %v2895
    %v3655 = vmul.f32 %v3533, %v2896
    %v3656 = vmul.f32 %v3533, %v2897
    %v3657 = vmul.f32 %v3533, %v2898
    %v3658 = vmul.f32 %v3533, %v2899
    %v3659 = vmul.f32 %v3533, %v2900
    %v3660 = vmul.f32 %v3533, %v2901
    %v3661 = vmul.f32 %v3533, %v2902
    %v3662 = vmul.f32 %v3533, %v2903
    %v3663 = vmul.f32 %v3533, %v2904
    %v3664 = vmul.f32 %v3533, %v2905
    %v3665 = vmul.f32 %v3533, %v2906
    %v3678 = vrot.slane %v3654, 1
    %v3679 = vrot.slane %v3655, 1
    %v3680 = vrot.slane %v3656, 1
    %v3681 = vrot.slane %v3657, 1
    %v3682 = vrot.slane %v3658, 1
    %v3683 = vrot.slane %v3659, 1
    %v3684 = vrot.slane %v3660, 1
    %v3685 = vrot.slane %v3661, 1
    %v3686 = vrot.slane %v3662, 1
    %v3687 = vrot.slane %v3663, 1
    %v3688 = vrot.slane %v3664, 1
    %v3689 = vrot.slane %v3665, 1
    %v3702 = vadd.f32 %v3642, %v3678
    %v3703 = vadd.f32 %v3643, %v3679
    %v3704 = vadd.f32 %v3644, %v3680
    %v3705 = vadd.f32 %v3645, %v3681
    %v3706 = vadd.f32 %v3646, %v3682
    %v3707 = vadd.f32 %v3647, %v3683
    %v3708 = vadd.f32 %v3648, %v3684
    %v3709 = vadd.f32 %v3649, %v3685
    %v3710 = vadd.f32 %v3650, %v3686
    %v3711 = vadd.f32 %v3651, %v3687
    %v3712 = vadd.f32 %v3652, %v3688
    %v3713 = vadd.f32 %v3653, %v3689
    %v3714 = vadd.f32 %v3442, %v3546
    %v3715 = vadd.f32 %v3443, %v3547
    %v3716 = vadd.f32 %v3444, %v3548
    %v3717 = vadd.f32 %v3445, %v3549
    %v3718 = vadd.f32 %v3446, %v3550
    %v3719 = vadd.f32 %v3447, %v3551
    %v3720 = vadd.f32 %v3448, %v3552
    %v3721 = vadd.f32 %v3449, %v3553
    %v3722 = vadd.f32 %v3450, %v3554
    %v3723 = vadd.f32 %v3451, %v3555
    %v3724 = vadd.f32 %v3452, %v3556
    %v3725 = vadd.f32 %v3453, %v3557
    %v3726 = vadd.f32 %v3454, %v3702
    %v3727 = vadd.f32 %v3455, %v3703
    %v3728 = vadd.f32 %v3456, %v3704
    %v3729 = vadd.f32 %v3457, %v3705
    %v3730 = vadd.f32 %v3458, %v3706
    %v3731 = vadd.f32 %v3459, %v3707
    %v3732 = vadd.f32 %v3460, %v3708
    %v3733 = vadd.f32 %v3461, %v3709
    %v3734 = vadd.f32 %v3462, %v3710
    %v3735 = vadd.f32 %v3463, %v3711
    %v3736 = vadd.f32 %v3464, %v3712
    %v3737 = vadd.f32 %v3465, %v3713
    %v3738 = vmax.f32 %v3714, %v3726
    %v3739 = vmax.f32 %v3715, %v3727
    %v3740 = vmax.f32 %v3716, %v3728
    %v3741 = vmax.f32 %v3717, %v3729
    %v3742 = vmax.f32 %v3718, %v3730
    %v3743 = vmax.f32 %v3719, %v3731
    %v3744 = vmax.f32 %v3720, %v3732
    %v3745 = vmax.f32 %v3721, %v3733
    %v3746 = vmax.f32 %v3722, %v3734
    %v3747 = vmax.f32 %v3723, %v3735
    %v3748 = vmax.f32 %v3724, %v3736
    %v3749 = vmax.f32 %v3725, %v3737
    %v3750 = vmax.f32 %v3738, %v3739
    %v3751 = vmax.f32 %v3740, %v3741
    %v3752 = vmax.f32 %v3742, %v3743
    %v3753 = vmax.f32 %v3744, %v3745
    %v3754 = vmax.f32 %v3746, %v3747
    %v3755 = vmax.f32 %v3748, %v3749
    %s3756 = sld [smem:[#allocation7]]
    %v3757 = vstv %s3756
    %v3758 = vadd.f32 %v3750, %v3757
    %v3759 = vadd.f32 %v3751, %v3757
    %v3760 = vadd.f32 %v3752, %v3757
    %v3761 = vadd.f32 %v3753, %v3757
    %v3762 = vadd.f32 %v3754, %v3757
    %v3763 = vadd.f32 %v3755, %v3757
    %v3764 = vmax.f32 %v3758, 0.0
    %v3765 = vmax.f32 %v3759, 0.0
    %v3766 = vmax.f32 %v3760, 0.0
    %v3767 = vmax.f32 %v3761, 0.0
    %v3768 = vmax.f32 %v3762, 0.0
    %v3769 = vmax.f32 %v3763, 0.0
    %s3770 = sld [smem:[#allocation6 + $0x80]]
    %s3771 = sld [smem:[#allocation6 + $0x81]]
    %s3772 = sld [smem:[#allocation6 + $0x82]]
    %s3773 = sld [smem:[#allocation6 + $0x83]]
    %v3774 = vstv %s3770
    %v3775 = vmul.f32 %v3774, %v1158
    %v3776 = vmul.f32 %v3774, %v1159
    %v3777 = vmul.f32 %v3774, %v1160
    %v3778 = vmul.f32 %v3774, %v1161
    %v3779 = vmul.f32 %v3774, %v1162
    %v3780 = vmul.f32 %v3774, %v1163
    %v3781 = vmul.f32 %v3774, %v1164
    %v3782 = vmul.f32 %v3774, %v1165
    %v3783 = vmul.f32 %v3774, %v1166
    %v3784 = vmul.f32 %v3774, %v1167
    %v3785 = vmul.f32 %v3774, %v1168
    %v3786 = vmul.f32 %v3774, %v1169
    %v3787 = vstv %s3771
    %v3788 = vmul.f32 %v3787, %v1197
    %v3789 = vmul.f32 %v3787, %v1198
    %v3790 = vmul.f32 %v3787, %v1199
    %v3791 = vmul.f32 %v3787, %v1200
    %v3792 = vmul.f32 %v3787, %v1201
    %v3793 = vmul.f32 %v3787, %v1202
    %v3794 = vmul.f32 %v3787, %v1203
    %v3795 = vmul.f32 %v3787, %v1204
    %v3796 = vmul.f32 %v3787, %v1205
    %v3797 = vmul.f32 %v3787, %v1206
    %v3798 = vmul.f32 %v3787, %v1207
    %v3799 = vmul.f32 %v3787, %v1208
    %v3800 = vadd.f32 %v3775, %v3788
    %v3801 = vadd.f32 %v3776, %v3789
    %v3802 = vadd.f32 %v3777, %v3790
    %v3803 = vadd.f32 %v3778, %v3791
    %v3804 = vadd.f32 %v3779, %v3792
    %v3805 = vadd.f32 %v3780, %v3793
    %v3806 = vadd.f32 %v3781, %v3794
    %v3807 = vadd.f32 %v3782, %v3795
    %v3808 = vadd.f32 %v3783, %v3796
    %v3809 = vadd.f32 %v3784, %v3797
    %v3810 = vadd.f32 %v3785, %v3798
    %v3811 = vadd.f32 %v3786, %v3799
    %v3812 = vstv %s3772
    %v3813 = vmul.f32 %v3812, %v1159
    %v3814 = vmul.f32 %v3812, %v1160
    %v3815 = vmul.f32 %v3812, %v1161
    %v3816 = vmul.f32 %v3812, %v1162
    %v3817 = vmul.f32 %v3812, %v1163
    %v3818 = vmul.f32 %v3812, %v1164
    %v3819 = vmul.f32 %v3812, %v1165
    %v3820 = vmul.f32 %v3812, %v1166
    %v3821 = vmul.f32 %v3812, %v1167
    %v3822 = vmul.f32 %v3812, %v1168
    %v3823 = vmul.f32 %v3812, %v1169
    %v3824 = vmul.f32 %v3812, %v1170
    %v3825 = vadd.f32 %v3800, %v3813
    %v3826 = vadd.f32 %v3801, %v3814
    %v3827 = vadd.f32 %v3802, %v3815
    %v3828 = vadd.f32 %v3803, %v3816
    %v3829 = vadd.f32 %v3804, %v3817
    %v3830 = vadd.f32 %v3805, %v3818
    %v3831 = vadd.f32 %v3806, %v3819
    %v3832 = vadd.f32 %v3807, %v3820
    %v3833 = vadd.f32 %v3808, %v3821
    %v3834 = vadd.f32 %v3809, %v3822
    %v3835 = vadd.f32 %v3810, %v3823
    %v3836 = vadd.f32 %v3811, %v3824
    %v3837 = vstv %s3773
    %v3838 = vmul.f32 %v3837, %v1198
    %v3839 = vmul.f32 %v3837, %v1199
    %v3840 = vmul.f32 %v3837, %v1200
    %v3841 = vmul.f32 %v3837, %v1201
    %v3842 = vmul.f32 %v3837, %v1202
    %v3843 = vmul.f32 %v3837, %v1203
    %v3844 = vmul.f32 %v3837, %v1204
    %v3845 = vmul.f32 %v3837, %v1205
    %v3846 = vmul.f32 %v3837, %v1206
    %v3847 = vmul.f32 %v3837, %v1207
    %v3848 = vmul.f32 %v3837, %v1208
    %v3849 = vmul.f32 %v3837, %v1209
    %v3850 = vadd.f32 %v3825, %v3838
    %v3851 = vadd.f32 %v3826, %v3839
    %v3852 = vadd.f32 %v3827, %v3840
    %v3853 = vadd.f32 %v3828, %v3841
    %v3854 = vadd.f32 %v3829, %v3842
    %v3855 = vadd.f32 %v3830, %v3843
    %v3856 = vadd.f32 %v3831, %v3844
    %v3857 = vadd.f32 %v3832, %v3845
    %v3858 = vadd.f32 %v3833, %v3846
    %v3859 = vadd.f32 %v3834, %v3847
    %v3860 = vadd.f32 %v3835, %v3848
    %v3861 = vadd.f32 %v3836, %v3849
    %v3862 = vmul.f32 %v3774, %v1197
    %v3863 = vmul.f32 %v3774, %v1198
    %v3864 = vmul.f32 %v3774, %v1199
    %v3865 = vmul.f32 %v3774, %v1200
    %v3866 = vmul.f32 %v3774, %v1201
    %v3867 = vmul.f32 %v3774, %v1202
    %v3868 = vmul.f32 %v3774, %v1203
    %v3869 = vmul.f32 %v3774, %v1204
    %v3870 = vmul.f32 %v3774, %v1205
    %v3871 = vmul.f32 %v3774, %v1206
    %v3872 = vmul.f32 %v3774, %v1207
    %v3873 = vmul.f32 %v3774, %v1208
    %v3874 = vmul.f32 %v3787, %v1158
    %v3875 = vmul.f32 %v3787, %v1159
    %v3876 = vmul.f32 %v3787, %v1160
    %v3877 = vmul.f32 %v3787, %v1161
    %v3878 = vmul.f32 %v3787, %v1162
    %v3879 = vmul.f32 %v3787, %v1163
    %v3880 = vmul.f32 %v3787, %v1164
    %v3881 = vmul.f32 %v3787, %v1165
    %v3882 = vmul.f32 %v3787, %v1166
    %v3883 = vmul.f32 %v3787, %v1167
    %v3884 = vmul.f32 %v3787, %v1168
    %v3885 = vmul.f32 %v3787, %v1169
    %v3898 = vrot.slane %v3874, 1
    %v3899 = vrot.slane %v3875, 1
    %v3900 = vrot.slane %v3876, 1
    %v3901 = vrot.slane %v3877, 1
    %v3902 = vrot.slane %v3878, 1
    %v3903 = vrot.slane %v3879, 1
    %v3904 = vrot.slane %v3880, 1
    %v3905 = vrot.slane %v3881, 1
    %v3906 = vrot.slane %v3882, 1
    %v3907 = vrot.slane %v3883, 1
    %v3908 = vrot.slane %v3884, 1
    %v3909 = vrot.slane %v3885, 1
    %v3922 = vadd.f32 %v3862, %v3898
    %v3923 = vadd.f32 %v3863, %v3899
    %v3924 = vadd.f32 %v3864, %v3900
    %v3925 = vadd.f32 %v3865, %v3901
    %v3926 = vadd.f32 %v3866, %v3902
    %v3927 = vadd.f32 %v3867, %v3903
    %v3928 = vadd.f32 %v3868, %v3904
    %v3929 = vadd.f32 %v3869, %v3905
    %v3930 = vadd.f32 %v3870, %v3906
    %v3931 = vadd.f32 %v3871, %v3907
    %v3932 = vadd.f32 %v3872, %v3908
    %v3933 = vadd.f32 %v3873, %v3909
    %v3934 = vmul.f32 %v3812, %v1198
    %v3935 = vmul.f32 %v3812, %v1199
    %v3936 = vmul.f32 %v3812, %v1200
    %v3937 = vmul.f32 %v3812, %v1201
    %v3938 = vmul.f32 %v3812, %v1202
    %v3939 = vmul.f32 %v3812, %v1203
    %v3940 = vmul.f32 %v3812, %v1204
    %v3941 = vmul.f32 %v3812, %v1205
    %v3942 = vmul.f32 %v3812, %v1206
    %v3943 = vmul.f32 %v3812, %v1207
    %v3944 = vmul.f32 %v3812, %v1208
    %v3945 = vmul.f32 %v3812, %v1209
    %v3946 = vadd.f32 %v3922, %v3934
    %v3947 = vadd.f32 %v3923, %v3935
    %v3948 = vadd.f32 %v3924, %v3936
    %v3949 = vadd.f32 %v3925, %v3937
    %v3950 = vadd.f32 %v3926, %v3938
    %v3951 = vadd.f32 %v3927, %v3939
    %v3952 = vadd.f32 %v3928, %v3940
    %v3953 = vadd.f32 %v3929, %v3941
    %v3954 = vadd.f32 %v3930, %v3942
    %v3955 = vadd.f32 %v3931, %v3943
    %v3956 = vadd.f32 %v3932, %v3944
    %v3957 = vadd.f32 %v3933, %v3945
    %v3958 = vmul.f32 %v3837, %v1159
    %v3959 = vmul.f32 %v3837, %v1160
    %v3960 = vmul.f32 %v3837, %v1161
    %v3961 = vmul.f32 %v3837, %v1162
    %v3962 = vmul.f32 %v3837, %v1163
    %v3963 = vmul.f32 %v3837, %v1164
    %v3964 = vmul.f32 %v3837, %v1165
    %v3965 = vmul.f32 %v3837, %v1166
    %v3966 = vmul.f32 %v3837, %v1167
    %v3967 = vmul.f32 %v3837, %v1168
    %v3968 = vmul.f32 %v3837, %v1169
    %v3969 = vmul.f32 %v3837, %v1170
    %v3982 = vrot.slane %v3958, 1
    %v3983 = vrot.slane %v3959, 1
    %v3984 = vrot.slane %v3960, 1
    %v3985 = vrot.slane %v3961, 1
    %v3986 = vrot.slane %v3962, 1
    %v3987 = vrot.slane %v3963, 1
    %v3988 = vrot.slane %v3964, 1
    %v3989 = vrot.slane %v3965, 1
    %v3990 = vrot.slane %v3966, 1
    %v3991 = vrot.slane %v3967, 1
    %v3992 = vrot.slane %v3968, 1
    %v3993 = vrot.slane %v3969, 1
    %v4006 = vadd.f32 %v3946, %v3982
    %v4007 = vadd.f32 %v3947, %v3983
    %v4008 = vadd.f32 %v3948, %v3984
    %v4009 = vadd.f32 %v3949, %v3985
    %v4010 = vadd.f32 %v3950, %v3986
    %v4011 = vadd.f32 %v3951, %v3987
    %v4012 = vadd.f32 %v3952, %v3988
    %v4013 = vadd.f32 %v3953, %v3989
    %v4014 = vadd.f32 %v3954, %v3990
    %v4015 = vadd.f32 %v3955, %v3991
    %v4016 = vadd.f32 %v3956, %v3992
    %v4017 = vadd.f32 %v3957, %v3993
    %s4018 = sld [smem:[#allocation6 + $0x84]]
    %s4019 = sld [smem:[#allocation6 + $0x85]]
    %s4020 = sld [smem:[#allocation6 + $0x86]]
    %s4021 = sld [smem:[#allocation6 + $0x87]]
    %v4022 = vstv %s4018
    %v4023 = vmul.f32 %v4022, %v2026
    %v4024 = vmul.f32 %v4022, %v2027
    %v4025 = vmul.f32 %v4022, %v2028
    %v4026 = vmul.f32 %v4022, %v2029
    %v4027 = vmul.f32 %v4022, %v2030
    %v4028 = vmul.f32 %v4022, %v2031
    %v4029 = vmul.f32 %v4022, %v2032
    %v4030 = vmul.f32 %v4022, %v2033
    %v4031 = vmul.f32 %v4022, %v2034
    %v4032 = vmul.f32 %v4022, %v2035
    %v4033 = vmul.f32 %v4022, %v2036
    %v4034 = vmul.f32 %v4022, %v2037
    %v4035 = vstv %s4019
    %v4036 = vmul.f32 %v4035, %v2065
    %v4037 = vmul.f32 %v4035, %v2066
    %v4038 = vmul.f32 %v4035, %v2067
    %v4039 = vmul.f32 %v4035, %v2068
    %v4040 = vmul.f32 %v4035, %v2069
    %v4041 = vmul.f32 %v4035, %v2070
    %v4042 = vmul.f32 %v4035, %v2071
    %v4043 = vmul.f32 %v4035, %v2072
    %v4044 = vmul.f32 %v4035, %v2073
    %v4045 = vmul.f32 %v4035, %v2074
    %v4046 = vmul.f32 %v4035, %v2075
    %v4047 = vmul.f32 %v4035, %v2076
    %v4048 = vadd.f32 %v4023, %v4036
    %v4049 = vadd.f32 %v4024, %v4037
    %v4050 = vadd.f32 %v4025, %v4038
    %v4051 = vadd.f32 %v4026, %v4039
    %v4052 = vadd.f32 %v4027, %v4040
    %v4053 = vadd.f32 %v4028, %v4041
    %v4054 = vadd.f32 %v4029, %v4042
    %v4055 = vadd.f32 %v4030, %v4043
    %v4056 = vadd.f32 %v4031, %v4044
    %v4057 = vadd.f32 %v4032, %v4045
    %v4058 = vadd.f32 %v4033, %v4046
    %v4059 = vadd.f32 %v4034, %v4047
    %v4060 = vstv %s4020
    %v4061 = vmul.f32 %v4060, %v2027
    %v4062 = vmul.f32 %v4060, %v2028
    %v4063 = vmul.f32 %v4060, %v2029
    %v4064 = vmul.f32 %v4060, %v2030
    %v4065 = vmul.f32 %v4060, %v2031
    %v4066 = vmul.f32 %v4060, %v2032
    %v4067 = vmul.f32 %v4060, %v2033
    %v4068 = vmul.f32 %v4060, %v2034
    %v4069 = vmul.f32 %v4060, %v2035
    %v4070 = vmul.f32 %v4060, %v2036
    %v4071 = vmul.f32 %v4060, %v2037
    %v4072 = vmul.f32 %v4060, %v2038
    %v4073 = vadd.f32 %v4048, %v4061
    %v4074 = vadd.f32 %v4049, %v4062
    %v4075 = vadd.f32 %v4050, %v4063
    %v4076 = vadd.f32 %v4051, %v4064
    %v4077 = vadd.f32 %v4052, %v4065
    %v4078 = vadd.f32 %v4053, %v4066
    %v4079 = vadd.f32 %v4054, %v4067
    %v4080 = vadd.f32 %v4055, %v4068
    %v4081 = vadd.f32 %v4056, %v4069
    %v4082 = vadd.f32 %v4057, %v4070
    %v4083 = vadd.f32 %v4058, %v4071
    %v4084 = vadd.f32 %v4059, %v4072
    %v4085 = vstv %s4021
    %v4086 = vmul.f32 %v4085, %v2066
    %v4087 = vmul.f32 %v4085, %v2067
    %v4088 = vmul.f32 %v4085, %v2068
    %v4089 = vmul.f32 %v4085, %v2069
    %v4090 = vmul.f32 %v4085, %v2070
    %v4091 = vmul.f32 %v4085, %v2071
    %v4092 = vmul.f32 %v4085, %v2072
    %v4093 = vmul.f32 %v4085, %v2073
    %v4094 = vmul.f32 %v4085, %v2074
    %v4095 = vmul.f32 %v4085, %v2075
    %v4096 = vmul.f32 %v4085, %v2076
    %v4097 = vmul.f32 %v4085, %v2077
    %v4098 = vadd.f32 %v4073, %v4086
    %v4099 = vadd.f32 %v4074, %v4087
    %v4100 = vadd.f32 %v4075, %v4088
    %v4101 = vadd.f32 %v4076, %v4089
    %v4102 = vadd.f32 %v4077, %v4090
    %v4103 = vadd.f32 %v4078, %v4091
    %v4104 = vadd.f32 %v4079, %v4092
    %v4105 = vadd.f32 %v4080, %v4093
    %v4106 = vadd.f32 %v4081, %v4094
    %v4107 = vadd.f32 %v4082, %v4095
    %v4108 = vadd.f32 %v4083, %v4096
    %v4109 = vadd.f32 %v4084, %v4097
    %v4110 = vmul.f32 %v4022, %v2065
    %v4111 = vmul.f32 %v4022, %v2066
    %v4112 = vmul.f32 %v4022, %v2067
    %v4113 = vmul.f32 %v4022, %v2068
    %v4114 = vmul.f32 %v4022, %v2069
    %v4115 = vmul.f32 %v4022, %v2070
    %v4116 = vmul.f32 %v4022, %v2071
    %v4117 = vmul.f32 %v4022, %v2072
    %v4118 = vmul.f32 %v4022, %v2073
    %v4119 = vmul.f32 %v4022, %v2074
    %v4120 = vmul.f32 %v4022, %v2075
    %v4121 = vmul.f32 %v4022, %v2076
    %v4122 = vmul.f32 %v4035, %v2026
    %v4123 = vmul.f32 %v4035, %v2027
    %v4124 = vmul.f32 %v4035, %v2028
    %v4125 = vmul.f32 %v4035, %v2029
    %v4126 = vmul.f32 %v4035, %v2030
    %v4127 = vmul.f32 %v4035, %v2031
    %v4128 = vmul.f32 %v4035, %v2032
    %v4129 = vmul.f32 %v4035, %v2033
    %v4130 = vmul.f32 %v4035, %v2034
    %v4131 = vmul.f32 %v4035, %v2035
    %v4132 = vmul.f32 %v4035, %v2036
    %v4133 = vmul.f32 %v4035, %v2037
    %v4146 = vrot.slane %v4122, 1
    %v4147 = vrot.slane %v4123, 1
    %v4148 = vrot.slane %v4124, 1
    %v4149 = vrot.slane %v4125, 1
    %v4150 = vrot.slane %v4126, 1
    %v4151 = vrot.slane %v4127, 1
    %v4152 = vrot.slane %v4128, 1
    %v4153 = vrot.slane %v4129, 1
    %v4154 = vrot.slane %v4130, 1
    %v4155 = vrot.slane %v4131, 1
    %v4156 = vrot.slane %v4132, 1
    %v4157 = vrot.slane %v4133, 1
    %v4170 = vadd.f32 %v4110, %v4146
    %v4171 = vadd.f32 %v4111, %v4147
    %v4172 = vadd.f32 %v4112, %v4148
    %v4173 = vadd.f32 %v4113, %v4149
    %v4174 = vadd.f32 %v4114, %v4150
    %v4175 = vadd.f32 %v4115, %v4151
    %v4176 = vadd.f32 %v4116, %v4152
    %v4177 = vadd.f32 %v4117, %v4153
    %v4178 = vadd.f32 %v4118, %v4154
    %v4179 = vadd.f32 %v4119, %v4155
    %v4180 = vadd.f32 %v4120, %v4156
    %v4181 = vadd.f32 %v4121, %v4157
    %v4182 = vmul.f32 %v4060, %v2066
    %v4183 = vmul.f32 %v4060, %v2067
    %v4184 = vmul.f32 %v4060, %v2068
    %v4185 = vmul.f32 %v4060, %v2069
    %v4186 = vmul.f32 %v4060, %v2070
    %v4187 = vmul.f32 %v4060, %v2071
    %v4188 = vmul.f32 %v4060, %v2072
    %v4189 = vmul.f32 %v4060, %v2073
    %v4190 = vmul.f32 %v4060, %v2074
    %v4191 = vmul.f32 %v4060, %v2075
    %v4192 = vmul.f32 %v4060, %v2076
    %v4193 = vmul.f32 %v4060, %v2077
    %v4194 = vadd.f32 %v4170, %v4182
    %v4195 = vadd.f32 %v4171, %v4183
    %v4196 = vadd.f32 %v4172, %v4184
    %v4197 = vadd.f32 %v4173, %v4185
    %v4198 = vadd.f32 %v4174, %v4186
    %v4199 = vadd.f32 %v4175, %v4187
    %v4200 = vadd.f32 %v4176, %v4188
    %v4201 = vadd.f32 %v4177, %v4189
    %v4202 = vadd.f32 %v4178, %v4190
    %v4203 = vadd.f32 %v4179, %v4191
    %v4204 = vadd.f32 %v4180, %v4192
    %v4205 = vadd.f32 %v4181, %v4193
    %v4206 = vmul.f32 %v4085, %v2027
    %v4207 = vmul.f32 %v4085, %v2028
    %v4208 = vmul.f32 %v4085, %v2029
    %v4209 = vmul.f32 %v4085, %v2030
    %v4210 = vmul.f32 %v4085, %v2031
    %v4211 = vmul.f32 %v4085, %v2032
    %v4212 = vmul.f32 %v4085, %v2033
    %v4213 = vmul.f32 %v4085, %v2034
    %v4214 = vmul.f32 %v4085, %v2035
    %v4215 = vmul.f32 %v4085, %v2036
    %v4216 = vmul.f32 %v4085, %v2037
    %v4217 = vmul.f32 %v4085, %v2038
    %v4230 = vrot.slane %v4206, 1
    %v4231 = vrot.slane %v4207, 1
    %v4232 = vrot.slane %v4208, 1
    %v4233 = vrot.slane %v4209, 1
    %v4234 = vrot.slane %v4210, 1
    %v4235 = vrot.slane %v4211, 1
    %v4236 = vrot.slane %v4212, 1
    %v4237 = vrot.slane %v4213, 1
    %v4238 = vrot.slane %v4214, 1
    %v4239 = vrot.slane %v4215, 1
    %v4240 = vrot.slane %v4216, 1
    %v4241 = vrot.slane %v4217, 1
    %v4254 = vadd.f32 %v4194, %v4230
    %v4255 = vadd.f32 %v4195, %v4231
    %v4256 = vadd.f32 %v4196, %v4232
    %v4257 = vadd.f32 %v4197, %v4233
    %v4258 = vadd.f32 %v4198, %v4234
    %v4259 = vadd.f32 %v4199, %v4235
    %v4260 = vadd.f32 %v4200, %v4236
    %v4261 = vadd.f32 %v4201, %v4237
    %v4262 = vadd.f32 %v4202, %v4238
    %v4263 = vadd.f32 %v4203, %v4239
    %v4264 = vadd.f32 %v4204, %v4240
    %v4265 = vadd.f32 %v4205, %v4241
    %v4266 = vadd.f32 %v3850, %v4098
    %v4267 = vadd.f32 %v3851, %v4099
    %v4268 = vadd.f32 %v3852, %v4100
    %v4269 = vadd.f32 %v3853, %v4101
    %v4270 = vadd.f32 %v3854, %v4102
    %v4271 = vadd.f32 %v3855, %v4103
    %v4272 = vadd.f32 %v3856, %v4104
    %v4273 = vadd.f32 %v3857, %v4105
    %v4274 = vadd.f32 %v3858, %v4106
    %v4275 = vadd.f32 %v3859, %v4107
    %v4276 = vadd.f32 %v3860, %v4108
    %v4277 = vadd.f32 %v3861, %v4109
    %v4278 = vadd.f32 %v4006, %v4254
    %v4279 = vadd.f32 %v4007, %v4255
    %v4280 = vadd.f32 %v4008, %v4256
    %v4281 = vadd.f32 %v4009, %v4257
    %v4282 = vadd.f32 %v4010, %v4258
    %v4283 = vadd.f32 %v4011, %v4259
    %v4284 = vadd.f32 %v4012, %v4260
    %v4285 = vadd.f32 %v4013, %v4261
    %v4286 = vadd.f32 %v4014, %v4262
    %v4287 = vadd.f32 %v4015, %v4263
    %v4288 = vadd.f32 %v4016, %v4264
    %v4289 = vadd.f32 %v4017, %v4265
    %s4290 = sld [smem:[#allocation6 + $0x88]]
    %s4291 = sld [smem:[#allocation6 + $0x89]]
    %s4292 = sld [smem:[#allocation6 + $0x8a]]
    %s4293 = sld [smem:[#allocation6 + $0x8b]]
    %v4294 = vstv %s4290
    %v4295 = vmul.f32 %v4294, %v2894
    %v4296 = vmul.f32 %v4294, %v2895
    %v4297 = vmul.f32 %v4294, %v2896
    %v4298 = vmul.f32 %v4294, %v2897
    %v4299 = vmul.f32 %v4294, %v2898
    %v4300 = vmul.f32 %v4294, %v2899
    %v4301 = vmul.f32 %v4294, %v2900
    %v4302 = vmul.f32 %v4294, %v2901
    %v4303 = vmul.f32 %v4294, %v2902
    %v4304 = vmul.f32 %v4294, %v2903
    %v4305 = vmul.f32 %v4294, %v2904
    %v4306 = vmul.f32 %v4294, %v2905
    %v4307 = vstv %s4291
    %v4308 = vmul.f32 %v4307, %v2933
    %v4309 = vmul.f32 %v4307, %v2934
    %v4310 = vmul.f32 %v4307, %v2935
    %v4311 = vmul.f32 %v4307, %v2936
    %v4312 = vmul.f32 %v4307, %v2937
    %v4313 = vmul.f32 %v4307, %v2938
    %v4314 = vmul.f32 %v4307, %v2939
    %v4315 = vmul.f32 %v4307, %v2940
    %v4316 = vmul.f32 %v4307, %v2941
    %v4317 = vmul.f32 %v4307, %v2942
    %v4318 = vmul.f32 %v4307, %v2943
    %v4319 = vmul.f32 %v4307, %v2944
    %v4320 = vadd.f32 %v4295, %v4308
    %v4321 = vadd.f32 %v4296, %v4309
    %v4322 = vadd.f32 %v4297, %v4310
    %v4323 = vadd.f32 %v4298, %v4311
    %v4324 = vadd.f32 %v4299, %v4312
    %v4325 = vadd.f32 %v4300, %v4313
    %v4326 = vadd.f32 %v4301, %v4314
    %v4327 = vadd.f32 %v4302, %v4315
    %v4328 = vadd.f32 %v4303, %v4316
    %v4329 = vadd.f32 %v4304, %v4317
    %v4330 = vadd.f32 %v4305, %v4318
    %v4331 = vadd.f32 %v4306, %v4319
    %v4332 = vstv %s4292
    %v4333 = vmul.f32 %v4332, %v2895
    %v4334 = vmul.f32 %v4332, %v2896
    %v4335 = vmul.f32 %v4332, %v2897
    %v4336 = vmul.f32 %v4332, %v2898
    %v4337 = vmul.f32 %v4332, %v2899
    %v4338 = vmul.f32 %v4332, %v2900
    %v4339 = vmul.f32 %v4332, %v2901
    %v4340 = vmul.f32 %v4332, %v2902
    %v4341 = vmul.f32 %v4332, %v2903
    %v4342 = vmul.f32 %v4332, %v2904
    %v4343 = vmul.f32 %v4332, %v2905
    %v4344 = vmul.f32 %v4332, %v2906
    %v4345 = vadd.f32 %v4320, %v4333
    %v4346 = vadd.f32 %v4321, %v4334
    %v4347 = vadd.f32 %v4322, %v4335
    %v4348 = vadd.f32 %v4323, %v4336
    %v4349 = vadd.f32 %v4324, %v4337
    %v4350 = vadd.f32 %v4325, %v4338
    %v4351 = vadd.f32 %v4326, %v4339
    %v4352 = vadd.f32 %v4327, %v4340
    %v4353 = vadd.f32 %v4328, %v4341
    %v4354 = vadd.f32 %v4329, %v4342
    %v4355 = vadd.f32 %v4330, %v4343
    %v4356 = vadd.f32 %v4331, %v4344
    %v4357 = vstv %s4293
    %v4358 = vmul.f32 %v4357, %v2934
    %v4359 = vmul.f32 %v4357, %v2935
    %v4360 = vmul.f32 %v4357, %v2936
    %v4361 = vmul.f32 %v4357, %v2937
    %v4362 = vmul.f32 %v4357, %v2938
    %v4363 = vmul.f32 %v4357, %v2939
    %v4364 = vmul.f32 %v4357, %v2940
    %v4365 = vmul.f32 %v4357, %v2941
    %v4366 = vmul.f32 %v4357, %v2942
    %v4367 = vmul.f32 %v4357, %v2943
    %v4368 = vmul.f32 %v4357, %v2944
    %v4369 = vmul.f32 %v4357, %v2945
    %v4370 = vadd.f32 %v4345, %v4358
    %v4371 = vadd.f32 %v4346, %v4359
    %v4372 = vadd.f32 %v4347, %v4360
    %v4373 = vadd.f32 %v4348, %v4361
    %v4374 = vadd.f32 %v4349, %v4362
    %v4375 = vadd.f32 %v4350, %v4363
    %v4376 = vadd.f32 %v4351, %v4364
    %v4377 = vadd.f32 %v4352, %v4365
    %v4378 = vadd.f32 %v4353, %v4366
    %v4379 = vadd.f32 %v4354, %v4367
    %v4380 = vadd.f32 %v4355, %v4368
    %v4381 = vadd.f32 %v4356, %v4369
    %v4382 = vmul.f32 %v4294, %v2933
    %v4383 = vmul.f32 %v4294, %v2934
    %v4384 = vmul.f32 %v4294, %v2935
    %v4385 = vmul.f32 %v4294, %v2936
    %v4386 = vmul.f32 %v4294, %v2937
    %v4387 = vmul.f32 %v4294, %v2938
    %v4388 = vmul.f32 %v4294, %v2939
    %v4389 = vmul.f32 %v4294, %v2940
    %v4390 = vmul.f32 %v4294, %v2941
    %v4391 = vmul.f32 %v4294, %v2942
    %v4392 = vmul.f32 %v4294, %v2943
    %v4393 = vmul.f32 %v4294, %v2944
    %v4394 = vmul.f32 %v4307, %v2894
    %v4395 = vmul.f32 %v4307, %v2895
    %v4396 = vmul.f32 %v4307, %v2896
    %v4397 = vmul.f32 %v4307, %v2897
    %v4398 = vmul.f32 %v4307, %v2898
    %v4399 = vmul.f32 %v4307, %v2899
    %v4400 = vmul.f32 %v4307, %v2900
    %v4401 = vmul.f32 %v4307, %v2901
    %v4402 = vmul.f32 %v4307, %v2902
    %v4403 = vmul.f32 %v4307, %v2903
    %v4404 = vmul.f32 %v4307, %v2904
    %v4405 = vmul.f32 %v4307, %v2905
    %v4418 = vrot.slane %v4394, 1
    %v4419 = vrot.slane %v4395, 1
    %v4420 = vrot.slane %v4396, 1
    %v4421 = vrot.slane %v4397, 1
    %v4422 = vrot.slane %v4398, 1
    %v4423 = vrot.slane %v4399, 1
    %v4424 = vrot.slane %v4400, 1
    %v4425 = vrot.slane %v4401, 1
    %v4426 = vrot.slane %v4402, 1
    %v4427 = vrot.slane %v4403, 1
    %v4428 = vrot.slane %v4404, 1
    %v4429 = vrot.slane %v4405, 1
    %v4442 = vadd.f32 %v4382, %v4418
    %v4443 = vadd.f32 %v4383, %v4419
    %v4444 = vadd.f32 %v4384, %v4420
    %v4445 = vadd.f32 %v4385, %v4421
    %v4446 = vadd.f32 %v4386, %v4422
    %v4447 = vadd.f32 %v4387, %v4423
    %v4448 = vadd.f32 %v4388, %v4424
    %v4449 = vadd.f32 %v4389, %v4425
    %v4450 = vadd.f32 %v4390, %v4426
    %v4451 = vadd.f32 %v4391, %v4427
    %v4452 = vadd.f32 %v4392, %v4428
    %v4453 = vadd.f32 %v4393, %v4429
    %v4454 = vmul.f32 %v4332, %v2934
    %v4455 = vmul.f32 %v4332, %v2935
    %v4456 = vmul.f32 %v4332, %v2936
    %v4457 = vmul.f32 %v4332, %v2937
    %v4458 = vmul.f32 %v4332, %v2938
    %v4459 = vmul.f32 %v4332, %v2939
    %v4460 = vmul.f32 %v4332, %v2940
    %v4461 = vmul.f32 %v4332, %v2941
    %v4462 = vmul.f32 %v4332, %v2942
    %v4463 = vmul.f32 %v4332, %v2943
    %v4464 = vmul.f32 %v4332, %v2944
    %v4465 = vmul.f32 %v4332, %v2945
    %v4466 = vadd.f32 %v4442, %v4454
    %v4467 = vadd.f32 %v4443, %v4455
    %v4468 = vadd.f32 %v4444, %v4456
    %v4469 = vadd.f32 %v4445, %v4457
    %v4470 = vadd.f32 %v4446, %v4458
    %v4471 = vadd.f32 %v4447, %v4459
    %v4472 = vadd.f32 %v4448, %v4460
    %v4473 = vadd.f32 %v4449, %v4461
    %v4474 = vadd.f32 %v4450, %v4462
    %v4475 = vadd.f32 %v4451, %v4463
    %v4476 = vadd.f32 %v4452, %v4464
    %v4477 = vadd.f32 %v4453, %v4465
    %v4478 = vmul.f32 %v4357, %v2895
    %v4479 = vmul.f32 %v4357, %v2896
    %v4480 = vmul.f32 %v4357, %v2897
    %v4481 = vmul.f32 %v4357, %v2898
    %v4482 = vmul.f32 %v4357, %v2899
    %v4483 = vmul.f32 %v4357, %v2900
    %v4484 = vmul.f32 %v4357, %v2901
    %v4485 = vmul.f32 %v4357, %v2902
    %v4486 = vmul.f32 %v4357, %v2903
    %v4487 = vmul.f32 %v4357, %v2904
    %v4488 = vmul.f32 %v4357, %v2905
    %v4489 = vmul.f32 %v4357, %v2906
    %v4502 = vrot.slane %v4478, 1
    %v4503 = vrot.slane %v4479, 1
    %v4504 = vrot.slane %v4480, 1
    %v4505 = vrot.slane %v4481, 1
    %v4506 = vrot.slane %v4482, 1
    %v4507 = vrot.slane %v4483, 1
    %v4508 = vrot.slane %v4484, 1
    %v4509 = vrot.slane %v4485, 1
    %v4510 = vrot.slane %v4486, 1
    %v4511 = vrot.slane %v4487, 1
    %v4512 = vrot.slane %v4488, 1
    %v4513 = vrot.slane %v4489, 1
    %v4526 = vadd.f32 %v4466, %v4502
    %v4527 = vadd.f32 %v4467, %v4503
    %v4528 = vadd.f32 %v4468, %v4504
    %v4529 = vadd.f32 %v4469, %v4505
    %v4530 = vadd.f32 %v4470, %v4506
    %v4531 = vadd.f32 %v4471, %v4507
    %v4532 = vadd.f32 %v4472, %v4508
    %v4533 = vadd.f32 %v4473, %v4509
    %v4534 = vadd.f32 %v4474, %v4510
    %v4535 = vadd.f32 %v4475, %v4511
    %v4536 = vadd.f32 %v4476, %v4512
    %v4537 = vadd.f32 %v4477, %v4513
    %v4538 = vadd.f32 %v4266, %v4370
    %v4539 = vadd.f32 %v4267, %v4371
    %v4540 = vadd.f32 %v4268, %v4372
    %v4541 = vadd.f32 %v4269, %v4373
    %v4542 = vadd.f32 %v4270, %v4374
    %v4543 = vadd.f32 %v4271, %v4375
    %v4544 = vadd.f32 %v4272, %v4376
    %v4545 = vadd.f32 %v4273, %v4377
    %v4546 = vadd.f32 %v4274, %v4378
    %v4547 = vadd.f32 %v4275, %v4379
    %v4548 = vadd.f32 %v4276, %v4380
    %v4549 = vadd.f32 %v4277, %v4381
    %v4550 = vadd.f32 %v4278, %v4526
    %v4551 = vadd.f32 %v4279, %v4527
    %v4552 = vadd.f32 %v4280, %v4528
    %v4553 = vadd.f32 %v4281, %v4529
    %v4554 = vadd.f32 %v4282, %v4530
    %v4555 = vadd.f32 %v4283, %v4531
    %v4556 = vadd.f32 %v4284, %v4532
    %v4557 = vadd.f32 %v4285, %v4533
    %v4558 = vadd.f32 %v4286, %v4534
    %v4559 = vadd.f32 %v4287, %v4535
    %v4560 = vadd.f32 %v4288, %v4536
    %v4561 = vadd.f32 %v4289, %v4537
    %v4562 = vmax.f32 %v4538, %v4550
    %v4563 = vmax.f32 %v4539, %v4551
    %v4564 = vmax.f32 %v4540, %v4552
    %v4565 = vmax.f32 %v4541, %v4553
    %v4566 = vmax.f32 %v4542, %v4554
    %v4567 = vmax.f32 %v4543, %v4555
    %v4568 = vmax.f32 %v4544, %v4556
    %v4569 = vmax.f32 %v4545, %v4557
    %v4570 = vmax.f32 %v4546, %v4558
    %v4571 = vmax.f32 %v4547, %v4559
    %v4572 = vmax.f32 %v4548, %v4560
    %v4573 = vmax.f32 %v4549, %v4561
    %v4574 = vmax.f32 %v4562, %v4563
    %v4575 = vmax.f32 %v4564, %v4565
    %v4576 = vmax.f32 %v4566, %v4567
    %v4577 = vmax.f32 %v4568, %v4569
    %v4578 = vmax.f32 %v4570, %v4571
    %v4579 = vmax.f32 %v4572, %v4573
    %s4580 = sld [smem:[#allocation7 + $0x1]]
    %v4581 = vstv %s4580
    %v4582 = vadd.f32 %v4574, %v4581
    %v4583 = vadd.f32 %v4575, %v4581
    %v4584 = vadd.f32 %v4576, %v4581
    %v4585 = vadd.f32 %v4577, %v4581
    %v4586 = vadd.f32 %v4578, %v4581
    %v4587 = vadd.f32 %v4579, %v4581
    %v4588 = vmax.f32 %v4582, 0.0
    %v4589 = vmax.f32 %v4583, 0.0
    %v4590 = vmax.f32 %v4584, 0.0
    %v4591 = vmax.f32 %v4585, 0.0
    %v4592 = vmax.f32 %v4586, 0.0
    %v4593 = vmax.f32 %v4587, 0.0
    %s4594 = sld [smem:[#allocation6 + $0x100]]
    %s4595 = sld [smem:[#allocation6 + $0x101]]
    %s4596 = sld [smem:[#allocation6 + $0x102]]
    %s4597 = sld [smem:[#allocation6 + $0x103]]
    %v4598 = vstv %s4594
    %v4599 = vmul.f32 %v4598, %v1158
    %v4600 = vmul.f32 %v4598, %v1159
    %v4601 = vmul.f32 %v4598, %v1160
    %v4602 = vmul.f32 %v4598, %v1161
    %v4603 = vmul.f32 %v4598, %v1162
    %v4604 = vmul.f32 %v4598, %v1163
    %v4605 = vmul.f32 %v4598, %v1164
    %v4606 = vmul.f32 %v4598, %v1165
    %v4607 = vmul.f32 %v4598, %v1166
    %v4608 = vmul.f32 %v4598, %v1167
    %v4609 = vmul.f32 %v4598, %v1168
    %v4610 = vmul.f32 %v4598, %v1169
    %v4611 = vstv %s4595
    %v4612 = vmul.f32 %v4611, %v1197
    %v4613 = vmul.f32 %v4611, %v1198
    %v4614 = vmul.f32 %v4611, %v1199
    %v4615 = vmul.f32 %v4611, %v1200
    %v4616 = vmul.f32 %v4611, %v1201
    %v4617 = vmul.f32 %v4611, %v1202
    %v4618 = vmul.f32 %v4611, %v1203
    %v4619 = vmul.f32 %v4611, %v1204
    %v4620 = vmul.f32 %v4611, %v1205
    %v4621 = vmul.f32 %v4611, %v1206
    %v4622 = vmul.f32 %v4611, %v1207
    %v4623 = vmul.f32 %v4611, %v1208
    %v4624 = vadd.f32 %v4599, %v4612
    %v4625 = vadd.f32 %v4600, %v4613
    %v4626 = vadd.f32 %v4601, %v4614
    %v4627 = vadd.f32 %v4602, %v4615
    %v4628 = vadd.f32 %v4603, %v4616
    %v4629 = vadd.f32 %v4604, %v4617
    %v4630 = vadd.f32 %v4605, %v4618
    %v4631 = vadd.f32 %v4606, %v4619
    %v4632 = vadd.f32 %v4607, %v4620
    %v4633 = vadd.f32 %v4608, %v4621
    %v4634 = vadd.f32 %v4609, %v4622
    %v4635 = vadd.f32 %v4610, %v4623
    %v4636 = vstv %s4596
    %v4637 = vmul.f32 %v4636, %v1159
    %v4638 = vmul.f32 %v4636, %v1160
    %v4639 = vmul.f32 %v4636, %v1161
    %v4640 = vmul.f32 %v4636, %v1162
    %v4641 = vmul.f32 %v4636, %v1163
    %v4642 = vmul.f32 %v4636, %v1164
    %v4643 = vmul.f32 %v4636, %v1165
    %v4644 = vmul.f32 %v4636, %v1166
    %v4645 = vmul.f32 %v4636, %v1167
    %v4646 = vmul.f32 %v4636, %v1168
    %v4647 = vmul.f32 %v4636, %v1169
    %v4648 = vmul.f32 %v4636, %v1170
    %v4649 = vadd.f32 %v4624, %v4637
    %v4650 = vadd.f32 %v4625, %v4638
    %v4651 = vadd.f32 %v4626, %v4639
    %v4652 = vadd.f32 %v4627, %v4640
    %v4653 = vadd.f32 %v4628, %v4641
    %v4654 = vadd.f32 %v4629, %v4642
    %v4655 = vadd.f32 %v4630, %v4643
    %v4656 = vadd.f32 %v4631, %v4644
    %v4657 = vadd.f32 %v4632, %v4645
    %v4658 = vadd.f32 %v4633, %v4646
    %v4659 = vadd.f32 %v4634, %v4647
    %v4660 = vadd.f32 %v4635, %v4648
    %v4661 = vstv %s4597
    %v4662 = vmul.f32 %v4661, %v1198
    %v4663 = vmul.f32 %v4661, %v1199
    %v4664 = vmul.f32 %v4661, %v1200
    %v4665 = vmul.f32 %v4661, %v1201
    %v4666 = vmul.f32 %v4661, %v1202
    %v4667 = vmul.f32 %v4661, %v1203
    %v4668 = vmul.f32 %v4661, %v1204
    %v4669 = vmul.f32 %v4661, %v1205
    %v4670 = vmul.f32 %v4661, %v1206
    %v4671 = vmul.f32 %v4661, %v1207
    %v4672 = vmul.f32 %v4661, %v1208
    %v4673 = vmul.f32 %v4661, %v1209
    %v4674 = vadd.f32 %v4649, %v4662
    %v4675 = vadd.f32 %v4650, %v4663
    %v4676 = vadd.f32 %v4651, %v4664
    %v4677 = vadd.f32 %v4652, %v4665
    %v4678 = vadd.f32 %v4653, %v4666
    %v4679 = vadd.f32 %v4654, %v4667
    %v4680 = vadd.f32 %v4655, %v4668
    %v4681 = vadd.f32 %v4656, %v4669
    %v4682 = vadd.f32 %v4657, %v4670
    %v4683 = vadd.f32 %v4658, %v4671
    %v4684 = vadd.f32 %v4659, %v4672
    %v4685 = vadd.f32 %v4660, %v4673
    %v4686 = vmul.f32 %v4598, %v1197
    %v4687 = vmul.f32 %v4598, %v1198
    %v4688 = vmul.f32 %v4598, %v1199
    %v4689 = vmul.f32 %v4598, %v1200
    %v4690 = vmul.f32 %v4598, %v1201
    %v4691 = vmul.f32 %v4598, %v1202
    %v4692 = vmul.f32 %v4598, %v1203
    %v4693 = vmul.f32 %v4598, %v1204
    %v4694 = vmul.f32 %v4598, %v1205
    %v4695 = vmul.f32 %v4598, %v1206
    %v4696 = vmul.f32 %v4598, %v1207
    %v4697 = vmul.f32 %v4598, %v1208
    %v4698 = vmul.f32 %v4611, %v1158
    %v4699 = vmul.f32 %v4611, %v1159
    %v4700 = vmul.f32 %v4611, %v1160
    %v4701 = vmul.f32 %v4611, %v1161
    %v4702 = vmul.f32 %v4611, %v1162
    %v4703 = vmul.f32 %v4611, %v1163
    %v4704 = vmul.f32 %v4611, %v1164
    %v4705 = vmul.f32 %v4611, %v1165
    %v4706 = vmul.f32 %v4611, %v1166
    %v4707 = vmul.f32 %v4611, %v1167
    %v4708 = vmul.f32 %v4611, %v1168
    %v4709 = vmul.f32 %v4611, %v1169
    %v4722 = vrot.slane %v4698, 1
    %v4723 = vrot.slane %v4699, 1
    %v4724 = vrot.slane %v4700, 1
    %v4725 = vrot.slane %v4701, 1
    %v4726 = vrot.slane %v4702, 1
    %v4727 = vrot.slane %v4703, 1
    %v4728 = vrot.slane %v4704, 1
    %v4729 = vrot.slane %v4705, 1
    %v4730 = vrot.slane %v4706, 1
    %v4731 = vrot.slane %v4707, 1
    %v4732 = vrot.slane %v4708, 1
    %v4733 = vrot.slane %v4709, 1
    %v4746 = vadd.f32 %v4686, %v4722
    %v4747 = vadd.f32 %v4687, %v4723
    %v4748 = vadd.f32 %v4688, %v4724
    %v4749 = vadd.f32 %v4689, %v4725
    %v4750 = vadd.f32 %v4690, %v4726
    %v4751 = vadd.f32 %v4691, %v4727
    %v4752 = vadd.f32 %v4692, %v4728
    %v4753 = vadd.f32 %v4693, %v4729
    %v4754 = vadd.f32 %v4694, %v4730
    %v4755 = vadd.f32 %v4695, %v4731
    %v4756 = vadd.f32 %v4696, %v4732
    %v4757 = vadd.f32 %v4697, %v4733
    %v4758 = vmul.f32 %v4636, %v1198
    %v4759 = vmul.f32 %v4636, %v1199
    %v4760 = vmul.f32 %v4636, %v1200
    %v4761 = vmul.f32 %v4636, %v1201
    %v4762 = vmul.f32 %v4636, %v1202
    %v4763 = vmul.f32 %v4636, %v1203
    %v4764 = vmul.f32 %v4636, %v1204
    %v4765 = vmul.f32 %v4636, %v1205
    %v4766 = vmul.f32 %v4636, %v1206
    %v4767 = vmul.f32 %v4636, %v1207
    %v4768 = vmul.f32 %v4636, %v1208
    %v4769 = vmul.f32 %v4636, %v1209
    %v4770 = vadd.f32 %v4746, %v4758
    %v4771 = vadd.f32 %v4747, %v4759
    %v4772 = vadd.f32 %v4748, %v4760
    %v4773 = vadd.f32 %v4749, %v4761
    %v4774 = vadd.f32 %v4750, %v4762
    %v4775 = vadd.f32 %v4751, %v4763
    %v4776 = vadd.f32 %v4752, %v4764
    %v4777 = vadd.f32 %v4753, %v4765
    %v4778 = vadd.f32 %v4754, %v4766
    %v4779 = vadd.f32 %v4755, %v4767
    %v4780 = vadd.f32 %v4756, %v4768
    %v4781 = vadd.f32 %v4757, %v4769
    %v4782 = vmul.f32 %v4661, %v1159
    %v4783 = vmul.f32 %v4661, %v1160
    %v4784 = vmul.f32 %v4661, %v1161
    %v4785 = vmul.f32 %v4661, %v1162
    %v4786 = vmul.f32 %v4661, %v1163
    %v4787 = vmul.f32 %v4661, %v1164
    %v4788 = vmul.f32 %v4661, %v1165
    %v4789 = vmul.f32 %v4661, %v1166
    %v4790 = vmul.f32 %v4661, %v1167
    %v4791 = vmul.f32 %v4661, %v1168
    %v4792 = vmul.f32 %v4661, %v1169
    %v4793 = vmul.f32 %v4661, %v1170
    %v4806 = vrot.slane %v4782, 1
    %v4807 = vrot.slane %v4783, 1
    %v4808 = vrot.slane %v4784, 1
    %v4809 = vrot.slane %v4785, 1
    %v4810 = vrot.slane %v4786, 1
    %v4811 = vrot.slane %v4787, 1
    %v4812 = vrot.slane %v4788, 1
    %v4813 = vrot.slane %v4789, 1
    %v4814 = vrot.slane %v4790, 1
    %v4815 = vrot.slane %v4791, 1
    %v4816 = vrot.slane %v4792, 1
    %v4817 = vrot.slane %v4793, 1
    %v4830 = vadd.f32 %v4770, %v4806
    %v4831 = vadd.f32 %v4771, %v4807
    %v4832 = vadd.f32 %v4772, %v4808
    %v4833 = vadd.f32 %v4773, %v4809
    %v4834 = vadd.f32 %v4774, %v4810
    %v4835 = vadd.f32 %v4775, %v4811
    %v4836 = vadd.f32 %v4776, %v4812
    %v4837 = vadd.f32 %v4777, %v4813
    %v4838 = vadd.f32 %v4778, %v4814
    %v4839 = vadd.f32 %v4779, %v4815
    %v4840 = vadd.f32 %v4780, %v4816
    %v4841 = vadd.f32 %v4781, %v4817
    %s4842 = sld [smem:[#allocation6 + $0x104]]
    %s4843 = sld [smem:[#allocation6 + $0x105]]
    %s4844 = sld [smem:[#allocation6 + $0x106]]
    %s4845 = sld [smem:[#allocation6 + $0x107]]
    %v4846 = vstv %s4842
    %v4847 = vmul.f32 %v4846, %v2026
    %v4848 = vmul.f32 %v4846, %v2027
    %v4849 = vmul.f32 %v4846, %v2028
    %v4850 = vmul.f32 %v4846, %v2029
    %v4851 = vmul.f32 %v4846, %v2030
    %v4852 = vmul.f32 %v4846, %v2031
    %v4853 = vmul.f32 %v4846, %v2032
    %v4854 = vmul.f32 %v4846, %v2033
    %v4855 = vmul.f32 %v4846, %v2034
    %v4856 = vmul.f32 %v4846, %v2035
    %v4857 = vmul.f32 %v4846, %v2036
    %v4858 = vmul.f32 %v4846, %v2037
    %v4859 = vstv %s4843
    %v4860 = vmul.f32 %v4859, %v2065
    %v4861 = vmul.f32 %v4859, %v2066
    %v4862 = vmul.f32 %v4859, %v2067
    %v4863 = vmul.f32 %v4859, %v2068
    %v4864 = vmul.f32 %v4859, %v2069
    %v4865 = vmul.f32 %v4859, %v2070
    %v4866 = vmul.f32 %v4859, %v2071
    %v4867 = vmul.f32 %v4859, %v2072
    %v4868 = vmul.f32 %v4859, %v2073
    %v4869 = vmul.f32 %v4859, %v2074
    %v4870 = vmul.f32 %v4859, %v2075
    %v4871 = vmul.f32 %v4859, %v2076
    %v4872 = vadd.f32 %v4847, %v4860
    %v4873 = vadd.f32 %v4848, %v4861
    %v4874 = vadd.f32 %v4849, %v4862
    %v4875 = vadd.f32 %v4850, %v4863
    %v4876 = vadd.f32 %v4851, %v4864
    %v4877 = vadd.f32 %v4852, %v4865
    %v4878 = vadd.f32 %v4853, %v4866
    %v4879 = vadd.f32 %v4854, %v4867
    %v4880 = vadd.f32 %v4855, %v4868
    %v4881 = vadd.f32 %v4856, %v4869
    %v4882 = vadd.f32 %v4857, %v4870
    %v4883 = vadd.f32 %v4858, %v4871
    %v4884 = vstv %s4844
    %v4885 = vmul.f32 %v4884, %v2027
    %v4886 = vmul.f32 %v4884, %v2028
    %v4887 = vmul.f32 %v4884, %v2029
    %v4888 = vmul.f32 %v4884, %v2030
    %v4889 = vmul.f32 %v4884, %v2031
    %v4890 = vmul.f32 %v4884, %v2032
    %v4891 = vmul.f32 %v4884, %v2033
    %v4892 = vmul.f32 %v4884, %v2034
    %v4893 = vmul.f32 %v4884, %v2035
    %v4894 = vmul.f32 %v4884, %v2036
    %v4895 = vmul.f32 %v4884, %v2037
    %v4896 = vmul.f32 %v4884, %v2038
    %v4897 = vadd.f32 %v4872, %v4885
    %v4898 = vadd.f32 %v4873, %v4886
    %v4899 = vadd.f32 %v4874, %v4887
    %v4900 = vadd.f32 %v4875, %v4888
    %v4901 = vadd.f32 %v4876, %v4889
    %v4902 = vadd.f32 %v4877, %v4890
    %v4903 = vadd.f32 %v4878, %v4891
    %v4904 = vadd.f32 %v4879, %v4892
    %v4905 = vadd.f32 %v4880, %v4893
    %v4906 = vadd.f32 %v4881, %v4894
    %v4907 = vadd.f32 %v4882, %v4895
    %v4908 = vadd.f32 %v4883, %v4896
    %v4909 = vstv %s4845
    %v4910 = vmul.f32 %v4909, %v2066
    %v4911 = vmul.f32 %v4909, %v2067
    %v4912 = vmul.f32 %v4909, %v2068
    %v4913 = vmul.f32 %v4909, %v2069
    %v4914 = vmul.f32 %v4909, %v2070
    %v4915 = vmul.f32 %v4909, %v2071
    %v4916 = vmul.f32 %v4909, %v2072
    %v4917 = vmul.f32 %v4909, %v2073
    %v4918 = vmul.f32 %v4909, %v2074
    %v4919 = vmul.f32 %v4909, %v2075
    %v4920 = vmul.f32 %v4909, %v2076
    %v4921 = vmul.f32 %v4909, %v2077
    %v4922 = vadd.f32 %v4897, %v4910
    %v4923 = vadd.f32 %v4898, %v4911
    %v4924 = vadd.f32 %v4899, %v4912
    %v4925 = vadd.f32 %v4900, %v4913
    %v4926 = vadd.f32 %v4901, %v4914
    %v4927 = vadd.f32 %v4902, %v4915
    %v4928 = vadd.f32 %v4903, %v4916
    %v4929 = vadd.f32 %v4904, %v4917
    %v4930 = vadd.f32 %v4905, %v4918
    %v4931 = vadd.f32 %v4906, %v4919
    %v4932 = vadd.f32 %v4907, %v4920
    %v4933 = vadd.f32 %v4908, %v4921
    %v4934 = vmul.f32 %v4846, %v2065
    %v4935 = vmul.f32 %v4846, %v2066
    %v4936 = vmul.f32 %v4846, %v2067
    %v4937 = vmul.f32 %v4846, %v2068
    %v4938 = vmul.f32 %v4846, %v2069
    %v4939 = vmul.f32 %v4846, %v2070
    %v4940 = vmul.f32 %v4846, %v2071
    %v4941 = vmul.f32 %v4846, %v2072
    %v4942 = vmul.f32 %v4846, %v2073
    %v4943 = vmul.f32 %v4846, %v2074
    %v4944 = vmul.f32 %v4846, %v2075
    %v4945 = vmul.f32 %v4846, %v2076
    %v4946 = vmul.f32 %v4859, %v2026
    %v4947 = vmul.f32 %v4859, %v2027
    %v4948 = vmul.f32 %v4859, %v2028
    %v4949 = vmul.f32 %v4859, %v2029
    %v4950 = vmul.f32 %v4859, %v2030
    %v4951 = vmul.f32 %v4859, %v2031
    %v4952 = vmul.f32 %v4859, %v2032
    %v4953 = vmul.f32 %v4859, %v2033
    %v4954 = vmul.f32 %v4859, %v2034
    %v4955 = vmul.f32 %v4859, %v2035
    %v4956 = vmul.f32 %v4859, %v2036
    %v4957 = vmul.f32 %v4859, %v2037
    %v4970 = vrot.slane %v4946, 1
    %v4971 = vrot.slane %v4947, 1
    %v4972 = vrot.slane %v4948, 1
    %v4973 = vrot.slane %v4949, 1
    %v4974 = vrot.slane %v4950, 1
    %v4975 = vrot.slane %v4951, 1
    %v4976 = vrot.slane %v4952, 1
    %v4977 = vrot.slane %v4953, 1
    %v4978 = vrot.slane %v4954, 1
    %v4979 = vrot.slane %v4955, 1
    %v4980 = vrot.slane %v4956, 1
    %v4981 = vrot.slane %v4957, 1
    %v4994 = vadd.f32 %v4934, %v4970
    %v4995 = vadd.f32 %v4935, %v4971
    %v4996 = vadd.f32 %v4936, %v4972
    %v4997 = vadd.f32 %v4937, %v4973
    %v4998 = vadd.f32 %v4938, %v4974
    %v4999 = vadd.f32 %v4939, %v4975
    %v5000 = vadd.f32 %v4940, %v4976
    %v5001 = vadd.f32 %v4941, %v4977
    %v5002 = vadd.f32 %v4942, %v4978
    %v5003 = vadd.f32 %v4943, %v4979
    %v5004 = vadd.f32 %v4944, %v4980
    %v5005 = vadd.f32 %v4945, %v4981
    %v5006 = vmul.f32 %v4884, %v2066
    %v5007 = vmul.f32 %v4884, %v2067
    %v5008 = vmul.f32 %v4884, %v2068
    %v5009 = vmul.f32 %v4884, %v2069
    %v5010 = vmul.f32 %v4884, %v2070
    %v5011 = vmul.f32 %v4884, %v2071
    %v5012 = vmul.f32 %v4884, %v2072
    %v5013 = vmul.f32 %v4884, %v2073
    %v5014 = vmul.f32 %v4884, %v2074
    %v5015 = vmul.f32 %v4884, %v2075
    %v5016 = vmul.f32 %v4884, %v2076
    %v5017 = vmul.f32 %v4884, %v2077
    %v5018 = vadd.f32 %v4994, %v5006
    %v5019 = vadd.f32 %v4995, %v5007
    %v5020 = vadd.f32 %v4996, %v5008
    %v5021 = vadd.f32 %v4997, %v5009
    %v5022 = vadd.f32 %v4998, %v5010
    %v5023 = vadd.f32 %v4999, %v5011
    %v5024 = vadd.f32 %v5000, %v5012
    %v5025 = vadd.f32 %v5001, %v5013
    %v5026 = vadd.f32 %v5002, %v5014
    %v5027 = vadd.f32 %v5003, %v5015
    %v5028 = vadd.f32 %v5004, %v5016
    %v5029 = vadd.f32 %v5005, %v5017
    %v5030 = vmul.f32 %v4909, %v2027
    %v5031 = vmul.f32 %v4909, %v2028
    %v5032 = vmul.f32 %v4909, %v2029
    %v5033 = vmul.f32 %v4909, %v2030
    %v5034 = vmul.f32 %v4909, %v2031
    %v5035 = vmul.f32 %v4909, %v2032
    %v5036 = vmul.f32 %v4909, %v2033
    %v5037 = vmul.f32 %v4909, %v2034
    %v5038 = vmul.f32 %v4909, %v2035
    %v5039 = vmul.f32 %v4909, %v2036
    %v5040 = vmul.f32 %v4909, %v2037
    %v5041 = vmul.f32 %v4909, %v2038
    %v5054 = vrot.slane %v5030, 1
    %v5055 = vrot.slane %v5031, 1
    %v5056 = vrot.slane %v5032, 1
    %v5057 = vrot.slane %v5033, 1
    %v5058 = vrot.slane %v5034, 1
    %v5059 = vrot.slane %v5035, 1
    %v5060 = vrot.slane %v5036, 1
    %v5061 = vrot.slane %v5037, 1
    %v5062 = vrot.slane %v5038, 1
    %v5063 = vrot.slane %v5039, 1
    %v5064 = vrot.slane %v5040, 1
    %v5065 = vrot.slane %v5041, 1
    %v5078 = vadd.f32 %v5018, %v5054
    %v5079 = vadd.f32 %v5019, %v5055
    %v5080 = vadd.f32 %v5020, %v5056
    %v5081 = vadd.f32 %v5021, %v5057
    %v5082 = vadd.f32 %v5022, %v5058
    %v5083 = vadd.f32 %v5023, %v5059
    %v5084 = vadd.f32 %v5024, %v5060
    %v5085 = vadd.f32 %v5025, %v5061
    %v5086 = vadd.f32 %v5026, %v5062
    %v5087 = vadd.f32 %v5027, %v5063
    %v5088 = vadd.f32 %v5028, %v5064
    %v5089 = vadd.f32 %v5029, %v5065
    %v5090 = vadd.f32 %v4674, %v4922
    %v5091 = vadd.f32 %v4675, %v4923
    %v5092 = vadd.f32 %v4676, %v4924
    %v5093 = vadd.f32 %v4677, %v4925
    %v5094 = vadd.f32 %v4678, %v4926
    %v5095 = vadd.f32 %v4679, %v4927
    %v5096 = vadd.f32 %v4680, %v4928
    %v5097 = vadd.f32 %v4681, %v4929
    %v5098 = vadd.f32 %v4682, %v4930
    %v5099 = vadd.f32 %v4683, %v4931
    %v5100 = vadd.f32 %v4684, %v4932
    %v5101 = vadd.f32 %v4685, %v4933
    %v5102 = vadd.f32 %v4830, %v5078
    %v5103 = vadd.f32 %v4831, %v5079
    %v5104 = vadd.f32 %v4832, %v5080
    %v5105 = vadd.f32 %v4833, %v5081
    %v5106 = vadd.f32 %v4834, %v5082
    %v5107 = vadd.f32 %v4835, %v5083
    %v5108 = vadd.f32 %v4836, %v5084
    %v5109 = vadd.f32 %v4837, %v5085
    %v5110 = vadd.f32 %v4838, %v5086
    %v5111 = vadd.f32 %v4839, %v5087
    %v5112 = vadd.f32 %v4840, %v5088
    %v5113 = vadd.f32 %v4841, %v5089
    %s5114 = sld [smem:[#allocation6 + $0x108]]
    %s5115 = sld [smem:[#allocation6 + $0x109]]
    %s5116 = sld [smem:[#allocation6 + $0x10a]]
    %s5117 = sld [smem:[#allocation6 + $0x10b]]
    %v5118 = vstv %s5114
    %v5119 = vmul.f32 %v5118, %v2894
    %v5120 = vmul.f32 %v5118, %v2895
    %v5121 = vmul.f32 %v5118, %v2896
    %v5122 = vmul.f32 %v5118, %v2897
    %v5123 = vmul.f32 %v5118, %v2898
    %v5124 = vmul.f32 %v5118, %v2899
    %v5125 = vmul.f32 %v5118, %v2900
    %v5126 = vmul.f32 %v5118, %v2901
    %v5127 = vmul.f32 %v5118, %v2902
    %v5128 = vmul.f32 %v5118, %v2903
    %v5129 = vmul.f32 %v5118, %v2904
    %v5130 = vmul.f32 %v5118, %v2905
    %v5131 = vstv %s5115
    %v5132 = vmul.f32 %v5131, %v2933
    %v5133 = vmul.f32 %v5131, %v2934
    %v5134 = vmul.f32 %v5131, %v2935
    %v5135 = vmul.f32 %v5131, %v2936
    %v5136 = vmul.f32 %v5131, %v2937
    %v5137 = vmul.f32 %v5131, %v2938
    %v5138 = vmul.f32 %v5131, %v2939
    %v5139 = vmul.f32 %v5131, %v2940
    %v5140 = vmul.f32 %v5131, %v2941
    %v5141 = vmul.f32 %v5131, %v2942
    %v5142 = vmul.f32 %v5131, %v2943
    %v5143 = vmul.f32 %v5131, %v2944
    %v5144 = vadd.f32 %v5119, %v5132
    %v5145 = vadd.f32 %v5120, %v5133
    %v5146 = vadd.f32 %v5121, %v5134
    %v5147 = vadd.f32 %v5122, %v5135
    %v5148 = vadd.f32 %v5123, %v5136
    %v5149 = vadd.f32 %v5124, %v5137
    %v5150 = vadd.f32 %v5125, %v5138
    %v5151 = vadd.f32 %v5126, %v5139
    %v5152 = vadd.f32 %v5127, %v5140
    %v5153 = vadd.f32 %v5128, %v5141
    %v5154 = vadd.f32 %v5129, %v5142
    %v5155 = vadd.f32 %v5130, %v5143
    %v5156 = vstv %s5116
    %v5157 = vmul.f32 %v5156, %v2895
    %v5158 = vmul.f32 %v5156, %v2896
    %v5159 = vmul.f32 %v5156, %v2897
    %v5160 = vmul.f32 %v5156, %v2898
    %v5161 = vmul.f32 %v5156, %v2899
    %v5162 = vmul.f32 %v5156, %v2900
    %v5163 = vmul.f32 %v5156, %v2901
    %v5164 = vmul.f32 %v5156, %v2902
    %v5165 = vmul.f32 %v5156, %v2903
    %v5166 = vmul.f32 %v5156, %v2904
    %v5167 = vmul.f32 %v5156, %v2905
    %v5168 = vmul.f32 %v5156, %v2906
    %v5169 = vadd.f32 %v5144, %v5157
    %v5170 = vadd.f32 %v5145, %v5158
    %v5171 = vadd.f32 %v5146, %v5159
    %v5172 = vadd.f32 %v5147, %v5160
    %v5173 = vadd.f32 %v5148, %v5161
    %v5174 = vadd.f32 %v5149, %v5162
    %v5175 = vadd.f32 %v5150, %v5163
    %v5176 = vadd.f32 %v5151, %v5164
    %v5177 = vadd.f32 %v5152, %v5165
    %v5178 = vadd.f32 %v5153, %v5166
    %v5179 = vadd.f32 %v5154, %v5167
    %v5180 = vadd.f32 %v5155, %v5168
    %v5181 = vstv %s5117
    %v5182 = vmul.f32 %v5181, %v2934
    %v5183 = vmul.f32 %v5181, %v2935
    %v5184 = vmul.f32 %v5181, %v2936
    %v5185 = vmul.f32 %v5181, %v2937
    %v5186 = vmul.f32 %v5181, %v2938
    %v5187 = vmul.f32 %v5181, %v2939
    %v5188 = vmul.f32 %v5181, %v2940
    %v5189 = vmul.f32 %v5181, %v2941
    %v5190 = vmul.f32 %v5181, %v2942
    %v5191 = vmul.f32 %v5181, %v2943
    %v5192 = vmul.f32 %v5181, %v2944
    %v5193 = vmul.f32 %v5181, %v2945
    %v5194 = vadd.f32 %v5169, %v5182
    %v5195 = vadd.f32 %v5170, %v5183
    %v5196 = vadd.f32 %v5171, %v5184
    %v5197 = vadd.f32 %v5172, %v5185
    %v5198 = vadd.f32 %v5173, %v5186
    %v5199 = vadd.f32 %v5174, %v5187
    %v5200 = vadd.f32 %v5175, %v5188
    %v5201 = vadd.f32 %v5176, %v5189
    %v5202 = vadd.f32 %v5177, %v5190
    %v5203 = vadd.f32 %v5178, %v5191
    %v5204 = vadd.f32 %v5179, %v5192
    %v5205 = vadd.f32 %v5180, %v5193
    %v5206 = vmul.f32 %v5118, %v2933
    %v5207 = vmul.f32 %v5118, %v2934
    %v5208 = vmul.f32 %v5118, %v2935
    %v5209 = vmul.f32 %v5118, %v2936
    %v5210 = vmul.f32 %v5118, %v2937
    %v5211 = vmul.f32 %v5118, %v2938
    %v5212 = vmul.f32 %v5118, %v2939
    %v5213 = vmul.f32 %v5118, %v2940
    %v5214 = vmul.f32 %v5118, %v2941
    %v5215 = vmul.f32 %v5118, %v2942
    %v5216 = vmul.f32 %v5118, %v2943
    %v5217 = vmul.f32 %v5118, %v2944
    %v5218 = vmul.f32 %v5131, %v2894
    %v5219 = vmul.f32 %v5131, %v2895
    %v5220 = vmul.f32 %v5131, %v2896
    %v5221 = vmul.f32 %v5131, %v2897
    %v5222 = vmul.f32 %v5131, %v2898
    %v5223 = vmul.f32 %v5131, %v2899
    %v5224 = vmul.f32 %v5131, %v2900
    %v5225 = vmul.f32 %v5131, %v2901
    %v5226 = vmul.f32 %v5131, %v2902
    %v5227 = vmul.f32 %v5131, %v2903
    %v5228 = vmul.f32 %v5131, %v2904
    %v5229 = vmul.f32 %v5131, %v2905
    %v5242 = vrot.slane %v5218, 1
    %v5243 = vrot.slane %v5219, 1
    %v5244 = vrot.slane %v5220, 1
    %v5245 = vrot.slane %v5221, 1
    %v5246 = vrot.slane %v5222, 1
    %v5247 = vrot.slane %v5223, 1
    %v5248 = vrot.slane %v5224, 1
    %v5249 = vrot.slane %v5225, 1
    %v5250 = vrot.slane %v5226, 1
    %v5251 = vrot.slane %v5227, 1
    %v5252 = vrot.slane %v5228, 1
    %v5253 = vrot.slane %v5229, 1
    %v5266 = vadd.f32 %v5206, %v5242
    %v5267 = vadd.f32 %v5207, %v5243
    %v5268 = vadd.f32 %v5208, %v5244
    %v5269 = vadd.f32 %v5209, %v5245
    %v5270 = vadd.f32 %v5210, %v5246
    %v5271 = vadd.f32 %v5211, %v5247
    %v5272 = vadd.f32 %v5212, %v5248
    %v5273 = vadd.f32 %v5213, %v5249
    %v5274 = vadd.f32 %v5214, %v5250
    %v5275 = vadd.f32 %v5215, %v5251
    %v5276 = vadd.f32 %v5216, %v5252
    %v5277 = vadd.f32 %v5217, %v5253
    %v5278 = vmul.f32 %v5156, %v2934
    %v5279 = vmul.f32 %v5156, %v2935
    %v5280 = vmul.f32 %v5156, %v2936
    %v5281 = vmul.f32 %v5156, %v2937
    %v5282 = vmul.f32 %v5156, %v2938
    %v5283 = vmul.f32 %v5156, %v2939
    %v5284 = vmul.f32 %v5156, %v2940
    %v5285 = vmul.f32 %v5156, %v2941
    %v5286 = vmul.f32 %v5156, %v2942
    %v5287 = vmul.f32 %v5156, %v2943
    %v5288 = vmul.f32 %v5156, %v2944
    %v5289 = vmul.f32 %v5156, %v2945
    %v5290 = vadd.f32 %v5266, %v5278
    %v5291 = vadd.f32 %v5267, %v5279
    %v5292 = vadd.f32 %v5268, %v5280
    %v5293 = vadd.f32 %v5269, %v5281
    %v5294 = vadd.f32 %v5270, %v5282
    %v5295 = vadd.f32 %v5271, %v5283
    %v5296 = vadd.f32 %v5272, %v5284
    %v5297 = vadd.f32 %v5273, %v5285
    %v5298 = vadd.f32 %v5274, %v5286
    %v5299 = vadd.f32 %v5275, %v5287
    %v5300 = vadd.f32 %v5276, %v5288
    %v5301 = vadd.f32 %v5277, %v5289
    %v5302 = vmul.f32 %v5181, %v2895
    %v5303 = vmul.f32 %v5181, %v2896
    %v5304 = vmul.f32 %v5181, %v2897
    %v5305 = vmul.f32 %v5181, %v2898
    %v5306 = vmul.f32 %v5181, %v2899
    %v5307 = vmul.f32 %v5181, %v2900
    %v5308 = vmul.f32 %v5181, %v2901
    %v5309 = vmul.f32 %v5181, %v2902
    %v5310 = vmul.f32 %v5181, %v2903
    %v5311 = vmul.f32 %v5181, %v2904
    %v5312 = vmul.f32 %v5181, %v2905
    %v5313 = vmul.f32 %v5181, %v2906
    %v5326 = vrot.slane %v5302, 1
    %v5327 = vrot.slane %v5303, 1
    %v5328 = vrot.slane %v5304, 1
    %v5329 = vrot.slane %v5305, 1
    %v5330 = vrot.slane %v5306, 1
    %v5331 = vrot.slane %v5307, 1
    %v5332 = vrot.slane %v5308, 1
    %v5333 = vrot.slane %v5309, 1
    %v5334 = vrot.slane %v5310, 1
    %v5335 = vrot.slane %v5311, 1
    %v5336 = vrot.slane %v5312, 1
    %v5337 = vrot.slane %v5313, 1
    %v5350 = vadd.f32 %v5290, %v5326
    %v5351 = vadd.f32 %v5291, %v5327
    %v5352 = vadd.f32 %v5292, %v5328
    %v5353 = vadd.f32 %v5293, %v5329
    %v5354 = vadd.f32 %v5294, %v5330
    %v5355 = vadd.f32 %v5295, %v5331
    %v5356 = vadd.f32 %v5296, %v5332
    %v5357 = vadd.f32 %v5297, %v5333
    %v5358 = vadd.f32 %v5298, %v5334
    %v5359 = vadd.f32 %v5299, %v5335
    %v5360 = vadd.f32 %v5300, %v5336
    %v5361 = vadd.f32 %v5301, %v5337
    %v5362 = vadd.f32 %v5090, %v5194
    %v5363 = vadd.f32 %v5091, %v5195
    %v5364 = vadd.f32 %v5092, %v5196
    %v5365 = vadd.f32 %v5093, %v5197
    %v5366 = vadd.f32 %v5094, %v5198
    %v5367 = vadd.f32 %v5095, %v5199
    %v5368 = vadd.f32 %v5096, %v5200
    %v5369 = vadd.f32 %v5097, %v5201
    %v5370 = vadd.f32 %v5098, %v5202
    %v5371 = vadd.f32 %v5099, %v5203
    %v5372 = vadd.f32 %v5100, %v5204
    %v5373 = vadd.f32 %v5101, %v5205
    %v5374 = vadd.f32 %v5102, %v5350
    %v5375 = vadd.f32 %v5103, %v5351
    %v5376 = vadd.f32 %v5104, %v5352
    %v5377 = vadd.f32 %v5105, %v5353
    %v5378 = vadd.f32 %v5106, %v5354
    %v5379 = vadd.f32 %v5107, %v5355
    %v5380 = vadd.f32 %v5108, %v5356
    %v5381 = vadd.f32 %v5109, %v5357
    %v5382 = vadd.f32 %v5110, %v5358
    %v5383 = vadd.f32 %v5111, %v5359
    %v5384 = vadd.f32 %v5112, %v5360
    %v5385 = vadd.f32 %v5113, %v5361
    %v5386 = vmax.f32 %v5362, %v5374
    %v5387 = vmax.f32 %v5363, %v5375
    %v5388 = vmax.f32 %v5364, %v5376
    %v5389 = vmax.f32 %v5365, %v5377
    %v5390 = vmax.f32 %v5366, %v5378
    %v5391 = vmax.f32 %v5367, %v5379
    %v5392 = vmax.f32 %v5368, %v5380
    %v5393 = vmax.f32 %v5369, %v5381
    %v5394 = vmax.f32 %v5370, %v5382
    %v5395 = vmax.f32 %v5371, %v5383
    %v5396 = vmax.f32 %v5372, %v5384
    %v5397 = vmax.f32 %v5373, %v5385
    %v5398 = vmax.f32 %v5386, %v5387
    %v5399 = vmax.f32 %v5388, %v5389
    %v5400 = vmax.f32 %v5390, %v5391
    %v5401 = vmax.f32 %v5392, %v5393
    %v5402 = vmax.f32 %v5394, %v5395
    %v5403 = vmax.f32 %v5396, %v5397
    %s5404 = sld [smem:[#allocation7 + $0x2]]
    %v5405 = vstv %s5404
    %v5406 = vadd.f32 %v5398, %v5405
    %v5407 = vadd.f32 %v5399, %v5405
    %v5408 = vadd.f32 %v5400, %v5405
    %v5409 = vadd.f32 %v5401, %v5405
    %v5410 = vadd.f32 %v5402, %v5405
    %v5411 = vadd.f32 %v5403, %v5405
    %v5412 = vmax.f32 %v5406, 0.0
    %v5413 = vmax.f32 %v5407, 0.0
    %v5414 = vmax.f32 %v5408, 0.0
    %v5415 = vmax.f32 %v5409, 0.0
    %v5416 = vmax.f32 %v5410, 0.0
    %v5417 = vmax.f32 %v5411, 0.0
    %s5418 = sld [smem:[#allocation6 + $0x180]]
    %s5419 = sld [smem:[#allocation6 + $0x181]]
    %s5420 = sld [smem:[#allocation6 + $0x182]]
    %s5421 = sld [smem:[#allocation6 + $0x183]]
    %v5422 = vstv %s5418
    %v5423 = vmul.f32 %v5422, %v1158
    %v5424 = vmul.f32 %v5422, %v1159
    %v5425 = vmul.f32 %v5422, %v1160
    %v5426 = vmul.f32 %v5422, %v1161
    %v5427 = vmul.f32 %v5422, %v1162
    %v5428 = vmul.f32 %v5422, %v1163
    %v5429 = vmul.f32 %v5422, %v1164
    %v5430 = vmul.f32 %v5422, %v1165
    %v5431 = vmul.f32 %v5422, %v1166
    %v5432 = vmul.f32 %v5422, %v1167
    %v5433 = vmul.f32 %v5422, %v1168
    %v5434 = vmul.f32 %v5422, %v1169
    %v5435 = vstv %s5419
    %v5436 = vmul.f32 %v5435, %v1197
    %v5437 = vmul.f32 %v5435, %v1198
    %v5438 = vmul.f32 %v5435, %v1199
    %v5439 = vmul.f32 %v5435, %v1200
    %v5440 = vmul.f32 %v5435, %v1201
    %v5441 = vmul.f32 %v5435, %v1202
    %v5442 = vmul.f32 %v5435, %v1203
    %v5443 = vmul.f32 %v5435, %v1204
    %v5444 = vmul.f32 %v5435, %v1205
    %v5445 = vmul.f32 %v5435, %v1206
    %v5446 = vmul.f32 %v5435, %v1207
    %v5447 = vmul.f32 %v5435, %v1208
    %v5448 = vadd.f32 %v5423, %v5436
    %v5449 = vadd.f32 %v5424, %v5437
    %v5450 = vadd.f32 %v5425, %v5438
    %v5451 = vadd.f32 %v5426, %v5439
    %v5452 = vadd.f32 %v5427, %v5440
    %v5453 = vadd.f32 %v5428, %v5441
    %v5454 = vadd.f32 %v5429, %v5442
    %v5455 = vadd.f32 %v5430, %v5443
    %v5456 = vadd.f32 %v5431, %v5444
    %v5457 = vadd.f32 %v5432, %v5445
    %v5458 = vadd.f32 %v5433, %v5446
    %v5459 = vadd.f32 %v5434, %v5447
    %v5460 = vstv %s5420
    %v5461 = vmul.f32 %v5460, %v1159
    %v5462 = vmul.f32 %v5460, %v1160
    %v5463 = vmul.f32 %v5460, %v1161
    %v5464 = vmul.f32 %v5460, %v1162
    %v5465 = vmul.f32 %v5460, %v1163
    %v5466 = vmul.f32 %v5460, %v1164
    %v5467 = vmul.f32 %v5460, %v1165
    %v5468 = vmul.f32 %v5460, %v1166
    %v5469 = vmul.f32 %v5460, %v1167
    %v5470 = vmul.f32 %v5460, %v1168
    %v5471 = vmul.f32 %v5460, %v1169
    %v5472 = vmul.f32 %v5460, %v1170
    %v5473 = vadd.f32 %v5448, %v5461
    %v5474 = vadd.f32 %v5449, %v5462
    %v5475 = vadd.f32 %v5450, %v5463
    %v5476 = vadd.f32 %v5451, %v5464
    %v5477 = vadd.f32 %v5452, %v5465
    %v5478 = vadd.f32 %v5453, %v5466
    %v5479 = vadd.f32 %v5454, %v5467
    %v5480 = vadd.f32 %v5455, %v5468
    %v5481 = vadd.f32 %v5456, %v5469
    %v5482 = vadd.f32 %v5457, %v5470
    %v5483 = vadd.f32 %v5458, %v5471
    %v5484 = vadd.f32 %v5459, %v5472
    %v5485 = vstv %s5421
    %v5486 = vmul.f32 %v5485, %v1198
    %v5487 = vmul.f32 %v5485, %v1199
    %v5488 = vmul.f32 %v5485, %v1200
    %v5489 = vmul.f32 %v5485, %v1201
    %v5490 = vmul.f32 %v5485, %v1202
    %v5491 = vmul.f32 %v5485, %v1203
    %v5492 = vmul.f32 %v5485, %v1204
    %v5493 = vmul.f32 %v5485, %v1205
    %v5494 = vmul.f32 %v5485, %v1206
    %v5495 = vmul.f32 %v5485, %v1207
    %v5496 = vmul.f32 %v5485, %v1208
    %v5497 = vmul.f32 %v5485, %v1209
    %v5498 = vadd.f32 %v5473, %v5486
    %v5499 = vadd.f32 %v5474, %v5487
    %v5500 = vadd.f32 %v5475, %v5488
    %v5501 = vadd.f32 %v5476, %v5489
    %v5502 = vadd.f32 %v5477, %v5490
    %v5503 = vadd.f32 %v5478, %v5491
    %v5504 = vadd.f32 %v5479, %v5492
    %v5505 = vadd.f32 %v5480, %v5493
    %v5506 = vadd.f32 %v5481, %v5494
    %v5507 = vadd.f32 %v5482, %v5495
    %v5508 = vadd.f32 %v5483, %v5496
    %v5509 = vadd.f32 %v5484, %v5497
    %v5510 = vmul.f32 %v5422, %v1197
    %v5511 = vmul.f32 %v5422, %v1198
    %v5512 = vmul.f32 %v5422, %v1199
    %v5513 = vmul.f32 %v5422, %v1200
    %v5514 = vmul.f32 %v5422, %v1201
    %v5515 = vmul.f32 %v5422, %v1202
    %v5516 = vmul.f32 %v5422, %v1203
    %v5517 = vmul.f32 %v5422, %v1204
    %v5518 = vmul.f32 %v5422, %v1205
    %v5519 = vmul.f32 %v5422, %v1206
    %v5520 = vmul.f32 %v5422, %v1207
    %v5521 = vmul.f32 %v5422, %v1208
    %v5522 = vmul.f32 %v5435, %v1158
    %v5523 = vmul.f32 %v5435, %v1159
    %v5524 = vmul.f32 %v5435, %v1160
    %v5525 = vmul.f32 %v5435, %v1161
    %v5526 = vmul.f32 %v5435, %v1162
    %v5527 = vmul.f32 %v5435, %v1163
    %v5528 = vmul.f32 %v5435, %v1164
    %v5529 = vmul.f32 %v5435, %v1165
    %v5530 = vmul.f32 %v5435, %v1166
    %v5531 = vmul.f32 %v5435, %v1167
    %v5532 = vmul.f32 %v5435, %v1168
    %v5533 = vmul.f32 %v5435, %v1169
    %v5546 = vrot.slane %v5522, 1
    %v5547 = vrot.slane %v5523, 1
    %v5548 = vrot.slane %v5524, 1
    %v5549 = vrot.slane %v5525, 1
    %v5550 = vrot.slane %v5526, 1
    %v5551 = vrot.slane %v5527, 1
    %v5552 = vrot.slane %v5528, 1
    %v5553 = vrot.slane %v5529, 1
    %v5554 = vrot.slane %v5530, 1
    %v5555 = vrot.slane %v5531, 1
    %v5556 = vrot.slane %v5532, 1
    %v5557 = vrot.slane %v5533, 1
    %v5570 = vadd.f32 %v5510, %v5546
    %v5571 = vadd.f32 %v5511, %v5547
    %v5572 = vadd.f32 %v5512, %v5548
    %v5573 = vadd.f32 %v5513, %v5549
    %v5574 = vadd.f32 %v5514, %v5550
    %v5575 = vadd.f32 %v5515, %v5551
    %v5576 = vadd.f32 %v5516, %v5552
    %v5577 = vadd.f32 %v5517, %v5553
    %v5578 = vadd.f32 %v5518, %v5554
    %v5579 = vadd.f32 %v5519, %v5555
    %v5580 = vadd.f32 %v5520, %v5556
    %v5581 = vadd.f32 %v5521, %v5557
    %v5582 = vmul.f32 %v5460, %v1198
    %v5583 = vmul.f32 %v5460, %v1199
    %v5584 = vmul.f32 %v5460, %v1200
    %v5585 = vmul.f32 %v5460, %v1201
    %v5586 = vmul.f32 %v5460, %v1202
    %v5587 = vmul.f32 %v5460, %v1203
    %v5588 = vmul.f32 %v5460, %v1204
    %v5589 = vmul.f32 %v5460, %v1205
    %v5590 = vmul.f32 %v5460, %v1206
    %v5591 = vmul.f32 %v5460, %v1207
    %v5592 = vmul.f32 %v5460, %v1208
    %v5593 = vmul.f32 %v5460, %v1209
    %v5594 = vadd.f32 %v5570, %v5582
    %v5595 = vadd.f32 %v5571, %v5583
    %v5596 = vadd.f32 %v5572, %v5584
    %v5597 = vadd.f32 %v5573, %v5585
    %v5598 = vadd.f32 %v5574, %v5586
    %v5599 = vadd.f32 %v5575, %v5587
    %v5600 = vadd.f32 %v5576, %v5588
    %v5601 = vadd.f32 %v5577, %v5589
    %v5602 = vadd.f32 %v5578, %v5590
    %v5603 = vadd.f32 %v5579, %v5591
    %v5604 = vadd.f32 %v5580, %v5592
    %v5605 = vadd.f32 %v5581, %v5593
    %v5606 = vmul.f32 %v5485, %v1159
    %v5607 = vmul.f32 %v5485, %v1160
    %v5608 = vmul.f32 %v5485, %v1161
    %v5609 = vmul.f32 %v5485, %v1162
    %v5610 = vmul.f32 %v5485, %v1163
    %v5611 = vmul.f32 %v5485, %v1164
    %v5612 = vmul.f32 %v5485, %v1165
    %v5613 = vmul.f32 %v5485, %v1166
    %v5614 = vmul.f32 %v5485, %v1167
    %v5615 = vmul.f32 %v5485, %v1168
    %v5616 = vmul.f32 %v5485, %v1169
    %v5617 = vmul.f32 %v5485, %v1170
    %v5630 = vrot.slane %v5606, 1
    %v5631 = vrot.slane %v5607, 1
    %v5632 = vrot.slane %v5608, 1
    %v5633 = vrot.slane %v5609, 1
    %v5634 = vrot.slane %v5610, 1
    %v5635 = vrot.slane %v5611, 1
    %v5636 = vrot.slane %v5612, 1
    %v5637 = vrot.slane %v5613, 1
    %v5638 = vrot.slane %v5614, 1
    %v5639 = vrot.slane %v5615, 1
    %v5640 = vrot.slane %v5616, 1
    %v5641 = vrot.slane %v5617, 1
    %v5654 = vadd.f32 %v5594, %v5630
    %v5655 = vadd.f32 %v5595, %v5631
    %v5656 = vadd.f32 %v5596, %v5632
    %v5657 = vadd.f32 %v5597, %v5633
    %v5658 = vadd.f32 %v5598, %v5634
    %v5659 = vadd.f32 %v5599, %v5635
    %v5660 = vadd.f32 %v5600, %v5636
    %v5661 = vadd.f32 %v5601, %v5637
    %v5662 = vadd.f32 %v5602, %v5638
    %v5663 = vadd.f32 %v5603, %v5639
    %v5664 = vadd.f32 %v5604, %v5640
    %v5665 = vadd.f32 %v5605, %v5641
    %s5666 = sld [smem:[#allocation6 + $0x184]]
    %s5667 = sld [smem:[#allocation6 + $0x185]]
    %s5668 = sld [smem:[#allocation6 + $0x186]]
    %s5669 = sld [smem:[#allocation6 + $0x187]]
    %v5670 = vstv %s5666
    %v5671 = vmul.f32 %v5670, %v2026
    %v5672 = vmul.f32 %v5670, %v2027
    %v5673 = vmul.f32 %v5670, %v2028
    %v5674 = vmul.f32 %v5670, %v2029
    %v5675 = vmul.f32 %v5670, %v2030
    %v5676 = vmul.f32 %v5670, %v2031
    %v5677 = vmul.f32 %v5670, %v2032
    %v5678 = vmul.f32 %v5670, %v2033
    %v5679 = vmul.f32 %v5670, %v2034
    %v5680 = vmul.f32 %v5670, %v2035
    %v5681 = vmul.f32 %v5670, %v2036
    %v5682 = vmul.f32 %v5670, %v2037
    %v5683 = vstv %s5667
    %v5684 = vmul.f32 %v5683, %v2065
    %v5685 = vmul.f32 %v5683, %v2066
    %v5686 = vmul.f32 %v5683, %v2067
    %v5687 = vmul.f32 %v5683, %v2068
    %v5688 = vmul.f32 %v5683, %v2069
    %v5689 = vmul.f32 %v5683, %v2070
    %v5690 = vmul.f32 %v5683, %v2071
    %v5691 = vmul.f32 %v5683, %v2072
    %v5692 = vmul.f32 %v5683, %v2073
    %v5693 = vmul.f32 %v5683, %v2074
    %v5694 = vmul.f32 %v5683, %v2075
    %v5695 = vmul.f32 %v5683, %v2076
    %v5696 = vadd.f32 %v5671, %v5684
    %v5697 = vadd.f32 %v5672, %v5685
    %v5698 = vadd.f32 %v5673, %v5686
    %v5699 = vadd.f32 %v5674, %v5687
    %v5700 = vadd.f32 %v5675, %v5688
    %v5701 = vadd.f32 %v5676, %v5689
    %v5702 = vadd.f32 %v5677, %v5690
    %v5703 = vadd.f32 %v5678, %v5691
    %v5704 = vadd.f32 %v5679, %v5692
    %v5705 = vadd.f32 %v5680, %v5693
    %v5706 = vadd.f32 %v5681, %v5694
    %v5707 = vadd.f32 %v5682, %v5695
    %v5708 = vstv %s5668
    %v5709 = vmul.f32 %v5708, %v2027
    %v5710 = vmul.f32 %v5708, %v2028
    %v5711 = vmul.f32 %v5708, %v2029
    %v5712 = vmul.f32 %v5708, %v2030
    %v5713 = vmul.f32 %v5708, %v2031
    %v5714 = vmul.f32 %v5708, %v2032
    %v5715 = vmul.f32 %v5708, %v2033
    %v5716 = vmul.f32 %v5708, %v2034
    %v5717 = vmul.f32 %v5708, %v2035
    %v5718 = vmul.f32 %v5708, %v2036
    %v5719 = vmul.f32 %v5708, %v2037
    %v5720 = vmul.f32 %v5708, %v2038
    %v5721 = vadd.f32 %v5696, %v5709
    %v5722 = vadd.f32 %v5697, %v5710
    %v5723 = vadd.f32 %v5698, %v5711
    %v5724 = vadd.f32 %v5699, %v5712
    %v5725 = vadd.f32 %v5700, %v5713
    %v5726 = vadd.f32 %v5701, %v5714
    %v5727 = vadd.f32 %v5702, %v5715
    %v5728 = vadd.f32 %v5703, %v5716
    %v5729 = vadd.f32 %v5704, %v5717
    %v5730 = vadd.f32 %v5705, %v5718
    %v5731 = vadd.f32 %v5706, %v5719
    %v5732 = vadd.f32 %v5707, %v5720
    %v5733 = vstv %s5669
    %v5734 = vmul.f32 %v5733, %v2066
    %v5735 = vmul.f32 %v5733, %v2067
    %v5736 = vmul.f32 %v5733, %v2068
    %v5737 = vmul.f32 %v5733, %v2069
    %v5738 = vmul.f32 %v5733, %v2070
    %v5739 = vmul.f32 %v5733, %v2071
    %v5740 = vmul.f32 %v5733, %v2072
    %v5741 = vmul.f32 %v5733, %v2073
    %v5742 = vmul.f32 %v5733, %v2074
    %v5743 = vmul.f32 %v5733, %v2075
    %v5744 = vmul.f32 %v5733, %v2076
    %v5745 = vmul.f32 %v5733, %v2077
    %v5746 = vadd.f32 %v5721, %v5734
    %v5747 = vadd.f32 %v5722, %v5735
    %v5748 = vadd.f32 %v5723, %v5736
    %v5749 = vadd.f32 %v5724, %v5737
    %v5750 = vadd.f32 %v5725, %v5738
    %v5751 = vadd.f32 %v5726, %v5739
    %v5752 = vadd.f32 %v5727, %v5740
    %v5753 = vadd.f32 %v5728, %v5741
    %v5754 = vadd.f32 %v5729, %v5742
    %v5755 = vadd.f32 %v5730, %v5743
    %v5756 = vadd.f32 %v5731, %v5744
    %v5757 = vadd.f32 %v5732, %v5745
    %v5758 = vmul.f32 %v5670, %v2065
    %v5759 = vmul.f32 %v5670, %v2066
    %v5760 = vmul.f32 %v5670, %v2067
    %v5761 = vmul.f32 %v5670, %v2068
    %v5762 = vmul.f32 %v5670, %v2069
    %v5763 = vmul.f32 %v5670, %v2070
    %v5764 = vmul.f32 %v5670, %v2071
    %v5765 = vmul.f32 %v5670, %v2072
    %v5766 = vmul.f32 %v5670, %v2073
    %v5767 = vmul.f32 %v5670, %v2074
    %v5768 = vmul.f32 %v5670, %v2075
    %v5769 = vmul.f32 %v5670, %v2076
    %v5770 = vmul.f32 %v5683, %v2026
    %v5771 = vmul.f32 %v5683, %v2027
    %v5772 = vmul.f32 %v5683, %v2028
    %v5773 = vmul.f32 %v5683, %v2029
    %v5774 = vmul.f32 %v5683, %v2030
    %v5775 = vmul.f32 %v5683, %v2031
    %v5776 = vmul.f32 %v5683, %v2032
    %v5777 = vmul.f32 %v5683, %v2033
    %v5778 = vmul.f32 %v5683, %v2034
    %v5779 = vmul.f32 %v5683, %v2035
    %v5780 = vmul.f32 %v5683, %v2036
    %v5781 = vmul.f32 %v5683, %v2037
    %v5794 = vrot.slane %v5770, 1
    %v5795 = vrot.slane %v5771, 1
    %v5796 = vrot.slane %v5772, 1
    %v5797 = vrot.slane %v5773, 1
    %v5798 = vrot.slane %v5774, 1
    %v5799 = vrot.slane %v5775, 1
    %v5800 = vrot.slane %v5776, 1
    %v5801 = vrot.slane %v5777, 1
    %v5802 = vrot.slane %v5778, 1
    %v5803 = vrot.slane %v5779, 1
    %v5804 = vrot.slane %v5780, 1
    %v5805 = vrot.slane %v5781, 1
    %v5818 = vadd.f32 %v5758, %v5794
    %v5819 = vadd.f32 %v5759, %v5795
    %v5820 = vadd.f32 %v5760, %v5796
    %v5821 = vadd.f32 %v5761, %v5797
    %v5822 = vadd.f32 %v5762, %v5798
    %v5823 = vadd.f32 %v5763, %v5799
    %v5824 = vadd.f32 %v5764, %v5800
    %v5825 = vadd.f32 %v5765, %v5801
    %v5826 = vadd.f32 %v5766, %v5802
    %v5827 = vadd.f32 %v5767, %v5803
    %v5828 = vadd.f32 %v5768, %v5804
    %v5829 = vadd.f32 %v5769, %v5805
    %v5830 = vmul.f32 %v5708, %v2066
    %v5831 = vmul.f32 %v5708, %v2067
    %v5832 = vmul.f32 %v5708, %v2068
    %v5833 = vmul.f32 %v5708, %v2069
    %v5834 = vmul.f32 %v5708, %v2070
    %v5835 = vmul.f32 %v5708, %v2071
    %v5836 = vmul.f32 %v5708, %v2072
    %v5837 = vmul.f32 %v5708, %v2073
    %v5838 = vmul.f32 %v5708, %v2074
    %v5839 = vmul.f32 %v5708, %v2075
    %v5840 = vmul.f32 %v5708, %v2076
    %v5841 = vmul.f32 %v5708, %v2077
    %v5842 = vadd.f32 %v5818, %v5830
    %v5843 = vadd.f32 %v5819, %v5831
    %v5844 = vadd.f32 %v5820, %v5832
    %v5845 = vadd.f32 %v5821, %v5833
    %v5846 = vadd.f32 %v5822, %v5834
    %v5847 = vadd.f32 %v5823, %v5835
    %v5848 = vadd.f32 %v5824, %v5836
    %v5849 = vadd.f32 %v5825, %v5837
    %v5850 = vadd.f32 %v5826, %v5838
    %v5851 = vadd.f32 %v5827, %v5839
    %v5852 = vadd.f32 %v5828, %v5840
    %v5853 = vadd.f32 %v5829, %v5841
    %v5854 = vmul.f32 %v5733, %v2027
    %v5855 = vmul.f32 %v5733, %v2028
    %v5856 = vmul.f32 %v5733, %v2029
    %v5857 = vmul.f32 %v5733, %v2030
    %v5858 = vmul.f32 %v5733, %v2031
    %v5859 = vmul.f32 %v5733, %v2032
    %v5860 = vmul.f32 %v5733, %v2033
    %v5861 = vmul.f32 %v5733, %v2034
    %v5862 = vmul.f32 %v5733, %v2035
    %v5863 = vmul.f32 %v5733, %v2036
    %v5864 = vmul.f32 %v5733, %v2037
    %v5865 = vmul.f32 %v5733, %v2038
    %v5878 = vrot.slane %v5854, 1
    %v5879 = vrot.slane %v5855, 1
    %v5880 = vrot.slane %v5856, 1
    %v5881 = vrot.slane %v5857, 1
    %v5882 = vrot.slane %v5858, 1
    %v5883 = vrot.slane %v5859, 1
    %v5884 = vrot.slane %v5860, 1
    %v5885 = vrot.slane %v5861, 1
    %v5886 = vrot.slane %v5862, 1
    %v5887 = vrot.slane %v5863, 1
    %v5888 = vrot.slane %v5864, 1
    %v5889 = vrot.slane %v5865, 1
    %v5902 = vadd.f32 %v5842, %v5878
    %v5903 = vadd.f32 %v5843, %v5879
    %v5904 = vadd.f32 %v5844, %v5880
    %v5905 = vadd.f32 %v5845, %v5881
    %v5906 = vadd.f32 %v5846, %v5882
    %v5907 = vadd.f32 %v5847, %v5883
    %v5908 = vadd.f32 %v5848, %v5884
    %v5909 = vadd.f32 %v5849, %v5885
    %v5910 = vadd.f32 %v5850, %v5886
    %v5911 = vadd.f32 %v5851, %v5887
    %v5912 = vadd.f32 %v5852, %v5888
    %v5913 = vadd.f32 %v5853, %v5889
    %v5914 = vadd.f32 %v5498, %v5746
    %v5915 = vadd.f32 %v5499, %v5747
    %v5916 = vadd.f32 %v5500, %v5748
    %v5917 = vadd.f32 %v5501, %v5749
    %v5918 = vadd.f32 %v5502, %v5750
    %v5919 = vadd.f32 %v5503, %v5751
    %v5920 = vadd.f32 %v5504, %v5752
    %v5921 = vadd.f32 %v5505, %v5753
    %v5922 = vadd.f32 %v5506, %v5754
    %v5923 = vadd.f32 %v5507, %v5755
    %v5924 = vadd.f32 %v5508, %v5756
    %v5925 = vadd.f32 %v5509, %v5757
    %v5926 = vadd.f32 %v5654, %v5902
    %v5927 = vadd.f32 %v5655, %v5903
    %v5928 = vadd.f32 %v5656, %v5904
    %v5929 = vadd.f32 %v5657, %v5905
    %v5930 = vadd.f32 %v5658, %v5906
    %v5931 = vadd.f32 %v5659, %v5907
    %v5932 = vadd.f32 %v5660, %v5908
    %v5933 = vadd.f32 %v5661, %v5909
    %v5934 = vadd.f32 %v5662, %v5910
    %v5935 = vadd.f32 %v5663, %v5911
    %v5936 = vadd.f32 %v5664, %v5912
    %v5937 = vadd.f32 %v5665, %v5913
    %s5938 = sld [smem:[#allocation6 + $0x188]]
    %s5939 = sld [smem:[#allocation6 + $0x189]]
    %s5940 = sld [smem:[#allocation6 + $0x18a]]
    %s5941 = sld [smem:[#allocation6 + $0x18b]]
    %v5942 = vstv %s5938
    %v5943 = vmul.f32 %v5942, %v2894
    %v5944 = vmul.f32 %v5942, %v2895
    %v5945 = vmul.f32 %v5942, %v2896
    %v5946 = vmul.f32 %v5942, %v2897
    %v5947 = vmul.f32 %v5942, %v2898
    %v5948 = vmul.f32 %v5942, %v2899
    %v5949 = vmul.f32 %v5942, %v2900
    %v5950 = vmul.f32 %v5942, %v2901
    %v5951 = vmul.f32 %v5942, %v2902
    %v5952 = vmul.f32 %v5942, %v2903
    %v5953 = vmul.f32 %v5942, %v2904
    %v5954 = vmul.f32 %v5942, %v2905
    %v5955 = vstv %s5939
    %v5956 = vmul.f32 %v5955, %v2933
    %v5957 = vmul.f32 %v5955, %v2934
    %v5958 = vmul.f32 %v5955, %v2935
    %v5959 = vmul.f32 %v5955, %v2936
    %v5960 = vmul.f32 %v5955, %v2937
    %v5961 = vmul.f32 %v5955, %v2938
    %v5962 = vmul.f32 %v5955, %v2939
    %v5963 = vmul.f32 %v5955, %v2940
    %v5964 = vmul.f32 %v5955, %v2941
    %v5965 = vmul.f32 %v5955, %v2942
    %v5966 = vmul.f32 %v5955, %v2943
    %v5967 = vmul.f32 %v5955, %v2944
    %v5968 = vadd.f32 %v5943, %v5956
    %v5969 = vadd.f32 %v5944, %v5957
    %v5970 = vadd.f32 %v5945, %v5958
    %v5971 = vadd.f32 %v5946, %v5959
    %v5972 = vadd.f32 %v5947, %v5960
    %v5973 = vadd.f32 %v5948, %v5961
    %v5974 = vadd.f32 %v5949, %v5962
    %v5975 = vadd.f32 %v5950, %v5963
    %v5976 = vadd.f32 %v5951, %v5964
    %v5977 = vadd.f32 %v5952, %v5965
    %v5978 = vadd.f32 %v5953, %v5966
    %v5979 = vadd.f32 %v5954, %v5967
    %v5980 = vstv %s5940
    %v5981 = vmul.f32 %v5980, %v2895
    %v5982 = vmul.f32 %v5980, %v2896
    %v5983 = vmul.f32 %v5980, %v2897
    %v5984 = vmul.f32 %v5980, %v2898
    %v5985 = vmul.f32 %v5980, %v2899
    %v5986 = vmul.f32 %v5980, %v2900
    %v5987 = vmul.f32 %v5980, %v2901
    %v5988 = vmul.f32 %v5980, %v2902
    %v5989 = vmul.f32 %v5980, %v2903
    %v5990 = vmul.f32 %v5980, %v2904
    %v5991 = vmul.f32 %v5980, %v2905
    %v5992 = vmul.f32 %v5980, %v2906
    %v5993 = vadd.f32 %v5968, %v5981
    %v5994 = vadd.f32 %v5969, %v5982
    %v5995 = vadd.f32 %v5970, %v5983
    %v5996 = vadd.f32 %v5971, %v5984
    %v5997 = vadd.f32 %v5972, %v5985
    %v5998 = vadd.f32 %v5973, %v5986
    %v5999 = vadd.f32 %v5974, %v5987
    %v6000 = vadd.f32 %v5975, %v5988
    %v6001 = vadd.f32 %v5976, %v5989
    %v6002 = vadd.f32 %v5977, %v5990
    %v6003 = vadd.f32 %v5978, %v5991
    %v6004 = vadd.f32 %v5979, %v5992
    %v6005 = vstv %s5941
    %v6006 = vmul.f32 %v6005, %v2934
    %v6007 = vmul.f32 %v6005, %v2935
    %v6008 = vmul.f32 %v6005, %v2936
    %v6009 = vmul.f32 %v6005, %v2937
    %v6010 = vmul.f32 %v6005, %v2938
    %v6011 = vmul.f32 %v6005, %v2939
    %v6012 = vmul.f32 %v6005, %v2940
    %v6013 = vmul.f32 %v6005, %v2941
    %v6014 = vmul.f32 %v6005, %v2942
    %v6015 = vmul.f32 %v6005, %v2943
    %v6016 = vmul.f32 %v6005, %v2944
    %v6017 = vmul.f32 %v6005, %v2945
    %v6018 = vadd.f32 %v5993, %v6006
    %v6019 = vadd.f32 %v5994, %v6007
    %v6020 = vadd.f32 %v5995, %v6008
    %v6021 = vadd.f32 %v5996, %v6009
    %v6022 = vadd.f32 %v5997, %v6010
    %v6023 = vadd.f32 %v5998, %v6011
    %v6024 = vadd.f32 %v5999, %v6012
    %v6025 = vadd.f32 %v6000, %v6013
    %v6026 = vadd.f32 %v6001, %v6014
    %v6027 = vadd.f32 %v6002, %v6015
    %v6028 = vadd.f32 %v6003, %v6016
    %v6029 = vadd.f32 %v6004, %v6017
    %v6030 = vmul.f32 %v5942, %v2933
    %v6031 = vmul.f32 %v5942, %v2934
    %v6032 = vmul.f32 %v5942, %v2935
    %v6033 = vmul.f32 %v5942, %v2936
    %v6034 = vmul.f32 %v5942, %v2937
    %v6035 = vmul.f32 %v5942, %v2938
    %v6036 = vmul.f32 %v5942, %v2939
    %v6037 = vmul.f32 %v5942, %v2940
    %v6038 = vmul.f32 %v5942, %v2941
    %v6039 = vmul.f32 %v5942, %v2942
    %v6040 = vmul.f32 %v5942, %v2943
    %v6041 = vmul.f32 %v5942, %v2944
    %v6042 = vmul.f32 %v5955, %v2894
    %v6043 = vmul.f32 %v5955, %v2895
    %v6044 = vmul.f32 %v5955, %v2896
    %v6045 = vmul.f32 %v5955, %v2897
    %v6046 = vmul.f32 %v5955, %v2898
    %v6047 = vmul.f32 %v5955, %v2899
    %v6048 = vmul.f32 %v5955, %v2900
    %v6049 = vmul.f32 %v5955, %v2901
    %v6050 = vmul.f32 %v5955, %v2902
    %v6051 = vmul.f32 %v5955, %v2903
    %v6052 = vmul.f32 %v5955, %v2904
    %v6053 = vmul.f32 %v5955, %v2905
    %v6066 = vrot.slane %v6042, 1
    %v6067 = vrot.slane %v6043, 1
    %v6068 = vrot.slane %v6044, 1
    %v6069 = vrot.slane %v6045, 1
    %v6070 = vrot.slane %v6046, 1
    %v6071 = vrot.slane %v6047, 1
    %v6072 = vrot.slane %v6048, 1
    %v6073 = vrot.slane %v6049, 1
    %v6074 = vrot.slane %v6050, 1
    %v6075 = vrot.slane %v6051, 1
    %v6076 = vrot.slane %v6052, 1
    %v6077 = vrot.slane %v6053, 1
    %v6090 = vadd.f32 %v6030, %v6066
    %v6091 = vadd.f32 %v6031, %v6067
    %v6092 = vadd.f32 %v6032, %v6068
    %v6093 = vadd.f32 %v6033, %v6069
    %v6094 = vadd.f32 %v6034, %v6070
    %v6095 = vadd.f32 %v6035, %v6071
    %v6096 = vadd.f32 %v6036, %v6072
    %v6097 = vadd.f32 %v6037, %v6073
    %v6098 = vadd.f32 %v6038, %v6074
    %v6099 = vadd.f32 %v6039, %v6075
    %v6100 = vadd.f32 %v6040, %v6076
    %v6101 = vadd.f32 %v6041, %v6077
    %v6102 = vmul.f32 %v5980, %v2934
    %v6103 = vmul.f32 %v5980, %v2935
    %v6104 = vmul.f32 %v5980, %v2936
    %v6105 = vmul.f32 %v5980, %v2937
    %v6106 = vmul.f32 %v5980, %v2938
    %v6107 = vmul.f32 %v5980, %v2939
    %v6108 = vmul.f32 %v5980, %v2940
    %v6109 = vmul.f32 %v5980, %v2941
    %v6110 = vmul.f32 %v5980, %v2942
    %v6111 = vmul.f32 %v5980, %v2943
    %v6112 = vmul.f32 %v5980, %v2944
    %v6113 = vmul.f32 %v5980, %v2945
    %v6114 = vadd.f32 %v6090, %v6102
    %v6115 = vadd.f32 %v6091, %v6103
    %v6116 = vadd.f32 %v6092, %v6104
    %v6117 = vadd.f32 %v6093, %v6105
    %v6118 = vadd.f32 %v6094, %v6106
    %v6119 = vadd.f32 %v6095, %v6107
    %v6120 = vadd.f32 %v6096, %v6108
    %v6121 = vadd.f32 %v6097, %v6109
    %v6122 = vadd.f32 %v6098, %v6110
    %v6123 = vadd.f32 %v6099, %v6111
    %v6124 = vadd.f32 %v6100, %v6112
    %v6125 = vadd.f32 %v6101, %v6113
    %v6126 = vmul.f32 %v6005, %v2895
    %v6127 = vmul.f32 %v6005, %v2896
    %v6128 = vmul.f32 %v6005, %v2897
    %v6129 = vmul.f32 %v6005, %v2898
    %v6130 = vmul.f32 %v6005, %v2899
    %v6131 = vmul.f32 %v6005, %v2900
    %v6132 = vmul.f32 %v6005, %v2901
    %v6133 = vmul.f32 %v6005, %v2902
    %v6134 = vmul.f32 %v6005, %v2903
    %v6135 = vmul.f32 %v6005, %v2904
    %v6136 = vmul.f32 %v6005, %v2905
    %v6137 = vmul.f32 %v6005, %v2906
    %v6150 = vrot.slane %v6126, 1
    %v6151 = vrot.slane %v6127, 1
    %v6152 = vrot.slane %v6128, 1
    %v6153 = vrot.slane %v6129, 1
    %v6154 = vrot.slane %v6130, 1
    %v6155 = vrot.slane %v6131, 1
    %v6156 = vrot.slane %v6132, 1
    %v6157 = vrot.slane %v6133, 1
    %v6158 = vrot.slane %v6134, 1
    %v6159 = vrot.slane %v6135, 1
    %v6160 = vrot.slane %v6136, 1
    %v6161 = vrot.slane %v6137, 1
    %v6174 = vadd.f32 %v6114, %v6150
    %v6175 = vadd.f32 %v6115, %v6151
    %v6176 = vadd.f32 %v6116, %v6152
    %v6177 = vadd.f32 %v6117, %v6153
    %v6178 = vadd.f32 %v6118, %v6154
    %v6179 = vadd.f32 %v6119, %v6155
    %v6180 = vadd.f32 %v6120, %v6156
    %v6181 = vadd.f32 %v6121, %v6157
    %v6182 = vadd.f32 %v6122, %v6158
    %v6183 = vadd.f32 %v6123, %v6159
    %v6184 = vadd.f32 %v6124, %v6160
    %v6185 = vadd.f32 %v6125, %v6161
    %v6186 = vadd.f32 %v5914, %v6018
    %v6187 = vadd.f32 %v5915, %v6019
    %v6188 = vadd.f32 %v5916, %v6020
    %v6189 = vadd.f32 %v5917, %v6021
    %v6190 = vadd.f32 %v5918, %v6022
    %v6191 = vadd.f32 %v5919, %v6023
    %v6192 = vadd.f32 %v5920, %v6024
    %v6193 = vadd.f32 %v5921, %v6025
    %v6194 = vadd.f32 %v5922, %v6026
    %v6195 = vadd.f32 %v5923, %v6027
    %v6196 = vadd.f32 %v5924, %v6028
    %v6197 = vadd.f32 %v5925, %v6029
    %v6198 = vadd.f32 %v5926, %v6174
    %v6199 = vadd.f32 %v5927, %v6175
    %v6200 = vadd.f32 %v5928, %v6176
    %v6201 = vadd.f32 %v5929, %v6177
    %v6202 = vadd.f32 %v5930, %v6178
    %v6203 = vadd.f32 %v5931, %v6179
    %v6204 = vadd.f32 %v5932, %v6180
    %v6205 = vadd.f32 %v5933, %v6181
    %v6206 = vadd.f32 %v5934, %v6182
    %v6207 = vadd.f32 %v5935, %v6183
    %v6208 = vadd.f32 %v5936, %v6184
    %v6209 = vadd.f32 %v5937, %v6185
    %v6210 = vmax.f32 %v6186, %v6198
    %v6211 = vmax.f32 %v6187, %v6199
    %v6212 = vmax.f32 %v6188, %v6200
    %v6213 = vmax.f32 %v6189, %v6201
    %v6214 = vmax.f32 %v6190, %v6202
    %v6215 = vmax.f32 %v6191, %v6203
    %v6216 = vmax.f32 %v6192, %v6204
    %v6217 = vmax.f32 %v6193, %v6205
    %v6218 = vmax.f32 %v6194, %v6206
    %v6219 = vmax.f32 %v6195, %v6207
    %v6220 = vmax.f32 %v6196, %v6208
    %v6221 = vmax.f32 %v6197, %v6209
    %v6222 = vmax.f32 %v6210, %v6211
    %v6223 = vmax.f32 %v6212, %v6213
    %v6224 = vmax.f32 %v6214, %v6215
    %v6225 = vmax.f32 %v6216, %v6217
    %v6226 = vmax.f32 %v6218, %v6219
    %v6227 = vmax.f32 %v6220, %v6221
    %s6228 = sld [smem:[#allocation7 + $0x3]]
    %v6229 = vstv %s6228
    %v6230 = vadd.f32 %v6222, %v6229
    %v6231 = vadd.f32 %v6223, %v6229
    %v6232 = vadd.f32 %v6224, %v6229
    %v6233 = vadd.f32 %v6225, %v6229
    %v6234 = vadd.f32 %v6226, %v6229
    %v6235 = vadd.f32 %v6227, %v6229
    %v6236 = vmax.f32 %v6230, 0.0
    %v6237 = vmax.f32 %v6231, 0.0
    %v6238 = vmax.f32 %v6232, 0.0
    %v6239 = vmax.f32 %v6233, 0.0
    %v6240 = vmax.f32 %v6234, 0.0
    %v6241 = vmax.f32 %v6235, 0.0
    %s6242 = sld [smem:[#allocation6 + $0x200]]
    %s6243 = sld [smem:[#allocation6 + $0x201]]
    %s6244 = sld [smem:[#allocation6 + $0x202]]
    %s6245 = sld [smem:[#allocation6 + $0x203]]
    %v6246 = vstv %s6242
    %v6247 = vmul.f32 %v6246, %v1158
    %v6248 = vmul.f32 %v6246, %v1159
    %v6249 = vmul.f32 %v6246, %v1160
    %v6250 = vmul.f32 %v6246, %v1161
    %v6251 = vmul.f32 %v6246, %v1162
    %v6252 = vmul.f32 %v6246, %v1163
    %v6253 = vmul.f32 %v6246, %v1164
    %v6254 = vmul.f32 %v6246, %v1165
    %v6255 = vmul.f32 %v6246, %v1166
    %v6256 = vmul.f32 %v6246, %v1167
    %v6257 = vmul.f32 %v6246, %v1168
    %v6258 = vmul.f32 %v6246, %v1169
    %v6259 = vstv %s6243
    %v6260 = vmul.f32 %v6259, %v1197
    %v6261 = vmul.f32 %v6259, %v1198
    %v6262 = vmul.f32 %v6259, %v1199
    %v6263 = vmul.f32 %v6259, %v1200
    %v6264 = vmul.f32 %v6259, %v1201
    %v6265 = vmul.f32 %v6259, %v1202
    %v6266 = vmul.f32 %v6259, %v1203
    %v6267 = vmul.f32 %v6259, %v1204
    %v6268 = vmul.f32 %v6259, %v1205
    %v6269 = vmul.f32 %v6259, %v1206
    %v6270 = vmul.f32 %v6259, %v1207
    %v6271 = vmul.f32 %v6259, %v1208
    %v6272 = vadd.f32 %v6247, %v6260
    %v6273 = vadd.f32 %v6248, %v6261
    %v6274 = vadd.f32 %v6249, %v6262
    %v6275 = vadd.f32 %v6250, %v6263
    %v6276 = vadd.f32 %v6251, %v6264
    %v6277 = vadd.f32 %v6252, %v6265
    %v6278 = vadd.f32 %v6253, %v6266
    %v6279 = vadd.f32 %v6254, %v6267
    %v6280 = vadd.f32 %v6255, %v6268
    %v6281 = vadd.f32 %v6256, %v6269
    %v6282 = vadd.f32 %v6257, %v6270
    %v6283 = vadd.f32 %v6258, %v6271
    %v6284 = vstv %s6244
    %v6285 = vmul.f32 %v6284, %v1159
    %v6286 = vmul.f32 %v6284, %v1160
    %v6287 = vmul.f32 %v6284, %v1161
    %v6288 = vmul.f32 %v6284, %v1162
    %v6289 = vmul.f32 %v6284, %v1163
    %v6290 = vmul.f32 %v6284, %v1164
    %v6291 = vmul.f32 %v6284, %v1165
    %v6292 = vmul.f32 %v6284, %v1166
    %v6293 = vmul.f32 %v6284, %v1167
    %v6294 = vmul.f32 %v6284, %v1168
    %v6295 = vmul.f32 %v6284, %v1169
    %v6296 = vmul.f32 %v6284, %v1170
    %v6297 = vadd.f32 %v6272, %v6285
    %v6298 = vadd.f32 %v6273, %v6286
    %v6299 = vadd.f32 %v6274, %v6287
    %v6300 = vadd.f32 %v6275, %v6288
    %v6301 = vadd.f32 %v6276, %v6289
    %v6302 = vadd.f32 %v6277, %v6290
    %v6303 = vadd.f32 %v6278, %v6291
    %v6304 = vadd.f32 %v6279, %v6292
    %v6305 = vadd.f32 %v6280, %v6293
    %v6306 = vadd.f32 %v6281, %v6294
    %v6307 = vadd.f32 %v6282, %v6295
    %v6308 = vadd.f32 %v6283, %v6296
    %v6309 = vstv %s6245
    %v6310 = vmul.f32 %v6309, %v1198
    %v6311 = vmul.f32 %v6309, %v1199
    %v6312 = vmul.f32 %v6309, %v1200
    %v6313 = vmul.f32 %v6309, %v1201
    %v6314 = vmul.f32 %v6309, %v1202
    %v6315 = vmul.f32 %v6309, %v1203
    %v6316 = vmul.f32 %v6309, %v1204
    %v6317 = vmul.f32 %v6309, %v1205
    %v6318 = vmul.f32 %v6309, %v1206
    %v6319 = vmul.f32 %v6309, %v1207
    %v6320 = vmul.f32 %v6309, %v1208
    %v6321 = vmul.f32 %v6309, %v1209
    %v6322 = vadd.f32 %v6297, %v6310
    %v6323 = vadd.f32 %v6298, %v6311
    %v6324 = vadd.f32 %v6299, %v6312
    %v6325 = vadd.f32 %v6300, %v6313
    %v6326 = vadd.f32 %v6301, %v6314
    %v6327 = vadd.f32 %v6302, %v6315
    %v6328 = vadd.f32 %v6303, %v6316
    %v6329 = vadd.f32 %v6304, %v6317
    %v6330 = vadd.f32 %v6305, %v6318
    %v6331 = vadd.f32 %v6306, %v6319
    %v6332 = vadd.f32 %v6307, %v6320
    %v6333 = vadd.f32 %v6308, %v6321
    %v6334 = vmul.f32 %v6246, %v1197
    %v6335 = vmul.f32 %v6246, %v1198
    %v6336 = vmul.f32 %v6246, %v1199
    %v6337 = vmul.f32 %v6246, %v1200
    %v6338 = vmul.f32 %v6246, %v1201
    %v6339 = vmul.f32 %v6246, %v1202
    %v6340 = vmul.f32 %v6246, %v1203
    %v6341 = vmul.f32 %v6246, %v1204
    %v6342 = vmul.f32 %v6246, %v1205
    %v6343 = vmul.f32 %v6246, %v1206
    %v6344 = vmul.f32 %v6246, %v1207
    %v6345 = vmul.f32 %v6246, %v1208
    %v6346 = vmul.f32 %v6259, %v1158
    %v6347 = vmul.f32 %v6259, %v1159
    %v6348 = vmul.f32 %v6259, %v1160
    %v6349 = vmul.f32 %v6259, %v1161
    %v6350 = vmul.f32 %v6259, %v1162
    %v6351 = vmul.f32 %v6259, %v1163
    %v6352 = vmul.f32 %v6259, %v1164
    %v6353 = vmul.f32 %v6259, %v1165
    %v6354 = vmul.f32 %v6259, %v1166
    %v6355 = vmul.f32 %v6259, %v1167
    %v6356 = vmul.f32 %v6259, %v1168
    %v6357 = vmul.f32 %v6259, %v1169
    %v6370 = vrot.slane %v6346, 1
    %v6371 = vrot.slane %v6347, 1
    %v6372 = vrot.slane %v6348, 1
    %v6373 = vrot.slane %v6349, 1
    %v6374 = vrot.slane %v6350, 1
    %v6375 = vrot.slane %v6351, 1
    %v6376 = vrot.slane %v6352, 1
    %v6377 = vrot.slane %v6353, 1
    %v6378 = vrot.slane %v6354, 1
    %v6379 = vrot.slane %v6355, 1
    %v6380 = vrot.slane %v6356, 1
    %v6381 = vrot.slane %v6357, 1
    %v6394 = vadd.f32 %v6334, %v6370
    %v6395 = vadd.f32 %v6335, %v6371
    %v6396 = vadd.f32 %v6336, %v6372
    %v6397 = vadd.f32 %v6337, %v6373
    %v6398 = vadd.f32 %v6338, %v6374
    %v6399 = vadd.f32 %v6339, %v6375
    %v6400 = vadd.f32 %v6340, %v6376
    %v6401 = vadd.f32 %v6341, %v6377
    %v6402 = vadd.f32 %v6342, %v6378
    %v6403 = vadd.f32 %v6343, %v6379
    %v6404 = vadd.f32 %v6344, %v6380
    %v6405 = vadd.f32 %v6345, %v6381
    %v6406 = vmul.f32 %v6284, %v1198
    %v6407 = vmul.f32 %v6284, %v1199
    %v6408 = vmul.f32 %v6284, %v1200
    %v6409 = vmul.f32 %v6284, %v1201
    %v6410 = vmul.f32 %v6284, %v1202
    %v6411 = vmul.f32 %v6284, %v1203
    %v6412 = vmul.f32 %v6284, %v1204
    %v6413 = vmul.f32 %v6284, %v1205
    %v6414 = vmul.f32 %v6284, %v1206
    %v6415 = vmul.f32 %v6284, %v1207
    %v6416 = vmul.f32 %v6284, %v1208
    %v6417 = vmul.f32 %v6284, %v1209
    %v6418 = vadd.f32 %v6394, %v6406
    %v6419 = vadd.f32 %v6395, %v6407
    %v6420 = vadd.f32 %v6396, %v6408
    %v6421 = vadd.f32 %v6397, %v6409
    %v6422 = vadd.f32 %v6398, %v6410
    %v6423 = vadd.f32 %v6399, %v6411
    %v6424 = vadd.f32 %v6400, %v6412
    %v6425 = vadd.f32 %v6401, %v6413
    %v6426 = vadd.f32 %v6402, %v6414
    %v6427 = vadd.f32 %v6403, %v6415
    %v6428 = vadd.f32 %v6404, %v6416
    %v6429 = vadd.f32 %v6405, %v6417
    %v6430 = vmul.f32 %v6309, %v1159
    %v6431 = vmul.f32 %v6309, %v1160
    %v6432 = vmul.f32 %v6309, %v1161
    %v6433 = vmul.f32 %v6309, %v1162
    %v6434 = vmul.f32 %v6309, %v1163
    %v6435 = vmul.f32 %v6309, %v1164
    %v6436 = vmul.f32 %v6309, %v1165
    %v6437 = vmul.f32 %v6309, %v1166
    %v6438 = vmul.f32 %v6309, %v1167
    %v6439 = vmul.f32 %v6309, %v1168
    %v6440 = vmul.f32 %v6309, %v1169
    %v6441 = vmul.f32 %v6309, %v1170
    %v6454 = vrot.slane %v6430, 1
    %v6455 = vrot.slane %v6431, 1
    %v6456 = vrot.slane %v6432, 1
    %v6457 = vrot.slane %v6433, 1
    %v6458 = vrot.slane %v6434, 1
    %v6459 = vrot.slane %v6435, 1
    %v6460 = vrot.slane %v6436, 1
    %v6461 = vrot.slane %v6437, 1
    %v6462 = vrot.slane %v6438, 1
    %v6463 = vrot.slane %v6439, 1
    %v6464 = vrot.slane %v6440, 1
    %v6465 = vrot.slane %v6441, 1
    %v6478 = vadd.f32 %v6418, %v6454
    %v6479 = vadd.f32 %v6419, %v6455
    %v6480 = vadd.f32 %v6420, %v6456
    %v6481 = vadd.f32 %v6421, %v6457
    %v6482 = vadd.f32 %v6422, %v6458
    %v6483 = vadd.f32 %v6423, %v6459
    %v6484 = vadd.f32 %v6424, %v6460
    %v6485 = vadd.f32 %v6425, %v6461
    %v6486 = vadd.f32 %v6426, %v6462
    %v6487 = vadd.f32 %v6427, %v6463
    %v6488 = vadd.f32 %v6428, %v6464
    %v6489 = vadd.f32 %v6429, %v6465
    %s6490 = sld [smem:[#allocation6 + $0x204]]
    %s6491 = sld [smem:[#allocation6 + $0x205]]
    %s6492 = sld [smem:[#allocation6 + $0x206]]
    %s6493 = sld [smem:[#allocation6 + $0x207]]
    %v6494 = vstv %s6490
    %v6495 = vmul.f32 %v6494, %v2026
    %v6496 = vmul.f32 %v6494, %v2027
    %v6497 = vmul.f32 %v6494, %v2028
    %v6498 = vmul.f32 %v6494, %v2029
    %v6499 = vmul.f32 %v6494, %v2030
    %v6500 = vmul.f32 %v6494, %v2031
    %v6501 = vmul.f32 %v6494, %v2032
    %v6502 = vmul.f32 %v6494, %v2033
    %v6503 = vmul.f32 %v6494, %v2034
    %v6504 = vmul.f32 %v6494, %v2035
    %v6505 = vmul.f32 %v6494, %v2036
    %v6506 = vmul.f32 %v6494, %v2037
    %v6507 = vstv %s6491
    %v6508 = vmul.f32 %v6507, %v2065
    %v6509 = vmul.f32 %v6507, %v2066
    %v6510 = vmul.f32 %v6507, %v2067
    %v6511 = vmul.f32 %v6507, %v2068
    %v6512 = vmul.f32 %v6507, %v2069
    %v6513 = vmul.f32 %v6507, %v2070
    %v6514 = vmul.f32 %v6507, %v2071
    %v6515 = vmul.f32 %v6507, %v2072
    %v6516 = vmul.f32 %v6507, %v2073
    %v6517 = vmul.f32 %v6507, %v2074
    %v6518 = vmul.f32 %v6507, %v2075
    %v6519 = vmul.f32 %v6507, %v2076
    %v6520 = vadd.f32 %v6495, %v6508
    %v6521 = vadd.f32 %v6496, %v6509
    %v6522 = vadd.f32 %v6497, %v6510
    %v6523 = vadd.f32 %v6498, %v6511
    %v6524 = vadd.f32 %v6499, %v6512
    %v6525 = vadd.f32 %v6500, %v6513
    %v6526 = vadd.f32 %v6501, %v6514
    %v6527 = vadd.f32 %v6502, %v6515
    %v6528 = vadd.f32 %v6503, %v6516
    %v6529 = vadd.f32 %v6504, %v6517
    %v6530 = vadd.f32 %v6505, %v6518
    %v6531 = vadd.f32 %v6506, %v6519
    %v6532 = vstv %s6492
    %v6533 = vmul.f32 %v6532, %v2027
    %v6534 = vmul.f32 %v6532, %v2028
    %v6535 = vmul.f32 %v6532, %v2029
    %v6536 = vmul.f32 %v6532, %v2030
    %v6537 = vmul.f32 %v6532, %v2031
    %v6538 = vmul.f32 %v6532, %v2032
    %v6539 = vmul.f32 %v6532, %v2033
    %v6540 = vmul.f32 %v6532, %v2034
    %v6541 = vmul.f32 %v6532, %v2035
    %v6542 = vmul.f32 %v6532, %v2036
    %v6543 = vmul.f32 %v6532, %v2037
    %v6544 = vmul.f32 %v6532, %v2038
    %v6545 = vadd.f32 %v6520, %v6533
    %v6546 = vadd.f32 %v6521, %v6534
    %v6547 = vadd.f32 %v6522, %v6535
    %v6548 = vadd.f32 %v6523, %v6536
    %v6549 = vadd.f32 %v6524, %v6537
    %v6550 = vadd.f32 %v6525, %v6538
    %v6551 = vadd.f32 %v6526, %v6539
    %v6552 = vadd.f32 %v6527, %v6540
    %v6553 = vadd.f32 %v6528, %v6541
    %v6554 = vadd.f32 %v6529, %v6542
    %v6555 = vadd.f32 %v6530, %v6543
    %v6556 = vadd.f32 %v6531, %v6544
    %v6557 = vstv %s6493
    %v6558 = vmul.f32 %v6557, %v2066
    %v6559 = vmul.f32 %v6557, %v2067
    %v6560 = vmul.f32 %v6557, %v2068
    %v6561 = vmul.f32 %v6557, %v2069
    %v6562 = vmul.f32 %v6557, %v2070
    %v6563 = vmul.f32 %v6557, %v2071
    %v6564 = vmul.f32 %v6557, %v2072
    %v6565 = vmul.f32 %v6557, %v2073
    %v6566 = vmul.f32 %v6557, %v2074
    %v6567 = vmul.f32 %v6557, %v2075
    %v6568 = vmul.f32 %v6557, %v2076
    %v6569 = vmul.f32 %v6557, %v2077
    %v6570 = vadd.f32 %v6545, %v6558
    %v6571 = vadd.f32 %v6546, %v6559
    %v6572 = vadd.f32 %v6547, %v6560
    %v6573 = vadd.f32 %v6548, %v6561
    %v6574 = vadd.f32 %v6549, %v6562
    %v6575 = vadd.f32 %v6550, %v6563
    %v6576 = vadd.f32 %v6551, %v6564
    %v6577 = vadd.f32 %v6552, %v6565
    %v6578 = vadd.f32 %v6553, %v6566
    %v6579 = vadd.f32 %v6554, %v6567
    %v6580 = vadd.f32 %v6555, %v6568
    %v6581 = vadd.f32 %v6556, %v6569
    %v6582 = vmul.f32 %v6494, %v2065
    %v6583 = vmul.f32 %v6494, %v2066
    %v6584 = vmul.f32 %v6494, %v2067
    %v6585 = vmul.f32 %v6494, %v2068
    %v6586 = vmul.f32 %v6494, %v2069
    %v6587 = vmul.f32 %v6494, %v2070
    %v6588 = vmul.f32 %v6494, %v2071
    %v6589 = vmul.f32 %v6494, %v2072
    %v6590 = vmul.f32 %v6494, %v2073
    %v6591 = vmul.f32 %v6494, %v2074
    %v6592 = vmul.f32 %v6494, %v2075
    %v6593 = vmul.f32 %v6494, %v2076
    %v6594 = vmul.f32 %v6507, %v2026
    %v6595 = vmul.f32 %v6507, %v2027
    %v6596 = vmul.f32 %v6507, %v2028
    %v6597 = vmul.f32 %v6507, %v2029
    %v6598 = vmul.f32 %v6507, %v2030
    %v6599 = vmul.f32 %v6507, %v2031
    %v6600 = vmul.f32 %v6507, %v2032
    %v6601 = vmul.f32 %v6507, %v2033
    %v6602 = vmul.f32 %v6507, %v2034
    %v6603 = vmul.f32 %v6507, %v2035
    %v6604 = vmul.f32 %v6507, %v2036
    %v6605 = vmul.f32 %v6507, %v2037
    %v6618 = vrot.slane %v6594, 1
    %v6619 = vrot.slane %v6595, 1
    %v6620 = vrot.slane %v6596, 1
    %v6621 = vrot.slane %v6597, 1
    %v6622 = vrot.slane %v6598, 1
    %v6623 = vrot.slane %v6599, 1
    %v6624 = vrot.slane %v6600, 1
    %v6625 = vrot.slane %v6601, 1
    %v6626 = vrot.slane %v6602, 1
    %v6627 = vrot.slane %v6603, 1
    %v6628 = vrot.slane %v6604, 1
    %v6629 = vrot.slane %v6605, 1
    %v6642 = vadd.f32 %v6582, %v6618
    %v6643 = vadd.f32 %v6583, %v6619
    %v6644 = vadd.f32 %v6584, %v6620
    %v6645 = vadd.f32 %v6585, %v6621
    %v6646 = vadd.f32 %v6586, %v6622
    %v6647 = vadd.f32 %v6587, %v6623
    %v6648 = vadd.f32 %v6588, %v6624
    %v6649 = vadd.f32 %v6589, %v6625
    %v6650 = vadd.f32 %v6590, %v6626
    %v6651 = vadd.f32 %v6591, %v6627
    %v6652 = vadd.f32 %v6592, %v6628
    %v6653 = vadd.f32 %v6593, %v6629
    %v6654 = vmul.f32 %v6532, %v2066
    %v6655 = vmul.f32 %v6532, %v2067
    %v6656 = vmul.f32 %v6532, %v2068
    %v6657 = vmul.f32 %v6532, %v2069
    %v6658 = vmul.f32 %v6532, %v2070
    %v6659 = vmul.f32 %v6532, %v2071
    %v6660 = vmul.f32 %v6532, %v2072
    %v6661 = vmul.f32 %v6532, %v2073
    %v6662 = vmul.f32 %v6532, %v2074
    %v6663 = vmul.f32 %v6532, %v2075
    %v6664 = vmul.f32 %v6532, %v2076
    %v6665 = vmul.f32 %v6532, %v2077
    %v6666 = vadd.f32 %v6642, %v6654
    %v6667 = vadd.f32 %v6643, %v6655
    %v6668 = vadd.f32 %v6644, %v6656
    %v6669 = vadd.f32 %v6645, %v6657
    %v6670 = vadd.f32 %v6646, %v6658
    %v6671 = vadd.f32 %v6647, %v6659
    %v6672 = vadd.f32 %v6648, %v6660
    %v6673 = vadd.f32 %v6649, %v6661
    %v6674 = vadd.f32 %v6650, %v6662
    %v6675 = vadd.f32 %v6651, %v6663
    %v6676 = vadd.f32 %v6652, %v6664
    %v6677 = vadd.f32 %v6653, %v6665
    %v6678 = vmul.f32 %v6557, %v2027
    %v6679 = vmul.f32 %v6557, %v2028
    %v6680 = vmul.f32 %v6557, %v2029
    %v6681 = vmul.f32 %v6557, %v2030
    %v6682 = vmul.f32 %v6557, %v2031
    %v6683 = vmul.f32 %v6557, %v2032
    %v6684 = vmul.f32 %v6557, %v2033
    %v6685 = vmul.f32 %v6557, %v2034
    %v6686 = vmul.f32 %v6557, %v2035
    %v6687 = vmul.f32 %v6557, %v2036
    %v6688 = vmul.f32 %v6557, %v2037
    %v6689 = vmul.f32 %v6557, %v2038
    %v6702 = vrot.slane %v6678, 1
    %v6703 = vrot.slane %v6679, 1
    %v6704 = vrot.slane %v6680, 1
    %v6705 = vrot.slane %v6681, 1
    %v6706 = vrot.slane %v6682, 1
    %v6707 = vrot.slane %v6683, 1
    %v6708 = vrot.slane %v6684, 1
    %v6709 = vrot.slane %v6685, 1
    %v6710 = vrot.slane %v6686, 1
    %v6711 = vrot.slane %v6687, 1
    %v6712 = vrot.slane %v6688, 1
    %v6713 = vrot.slane %v6689, 1
    %v6726 = vadd.f32 %v6666, %v6702
    %v6727 = vadd.f32 %v6667, %v6703
    %v6728 = vadd.f32 %v6668, %v6704
    %v6729 = vadd.f32 %v6669, %v6705
    %v6730 = vadd.f32 %v6670, %v6706
    %v6731 = vadd.f32 %v6671, %v6707
    %v6732 = vadd.f32 %v6672, %v6708
    %v6733 = vadd.f32 %v6673, %v6709
    %v6734 = vadd.f32 %v6674, %v6710
    %v6735 = vadd.f32 %v6675, %v6711
    %v6736 = vadd.f32 %v6676, %v6712
    %v6737 = vadd.f32 %v6677, %v6713
    %v6738 = vadd.f32 %v6322, %v6570
    %v6739 = vadd.f32 %v6323, %v6571
    %v6740 = vadd.f32 %v6324, %v6572
    %v6741 = vadd.f32 %v6325, %v6573
    %v6742 = vadd.f32 %v6326, %v6574
    %v6743 = vadd.f32 %v6327, %v6575
    %v6744 = vadd.f32 %v6328, %v6576
    %v6745 = vadd.f32 %v6329, %v6577
    %v6746 = vadd.f32 %v6330, %v6578
    %v6747 = vadd.f32 %v6331, %v6579
    %v6748 = vadd.f32 %v6332, %v6580
    %v6749 = vadd.f32 %v6333, %v6581
    %v6750 = vadd.f32 %v6478, %v6726
    %v6751 = vadd.f32 %v6479, %v6727
    %v6752 = vadd.f32 %v6480, %v6728
    %v6753 = vadd.f32 %v6481, %v6729
    %v6754 = vadd.f32 %v6482, %v6730
    %v6755 = vadd.f32 %v6483, %v6731
    %v6756 = vadd.f32 %v6484, %v6732
    %v6757 = vadd.f32 %v6485, %v6733
    %v6758 = vadd.f32 %v6486, %v6734
    %v6759 = vadd.f32 %v6487, %v6735
    %v6760 = vadd.f32 %v6488, %v6736
    %v6761 = vadd.f32 %v6489, %v6737
    %s6762 = sld [smem:[#allocation6 + $0x208]]
    %s6763 = sld [smem:[#allocation6 + $0x209]]
    %s6764 = sld [smem:[#allocation6 + $0x20a]]
    %s6765 = sld [smem:[#allocation6 + $0x20b]]
    %v6766 = vstv %s6762
    %v6767 = vmul.f32 %v6766, %v2894
    %v6768 = vmul.f32 %v6766, %v2895
    %v6769 = vmul.f32 %v6766, %v2896
    %v6770 = vmul.f32 %v6766, %v2897
    %v6771 = vmul.f32 %v6766, %v2898
    %v6772 = vmul.f32 %v6766, %v2899
    %v6773 = vmul.f32 %v6766, %v2900
    %v6774 = vmul.f32 %v6766, %v2901
    %v6775 = vmul.f32 %v6766, %v2902
    %v6776 = vmul.f32 %v6766, %v2903
    %v6777 = vmul.f32 %v6766, %v2904
    %v6778 = vmul.f32 %v6766, %v2905
    %v6779 = vstv %s6763
    %v6780 = vmul.f32 %v6779, %v2933
    %v6781 = vmul.f32 %v6779, %v2934
    %v6782 = vmul.f32 %v6779, %v2935
    %v6783 = vmul.f32 %v6779, %v2936
    %v6784 = vmul.f32 %v6779, %v2937
    %v6785 = vmul.f32 %v6779, %v2938
    %v6786 = vmul.f32 %v6779, %v2939
    %v6787 = vmul.f32 %v6779, %v2940
    %v6788 = vmul.f32 %v6779, %v2941
    %v6789 = vmul.f32 %v6779, %v2942
    %v6790 = vmul.f32 %v6779, %v2943
    %v6791 = vmul.f32 %v6779, %v2944
    %v6792 = vadd.f32 %v6767, %v6780
    %v6793 = vadd.f32 %v6768, %v6781
    %v6794 = vadd.f32 %v6769, %v6782
    %v6795 = vadd.f32 %v6770, %v6783
    %v6796 = vadd.f32 %v6771, %v6784
    %v6797 = vadd.f32 %v6772, %v6785
    %v6798 = vadd.f32 %v6773, %v6786
    %v6799 = vadd.f32 %v6774, %v6787
    %v6800 = vadd.f32 %v6775, %v6788
    %v6801 = vadd.f32 %v6776, %v6789
    %v6802 = vadd.f32 %v6777, %v6790
    %v6803 = vadd.f32 %v6778, %v6791
    %v6804 = vstv %s6764
    %v6805 = vmul.f32 %v6804, %v2895
    %v6806 = vmul.f32 %v6804, %v2896
    %v6807 = vmul.f32 %v6804, %v2897
    %v6808 = vmul.f32 %v6804, %v2898
    %v6809 = vmul.f32 %v6804, %v2899
    %v6810 = vmul.f32 %v6804, %v2900
    %v6811 = vmul.f32 %v6804, %v2901
    %v6812 = vmul.f32 %v6804, %v2902
    %v6813 = vmul.f32 %v6804, %v2903
    %v6814 = vmul.f32 %v6804, %v2904
    %v6815 = vmul.f32 %v6804, %v2905
    %v6816 = vmul.f32 %v6804, %v2906
    %v6817 = vadd.f32 %v6792, %v6805
    %v6818 = vadd.f32 %v6793, %v6806
    %v6819 = vadd.f32 %v6794, %v6807
    %v6820 = vadd.f32 %v6795, %v6808
    %v6821 = vadd.f32 %v6796, %v6809
    %v6822 = vadd.f32 %v6797, %v6810
    %v6823 = vadd.f32 %v6798, %v6811
    %v6824 = vadd.f32 %v6799, %v6812
    %v6825 = vadd.f32 %v6800, %v6813
    %v6826 = vadd.f32 %v6801, %v6814
    %v6827 = vadd.f32 %v6802, %v6815
    %v6828 = vadd.f32 %v6803, %v6816
    %v6829 = vstv %s6765
    %v6830 = vmul.f32 %v6829, %v2934
    %v6831 = vmul.f32 %v6829, %v2935
    %v6832 = vmul.f32 %v6829, %v2936
    %v6833 = vmul.f32 %v6829, %v2937
    %v6834 = vmul.f32 %v6829, %v2938
    %v6835 = vmul.f32 %v6829, %v2939
    %v6836 = vmul.f32 %v6829, %v2940
    %v6837 = vmul.f32 %v6829, %v2941
    %v6838 = vmul.f32 %v6829, %v2942
    %v6839 = vmul.f32 %v6829, %v2943
    %v6840 = vmul.f32 %v6829, %v2944
    %v6841 = vmul.f32 %v6829, %v2945
    %v6842 = vadd.f32 %v6817, %v6830
    %v6843 = vadd.f32 %v6818, %v6831
    %v6844 = vadd.f32 %v6819, %v6832
    %v6845 = vadd.f32 %v6820, %v6833
    %v6846 = vadd.f32 %v6821, %v6834
    %v6847 = vadd.f32 %v6822, %v6835
    %v6848 = vadd.f32 %v6823, %v6836
    %v6849 = vadd.f32 %v6824, %v6837
    %v6850 = vadd.f32 %v6825, %v6838
    %v6851 = vadd.f32 %v6826, %v6839
    %v6852 = vadd.f32 %v6827, %v6840
    %v6853 = vadd.f32 %v6828, %v6841
    %v6854 = vmul.f32 %v6766, %v2933
    %v6855 = vmul.f32 %v6766, %v2934
    %v6856 = vmul.f32 %v6766, %v2935
    %v6857 = vmul.f32 %v6766, %v2936
    %v6858 = vmul.f32 %v6766, %v2937
    %v6859 = vmul.f32 %v6766, %v2938
    %v6860 = vmul.f32 %v6766, %v2939
    %v6861 = vmul.f32 %v6766, %v2940
    %v6862 = vmul.f32 %v6766, %v2941
    %v6863 = vmul.f32 %v6766, %v2942
    %v6864 = vmul.f32 %v6766, %v2943
    %v6865 = vmul.f32 %v6766, %v2944
    %v6866 = vmul.f32 %v6779, %v2894
    %v6867 = vmul.f32 %v6779, %v2895
    %v6868 = vmul.f32 %v6779, %v2896
    %v6869 = vmul.f32 %v6779, %v2897
    %v6870 = vmul.f32 %v6779, %v2898
    %v6871 = vmul.f32 %v6779, %v2899
    %v6872 = vmul.f32 %v6779, %v2900
    %v6873 = vmul.f32 %v6779, %v2901
    %v6874 = vmul.f32 %v6779, %v2902
    %v6875 = vmul.f32 %v6779, %v2903
    %v6876 = vmul.f32 %v6779, %v2904
    %v6877 = vmul.f32 %v6779, %v2905
    %v6890 = vrot.slane %v6866, 1
    %v6891 = vrot.slane %v6867, 1
    %v6892 = vrot.slane %v6868, 1
    %v6893 = vrot.slane %v6869, 1
    %v6894 = vrot.slane %v6870, 1
    %v6895 = vrot.slane %v6871, 1
    %v6896 = vrot.slane %v6872, 1
    %v6897 = vrot.slane %v6873, 1
    %v6898 = vrot.slane %v6874, 1
    %v6899 = vrot.slane %v6875, 1
    %v6900 = vrot.slane %v6876, 1
    %v6901 = vrot.slane %v6877, 1
    %v6914 = vadd.f32 %v6854, %v6890
    %v6915 = vadd.f32 %v6855, %v6891
    %v6916 = vadd.f32 %v6856, %v6892
    %v6917 = vadd.f32 %v6857, %v6893
    %v6918 = vadd.f32 %v6858, %v6894
    %v6919 = vadd.f32 %v6859, %v6895
    %v6920 = vadd.f32 %v6860, %v6896
    %v6921 = vadd.f32 %v6861, %v6897
    %v6922 = vadd.f32 %v6862, %v6898
    %v6923 = vadd.f32 %v6863, %v6899
    %v6924 = vadd.f32 %v6864, %v6900
    %v6925 = vadd.f32 %v6865, %v6901
    %v6926 = vmul.f32 %v6804, %v2934
    %v6927 = vmul.f32 %v6804, %v2935
    %v6928 = vmul.f32 %v6804, %v2936
    %v6929 = vmul.f32 %v6804, %v2937
    %v6930 = vmul.f32 %v6804, %v2938
    %v6931 = vmul.f32 %v6804, %v2939
    %v6932 = vmul.f32 %v6804, %v2940
    %v6933 = vmul.f32 %v6804, %v2941
    %v6934 = vmul.f32 %v6804, %v2942
    %v6935 = vmul.f32 %v6804, %v2943
    %v6936 = vmul.f32 %v6804, %v2944
    %v6937 = vmul.f32 %v6804, %v2945
    %v6938 = vadd.f32 %v6914, %v6926
    %v6939 = vadd.f32 %v6915, %v6927
    %v6940 = vadd.f32 %v6916, %v6928
    %v6941 = vadd.f32 %v6917, %v6929
    %v6942 = vadd.f32 %v6918, %v6930
    %v6943 = vadd.f32 %v6919, %v6931
    %v6944 = vadd.f32 %v6920, %v6932
    %v6945 = vadd.f32 %v6921, %v6933
    %v6946 = vadd.f32 %v6922, %v6934
    %v6947 = vadd.f32 %v6923, %v6935
    %v6948 = vadd.f32 %v6924, %v6936
    %v6949 = vadd.f32 %v6925, %v6937
    %v6950 = vmul.f32 %v6829, %v2895
    %v6951 = vmul.f32 %v6829, %v2896
    %v6952 = vmul.f32 %v6829, %v2897
    %v6953 = vmul.f32 %v6829, %v2898
    %v6954 = vmul.f32 %v6829, %v2899
    %v6955 = vmul.f32 %v6829, %v2900
    %v6956 = vmul.f32 %v6829, %v2901
    %v6957 = vmul.f32 %v6829, %v2902
    %v6958 = vmul.f32 %v6829, %v2903
    %v6959 = vmul.f32 %v6829, %v2904
    %v6960 = vmul.f32 %v6829, %v2905
    %v6961 = vmul.f32 %v6829, %v2906
    %v6974 = vrot.slane %v6950, 1
    %v6975 = vrot.slane %v6951, 1
    %v6976 = vrot.slane %v6952, 1
    %v6977 = vrot.slane %v6953, 1
    %v6978 = vrot.slane %v6954, 1
    %v6979 = vrot.slane %v6955, 1
    %v6980 = vrot.slane %v6956, 1
    %v6981 = vrot.slane %v6957, 1
    %v6982 = vrot.slane %v6958, 1
    %v6983 = vrot.slane %v6959, 1
    %v6984 = vrot.slane %v6960, 1
    %v6985 = vrot.slane %v6961, 1
    %v6998 = vadd.f32 %v6938, %v6974
    %v6999 = vadd.f32 %v6939, %v6975
    %v7000 = vadd.f32 %v6940, %v6976
    %v7001 = vadd.f32 %v6941, %v6977
    %v7002 = vadd.f32 %v6942, %v6978
    %v7003 = vadd.f32 %v6943, %v6979
    %v7004 = vadd.f32 %v6944, %v6980
    %v7005 = vadd.f32 %v6945, %v6981
    %v7006 = vadd.f32 %v6946, %v6982
    %v7007 = vadd.f32 %v6947, %v6983
    %v7008 = vadd.f32 %v6948, %v6984
    %v7009 = vadd.f32 %v6949, %v6985
    %v7010 = vadd.f32 %v6738, %v6842
    %v7011 = vadd.f32 %v6739, %v6843
    %v7012 = vadd.f32 %v6740, %v6844
    %v7013 = vadd.f32 %v6741, %v6845
    %v7014 = vadd.f32 %v6742, %v6846
    %v7015 = vadd.f32 %v6743, %v6847
    %v7016 = vadd.f32 %v6744, %v6848
    %v7017 = vadd.f32 %v6745, %v6849
    %v7018 = vadd.f32 %v6746, %v6850
    %v7019 = vadd.f32 %v6747, %v6851
    %v7020 = vadd.f32 %v6748, %v6852
    %v7021 = vadd.f32 %v6749, %v6853
    %v7022 = vadd.f32 %v6750, %v6998
    %v7023 = vadd.f32 %v6751, %v6999
    %v7024 = vadd.f32 %v6752, %v7000
    %v7025 = vadd.f32 %v6753, %v7001
    %v7026 = vadd.f32 %v6754, %v7002
    %v7027 = vadd.f32 %v6755, %v7003
    %v7028 = vadd.f32 %v6756, %v7004
    %v7029 = vadd.f32 %v6757, %v7005
    %v7030 = vadd.f32 %v6758, %v7006
    %v7031 = vadd.f32 %v6759, %v7007
    %v7032 = vadd.f32 %v6760, %v7008
    %v7033 = vadd.f32 %v6761, %v7009
    %v7034 = vmax.f32 %v7010, %v7022
    %v7035 = vmax.f32 %v7011, %v7023
    %v7036 = vmax.f32 %v7012, %v7024
    %v7037 = vmax.f32 %v7013, %v7025
    %v7038 = vmax.f32 %v7014, %v7026
    %v7039 = vmax.f32 %v7015, %v7027
    %v7040 = vmax.f32 %v7016, %v7028
    %v7041 = vmax.f32 %v7017, %v7029
    %v7042 = vmax.f32 %v7018, %v7030
    %v7043 = vmax.f32 %v7019, %v7031
    %v7044 = vmax.f32 %v7020, %v7032
    %v7045 = vmax.f32 %v7021, %v7033
    %v7046 = vmax.f32 %v7034, %v7035
    %v7047 = vmax.f32 %v7036, %v7037
    %v7048 = vmax.f32 %v7038, %v7039
    %v7049 = vmax.f32 %v7040, %v7041
    %v7050 = vmax.f32 %v7042, %v7043
    %v7051 = vmax.f32 %v7044, %v7045
    %s7052 = sld [smem:[#allocation7 + $0x4]]
    %v7053 = vstv %s7052
    %v7054 = vadd.f32 %v7046, %v7053
    %v7055 = vadd.f32 %v7047, %v7053
    %v7056 = vadd.f32 %v7048, %v7053
    %v7057 = vadd.f32 %v7049, %v7053
    %v7058 = vadd.f32 %v7050, %v7053
    %v7059 = vadd.f32 %v7051, %v7053
    %v7060 = vmax.f32 %v7054, 0.0
    %v7061 = vmax.f32 %v7055, 0.0
    %v7062 = vmax.f32 %v7056, 0.0
    %v7063 = vmax.f32 %v7057, 0.0
    %v7064 = vmax.f32 %v7058, 0.0
    %v7065 = vmax.f32 %v7059, 0.0
    %s7066 = sld [smem:[#allocation6 + $0x280]]
    %s7067 = sld [smem:[#allocation6 + $0x281]]
    %s7068 = sld [smem:[#allocation6 + $0x282]]
    %s7069 = sld [smem:[#allocation6 + $0x283]]
    %v7070 = vstv %s7066
    %v7071 = vmul.f32 %v7070, %v1158
    %v7072 = vmul.f32 %v7070, %v1159
    %v7073 = vmul.f32 %v7070, %v1160
    %v7074 = vmul.f32 %v7070, %v1161
    %v7075 = vmul.f32 %v7070, %v1162
    %v7076 = vmul.f32 %v7070, %v1163
    %v7077 = vmul.f32 %v7070, %v1164
    %v7078 = vmul.f32 %v7070, %v1165
    %v7079 = vmul.f32 %v7070, %v1166
    %v7080 = vmul.f32 %v7070, %v1167
    %v7081 = vmul.f32 %v7070, %v1168
    %v7082 = vmul.f32 %v7070, %v1169
    %v7083 = vstv %s7067
    %v7084 = vmul.f32 %v7083, %v1197
    %v7085 = vmul.f32 %v7083, %v1198
    %v7086 = vmul.f32 %v7083, %v1199
    %v7087 = vmul.f32 %v7083, %v1200
    %v7088 = vmul.f32 %v7083, %v1201
    %v7089 = vmul.f32 %v7083, %v1202
    %v7090 = vmul.f32 %v7083, %v1203
    %v7091 = vmul.f32 %v7083, %v1204
    %v7092 = vmul.f32 %v7083, %v1205
    %v7093 = vmul.f32 %v7083, %v1206
    %v7094 = vmul.f32 %v7083, %v1207
    %v7095 = vmul.f32 %v7083, %v1208
    %v7096 = vadd.f32 %v7071, %v7084
    %v7097 = vadd.f32 %v7072, %v7085
    %v7098 = vadd.f32 %v7073, %v7086
    %v7099 = vadd.f32 %v7074, %v7087
    %v7100 = vadd.f32 %v7075, %v7088
    %v7101 = vadd.f32 %v7076, %v7089
    %v7102 = vadd.f32 %v7077, %v7090
    %v7103 = vadd.f32 %v7078, %v7091
    %v7104 = vadd.f32 %v7079, %v7092
    %v7105 = vadd.f32 %v7080, %v7093
    %v7106 = vadd.f32 %v7081, %v7094
    %v7107 = vadd.f32 %v7082, %v7095
    %v7108 = vstv %s7068
    %v7109 = vmul.f32 %v7108, %v1159
    %v7110 = vmul.f32 %v7108, %v1160
    %v7111 = vmul.f32 %v7108, %v1161
    %v7112 = vmul.f32 %v7108, %v1162
    %v7113 = vmul.f32 %v7108, %v1163
    %v7114 = vmul.f32 %v7108, %v1164
    %v7115 = vmul.f32 %v7108, %v1165
    %v7116 = vmul.f32 %v7108, %v1166
    %v7117 = vmul.f32 %v7108, %v1167
    %v7118 = vmul.f32 %v7108, %v1168
    %v7119 = vmul.f32 %v7108, %v1169
    %v7120 = vmul.f32 %v7108, %v1170
    %v7121 = vadd.f32 %v7096, %v7109
    %v7122 = vadd.f32 %v7097, %v7110
    %v7123 = vadd.f32 %v7098, %v7111
    %v7124 = vadd.f32 %v7099, %v7112
    %v7125 = vadd.f32 %v7100, %v7113
    %v7126 = vadd.f32 %v7101, %v7114
    %v7127 = vadd.f32 %v7102, %v7115
    %v7128 = vadd.f32 %v7103, %v7116
    %v7129 = vadd.f32 %v7104, %v7117
    %v7130 = vadd.f32 %v7105, %v7118
    %v7131 = vadd.f32 %v7106, %v7119
    %v7132 = vadd.f32 %v7107, %v7120
    %v7133 = vstv %s7069
    %v7134 = vmul.f32 %v7133, %v1198
    %v7135 = vmul.f32 %v7133, %v1199
    %v7136 = vmul.f32 %v7133, %v1200
    %v7137 = vmul.f32 %v7133, %v1201
    %v7138 = vmul.f32 %v7133, %v1202
    %v7139 = vmul.f32 %v7133, %v1203
    %v7140 = vmul.f32 %v7133, %v1204
    %v7141 = vmul.f32 %v7133, %v1205
    %v7142 = vmul.f32 %v7133, %v1206
    %v7143 = vmul.f32 %v7133, %v1207
    %v7144 = vmul.f32 %v7133, %v1208
    %v7145 = vmul.f32 %v7133, %v1209
    %v7146 = vadd.f32 %v7121, %v7134
    %v7147 = vadd.f32 %v7122, %v7135
    %v7148 = vadd.f32 %v7123, %v7136
    %v7149 = vadd.f32 %v7124, %v7137
    %v7150 = vadd.f32 %v7125, %v7138
    %v7151 = vadd.f32 %v7126, %v7139
    %v7152 = vadd.f32 %v7127, %v7140
    %v7153 = vadd.f32 %v7128, %v7141
    %v7154 = vadd.f32 %v7129, %v7142
    %v7155 = vadd.f32 %v7130, %v7143
    %v7156 = vadd.f32 %v7131, %v7144
    %v7157 = vadd.f32 %v7132, %v7145
    %v7158 = vmul.f32 %v7070, %v1197
    %v7159 = vmul.f32 %v7070, %v1198
    %v7160 = vmul.f32 %v7070, %v1199
    %v7161 = vmul.f32 %v7070, %v1200
    %v7162 = vmul.f32 %v7070, %v1201
    %v7163 = vmul.f32 %v7070, %v1202
    %v7164 = vmul.f32 %v7070, %v1203
    %v7165 = vmul.f32 %v7070, %v1204
    %v7166 = vmul.f32 %v7070, %v1205
    %v7167 = vmul.f32 %v7070, %v1206
    %v7168 = vmul.f32 %v7070, %v1207
    %v7169 = vmul.f32 %v7070, %v1208
    %v7170 = vmul.f32 %v7083, %v1158
    %v7171 = vmul.f32 %v7083, %v1159
    %v7172 = vmul.f32 %v7083, %v1160
    %v7173 = vmul.f32 %v7083, %v1161
    %v7174 = vmul.f32 %v7083, %v1162
    %v7175 = vmul.f32 %v7083, %v1163
    %v7176 = vmul.f32 %v7083, %v1164
    %v7177 = vmul.f32 %v7083, %v1165
    %v7178 = vmul.f32 %v7083, %v1166
    %v7179 = vmul.f32 %v7083, %v1167
    %v7180 = vmul.f32 %v7083, %v1168
    %v7181 = vmul.f32 %v7083, %v1169
    %v7194 = vrot.slane %v7170, 1
    %v7195 = vrot.slane %v7171, 1
    %v7196 = vrot.slane %v7172, 1
    %v7197 = vrot.slane %v7173, 1
    %v7198 = vrot.slane %v7174, 1
    %v7199 = vrot.slane %v7175, 1
    %v7200 = vrot.slane %v7176, 1
    %v7201 = vrot.slane %v7177, 1
    %v7202 = vrot.slane %v7178, 1
    %v7203 = vrot.slane %v7179, 1
    %v7204 = vrot.slane %v7180, 1
    %v7205 = vrot.slane %v7181, 1
    %v7218 = vadd.f32 %v7158, %v7194
    %v7219 = vadd.f32 %v7159, %v7195
    %v7220 = vadd.f32 %v7160, %v7196
    %v7221 = vadd.f32 %v7161, %v7197
    %v7222 = vadd.f32 %v7162, %v7198
    %v7223 = vadd.f32 %v7163, %v7199
    %v7224 = vadd.f32 %v7164, %v7200
    %v7225 = vadd.f32 %v7165, %v7201
    %v7226 = vadd.f32 %v7166, %v7202
    %v7227 = vadd.f32 %v7167, %v7203
    %v7228 = vadd.f32 %v7168, %v7204
    %v7229 = vadd.f32 %v7169, %v7205
    %v7230 = vmul.f32 %v7108, %v1198
    %v7231 = vmul.f32 %v7108, %v1199
    %v7232 = vmul.f32 %v7108, %v1200
    %v7233 = vmul.f32 %v7108, %v1201
    %v7234 = vmul.f32 %v7108, %v1202
    %v7235 = vmul.f32 %v7108, %v1203
    %v7236 = vmul.f32 %v7108, %v1204
    %v7237 = vmul.f32 %v7108, %v1205
    %v7238 = vmul.f32 %v7108, %v1206
    %v7239 = vmul.f32 %v7108, %v1207
    %v7240 = vmul.f32 %v7108, %v1208
    %v7241 = vmul.f32 %v7108, %v1209
    %v7242 = vadd.f32 %v7218, %v7230
    %v7243 = vadd.f32 %v7219, %v7231
    %v7244 = vadd.f32 %v7220, %v7232
    %v7245 = vadd.f32 %v7221, %v7233
    %v7246 = vadd.f32 %v7222, %v7234
    %v7247 = vadd.f32 %v7223, %v7235
    %v7248 = vadd.f32 %v7224, %v7236
    %v7249 = vadd.f32 %v7225, %v7237
    %v7250 = vadd.f32 %v7226, %v7238
    %v7251 = vadd.f32 %v7227, %v7239
    %v7252 = vadd.f32 %v7228, %v7240
    %v7253 = vadd.f32 %v7229, %v7241
    %v7254 = vmul.f32 %v7133, %v1159
    %v7255 = vmul.f32 %v7133, %v1160
    %v7256 = vmul.f32 %v7133, %v1161
    %v7257 = vmul.f32 %v7133, %v1162
    %v7258 = vmul.f32 %v7133, %v1163
    %v7259 = vmul.f32 %v7133, %v1164
    %v7260 = vmul.f32 %v7133, %v1165
    %v7261 = vmul.f32 %v7133, %v1166
    %v7262 = vmul.f32 %v7133, %v1167
    %v7263 = vmul.f32 %v7133, %v1168
    %v7264 = vmul.f32 %v7133, %v1169
    %v7265 = vmul.f32 %v7133, %v1170
    %v7278 = vrot.slane %v7254, 1
    %v7279 = vrot.slane %v7255, 1
    %v7280 = vrot.slane %v7256, 1
    %v7281 = vrot.slane %v7257, 1
    %v7282 = vrot.slane %v7258, 1
    %v7283 = vrot.slane %v7259, 1
    %v7284 = vrot.slane %v7260, 1
    %v7285 = vrot.slane %v7261, 1
    %v7286 = vrot.slane %v7262, 1
    %v7287 = vrot.slane %v7263, 1
    %v7288 = vrot.slane %v7264, 1
    %v7289 = vrot.slane %v7265, 1
    %v7302 = vadd.f32 %v7242, %v7278
    %v7303 = vadd.f32 %v7243, %v7279
    %v7304 = vadd.f32 %v7244, %v7280
    %v7305 = vadd.f32 %v7245, %v7281
    %v7306 = vadd.f32 %v7246, %v7282
    %v7307 = vadd.f32 %v7247, %v7283
    %v7308 = vadd.f32 %v7248, %v7284
    %v7309 = vadd.f32 %v7249, %v7285
    %v7310 = vadd.f32 %v7250, %v7286
    %v7311 = vadd.f32 %v7251, %v7287
    %v7312 = vadd.f32 %v7252, %v7288
    %v7313 = vadd.f32 %v7253, %v7289
    %s7314 = sld [smem:[#allocation6 + $0x284]]
    %s7315 = sld [smem:[#allocation6 + $0x285]]
    %s7316 = sld [smem:[#allocation6 + $0x286]]
    %s7317 = sld [smem:[#allocation6 + $0x287]]
    %v7318 = vstv %s7314
    %v7319 = vmul.f32 %v7318, %v2026
    %v7320 = vmul.f32 %v7318, %v2027
    %v7321 = vmul.f32 %v7318, %v2028
    %v7322 = vmul.f32 %v7318, %v2029
    %v7323 = vmul.f32 %v7318, %v2030
    %v7324 = vmul.f32 %v7318, %v2031
    %v7325 = vmul.f32 %v7318, %v2032
    %v7326 = vmul.f32 %v7318, %v2033
    %v7327 = vmul.f32 %v7318, %v2034
    %v7328 = vmul.f32 %v7318, %v2035
    %v7329 = vmul.f32 %v7318, %v2036
    %v7330 = vmul.f32 %v7318, %v2037
    %v7331 = vstv %s7315
    %v7332 = vmul.f32 %v7331, %v2065
    %v7333 = vmul.f32 %v7331, %v2066
    %v7334 = vmul.f32 %v7331, %v2067
    %v7335 = vmul.f32 %v7331, %v2068
    %v7336 = vmul.f32 %v7331, %v2069
    %v7337 = vmul.f32 %v7331, %v2070
    %v7338 = vmul.f32 %v7331, %v2071
    %v7339 = vmul.f32 %v7331, %v2072
    %v7340 = vmul.f32 %v7331, %v2073
    %v7341 = vmul.f32 %v7331, %v2074
    %v7342 = vmul.f32 %v7331, %v2075
    %v7343 = vmul.f32 %v7331, %v2076
    %v7344 = vadd.f32 %v7319, %v7332
    %v7345 = vadd.f32 %v7320, %v7333
    %v7346 = vadd.f32 %v7321, %v7334
    %v7347 = vadd.f32 %v7322, %v7335
    %v7348 = vadd.f32 %v7323, %v7336
    %v7349 = vadd.f32 %v7324, %v7337
    %v7350 = vadd.f32 %v7325, %v7338
    %v7351 = vadd.f32 %v7326, %v7339
    %v7352 = vadd.f32 %v7327, %v7340
    %v7353 = vadd.f32 %v7328, %v7341
    %v7354 = vadd.f32 %v7329, %v7342
    %v7355 = vadd.f32 %v7330, %v7343
    %v7356 = vstv %s7316
    %v7357 = vmul.f32 %v7356, %v2027
    %v7358 = vmul.f32 %v7356, %v2028
    %v7359 = vmul.f32 %v7356, %v2029
    %v7360 = vmul.f32 %v7356, %v2030
    %v7361 = vmul.f32 %v7356, %v2031
    %v7362 = vmul.f32 %v7356, %v2032
    %v7363 = vmul.f32 %v7356, %v2033
    %v7364 = vmul.f32 %v7356, %v2034
    %v7365 = vmul.f32 %v7356, %v2035
    %v7366 = vmul.f32 %v7356, %v2036
    %v7367 = vmul.f32 %v7356, %v2037
    %v7368 = vmul.f32 %v7356, %v2038
    %v7369 = vadd.f32 %v7344, %v7357
    %v7370 = vadd.f32 %v7345, %v7358
    %v7371 = vadd.f32 %v7346, %v7359
    %v7372 = vadd.f32 %v7347, %v7360
    %v7373 = vadd.f32 %v7348, %v7361
    %v7374 = vadd.f32 %v7349, %v7362
    %v7375 = vadd.f32 %v7350, %v7363
    %v7376 = vadd.f32 %v7351, %v7364
    %v7377 = vadd.f32 %v7352, %v7365
    %v7378 = vadd.f32 %v7353, %v7366
    %v7379 = vadd.f32 %v7354, %v7367
    %v7380 = vadd.f32 %v7355, %v7368
    %v7381 = vstv %s7317
    %v7382 = vmul.f32 %v7381, %v2066
    %v7383 = vmul.f32 %v7381, %v2067
    %v7384 = vmul.f32 %v7381, %v2068
    %v7385 = vmul.f32 %v7381, %v2069
    %v7386 = vmul.f32 %v7381, %v2070
    %v7387 = vmul.f32 %v7381, %v2071
    %v7388 = vmul.f32 %v7381, %v2072
    %v7389 = vmul.f32 %v7381, %v2073
    %v7390 = vmul.f32 %v7381, %v2074
    %v7391 = vmul.f32 %v7381, %v2075
    %v7392 = vmul.f32 %v7381, %v2076
    %v7393 = vmul.f32 %v7381, %v2077
    %v7394 = vadd.f32 %v7369, %v7382
    %v7395 = vadd.f32 %v7370, %v7383
    %v7396 = vadd.f32 %v7371, %v7384
    %v7397 = vadd.f32 %v7372, %v7385
    %v7398 = vadd.f32 %v7373, %v7386
    %v7399 = vadd.f32 %v7374, %v7387
    %v7400 = vadd.f32 %v7375, %v7388
    %v7401 = vadd.f32 %v7376, %v7389
    %v7402 = vadd.f32 %v7377, %v7390
    %v7403 = vadd.f32 %v7378, %v7391
    %v7404 = vadd.f32 %v7379, %v7392
    %v7405 = vadd.f32 %v7380, %v7393
    %v7406 = vmul.f32 %v7318, %v2065
    %v7407 = vmul.f32 %v7318, %v2066
    %v7408 = vmul.f32 %v7318, %v2067
    %v7409 = vmul.f32 %v7318, %v2068
    %v7410 = vmul.f32 %v7318, %v2069
    %v7411 = vmul.f32 %v7318, %v2070
    %v7412 = vmul.f32 %v7318, %v2071
    %v7413 = vmul.f32 %v7318, %v2072
    %v7414 = vmul.f32 %v7318, %v2073
    %v7415 = vmul.f32 %v7318, %v2074
    %v7416 = vmul.f32 %v7318, %v2075
    %v7417 = vmul.f32 %v7318, %v2076
    %v7418 = vmul.f32 %v7331, %v2026
    %v7419 = vmul.f32 %v7331, %v2027
    %v7420 = vmul.f32 %v7331, %v2028
    %v7421 = vmul.f32 %v7331, %v2029
    %v7422 = vmul.f32 %v7331, %v2030
    %v7423 = vmul.f32 %v7331, %v2031
    %v7424 = vmul.f32 %v7331, %v2032
    %v7425 = vmul.f32 %v7331, %v2033
    %v7426 = vmul.f32 %v7331, %v2034
    %v7427 = vmul.f32 %v7331, %v2035
    %v7428 = vmul.f32 %v7331, %v2036
    %v7429 = vmul.f32 %v7331, %v2037
    %v7442 = vrot.slane %v7418, 1
    %v7443 = vrot.slane %v7419, 1
    %v7444 = vrot.slane %v7420, 1
    %v7445 = vrot.slane %v7421, 1
    %v7446 = vrot.slane %v7422, 1
    %v7447 = vrot.slane %v7423, 1
    %v7448 = vrot.slane %v7424, 1
    %v7449 = vrot.slane %v7425, 1
    %v7450 = vrot.slane %v7426, 1
    %v7451 = vrot.slane %v7427, 1
    %v7452 = vrot.slane %v7428, 1
    %v7453 = vrot.slane %v7429, 1
    %v7466 = vadd.f32 %v7406, %v7442
    %v7467 = vadd.f32 %v7407, %v7443
    %v7468 = vadd.f32 %v7408, %v7444
    %v7469 = vadd.f32 %v7409, %v7445
    %v7470 = vadd.f32 %v7410, %v7446
    %v7471 = vadd.f32 %v7411, %v7447
    %v7472 = vadd.f32 %v7412, %v7448
    %v7473 = vadd.f32 %v7413, %v7449
    %v7474 = vadd.f32 %v7414, %v7450
    %v7475 = vadd.f32 %v7415, %v7451
    %v7476 = vadd.f32 %v7416, %v7452
    %v7477 = vadd.f32 %v7417, %v7453
    %v7478 = vmul.f32 %v7356, %v2066
    %v7479 = vmul.f32 %v7356, %v2067
    %v7480 = vmul.f32 %v7356, %v2068
    %v7481 = vmul.f32 %v7356, %v2069
    %v7482 = vmul.f32 %v7356, %v2070
    %v7483 = vmul.f32 %v7356, %v2071
    %v7484 = vmul.f32 %v7356, %v2072
    %v7485 = vmul.f32 %v7356, %v2073
    %v7486 = vmul.f32 %v7356, %v2074
    %v7487 = vmul.f32 %v7356, %v2075
    %v7488 = vmul.f32 %v7356, %v2076
    %v7489 = vmul.f32 %v7356, %v2077
    %v7490 = vadd.f32 %v7466, %v7478
    %v7491 = vadd.f32 %v7467, %v7479
    %v7492 = vadd.f32 %v7468, %v7480
    %v7493 = vadd.f32 %v7469, %v7481
    %v7494 = vadd.f32 %v7470, %v7482
    %v7495 = vadd.f32 %v7471, %v7483
    %v7496 = vadd.f32 %v7472, %v7484
    %v7497 = vadd.f32 %v7473, %v7485
    %v7498 = vadd.f32 %v7474, %v7486
    %v7499 = vadd.f32 %v7475, %v7487
    %v7500 = vadd.f32 %v7476, %v7488
    %v7501 = vadd.f32 %v7477, %v7489
    %v7502 = vmul.f32 %v7381, %v2027
    %v7503 = vmul.f32 %v7381, %v2028
    %v7504 = vmul.f32 %v7381, %v2029
    %v7505 = vmul.f32 %v7381, %v2030
    %v7506 = vmul.f32 %v7381, %v2031
    %v7507 = vmul.f32 %v7381, %v2032
    %v7508 = vmul.f32 %v7381, %v2033
    %v7509 = vmul.f32 %v7381, %v2034
    %v7510 = vmul.f32 %v7381, %v2035
    %v7511 = vmul.f32 %v7381, %v2036
    %v7512 = vmul.f32 %v7381, %v2037
    %v7513 = vmul.f32 %v7381, %v2038
    %v7526 = vrot.slane %v7502, 1
    %v7527 = vrot.slane %v7503, 1
    %v7528 = vrot.slane %v7504, 1
    %v7529 = vrot.slane %v7505, 1
    %v7530 = vrot.slane %v7506, 1
    %v7531 = vrot.slane %v7507, 1
    %v7532 = vrot.slane %v7508, 1
    %v7533 = vrot.slane %v7509, 1
    %v7534 = vrot.slane %v7510, 1
    %v7535 = vrot.slane %v7511, 1
    %v7536 = vrot.slane %v7512, 1
    %v7537 = vrot.slane %v7513, 1
    %v7550 = vadd.f32 %v7490, %v7526
    %v7551 = vadd.f32 %v7491, %v7527
    %v7552 = vadd.f32 %v7492, %v7528
    %v7553 = vadd.f32 %v7493, %v7529
    %v7554 = vadd.f32 %v7494, %v7530
    %v7555 = vadd.f32 %v7495, %v7531
    %v7556 = vadd.f32 %v7496, %v7532
    %v7557 = vadd.f32 %v7497, %v7533
    %v7558 = vadd.f32 %v7498, %v7534
    %v7559 = vadd.f32 %v7499, %v7535
    %v7560 = vadd.f32 %v7500, %v7536
    %v7561 = vadd.f32 %v7501, %v7537
    %v7562 = vadd.f32 %v7146, %v7394
    %v7563 = vadd.f32 %v7147, %v7395
    %v7564 = vadd.f32 %v7148, %v7396
    %v7565 = vadd.f32 %v7149, %v7397
    %v7566 = vadd.f32 %v7150, %v7398
    %v7567 = vadd.f32 %v7151, %v7399
    %v7568 = vadd.f32 %v7152, %v7400
    %v7569 = vadd.f32 %v7153, %v7401
    %v7570 = vadd.f32 %v7154, %v7402
    %v7571 = vadd.f32 %v7155, %v7403
    %v7572 = vadd.f32 %v7156, %v7404
    %v7573 = vadd.f32 %v7157, %v7405
    %v7574 = vadd.f32 %v7302, %v7550
    %v7575 = vadd.f32 %v7303, %v7551
    %v7576 = vadd.f32 %v7304, %v7552
    %v7577 = vadd.f32 %v7305, %v7553
    %v7578 = vadd.f32 %v7306, %v7554
    %v7579 = vadd.f32 %v7307, %v7555
    %v7580 = vadd.f32 %v7308, %v7556
    %v7581 = vadd.f32 %v7309, %v7557
    %v7582 = vadd.f32 %v7310, %v7558
    %v7583 = vadd.f32 %v7311, %v7559
    %v7584 = vadd.f32 %v7312, %v7560
    %v7585 = vadd.f32 %v7313, %v7561
    %s7586 = sld [smem:[#allocation6 + $0x288]]
    %s7587 = sld [smem:[#allocation6 + $0x289]]
    %s7588 = sld [smem:[#allocation6 + $0x28a]]
    %s7589 = sld [smem:[#allocation6 + $0x28b]]
    %v7590 = vstv %s7586
    %v7591 = vmul.f32 %v7590, %v2894
    %v7592 = vmul.f32 %v7590, %v2895
    %v7593 = vmul.f32 %v7590, %v2896
    %v7594 = vmul.f32 %v7590, %v2897
    %v7595 = vmul.f32 %v7590, %v2898
    %v7596 = vmul.f32 %v7590, %v2899
    %v7597 = vmul.f32 %v7590, %v2900
    %v7598 = vmul.f32 %v7590, %v2901
    %v7599 = vmul.f32 %v7590, %v2902
    %v7600 = vmul.f32 %v7590, %v2903
    %v7601 = vmul.f32 %v7590, %v2904
    %v7602 = vmul.f32 %v7590, %v2905
    %v7603 = vstv %s7587
    %v7604 = vmul.f32 %v7603, %v2933
    %v7605 = vmul.f32 %v7603, %v2934
    %v7606 = vmul.f32 %v7603, %v2935
    %v7607 = vmul.f32 %v7603, %v2936
    %v7608 = vmul.f32 %v7603, %v2937
    %v7609 = vmul.f32 %v7603, %v2938
    %v7610 = vmul.f32 %v7603, %v2939
    %v7611 = vmul.f32 %v7603, %v2940
    %v7612 = vmul.f32 %v7603, %v2941
    %v7613 = vmul.f32 %v7603, %v2942
    %v7614 = vmul.f32 %v7603, %v2943
    %v7615 = vmul.f32 %v7603, %v2944
    %v7616 = vadd.f32 %v7591, %v7604
    %v7617 = vadd.f32 %v7592, %v7605
    %v7618 = vadd.f32 %v7593, %v7606
    %v7619 = vadd.f32 %v7594, %v7607
    %v7620 = vadd.f32 %v7595, %v7608
    %v7621 = vadd.f32 %v7596, %v7609
    %v7622 = vadd.f32 %v7597, %v7610
    %v7623 = vadd.f32 %v7598, %v7611
    %v7624 = vadd.f32 %v7599, %v7612
    %v7625 = vadd.f32 %v7600, %v7613
    %v7626 = vadd.f32 %v7601, %v7614
    %v7627 = vadd.f32 %v7602, %v7615
    %v7628 = vstv %s7588
    %v7629 = vmul.f32 %v7628, %v2895
    %v7630 = vmul.f32 %v7628, %v2896
    %v7631 = vmul.f32 %v7628, %v2897
    %v7632 = vmul.f32 %v7628, %v2898
    %v7633 = vmul.f32 %v7628, %v2899
    %v7634 = vmul.f32 %v7628, %v2900
    %v7635 = vmul.f32 %v7628, %v2901
    %v7636 = vmul.f32 %v7628, %v2902
    %v7637 = vmul.f32 %v7628, %v2903
    %v7638 = vmul.f32 %v7628, %v2904
    %v7639 = vmul.f32 %v7628, %v2905
    %v7640 = vmul.f32 %v7628, %v2906
    %v7641 = vadd.f32 %v7616, %v7629
    %v7642 = vadd.f32 %v7617, %v7630
    %v7643 = vadd.f32 %v7618, %v7631
    %v7644 = vadd.f32 %v7619, %v7632
    %v7645 = vadd.f32 %v7620, %v7633
    %v7646 = vadd.f32 %v7621, %v7634
    %v7647 = vadd.f32 %v7622, %v7635
    %v7648 = vadd.f32 %v7623, %v7636
    %v7649 = vadd.f32 %v7624, %v7637
    %v7650 = vadd.f32 %v7625, %v7638
    %v7651 = vadd.f32 %v7626, %v7639
    %v7652 = vadd.f32 %v7627, %v7640
    %v7653 = vstv %s7589
    %v7654 = vmul.f32 %v7653, %v2934
    %v7655 = vmul.f32 %v7653, %v2935
    %v7656 = vmul.f32 %v7653, %v2936
    %v7657 = vmul.f32 %v7653, %v2937
    %v7658 = vmul.f32 %v7653, %v2938
    %v7659 = vmul.f32 %v7653, %v2939
    %v7660 = vmul.f32 %v7653, %v2940
    %v7661 = vmul.f32 %v7653, %v2941
    %v7662 = vmul.f32 %v7653, %v2942
    %v7663 = vmul.f32 %v7653, %v2943
    %v7664 = vmul.f32 %v7653, %v2944
    %v7665 = vmul.f32 %v7653, %v2945
    %v7666 = vadd.f32 %v7641, %v7654
    %v7667 = vadd.f32 %v7642, %v7655
    %v7668 = vadd.f32 %v7643, %v7656
    %v7669 = vadd.f32 %v7644, %v7657
    %v7670 = vadd.f32 %v7645, %v7658
    %v7671 = vadd.f32 %v7646, %v7659
    %v7672 = vadd.f32 %v7647, %v7660
    %v7673 = vadd.f32 %v7648, %v7661
    %v7674 = vadd.f32 %v7649, %v7662
    %v7675 = vadd.f32 %v7650, %v7663
    %v7676 = vadd.f32 %v7651, %v7664
    %v7677 = vadd.f32 %v7652, %v7665
    %v7678 = vmul.f32 %v7590, %v2933
    %v7679 = vmul.f32 %v7590, %v2934
    %v7680 = vmul.f32 %v7590, %v2935
    %v7681 = vmul.f32 %v7590, %v2936
    %v7682 = vmul.f32 %v7590, %v2937
    %v7683 = vmul.f32 %v7590, %v2938
    %v7684 = vmul.f32 %v7590, %v2939
    %v7685 = vmul.f32 %v7590, %v2940
    %v7686 = vmul.f32 %v7590, %v2941
    %v7687 = vmul.f32 %v7590, %v2942
    %v7688 = vmul.f32 %v7590, %v2943
    %v7689 = vmul.f32 %v7590, %v2944
    %v7690 = vmul.f32 %v7603, %v2894
    %v7691 = vmul.f32 %v7603, %v2895
    %v7692 = vmul.f32 %v7603, %v2896
    %v7693 = vmul.f32 %v7603, %v2897
    %v7694 = vmul.f32 %v7603, %v2898
    %v7695 = vmul.f32 %v7603, %v2899
    %v7696 = vmul.f32 %v7603, %v2900
    %v7697 = vmul.f32 %v7603, %v2901
    %v7698 = vmul.f32 %v7603, %v2902
    %v7699 = vmul.f32 %v7603, %v2903
    %v7700 = vmul.f32 %v7603, %v2904
    %v7701 = vmul.f32 %v7603, %v2905
    %v7714 = vrot.slane %v7690, 1
    %v7715 = vrot.slane %v7691, 1
    %v7716 = vrot.slane %v7692, 1
    %v7717 = vrot.slane %v7693, 1
    %v7718 = vrot.slane %v7694, 1
    %v7719 = vrot.slane %v7695, 1
    %v7720 = vrot.slane %v7696, 1
    %v7721 = vrot.slane %v7697, 1
    %v7722 = vrot.slane %v7698, 1
    %v7723 = vrot.slane %v7699, 1
    %v7724 = vrot.slane %v7700, 1
    %v7725 = vrot.slane %v7701, 1
    %v7738 = vadd.f32 %v7678, %v7714
    %v7739 = vadd.f32 %v7679, %v7715
    %v7740 = vadd.f32 %v7680, %v7716
    %v7741 = vadd.f32 %v7681, %v7717
    %v7742 = vadd.f32 %v7682, %v7718
    %v7743 = vadd.f32 %v7683, %v7719
    %v7744 = vadd.f32 %v7684, %v7720
    %v7745 = vadd.f32 %v7685, %v7721
    %v7746 = vadd.f32 %v7686, %v7722
    %v7747 = vadd.f32 %v7687, %v7723
    %v7748 = vadd.f32 %v7688, %v7724
    %v7749 = vadd.f32 %v7689, %v7725
    %v7750 = vmul.f32 %v7628, %v2934
    %v7751 = vmul.f32 %v7628, %v2935
    %v7752 = vmul.f32 %v7628, %v2936
    %v7753 = vmul.f32 %v7628, %v2937
    %v7754 = vmul.f32 %v7628, %v2938
    %v7755 = vmul.f32 %v7628, %v2939
    %v7756 = vmul.f32 %v7628, %v2940
    %v7757 = vmul.f32 %v7628, %v2941
    %v7758 = vmul.f32 %v7628, %v2942
    %v7759 = vmul.f32 %v7628, %v2943
    %v7760 = vmul.f32 %v7628, %v2944
    %v7761 = vmul.f32 %v7628, %v2945
    %v7762 = vadd.f32 %v7738, %v7750
    %v7763 = vadd.f32 %v7739, %v7751
    %v7764 = vadd.f32 %v7740, %v7752
    %v7765 = vadd.f32 %v7741, %v7753
    %v7766 = vadd.f32 %v7742, %v7754
    %v7767 = vadd.f32 %v7743, %v7755
    %v7768 = vadd.f32 %v7744, %v7756
    %v7769 = vadd.f32 %v7745, %v7757
    %v7770 = vadd.f32 %v7746, %v7758
    %v7771 = vadd.f32 %v7747, %v7759
    %v7772 = vadd.f32 %v7748, %v7760
    %v7773 = vadd.f32 %v7749, %v7761
    %v7774 = vmul.f32 %v7653, %v2895
    %v7775 = vmul.f32 %v7653, %v2896
    %v7776 = vmul.f32 %v7653, %v2897
    %v7777 = vmul.f32 %v7653, %v2898
    %v7778 = vmul.f32 %v7653, %v2899
    %v7779 = vmul.f32 %v7653, %v2900
    %v7780 = vmul.f32 %v7653, %v2901
    %v7781 = vmul.f32 %v7653, %v2902
    %v7782 = vmul.f32 %v7653, %v2903
    %v7783 = vmul.f32 %v7653, %v2904
    %v7784 = vmul.f32 %v7653, %v2905
    %v7785 = vmul.f32 %v7653, %v2906
    %v7798 = vrot.slane %v7774, 1
    %v7799 = vrot.slane %v7775, 1
    %v7800 = vrot.slane %v7776, 1
    %v7801 = vrot.slane %v7777, 1
    %v7802 = vrot.slane %v7778, 1
    %v7803 = vrot.slane %v7779, 1
    %v7804 = vrot.slane %v7780, 1
    %v7805 = vrot.slane %v7781, 1
    %v7806 = vrot.slane %v7782, 1
    %v7807 = vrot.slane %v7783, 1
    %v7808 = vrot.slane %v7784, 1
    %v7809 = vrot.slane %v7785, 1
    %v7822 = vadd.f32 %v7762, %v7798
    %v7823 = vadd.f32 %v7763, %v7799
    %v7824 = vadd.f32 %v7764, %v7800
    %v7825 = vadd.f32 %v7765, %v7801
    %v7826 = vadd.f32 %v7766, %v7802
    %v7827 = vadd.f32 %v7767, %v7803
    %v7828 = vadd.f32 %v7768, %v7804
    %v7829 = vadd.f32 %v7769, %v7805
    %v7830 = vadd.f32 %v7770, %v7806
    %v7831 = vadd.f32 %v7771, %v7807
    %v7832 = vadd.f32 %v7772, %v7808
    %v7833 = vadd.f32 %v7773, %v7809
    %v7834 = vadd.f32 %v7562, %v7666
    %v7835 = vadd.f32 %v7563, %v7667
    %v7836 = vadd.f32 %v7564, %v7668
    %v7837 = vadd.f32 %v7565, %v7669
    %v7838 = vadd.f32 %v7566, %v7670
    %v7839 = vadd.f32 %v7567, %v7671
    %v7840 = vadd.f32 %v7568, %v7672
    %v7841 = vadd.f32 %v7569, %v7673
    %v7842 = vadd.f32 %v7570, %v7674
    %v7843 = vadd.f32 %v7571, %v7675
    %v7844 = vadd.f32 %v7572, %v7676
    %v7845 = vadd.f32 %v7573, %v7677
    %v7846 = vadd.f32 %v7574, %v7822
    %v7847 = vadd.f32 %v7575, %v7823
    %v7848 = vadd.f32 %v7576, %v7824
    %v7849 = vadd.f32 %v7577, %v7825
    %v7850 = vadd.f32 %v7578, %v7826
    %v7851 = vadd.f32 %v7579, %v7827
    %v7852 = vadd.f32 %v7580, %v7828
    %v7853 = vadd.f32 %v7581, %v7829
    %v7854 = vadd.f32 %v7582, %v7830
    %v7855 = vadd.f32 %v7583, %v7831
    %v7856 = vadd.f32 %v7584, %v7832
    %v7857 = vadd.f32 %v7585, %v7833
    %v7858 = vmax.f32 %v7834, %v7846
    %v7859 = vmax.f32 %v7835, %v7847
    %v7860 = vmax.f32 %v7836, %v7848
    %v7861 = vmax.f32 %v7837, %v7849
    %v7862 = vmax.f32 %v7838, %v7850
    %v7863 = vmax.f32 %v7839, %v7851
    %v7864 = vmax.f32 %v7840, %v7852
    %v7865 = vmax.f32 %v7841, %v7853
    %v7866 = vmax.f32 %v7842, %v7854
    %v7867 = vmax.f32 %v7843, %v7855
    %v7868 = vmax.f32 %v7844, %v7856
    %v7869 = vmax.f32 %v7845, %v7857
    %v7870 = vmax.f32 %v7858, %v7859
    %v7871 = vmax.f32 %v7860, %v7861
    %v7872 = vmax.f32 %v7862, %v7863
    %v7873 = vmax.f32 %v7864, %v7865
    %v7874 = vmax.f32 %v7866, %v7867
    %v7875 = vmax.f32 %v7868, %v7869
    %s7876 = sld [smem:[#allocation7 + $0x5]]
    %v7877 = vstv %s7876
    %v7878 = vadd.f32 %v7870, %v7877
    %v7879 = vadd.f32 %v7871, %v7877
    %v7880 = vadd.f32 %v7872, %v7877
    %v7881 = vadd.f32 %v7873, %v7877
    %v7882 = vadd.f32 %v7874, %v7877
    %v7883 = vadd.f32 %v7875, %v7877
    %v7884 = vmax.f32 %v7878, 0.0
    %v7885 = vmax.f32 %v7879, 0.0
    %v7886 = vmax.f32 %v7880, 0.0
    %v7887 = vmax.f32 %v7881, 0.0
    %v7888 = vmax.f32 %v7882, 0.0
    %v7889 = vmax.f32 %v7883, 0.0
    %v7891 = vrot.slane %v3765, 2
    %v7894 = vrot.slane %v3766, 4
    %v7897 = vrot.slane %v3767, 6
    %v7900 = vrot.slane %v3769, 2
    %v7903 = vrot.slane %v4588, 4
    %v7906 = vrot.slane %v4589, 6
    %v7909 = vrot.slane %v4591, 2
    %v7912 = vrot.slane %v4592, 4
    %v7915 = vrot.slane %v4593, 6
    %v7918 = vrot.slane %v5413, 2
    %v7921 = vrot.slane %v5414, 4
    %v7924 = vrot.slane %v5415, 6
    %vm7926 = vcmask 1045504
    %v7927 = vsel %vm7926, %v3764, %v7891
    %vm7928 = vcmask 1043456
    %v7929 = vsel %vm7928, %v7891, %v7894
    %vm7930 = vcmask 1041408
    %v7931 = vsel %vm7930, %v7894, %v7897
    %v7932 = vsel %vm7926, %v3768, %v7900
    %v7933 = vsel %vm7928, %v7900, %v7903
    %v7934 = vsel %vm7930, %v7903, %v7906
    %v7935 = vsel %vm7926, %v4590, %v7909
    %v7936 = vsel %vm7928, %v7909, %v7912
    %v7937 = vsel %vm7930, %v7912, %v7915
    %v7938 = vsel %vm7926, %v5412, %v7918
    %v7939 = vsel %vm7928, %v7918, %v7921
    %v7940 = vsel %vm7930, %v7921, %v7924
    %v7942 = vrot.slane %v5417, 2
    %v7945 = vrot.slane %v6236, 4
    %v7948 = vrot.slane %v6237, 6
    %v7951 = vrot.slane %v6239, 2
    %v7954 = vrot.slane %v6240, 4
    %v7957 = vrot.slane %v6241, 6
    %v7960 = vrot.slane %v7061, 2
    %v7963 = vrot.slane %v7062, 4
    %v7966 = vrot.slane %v7063, 6
    %v7969 = vrot.slane %v7065, 2
    %v7972 = vrot.slane %v7884, 4
    %v7975 = vrot.slane %v7885, 6
    %v7977 = vsel %vm7926, %v5416, %v7942
    %v7978 = vsel %vm7928, %v7942, %v7945
    %v7979 = vsel %vm7930, %v7945, %v7948
    %v7980 = vsel %vm7926, %v6238, %v7951
    %v7981 = vsel %vm7928, %v7951, %v7954
    %v7982 = vsel %vm7930, %v7954, %v7957
    %v7983 = vsel %vm7926, %v7060, %v7960
    %v7984 = vsel %vm7928, %v7960, %v7963
    %v7985 = vsel %vm7930, %v7963, %v7966
    %v7986 = vsel %vm7926, %v7064, %v7969
    %v7987 = vsel %vm7928, %v7969, %v7972
    %v7988 = vsel %vm7930, %v7972, %v7975
    %v7990 = vrot.slane %v7887, 2
    %v7993 = vrot.slane %v7888, 4
    %v7996 = vrot.slane %v7889, 6
    %v7998 = vsel %vm7926, %v7886, %v7990
    %v7999 = vsel %vm7928, %v7990, %v7993
    %v8000 = vsel %vm7930, %v7993, %v7996
    %v8001 = vld [vmem:[%s5] sm:$0xff]
    %v8002 = vld [vmem:[%s5 + $0x8] sm:$0xff]
    %v8003 = vld [vmem:[%s5 + $0x10] sm:$0xff]
    %v8004 = vld [vmem:[%s5 + $0x18] sm:$0xff]
    %v8005 = vpack.c.bf16 %v7929, %v7927
    %v8006 = vpack.c.bf16 %v7932, %v7931
    %v8007 = vpack.c.bf16 %v7934, %v7933
    %v8008 = vpack.c.bf16 %v7936, %v7935
    %v8009 = vpack.c.bf16 %v7938, %v7937
    %v8010 = vpack.c.bf16 %v7940, %v7939
    %v8011 = vpack.c.bf16 %v7978, %v7977
    %v8012 = vpack.c.bf16 %v7980, %v7979
    %v8013 = vpack.c.bf16 %v7982, %v7981
    %v8014 = vpack.c.bf16 %v7984, %v7983
    %v8015 = vpack.c.bf16 %v7986, %v7985
    %v8016 = vpack.c.bf16 %v7988, %v7987
    %v8017 = vpack.c.bf16 %v7999, %v7998
    %v8018 = vpack.c.bf16 %v8000, %v8000
    %v8019 = vld [vmem:[%s6] sm:$0xff]
    %v8020 = vld [vmem:[%s6 + $0x8] sm:$0xff]
    %v8021 = vld [vmem:[%s6 + $0x10] sm:$0xff]
    %v8022 = vld [vmem:[%s6 + $0x18] sm:$0xff]
    %8024 = vset.pattern.permute.xlu0 0
    %8025 = vperm.xlu0 %8024, %v8019
    %v8026 = vpop.permute.xlu0 %8025
    %8029 = vset.pattern.permute.xlu0 0
    %8030 = vperm.xlu0 %8029, %v8020
    %v8031 = vpop.permute.xlu0 %8030
    %8034 = vset.pattern.permute.xlu0 0
    %8035 = vperm.xlu0 %8034, %v8021
    %v8036 = vpop.permute.xlu0 %8035
    %8039 = vset.pattern.permute.xlu0 0
    %8040 = vperm.xlu0 %8039, %v8022
    %v8041 = vpop.permute.xlu0 %8040
    %v8047 = vunpack.c.l.b16 %v8001
    %v8048 = vunpack.c.h.b16 %v8001
    %v8049 = vunpack.c.l.b16 %v8002
    %v8050 = vunpack.c.h.b16 %v8002
    %v8051 = vunpack.c.l.b16 %v8003
    %v8052 = vunpack.c.h.b16 %v8003
    %v8053 = vunpack.c.l.b16 %v8004
    %v8054 = vunpack.c.h.b16 %v8004
    %v8055 = vpack.c.b16 %v8049, %v8047
    %v8056 = vpack.c.b16 %v8050, %v8048
    %v8057 = vpack.c.b16 %v8053, %v8051
    %v8058 = vpack.c.b16 %v8054, %v8052
    %vm8061 = vcmask 719872
    %v8063 = vsel %vm8061, %v8056, 0
    %v8066 = vsel %vm8061, %v8058, 0
    %v8069 = vsel %vm7928, %v8018, 0
    %8071 = vmatprep.subr.bf16.mxu0 0
    %8072 = vmatpush1.bf16.msra.mxu0 %v8005
    %8073 = vmatprep.subr.bf16.mxu0 0
    %8074 = vmatpush1.bf16.msra.mxu0 %v8006
    %8075 = vmatprep.subr.bf16.mxu0 0
    %8076 = vmatpush1.bf16.msra.mxu0 %v8007
    %8077 = vmatprep.subr.bf16.mxu0 0
    %8078 = vmatpush1.bf16.msra.mxu0 %v8008
    %8079 = vmatprep.subr.bf16.mxu0 0
    %8080 = vmatpush1.bf16.msra.mxu0 %v8009
    %8081 = vmatprep.subr.bf16.mxu0 0
    %8082 = vmatpush1.bf16.msra.mxu0 %v8010
    %8083 = vmatprep.subr.bf16.mxu0 0
    %8084 = vmatpush1.bf16.msra.mxu0 %v8011
    %8085 = vmatprep.subr.bf16.mxu0 0
    %8086 = vmatpush1.bf16.msra.mxu0 %v8012
    %8087 = vmatprep.subr.bf16.mxu0 0
    %8088 = vmatpush1.bf16.msra.mxu0 %v8013
    %8089 = vmatprep.subr.bf16.mxu0 0
    %8090 = vmatpush1.bf16.msra.mxu0 %v8014
    %8091 = vmatprep.subr.bf16.mxu0 0
    %8092 = vmatpush1.bf16.msra.mxu0 %v8015
    %8093 = vmatprep.subr.bf16.mxu0 0
    %8094 = vmatpush1.bf16.msra.mxu0 %v8016
    %8095 = vmatprep.subr.bf16.mxu0 0
    %8096 = vmatpush1.bf16.msra.mxu0 %v8017
    %8097 = vmatprep.subr.bf16.mxu0 0
    %8098 = vmatpush1.bf16.msra.mxu0 %v8069
    %8099 = vmatprep.subr.bf16.mxu0 0
    %8100 = vmatpush1.bf16.msra.mxu0 0
    %8101 = vmatprep.subr.bf16.mxu0 0
    %8102 = vmatpush1.bf16.msra.mxu0 0
    %8103 = vmatprep.mubr.bf16.mxu0 %v8063
    %8104 = vmatmul.mubr.bf16.gmra.mrb[0].mxu0 %v8055
    %v8105 = vpop.f32.mrb[0].mxu0
    %v8106 = vadd.f32 %v8026, %v8105
    %v8107 = vpop.f32.mrb[0].mxu0
    %v8108 = vpop.f32.mrb[0].mxu0
    %v8109 = vadd.f32 %v8031, %v8108
    %v8110 = vpop.f32.mrb[0].mxu0
    %8111 = vmatprep.mubr.bf16.mxu0 %v8066
    %8112 = vmatmul.mubr.bf16.gmra.mrb[0].mxu0 %v8057
    %v8113 = vpop.f32.mrb[0].mxu0
    %v8114 = vadd.f32 %v8036, %v8113
    %v8115 = vpop.f32.mrb[0].mxu0
    %v8116 = vpop.f32.mrb[0].mxu0
    %v8117 = vadd.f32 %v8041, %v8116
    %v8118 = vpop.f32.mrb[0].mxu0
    %8119 = vdwg.mxu0
    %v8120 = vtanh.pop %v8106
    %v8121 = vtanh.pop %v8109
    %v8122 = vtanh.pop %v8114
    %v8123 = vtanh.pop %v8117
    %8124 = vst [vmem:[%s7] sm:$0xff] %v8120
    %8125 = vst [vmem:[%s7 + $0x8] sm:$0xff] %v8121
    %8126 = vst [vmem:[%s7 + $0x10] sm:$0xff] %v8122
    %8127 = vst [vmem:[%s7 + $0x18] sm:$0xff] %v8123
    // Predicated region
    $region46: #{lenet_forward.1} parent=1 // pred_check
      _
    $region47: #{lenet_forward.1} parent=1 // pred_check_branch
      %8129 = sbr.rel (0) target = $region49
    $region48: #{lenet_forward.1} parent=1 // pred_region
      _
    $region49: #{lenet_forward.1} parent=1 // pred_fallthru
      _
    // Predicated region
    $region50: #{lenet_forward.1} parent=1 // pred_check
      _
    $region51: #{lenet_forward.1} parent=1 // pred_check_branch
      %8131 = sbr.rel (0) target = $region53
    $region52: #{lenet_forward.1} parent=1 // pred_region
      _
    $region53: #{lenet_forward.1} parent=1 // pred_fallthru
      _
    %8132 = vsyncpa [#allocation3], 1
    %8133 = vsyncpa [#allocation5], 1
    %8134 = vsyncpa [#allocation8], 1

</llo_original>
